<compile_context>
chip_gen: v7x
topology: tpu7x:2x2x1
jax: 0.10.0
libtpu: 0.0.40
codegen_flags: <defaults>
</compile_context>

<pallas_src>
import functools

import jax
import jax.numpy as jnp
from jax import lax
from jax.experimental import pallas as pl
from jax.experimental.pallas import tpu as pltpu


def _basic_block_kernel(x_ref, w1_ref, b1_ref, w2_ref, b2_ref, out_ref,
                        pad_ref, *, B, H, W, C):
    f32 = jnp.float32
    bf16 = jnp.bfloat16
    M = B * H * W

    # Zero only the 1-pixel border ring of the bf16 padded scratch (cheap,
    # O(ring)).  Must run every grid step: scratch is per-core under megacore
    # sharding, so a program_id==0 guard would leave core 1 uninitialized.
    pad_ref[:, 0:1, :, :] = jnp.zeros((B, 1, W + 2, C), bf16)
    pad_ref[:, H + 1:H + 2, :, :] = jnp.zeros((B, 1, W + 2, C), bf16)
    pad_ref[:, :, 0:1, :] = jnp.zeros((B, H + 2, 1, C), bf16)
    pad_ref[:, :, W + 1:W + 2, :] = jnp.zeros((B, H + 2, 1, C), bf16)

    def conv3x3(w_ref, b_ref):
        # Decomposed 3x3 conv: 9 accumulating (M, C) @ (C, C) MXU matmuls,
        # bf16 in / f32 accumulate.  No (M, 9C) im2col tensor is ever built.
        acc = None
        for dy in range(3):
            for dx in range(3):
                t = dy * 3 + dx
                tap = pad_ref[:, dy:dy + H, dx:dx + W, :].reshape(M, C)
                part = jnp.dot(tap, w_ref[t * C:(t + 1) * C, :],
                               preferred_element_type=f32)
                acc = part if acc is None else acc + part
        return acc + b_ref[...]

    # ---- conv1 (BN1 scale pre-folded into weights) + bias + relu
    pad_ref[:, 1:H + 1, 1:W + 1, :] = x_ref[...].astype(bf16)
    h1 = jnp.maximum(conv3x3(w1_ref, b1_ref), 0.0)             # (M, C) f32

    # ---- conv2 (BN2 scale pre-folded into weights) + bias
    pad_ref[:, 1:H + 1, 1:W + 1, :] = h1.reshape(B, H, W, C).astype(bf16)
    h2 = conv3x3(w2_ref, b2_ref)                               # (M, C) f32

    # ---- identity residual (f32, re-read from the input block) + relu
    out = jnp.maximum(h2.reshape(B, H, W, C) + x_ref[...], 0.0)
    out_ref[...] = out.astype(out_ref.dtype)


def basic_block_pallas_nhwc(x_nhwc, params, *, batch_block=1):
    """Native NHWC entry point.  x_nhwc: (N, H, W, C) float32."""
    N, H, W, C = x_nhwc.shape
    B = batch_block
    assert N % B == 0, "batch_block must divide N"

    eps = 1e-5
    # Fold BN (inference mode) into per-channel scale & bias; fold the scale
    # straight into the conv weights so only the bias add remains in-kernel.
    s1 = params["gamma1"] / jnp.sqrt(params["var1"] + eps)       # (C,)
    s2 = params["gamma2"] / jnp.sqrt(params["var2"] + eps)
    b1 = (params["beta1"] - params["mean1"] * s1).reshape(1, C)
    b2 = (params["beta2"] - params["mean2"] * s2).reshape(1, C)
    # HWIO (3,3,Cin,Cout) -> im2col (9*Cin, Cout), bf16 for the MXU.  Row block
    # t*C:(t+1)*C holds tap t = dy*3+dx, matching the in-kernel loop order.
    w1 = (params["w1"] * s1).reshape(9 * C, C).astype(jnp.bfloat16)
    w2 = (params["w2"] * s2).reshape(9 * C, C).astype(jnp.bfloat16)

    flops = 2 * 2 * N * H * W * (9 * C) * C                     # two convs
    bytes_accessed = (2 * N * H * W * C * 4                      # x in + out
                      + 2 * 9 * C * C * 2                        # bf16 weights
                      + 4 * C * 4)                               # biases

    kernel = functools.partial(_basic_block_kernel, B=B, H=H, W=W, C=C)
    return pl.pallas_call(
        kernel,
        out_shape=jax.ShapeDtypeStruct((N, H, W, C), jnp.float32),
        grid=(N // B,),
        in_specs=[
            pl.BlockSpec((B, H, W, C), lambda n: (n, 0, 0, 0)),
            pl.BlockSpec((9 * C, C), lambda n: (0, 0)),
            pl.BlockSpec((1, C), lambda n: (0, 0)),
            pl.BlockSpec((9 * C, C), lambda n: (0, 0)),
            pl.BlockSpec((1, C), lambda n: (0, 0)),
        ],
        out_specs=pl.BlockSpec((B, H, W, C), lambda n: (n, 0, 0, 0)),
        scratch_shapes=[pltpu.VMEM((B, H + 2, W + 2, C), jnp.bfloat16)],
        compiler_params=pltpu.CompilerParams(
            dimension_semantics=("parallel",)),
        cost_estimate=pl.CostEstimate(flops=flops, transcendentals=0,
                                      bytes_accessed=bytes_accessed),
    )(x_nhwc, w1, b1, w2, b2)


def basic_block_pallas(x_nchw, params, *, batch_block=1):
    """NCHW (PyTorch-layout) wrapper.  x_nchw: (N, C, H, W) float32.

    In a full network keep activations NHWC end-to-end and call
    basic_block_pallas_nhwc directly so this HBM relayout happens once per
    network, not once per block.
    """
    x = jnp.transpose(x_nchw, (0, 2, 3, 1))                      # NHWC
    out = basic_block_pallas_nhwc(x, params, batch_block=batch_block)
    return jnp.transpose(out, (0, 3, 1, 2))


def basic_block_reference(x_nchw, params):
    """Pure-JAX reference (lax conv, NHWC, f32) for correctness checking."""
    eps = 1e-5
    x = jnp.transpose(x_nchw, (0, 2, 3, 1))  # NHWC
    dn = lax.conv_dimension_numbers(x.shape, params["w1"].shape,
                                    ("NHWC", "HWIO", "NHWC"))

    def conv(z, w):
        return lax.conv_general_dilated(z, w, (1, 1), "SAME",
                                        dimension_numbers=dn)

    def bn(z, g, b, m, v):
        return (z - m) / jnp.sqrt(v + eps) * g + b

    h = jnp.maximum(
        bn(conv(x, params["w1"]), params["gamma1"], params["beta1"],
           params["mean1"], params["var1"]), 0.0)
    h = bn(conv(h, params["w2"]), params["gamma2"], params["beta2"],
           params["mean2"], params["var2"])
    out = jnp.maximum(h + x, 0.0)
    return jnp.transpose(out, (0, 3, 1, 2))


def init_params(key, inplanes, planes):
    ks = jax.random.split(key, 8)
    fan1 = 3 * 3 * inplanes
    fan2 = 3 * 3 * planes
    return {
        # HWIO conv weights
        "w1": jax.random.normal(ks[0], (3, 3, inplanes, planes),
                                jnp.float32) * (2.0 / fan1) ** 0.5,
        "w2": jax.random.normal(ks[1], (3, 3, planes, planes),
                                jnp.float32) * (2.0 / fan2) ** 0.5,
        # BatchNorm params + running stats (inference mode)
        "gamma1": 1.0 + 0.1 * jax.random.normal(ks[2], (planes,), jnp.float32),
        "beta1": 0.1 * jax.random.normal(ks[3], (planes,), jnp.float32),
        "mean1": 0.1 * jax.random.normal(ks[4], (planes,), jnp.float32),
        "var1": 1.0 + 0.1 * jax.random.uniform(ks[5], (planes,), jnp.float32),
        "gamma2": 1.0 + 0.1 * jax.random.normal(ks[6], (planes,), jnp.float32),
        "beta2": 0.1 * jax.random.normal(ks[7], (planes,), jnp.float32),
        "mean2": jnp.zeros((planes,), jnp.float32),
        "var2": jnp.ones((planes,), jnp.float32),
    }


if __name__ == "__main__":
    # batch=2, channels=128 (a real BasicBlock width; fills the 128-lane axis),
    # spatial=16x16.  inplanes == planes, stride=1, downsample=None.
    # batch_block=1 keeps two parallel grid steps (one per v7x TensorCore).
    N, C, H, W = 2, 128, 16, 16
    key = jax.random.PRNGKey(0)
    kx, kp = jax.random.split(key)
    x = jax.random.normal(kx, (N, C, H, W), jnp.float32)
    params = init_params(kp, C, C)

    out = basic_block_pallas(x, params, batch_block=1)
    out = jax.block_until_ready(out)

    ref = basic_block_reference(x, params)
    assert out.shape == (N, C, H, W)
    # bf16 matmul operands (f32 accumulation) -> slightly looser tolerance.
    assert jnp.allclose(out, ref, atol=3e-2, rtol=3e-2), (
        "mismatch vs reference: max abs err = "
        f"{float(jnp.max(jnp.abs(out - ref)))}")

    print("KERNEL_OK")
</pallas_src>

<mosaic_0001>
module attributes {stable_mosaic.version = 11 : i64} {
  func.func @_basic_block_kernel(%arg0: i32, %arg1: memref<1x16x16x128xf32, #tpu.memory_space<vmem>>, %arg2: memref<1152x128xbf16, #tpu.memory_space<vmem>>, %arg3: memref<1x128xf32, #tpu.memory_space<vmem>>, %arg4: memref<1152x128xbf16, #tpu.memory_space<vmem>>, %arg5: memref<1x128xf32, #tpu.memory_space<vmem>>, %arg6: memref<1x16x16x128xf32, #tpu.memory_space<vmem>>, %arg7: memref<1x18x18x128xbf16, #tpu.memory_space<vmem>>) attributes {dimension_semantics = [#tpu.dimension_semantics<parallel>], iteration_bounds = array<i64: 2>, scalar_prefetch = 0 : i64, scratch_operands = 1 : i64, tpu.core_type = #tpu.core_type<tc>, window_params = [{transform_indices = @transform_0, window_bounds = array<i64: 1, 16, 16, 128>}, {pipeline_mode = #tpu.pipeline_mode<synchronous>, transform_indices = @transform_1, window_bounds = array<i64: 1152, 128>}, {pipeline_mode = #tpu.pipeline_mode<synchronous>, transform_indices = @transform_2, window_bounds = array<i64: 1, 128>}, {pipeline_mode = #tpu.pipeline_mode<synchronous>, transform_indices = @transform_3, window_bounds = array<i64: 1152, 128>}, {pipeline_mode = #tpu.pipeline_mode<synchronous>, transform_indices = @transform_4, window_bounds = array<i64: 1, 128>}, {transform_indices = @transform_5, window_bounds = array<i64: 1, 16, 16, 128>}]} {
    %cst = arith.constant 0.000000e+00 : bf16
    %0 = vector.broadcast %cst : bf16 to vector<1x1x18x128xbf16>
    %c0 = arith.constant 0 : index
    %c0_0 = arith.constant 0 : index
    %c0_1 = arith.constant 0 : index
    %c0_2 = arith.constant 0 : index
    %1 = vector.load %arg7[%c0, %c0_0, %c0_1, %c0_2] : memref<1x18x18x128xbf16, #tpu.memory_space<vmem>>, vector<1x1x18x128xbf16>
    tpu.vector_store %arg7[%c0, %c0_0, %c0_1, %c0_2], %0 {strides = array<i32>} : memref<1x18x18x128xbf16, #tpu.memory_space<vmem>>, vector<1x1x18x128xbf16>,
    %cst_3 = arith.constant 0.000000e+00 : bf16
    %2 = vector.broadcast %cst_3 : bf16 to vector<1x1x18x128xbf16>
    %c0_4 = arith.constant 0 : index
    %c17 = arith.constant 17 : index
    %c0_5 = arith.constant 0 : index
    %c0_6 = arith.constant 0 : index
    %3 = vector.load %arg7[%c0_4, %c17, %c0_5, %c0_6] : memref<1x18x18x128xbf16, #tpu.memory_space<vmem>>, vector<1x1x18x128xbf16>
    tpu.vector_store %arg7[%c0_4, %c17, %c0_5, %c0_6], %2 {strides = array<i32>} : memref<1x18x18x128xbf16, #tpu.memory_space<vmem>>, vector<1x1x18x128xbf16>,
    %cst_7 = arith.constant 0.000000e+00 : bf16
    %4 = vector.broadcast %cst_7 : bf16 to vector<1x18x1x128xbf16>
    %c0_8 = arith.constant 0 : index
    %c0_9 = arith.constant 0 : index
    %c0_10 = arith.constant 0 : index
    %c0_11 = arith.constant 0 : index
    %5 = vector.load %arg7[%c0_8, %c0_9, %c0_10, %c0_11] : memref<1x18x18x128xbf16, #tpu.memory_space<vmem>>, vector<1x18x1x128xbf16>
    tpu.vector_store %arg7[%c0_8, %c0_9, %c0_10, %c0_11], %4 {strides = array<i32>} : memref<1x18x18x128xbf16, #tpu.memory_space<vmem>>, vector<1x18x1x128xbf16>,
    %cst_12 = arith.constant 0.000000e+00 : bf16
    %6 = vector.broadcast %cst_12 : bf16 to vector<1x18x1x128xbf16>
    %c0_13 = arith.constant 0 : index
    %c0_14 = arith.constant 0 : index
    %c17_15 = arith.constant 17 : index
    %c0_16 = arith.constant 0 : index
    %7 = vector.load %arg7[%c0_13, %c0_14, %c17_15, %c0_16] : memref<1x18x18x128xbf16, #tpu.memory_space<vmem>>, vector<1x18x1x128xbf16>
    tpu.vector_store %arg7[%c0_13, %c0_14, %c17_15, %c0_16], %6 {strides = array<i32>} : memref<1x18x18x128xbf16, #tpu.memory_space<vmem>>, vector<1x18x1x128xbf16>,
    %c0_17 = arith.constant 0 : index
    %c0_18 = arith.constant 0 : index
    %c0_19 = arith.constant 0 : index
    %c0_20 = arith.constant 0 : index
    %8 = vector.load %arg1[%c0_17, %c0_18, %c0_19, %c0_20] : memref<1x16x16x128xf32, #tpu.memory_space<vmem>>, vector<1x16x16x128xf32>
    %9 = arith.truncf %8 : vector<1x16x16x128xf32> to vector<1x16x16x128xbf16>
    %c0_21 = arith.constant 0 : index
    %c1 = arith.constant 1 : index
    %c1_22 = arith.constant 1 : index
    %c0_23 = arith.constant 0 : index
    %10 = vector.load %arg7[%c0_21, %c1, %c1_22, %c0_23] : memref<1x18x18x128xbf16, #tpu.memory_space<vmem>>, vector<1x16x16x128xbf16>
    tpu.vector_store %arg7[%c0_21, %c1, %c1_22, %c0_23], %9 {strides = array<i32>} : memref<1x18x18x128xbf16, #tpu.memory_space<vmem>>, vector<1x16x16x128xbf16>,
    %c0_24 = arith.constant 0 : index
    %c0_25 = arith.constant 0 : index
    %c0_26 = arith.constant 0 : index
    %c0_27 = arith.constant 0 : index
    %11 = vector.load %arg7[%c0_24, %c0_25, %c0_26, %c0_27] : memref<1x18x18x128xbf16, #tpu.memory_space<vmem>>, vector<1x16x16x128xbf16>
    %12 = vector.shape_cast %11 : vector<1x16x16x128xbf16> to vector<256x128xbf16>
    %c0_28 = arith.constant 0 : index
    %c0_29 = arith.constant 0 : index
    %13 = vector.load %arg2[%c0_28, %c0_29] : memref<1152x128xbf16, #tpu.memory_space<vmem>>, vector<128x128xbf16>
    %cst_30 = arith.constant dense<0.000000e+00> : vector<256x128xf32>
    %14 = tpu.matmul %12, %13, %cst_30 {dimension_numbers = #tpu.dot_dimension_numbers<[1], [0], [0], [1], [0, 0, 1, 1], [], []>} : vector<256x128xbf16>, vector<128x128xbf16>, vector<256x128xf32> -> vector<256x128xf32>
    %c0_31 = arith.constant 0 : index
    %c0_32 = arith.constant 0 : index
    %c1_33 = arith.constant 1 : index
    %c0_34 = arith.constant 0 : index
    %15 = vector.load %arg7[%c0_31, %c0_32, %c1_33, %c0_34] : memref<1x18x18x128xbf16, #tpu.memory_space<vmem>>, vector<1x16x16x128xbf16>
    %16 = vector.shape_cast %15 : vector<1x16x16x128xbf16> to vector<256x128xbf16>
    %c128 = arith.constant 128 : index
    %c0_35 = arith.constant 0 : index
    %17 = vector.load %arg2[%c128, %c0_35] : memref<1152x128xbf16, #tpu.memory_space<vmem>>, vector<128x128xbf16>
    %cst_36 = arith.constant dense<0.000000e+00> : vector<256x128xf32>
    %18 = tpu.matmul %16, %17, %cst_36 {dimension_numbers = #tpu.dot_dimension_numbers<[1], [0], [0], [1], [0, 0, 1, 1], [], []>} : vector<256x128xbf16>, vector<128x128xbf16>, vector<256x128xf32> -> vector<256x128xf32>
    %19 = arith.addf %14, %18 : vector<256x128xf32>
    %c0_37 = arith.constant 0 : index
    %c0_38 = arith.constant 0 : index
    %c2 = arith.constant 2 : index
    %c0_39 = arith.constant 0 : index
    %20 = vector.load %arg7[%c0_37, %c0_38, %c2, %c0_39] : memref<1x18x18x128xbf16, #tpu.memory_space<vmem>>, vector<1x16x16x128xbf16>
    %21 = vector.shape_cast %20 : vector<1x16x16x128xbf16> to vector<256x128xbf16>
    %c256 = arith.constant 256 : index
    %c0_40 = arith.constant 0 : index
    %22 = vector.load %arg2[%c256, %c0_40] : memref<1152x128xbf16, #tpu.memory_space<vmem>>, vector<128x128xbf16>
    %cst_41 = arith.constant dense<0.000000e+00> : vector<256x128xf32>
    %23 = tpu.matmul %21, %22, %cst_41 {dimension_numbers = #tpu.dot_dimension_numbers<[1], [0], [0], [1], [0, 0, 1, 1], [], []>} : vector<256x128xbf16>, vector<128x128xbf16>, vector<256x128xf32> -> vector<256x128xf32>
    %24 = arith.addf %19, %23 : vector<256x128xf32>
    %c0_42 = arith.constant 0 : index
    %c1_43 = arith.constant 1 : index
    %c0_44 = arith.constant 0 : index
    %c0_45 = arith.constant 0 : index
    %25 = vector.load %arg7[%c0_42, %c1_43, %c0_44, %c0_45] : memref<1x18x18x128xbf16, #tpu.memory_space<vmem>>, vector<1x16x16x128xbf16>
    %26 = vector.shape_cast %25 : vector<1x16x16x128xbf16> to vector<256x128xbf16>
    %c384 = arith.constant 384 : index
    %c0_46 = arith.constant 0 : index
    %27 = vector.load %arg2[%c384, %c0_46] : memref<1152x128xbf16, #tpu.memory_space<vmem>>, vector<128x128xbf16>
    %cst_47 = arith.constant dense<0.000000e+00> : vector<256x128xf32>
    %28 = tpu.matmul %26, %27, %cst_47 {dimension_numbers = #tpu.dot_dimension_numbers<[1], [0], [0], [1], [0, 0, 1, 1], [], []>} : vector<256x128xbf16>, vector<128x128xbf16>, vector<256x128xf32> -> vector<256x128xf32>
    %29 = arith.addf %24, %28 : vector<256x128xf32>
    %c0_48 = arith.constant 0 : index
    %c1_49 = arith.constant 1 : index
    %c1_50 = arith.constant 1 : index
    %c0_51 = arith.constant 0 : index
    %30 = vector.load %arg7[%c0_48, %c1_49, %c1_50, %c0_51] : memref<1x18x18x128xbf16, #tpu.memory_space<vmem>>, vector<1x16x16x128xbf16>
    %31 = vector.shape_cast %30 : vector<1x16x16x128xbf16> to vector<256x128xbf16>
    %c512 = arith.constant 512 : index
    %c0_52 = arith.constant 0 : index
    %32 = vector.load %arg2[%c512, %c0_52] : memref<1152x128xbf16, #tpu.memory_space<vmem>>, vector<128x128xbf16>
    %cst_53 = arith.constant dense<0.000000e+00> : vector<256x128xf32>
    %33 = tpu.matmul %31, %32, %cst_53 {dimension_numbers = #tpu.dot_dimension_numbers<[1], [0], [0], [1], [0, 0, 1, 1], [], []>} : vector<256x128xbf16>, vector<128x128xbf16>, vector<256x128xf32> -> vector<256x128xf32>
    %34 = arith.addf %29, %33 : vector<256x128xf32>
    %c0_54 = arith.constant 0 : index
    %c1_55 = arith.constant 1 : index
    %c2_56 = arith.constant 2 : index
    %c0_57 = arith.constant 0 : index
    %35 = vector.load %arg7[%c0_54, %c1_55, %c2_56, %c0_57] : memref<1x18x18x128xbf16, #tpu.memory_space<vmem>>, vector<1x16x16x128xbf16>
    %36 = vector.shape_cast %35 : vector<1x16x16x128xbf16> to vector<256x128xbf16>
    %c640 = arith.constant 640 : index
    %c0_58 = arith.constant 0 : index
    %37 = vector.load %arg2[%c640, %c0_58] : memref<1152x128xbf16, #tpu.memory_space<vmem>>, vector<128x128xbf16>
    %cst_59 = arith.constant dense<0.000000e+00> : vector<256x128xf32>
    %38 = tpu.matmul %36, %37, %cst_59 {dimension_numbers = #tpu.dot_dimension_numbers<[1], [0], [0], [1], [0, 0, 1, 1], [], []>} : vector<256x128xbf16>, vector<128x128xbf16>, vector<256x128xf32> -> vector<256x128xf32>
    %39 = arith.addf %34, %38 : vector<256x128xf32>
    %c0_60 = arith.constant 0 : index
    %c2_61 = arith.constant 2 : index
    %c0_62 = arith.constant 0 : index
    %c0_63 = arith.constant 0 : index
    %40 = vector.load %arg7[%c0_60, %c2_61, %c0_62, %c0_63] : memref<1x18x18x128xbf16, #tpu.memory_space<vmem>>, vector<1x16x16x128xbf16>
    %41 = vector.shape_cast %40 : vector<1x16x16x128xbf16> to vector<256x128xbf16>
    %c768 = arith.constant 768 : index
    %c0_64 = arith.constant 0 : index
    %42 = vector.load %arg2[%c768, %c0_64] : memref<1152x128xbf16, #tpu.memory_space<vmem>>, vector<128x128xbf16>
    %cst_65 = arith.constant dense<0.000000e+00> : vector<256x128xf32>
    %43 = tpu.matmul %41, %42, %cst_65 {dimension_numbers = #tpu.dot_dimension_numbers<[1], [0], [0], [1], [0, 0, 1, 1], [], []>} : vector<256x128xbf16>, vector<128x128xbf16>, vector<256x128xf32> -> vector<256x128xf32>
    %44 = arith.addf %39, %43 : vector<256x128xf32>
    %c0_66 = arith.constant 0 : index
    %c2_67 = arith.constant 2 : index
    %c1_68 = arith.constant 1 : index
    %c0_69 = arith.constant 0 : index
    %45 = vector.load %arg7[%c0_66, %c2_67, %c1_68, %c0_69] : memref<1x18x18x128xbf16, #tpu.memory_space<vmem>>, vector<1x16x16x128xbf16>
    %46 = vector.shape_cast %45 : vector<1x16x16x128xbf16> to vector<256x128xbf16>
    %c896 = arith.constant 896 : index
    %c0_70 = arith.constant 0 : index
    %47 = vector.load %arg2[%c896, %c0_70] : memref<1152x128xbf16, #tpu.memory_space<vmem>>, vector<128x128xbf16>
    %cst_71 = arith.constant dense<0.000000e+00> : vector<256x128xf32>
    %48 = tpu.matmul %46, %47, %cst_71 {dimension_numbers = #tpu.dot_dimension_numbers<[1], [0], [0], [1], [0, 0, 1, 1], [], []>} : vector<256x128xbf16>, vector<128x128xbf16>, vector<256x128xf32> -> vector<256x128xf32>
    %49 = arith.addf %44, %48 : vector<256x128xf32>
    %c0_72 = arith.constant 0 : index
    %c2_73 = arith.constant 2 : index
    %c2_74 = arith.constant 2 : index
    %c0_75 = arith.constant 0 : index
    %50 = vector.load %arg7[%c0_72, %c2_73, %c2_74, %c0_75] : memref<1x18x18x128xbf16, #tpu.memory_space<vmem>>, vector<1x16x16x128xbf16>
    %51 = vector.shape_cast %50 : vector<1x16x16x128xbf16> to vector<256x128xbf16>
    %c1024 = arith.constant 1024 : index
    %c0_76 = arith.constant 0 : index
    %52 = vector.load %arg2[%c1024, %c0_76] : memref<1152x128xbf16, #tpu.memory_space<vmem>>, vector<128x128xbf16>
    %cst_77 = arith.constant dense<0.000000e+00> : vector<256x128xf32>
    %53 = tpu.matmul %51, %52, %cst_77 {dimension_numbers = #tpu.dot_dimension_numbers<[1], [0], [0], [1], [0, 0, 1, 1], [], []>} : vector<256x128xbf16>, vector<128x128xbf16>, vector<256x128xf32> -> vector<256x128xf32>
    %54 = arith.addf %49, %53 : vector<256x128xf32>
    %c0_78 = arith.constant 0 : index
    %c0_79 = arith.constant 0 : index
    %55 = vector.load %arg3[%c0_78, %c0_79] : memref<1x128xf32, #tpu.memory_space<vmem>>, vector<1x128xf32>
    %56 = vector.broadcast %55 : vector<1x128xf32> to vector<256x128xf32>
    %57 = arith.addf %54, %56 : vector<256x128xf32>
    %cst_80 = arith.constant 0.000000e+00 : f32
    %58 = vector.broadcast %cst_80 : f32 to vector<256x128xf32>
    %59 = arith.maximumf %57, %58 : vector<256x128xf32>
    %60 = vector.shape_cast %59 : vector<256x128xf32> to vector<1x16x16x128xf32>
    %61 = arith.truncf %60 : vector<1x16x16x128xf32> to vector<1x16x16x128xbf16>
    %c0_81 = arith.constant 0 : index
    %c1_82 = arith.constant 1 : index
    %c1_83 = arith.constant 1 : index
    %c0_84 = arith.constant 0 : index
    %62 = vector.load %arg7[%c0_81, %c1_82, %c1_83, %c0_84] : memref<1x18x18x128xbf16, #tpu.memory_space<vmem>>, vector<1x16x16x128xbf16>
    tpu.vector_store %arg7[%c0_81, %c1_82, %c1_83, %c0_84], %61 {strides = array<i32>} : memref<1x18x18x128xbf16, #tpu.memory_space<vmem>>, vector<1x16x16x128xbf16>,
    %c0_85 = arith.constant 0 : index
    %c0_86 = arith.constant 0 : index
    %c0_87 = arith.constant 0 : index
    %c0_88 = arith.constant 0 : index
    %63 = vector.load %arg7[%c0_85, %c0_86, %c0_87, %c0_88] : memref<1x18x18x128xbf16, #tpu.memory_space<vmem>>, vector<1x16x16x128xbf16>
    %64 = vector.shape_cast %63 : vector<1x16x16x128xbf16> to vector<256x128xbf16>
    %c0_89 = arith.constant 0 : index
    %c0_90 = arith.constant 0 : index
    %65 = vector.load %arg4[%c0_89, %c0_90] : memref<1152x128xbf16, #tpu.memory_space<vmem>>, vector<128x128xbf16>
    %cst_91 = arith.constant dense<0.000000e+00> : vector<256x128xf32>
    %66 = tpu.matmul %64, %65, %cst_91 {dimension_numbers = #tpu.dot_dimension_numbers<[1], [0], [0], [1], [0, 0, 1, 1], [], []>} : vector<256x128xbf16>, vector<128x128xbf16>, vector<256x128xf32> -> vector<256x128xf32>
    %c0_92 = arith.constant 0 : index
    %c0_93 = arith.constant 0 : index
    %c1_94 = arith.constant 1 : index
    %c0_95 = arith.constant 0 : index
    %67 = vector.load %arg7[%c0_92, %c0_93, %c1_94, %c0_95] : memref<1x18x18x128xbf16, #tpu.memory_space<vmem>>, vector<1x16x16x128xbf16>
    %68 = vector.shape_cast %67 : vector<1x16x16x128xbf16> to vector<256x128xbf16>
    %c128_96 = arith.constant 128 : index
    %c0_97 = arith.constant 0 : index
    %69 = vector.load %arg4[%c128_96, %c0_97] : memref<1152x128xbf16, #tpu.memory_space<vmem>>, vector<128x128xbf16>
    %cst_98 = arith.constant dense<0.000000e+00> : vector<256x128xf32>
    %70 = tpu.matmul %68, %69, %cst_98 {dimension_numbers = #tpu.dot_dimension_numbers<[1], [0], [0], [1], [0, 0, 1, 1], [], []>} : vector<256x128xbf16>, vector<128x128xbf16>, vector<256x128xf32> -> vector<256x128xf32>
    %71 = arith.addf %66, %70 : vector<256x128xf32>
    %c0_99 = arith.constant 0 : index
    %c0_100 = arith.constant 0 : index
    %c2_101 = arith.constant 2 : index
    %c0_102 = arith.constant 0 : index
    %72 = vector.load %arg7[%c0_99, %c0_100, %c2_101, %c0_102] : memref<1x18x18x128xbf16, #tpu.memory_space<vmem>>, vector<1x16x16x128xbf16>
    %73 = vector.shape_cast %72 : vector<1x16x16x128xbf16> to vector<256x128xbf16>
    %c256_103 = arith.constant 256 : index
    %c0_104 = arith.constant 0 : index
    %74 = vector.load %arg4[%c256_103, %c0_104] : memref<1152x128xbf16, #tpu.memory_space<vmem>>, vector<128x128xbf16>
    %cst_105 = arith.constant dense<0.000000e+00> : vector<256x128xf32>
    %75 = tpu.matmul %73, %74, %cst_105 {dimension_numbers = #tpu.dot_dimension_numbers<[1], [0], [0], [1], [0, 0, 1, 1], [], []>} : vector<256x128xbf16>, vector<128x128xbf16>, vector<256x128xf32> -> vector<256x128xf32>
    %76 = arith.addf %71, %75 : vector<256x128xf32>
    %c0_106 = arith.constant 0 : index
    %c1_107 = arith.constant 1 : index
    %c0_108 = arith.constant 0 : index
    %c0_109 = arith.constant 0 : index
    %77 = vector.load %arg7[%c0_106, %c1_107, %c0_108, %c0_109] : memref<1x18x18x128xbf16, #tpu.memory_space<vmem>>, vector<1x16x16x128xbf16>
    %78 = vector.shape_cast %77 : vector<1x16x16x128xbf16> to vector<256x128xbf16>
    %c384_110 = arith.constant 384 : index
    %c0_111 = arith.constant 0 : index
    %79 = vector.load %arg4[%c384_110, %c0_111] : memref<1152x128xbf16, #tpu.memory_space<vmem>>, vector<128x128xbf16>
    %cst_112 = arith.constant dense<0.000000e+00> : vector<256x128xf32>
    %80 = tpu.matmul %78, %79, %cst_112 {dimension_numbers = #tpu.dot_dimension_numbers<[1], [0], [0], [1], [0, 0, 1, 1], [], []>} : vector<256x128xbf16>, vector<128x128xbf16>, vector<256x128xf32> -> vector<256x128xf32>
    %81 = arith.addf %76, %80 : vector<256x128xf32>
    %c0_113 = arith.constant 0 : index
    %c1_114 = arith.constant 1 : index
    %c1_115 = arith.constant 1 : index
    %c0_116 = arith.constant 0 : index
    %82 = vector.load %arg7[%c0_113, %c1_114, %c1_115, %c0_116] : memref<1x18x18x128xbf16, #tpu.memory_space<vmem>>, vector<1x16x16x128xbf16>
    %83 = vector.shape_cast %82 : vector<1x16x16x128xbf16> to vector<256x128xbf16>
    %c512_117 = arith.constant 512 : index
    %c0_118 = arith.constant 0 : index
    %84 = vector.load %arg4[%c512_117, %c0_118] : memref<1152x128xbf16, #tpu.memory_space<vmem>>, vector<128x128xbf16>
    %cst_119 = arith.constant dense<0.000000e+00> : vector<256x128xf32>
    %85 = tpu.matmul %83, %84, %cst_119 {dimension_numbers = #tpu.dot_dimension_numbers<[1], [0], [0], [1], [0, 0, 1, 1], [], []>} : vector<256x128xbf16>, vector<128x128xbf16>, vector<256x128xf32> -> vector<256x128xf32>
    %86 = arith.addf %81, %85 : vector<256x128xf32>
    %c0_120 = arith.constant 0 : index
    %c1_121 = arith.constant 1 : index
    %c2_122 = arith.constant 2 : index
    %c0_123 = arith.constant 0 : index
    %87 = vector.load %arg7[%c0_120, %c1_121, %c2_122, %c0_123] : memref<1x18x18x128xbf16, #tpu.memory_space<vmem>>, vector<1x16x16x128xbf16>
    %88 = vector.shape_cast %87 : vector<1x16x16x128xbf16> to vector<256x128xbf16>
    %c640_124 = arith.constant 640 : index
    %c0_125 = arith.constant 0 : index
    %89 = vector.load %arg4[%c640_124, %c0_125] : memref<1152x128xbf16, #tpu.memory_space<vmem>>, vector<128x128xbf16>
    %cst_126 = arith.constant dense<0.000000e+00> : vector<256x128xf32>
    %90 = tpu.matmul %88, %89, %cst_126 {dimension_numbers = #tpu.dot_dimension_numbers<[1], [0], [0], [1], [0, 0, 1, 1], [], []>} : vector<256x128xbf16>, vector<128x128xbf16>, vector<256x128xf32> -> vector<256x128xf32>
    %91 = arith.addf %86, %90 : vector<256x128xf32>
    %c0_127 = arith.constant 0 : index
    %c2_128 = arith.constant 2 : index
    %c0_129 = arith.constant 0 : index
    %c0_130 = arith.constant 0 : index
    %92 = vector.load %arg7[%c0_127, %c2_128, %c0_129, %c0_130] : memref<1x18x18x128xbf16, #tpu.memory_space<vmem>>, vector<1x16x16x128xbf16>
    %93 = vector.shape_cast %92 : vector<1x16x16x128xbf16> to vector<256x128xbf16>
    %c768_131 = arith.constant 768 : index
    %c0_132 = arith.constant 0 : index
    %94 = vector.load %arg4[%c768_131, %c0_132] : memref<1152x128xbf16, #tpu.memory_space<vmem>>, vector<128x128xbf16>
    %cst_133 = arith.constant dense<0.000000e+00> : vector<256x128xf32>
    %95 = tpu.matmul %93, %94, %cst_133 {dimension_numbers = #tpu.dot_dimension_numbers<[1], [0], [0], [1], [0, 0, 1, 1], [], []>} : vector<256x128xbf16>, vector<128x128xbf16>, vector<256x128xf32> -> vector<256x128xf32>
    %96 = arith.addf %91, %95 : vector<256x128xf32>
    %c0_134 = arith.constant 0 : index
    %c2_135 = arith.constant 2 : index
    %c1_136 = arith.constant 1 : index
    %c0_137 = arith.constant 0 : index
    %97 = vector.load %arg7[%c0_134, %c2_135, %c1_136, %c0_137] : memref<1x18x18x128xbf16, #tpu.memory_space<vmem>>, vector<1x16x16x128xbf16>
    %98 = vector.shape_cast %97 : vector<1x16x16x128xbf16> to vector<256x128xbf16>
    %c896_138 = arith.constant 896 : index
    %c0_139 = arith.constant 0 : index
    %99 = vector.load %arg4[%c896_138, %c0_139] : memref<1152x128xbf16, #tpu.memory_space<vmem>>, vector<128x128xbf16>
    %cst_140 = arith.constant dense<0.000000e+00> : vector<256x128xf32>
    %100 = tpu.matmul %98, %99, %cst_140 {dimension_numbers = #tpu.dot_dimension_numbers<[1], [0], [0], [1], [0, 0, 1, 1], [], []>} : vector<256x128xbf16>, vector<128x128xbf16>, vector<256x128xf32> -> vector<256x128xf32>
    %101 = arith.addf %96, %100 : vector<256x128xf32>
    %c0_141 = arith.constant 0 : index
    %c2_142 = arith.constant 2 : index
    %c2_143 = arith.constant 2 : index
    %c0_144 = arith.constant 0 : index
    %102 = vector.load %arg7[%c0_141, %c2_142, %c2_143, %c0_144] : memref<1x18x18x128xbf16, #tpu.memory_space<vmem>>, vector<1x16x16x128xbf16>
    %103 = vector.shape_cast %102 : vector<1x16x16x128xbf16> to vector<256x128xbf16>
    %c1024_145 = arith.constant 1024 : index
    %c0_146 = arith.constant 0 : index
    %104 = vector.load %arg4[%c1024_145, %c0_146] : memref<1152x128xbf16, #tpu.memory_space<vmem>>, vector<128x128xbf16>
    %cst_147 = arith.constant dense<0.000000e+00> : vector<256x128xf32>
    %105 = tpu.matmul %103, %104, %cst_147 {dimension_numbers = #tpu.dot_dimension_numbers<[1], [0], [0], [1], [0, 0, 1, 1], [], []>} : vector<256x128xbf16>, vector<128x128xbf16>, vector<256x128xf32> -> vector<256x128xf32>
    %106 = arith.addf %101, %105 : vector<256x128xf32>
    %c0_148 = arith.constant 0 : index
    %c0_149 = arith.constant 0 : index
    %107 = vector.load %arg5[%c0_148, %c0_149] : memref<1x128xf32, #tpu.memory_space<vmem>>, vector<1x128xf32>
    %108 = vector.broadcast %107 : vector<1x128xf32> to vector<256x128xf32>
    %109 = arith.addf %106, %108 : vector<256x128xf32>
    %110 = vector.shape_cast %109 : vector<256x128xf32> to vector<1x16x16x128xf32>
    %c0_150 = arith.constant 0 : index
    %c0_151 = arith.constant 0 : index
    %c0_152 = arith.constant 0 : index
    %c0_153 = arith.constant 0 : index
    %111 = vector.load %arg1[%c0_150, %c0_151, %c0_152, %c0_153] : memref<1x16x16x128xf32, #tpu.memory_space<vmem>>, vector<1x16x16x128xf32>
    %112 = arith.addf %110, %111 : vector<1x16x16x128xf32>
    %cst_154 = arith.constant 0.000000e+00 : f32
    %113 = vector.broadcast %cst_154 : f32 to vector<1x16x16x128xf32>
    %114 = arith.maximumf %112, %113 : vector<1x16x16x128xf32>
    %c0_155 = arith.constant 0 : index
    %c0_156 = arith.constant 0 : index
    %c0_157 = arith.constant 0 : index
    %c0_158 = arith.constant 0 : index
    %115 = vector.load %arg6[%c0_155, %c0_156, %c0_157, %c0_158] : memref<1x16x16x128xf32, #tpu.memory_space<vmem>>, vector<1x16x16x128xf32>
    tpu.vector_store %arg6[%c0_155, %c0_156, %c0_157, %c0_158], %114 {strides = array<i32>} : memref<1x16x16x128xf32, #tpu.memory_space<vmem>>, vector<1x16x16x128xf32>,
    return
  }
  func.func @transform_0(%arg0: i32) -> (i32, i32, i32, i32) {
    %c0_i32 = arith.constant 0 : i32
    %c0_i32_0 = arith.constant 0 : i32
    %c0_i32_1 = arith.constant 0 : i32
    %c0_i32_2 = arith.constant 0 : i32
    return %arg0, %c0_i32, %c0_i32_0, %c0_i32_1 : i32, i32, i32, i32
  }
  func.func @transform_1(%arg0: i32) -> (i32, i32) {
    %c0_i32 = arith.constant 0 : i32
    %c0_i32_0 = arith.constant 0 : i32
    %c0_i32_1 = arith.constant 0 : i32
    return %c0_i32, %c0_i32_0 : i32, i32
  }
  func.func @transform_2(%arg0: i32) -> (i32, i32) {
    %c0_i32 = arith.constant 0 : i32
    %c0_i32_0 = arith.constant 0 : i32
    %c0_i32_1 = arith.constant 0 : i32
    return %c0_i32, %c0_i32_0 : i32, i32
  }
  func.func @transform_3(%arg0: i32) -> (i32, i32) {
    %c0_i32 = arith.constant 0 : i32
    %c0_i32_0 = arith.constant 0 : i32
    %c0_i32_1 = arith.constant 0 : i32
    return %c0_i32, %c0_i32_0 : i32, i32
  }
  func.func @transform_4(%arg0: i32) -> (i32, i32) {
    %c0_i32 = arith.constant 0 : i32
    %c0_i32_0 = arith.constant 0 : i32
    %c0_i32_1 = arith.constant 0 : i32
    return %c0_i32, %c0_i32_0 : i32, i32
  }
  func.func @transform_5(%arg0: i32) -> (i32, i32, i32, i32) {
    %c0_i32 = arith.constant 0 : i32
    %c0_i32_0 = arith.constant 0 : i32
    %c0_i32_1 = arith.constant 0 : i32
    %c0_i32_2 = arith.constant 0 : i32
    return %arg0, %c0_i32, %c0_i32_0, %c0_i32_1 : i32, i32, i32, i32
  }
}

</mosaic_0001>

<llo_original>
// kernel: tpu_custom_call.1
$region0: #{tpu_custom_call.1}
  #allocation0 [shape = 'u32[]', space=smem, size = 0x4, offset = 0x4, fixed_abs, tag = 'smem constant byte address 0x4 - core index']
  #allocation1 [shape = 'u32[144,128]{1,0:T(1,128)}', space=vmem, size = 0x12000, scoped, tag = 'internal scratch']
  #allocation2 [shape = 'bf16[1,18,18,128]{3,2,1,0:T(8,128)(2,1)}', space=vmem, size = 0x1b000, scoped, tag = 'scratch operand']
  %s0 = inlined_call_operand.hbm [shape: f32[2,16,16,128], index: 0, kind: input, shape index: {}]
  %s1 = inlined_call_operand.hbm [shape: bf16[1152,128], index: 1, kind: input, shape index: {}]
  %s2 = inlined_call_operand.vmem [shape: f32[1,128], index: 2, kind: input, shape index: {}]
  %s3 = inlined_call_operand.hbm [shape: bf16[1152,128], index: 3, kind: input, shape index: {}]
  %s4 = inlined_call_operand.vmem [shape: f32[1,128], index: 4, kind: input, shape index: {}]
  %s5 = inlined_call_operand.hbm [shape: f32[2,16,16,128], index: 5, kind: output, shape index: {}]
  %s6 = sld [smem:[#allocation0]]
  $region65: #{tpu_custom_call.1} parent=0
    _
  %s8 = ssub.s32 1, %s6
  %s9 = scalar_select 0, %s8, %s6
  $region1: #{tpu_custom_call.1} parent=0
    #allocation3 [shape = 'u8[262144]{0}', space=vmem, size = 0x40000, scoped, tag = 'input window, operand 0']
    #allocation4 [shape = 's32[2]{0}', space=sflag, size = 0x8, scoped, tag = 'scoped memory for tpu_custom_call.1']
    #allocation5 [shape = 's32[2]{0}', space=sflag, size = 0x8, scoped, tag = 'scoped memory for tpu_custom_call.1']
    #allocation6 [shape = 'u8[294912]{0}', space=vmem, size = 0x48000, scoped, tag = 'input window, operand 1, single buffered']
    #allocation7 [shape = 's32[1]{0}', space=sflag, size = 0x4, scoped, tag = 'scoped memory for tpu_custom_call.1']
    #allocation8 [shape = 'u8[294912]{0}', space=vmem, size = 0x48000, scoped, tag = 'input window, operand 3, single buffered']
    #allocation9 [shape = 'u8[262144]{0}', space=vmem, size = 0x40000, scoped, tag = 'output window, operand 0']
    %10 = vsyncpa [#allocation4], 0
    %s11 = scalar_lea.sflag [#allocation4], 1
    %12 = vsyncpa %s11, 0
    %13 = vsyncpa [#allocation7], 0
    %14 = vsyncpa [#allocation5], 0
    %s15 = scalar_lea.sflag [#allocation5], 1
    %16 = vsyncpa %s15, 0
    loop: start=0, step=1, limit=4
    $region2: #{tpu_custom_call.1} parent=1 // loop_pre_header
      _
    $region3: #{tpu_custom_call.1} parent=1 // loop_header
      %s18 = sphi 0, %s22
      %p19 = scmp.ge.s32.totalorder %s18, 4
      %s28 = sphi 0, %s30
      %s31 = sphi 0, %s28
      %s32 = sphi 0, %s31
      %s48 = sphi 0, %s32
      %s52 = sphi 0, %s52
      %s54 = sphi 0, %s52
      %s55 = sphi 0, %s54
      %s69 = sphi 0, %s55
      %s73 = sphi 0, %s73
      %s75 = sphi 0, %s73
      %s76 = sphi 0, %s75
      %s90 = sphi 0, %s76
      %s94 = sphi 0, %s94
      %s96 = sphi 0, %s94
      %s97 = sphi 0, %s96
      %s111 = sphi 0, %s97
      %s115 = sphi 0, %s115
      %s117 = sphi 0, %s115
      %s118 = sphi 0, %s117
      %s132 = sphi 0, %s118
      %s138 = sphi 0, %s140
      %s141 = sphi 0, %s138
      %s142 = sphi 0, %s141
      %s158 = sphi 0, %s142
    $region4: #{tpu_custom_call.1} parent=1 // loop_header_branch
      %21 = sbr.rel (%p19) target = $region8
    $region5: #{tpu_custom_call.1} parent=1 // loop_body
      %s23 = ssub.s32 %s18, 1
      %s24 = ssub.s32 %s18, 2
      %s25 = sadd.s32 %s18, 1
      %s26 = ssub.s32 %s18, %s25
      %p27 = scmp.eq.s32.totalorder %s26, 0
      %s29 = sadd.s32 %s28, 1
      %s30 = scalar_select %p27, %s28, %s29
      %p33 = pneg %p27
      %p34 = scmp.eq.s32.totalorder %s18, 1
      %p35 = por %p33, %p34
      %p36 = scmp.ne.s32.totalorder %s28, %s31
      %p37 = scmp.eq.s32.totalorder %s18, 0
      %p38 = por %p36, %p37
      %p39 = scmp.ne.s32.totalorder %s28, %s31
      %p40 = scmp.eq.s32.totalorder %s23, 1
      %p41 = por %p39, %p40
      %p42 = scmp.ne.s32.totalorder %s31, %s32
      %p43 = scmp.eq.s32.totalorder %s23, 0
      %p44 = por %p42, %p43
      %p45 = scmp.ne.s32.totalorder %s31, %s32
      %p46 = scmp.eq.s32.totalorder %s24, 1
      %p47 = por %p45, %p46
      %p49 = scmp.ne.s32.totalorder %s32, %s48
      %p50 = scmp.eq.s32.totalorder %s24, 0
      %p51 = por %p49, %p50
      %s53 = sadd.s32 %s52, 1
      %p56 = scmp.eq.s32.totalorder %s18, 1
      %p57 = scmp.ne.s32.totalorder %s52, %s54
      %p58 = scmp.eq.s32.totalorder %s18, 0
      %p59 = por %p57, %p58
      %p60 = scmp.ne.s32.totalorder %s52, %s54
      %p61 = scmp.eq.s32.totalorder %s23, 1
      %p62 = por %p60, %p61
      %p63 = scmp.ne.s32.totalorder %s54, %s55
      %p64 = scmp.eq.s32.totalorder %s23, 0
      %p65 = por %p63, %p64
      %p66 = scmp.ne.s32.totalorder %s54, %s55
      %p67 = scmp.eq.s32.totalorder %s24, 1
      %p68 = por %p66, %p67
      %p70 = scmp.ne.s32.totalorder %s55, %s69
      %p71 = scmp.eq.s32.totalorder %s24, 0
      %p72 = por %p70, %p71
      %s74 = sadd.s32 %s73, 1
      %p77 = scmp.eq.s32.totalorder %s18, 1
      %p78 = scmp.ne.s32.totalorder %s73, %s75
      %p79 = scmp.eq.s32.totalorder %s18, 0
      %p80 = por %p78, %p79
      %p81 = scmp.ne.s32.totalorder %s73, %s75
      %p82 = scmp.eq.s32.totalorder %s23, 1
      %p83 = por %p81, %p82
      %p84 = scmp.ne.s32.totalorder %s75, %s76
      %p85 = scmp.eq.s32.totalorder %s23, 0
      %p86 = por %p84, %p85
      %p87 = scmp.ne.s32.totalorder %s75, %s76
      %p88 = scmp.eq.s32.totalorder %s24, 1
      %p89 = por %p87, %p88
      %p91 = scmp.ne.s32.totalorder %s76, %s90
      %p92 = scmp.eq.s32.totalorder %s24, 0
      %p93 = por %p91, %p92
      %s95 = sadd.s32 %s94, 1
      %p98 = scmp.eq.s32.totalorder %s18, 1
      %p99 = scmp.ne.s32.totalorder %s94, %s96
      %p100 = scmp.eq.s32.totalorder %s18, 0
      %p101 = por %p99, %p100
      %p102 = scmp.ne.s32.totalorder %s94, %s96
      %p103 = scmp.eq.s32.totalorder %s23, 1
      %p104 = por %p102, %p103
      %p105 = scmp.ne.s32.totalorder %s96, %s97
      %p106 = scmp.eq.s32.totalorder %s23, 0
      %p107 = por %p105, %p106
      %p108 = scmp.ne.s32.totalorder %s96, %s97
      %p109 = scmp.eq.s32.totalorder %s24, 1
      %p110 = por %p108, %p109
      %p112 = scmp.ne.s32.totalorder %s97, %s111
      %p113 = scmp.eq.s32.totalorder %s24, 0
      %p114 = por %p112, %p113
      %s116 = sadd.s32 %s115, 1
      %p119 = scmp.eq.s32.totalorder %s18, 1
      %p120 = scmp.ne.s32.totalorder %s115, %s117
      %p121 = scmp.eq.s32.totalorder %s18, 0
      %p122 = por %p120, %p121
      %p123 = scmp.ne.s32.totalorder %s115, %s117
      %p124 = scmp.eq.s32.totalorder %s23, 1
      %p125 = por %p123, %p124
      %p126 = scmp.ne.s32.totalorder %s117, %s118
      %p127 = scmp.eq.s32.totalorder %s23, 0
      %p128 = por %p126, %p127
      %p129 = scmp.ne.s32.totalorder %s117, %s118
      %p130 = scmp.eq.s32.totalorder %s24, 1
      %p131 = por %p129, %p130
      %p133 = scmp.ne.s32.totalorder %s118, %s132
      %p134 = scmp.eq.s32.totalorder %s24, 0
      %p135 = por %p133, %p134
      %s136 = ssub.s32 %s18, %s25
      %p137 = scmp.eq.s32.totalorder %s136, 0
      %s139 = sadd.s32 %s138, 1
      %s140 = scalar_select %p137, %s138, %s139
      %p143 = pneg %p137
      %p144 = scmp.eq.s32.totalorder %s18, 1
      %p145 = por %p143, %p144
      %p146 = scmp.ne.s32.totalorder %s138, %s141
      %p147 = scmp.eq.s32.totalorder %s18, 0
      %p148 = por %p146, %p147
      %p149 = scmp.ne.s32.totalorder %s138, %s141
      %p150 = scmp.eq.s32.totalorder %s23, 1
      %p151 = por %p149, %p150
      %p152 = scmp.ne.s32.totalorder %s141, %s142
      %p153 = scmp.eq.s32.totalorder %s23, 0
      %p154 = por %p152, %p153
      %p155 = scmp.ne.s32.totalorder %s141, %s142
      %p156 = scmp.eq.s32.totalorder %s24, 1
      %p157 = por %p155, %p156
      %p159 = scmp.ne.s32.totalorder %s142, %s158
      %p160 = scmp.eq.s32.totalorder %s24, 0
      %p161 = por %p159, %p160
      %p162 = scmp.le.s32.totalorder 1, %s18
      %p163 = scmp.lt.s32.totalorder %s18, 3
      %p164 = pnand %p162, %p163
      %p165 = pneg %p164
      // Predicated region
      $region9: #{tpu_custom_call.1} parent=5 // pred_check
        _
      $region10: #{tpu_custom_call.1} parent=5 // pred_check_branch
        %167 = sbr.rel (%p164) target = $region12
      $region11: #{tpu_custom_call.1} parent=5 // pred_region
        %s168 = ssub.s32 %s18, 1
        // Predicated region
        $region13: #{tpu_custom_call.1} parent=11 // pred_check
          %p169 = pneg %p65
        $region14: #{tpu_custom_call.1} parent=11 // pred_check_branch
          %171 = sbr.rel (%p169) target = $region16
        $region15: #{tpu_custom_call.1} parent=11 // pred_region
          %s173 = ssub.s32 9216, 9216
          %174 = vsyncadd [#allocation7], %s173
          %s175 = sshll.u32 [#allocation6], 4
          %s176 = int_to_ptr.vmem [resolvable:$true] %s175
          %181 = dma.hbm_to_vmem [thread:$0]  %s1, 9216, %s176, [#allocation7], 64, 64, 4
        $region16: #{tpu_custom_call.1} parent=11 // pred_fallthru
          _
        // Predicated region
        $region17: #{tpu_custom_call.1} parent=11 // pred_check
          %p182 = pneg %p86
        $region18: #{tpu_custom_call.1} parent=11 // pred_check_branch
          %184 = sbr.rel (%p182) target = $region20
        $region19: #{tpu_custom_call.1} parent=11 // pred_region
          _
        $region20: #{tpu_custom_call.1} parent=11 // pred_fallthru
          _
        // Predicated region
        $region21: #{tpu_custom_call.1} parent=11 // pred_check
          %p185 = pneg %p107
        $region22: #{tpu_custom_call.1} parent=11 // pred_check_branch
          %187 = sbr.rel (%p185) target = $region24
        $region23: #{tpu_custom_call.1} parent=11 // pred_region
          %s189 = ssub.s32 9216, 9216
          %190 = vsyncadd [#allocation7], %s189
          %s191 = sshll.u32 [#allocation8], 4
          %s192 = int_to_ptr.vmem [resolvable:$true] %s191
          %197 = dma.hbm_to_vmem [thread:$0]  %s3, 9216, %s192, [#allocation7], 64, 64, 4
        $region24: #{tpu_custom_call.1} parent=11 // pred_fallthru
          _
        // Predicated region
        $region25: #{tpu_custom_call.1} parent=11 // pred_check
          %p198 = pneg %p128
        $region26: #{tpu_custom_call.1} parent=11 // pred_check_branch
          %200 = sbr.rel (%p198) target = $region28
        $region27: #{tpu_custom_call.1} parent=11 // pred_region
          _
        $region28: #{tpu_custom_call.1} parent=11 // pred_fallthru
          _
      $region12: #{tpu_custom_call.1} parent=5 // pred_fallthru
        _
      %p201 = scmp.lt.s32.totalorder %s18, 2
      // Predicated region
      $region29: #{tpu_custom_call.1} parent=5 // pred_check
        %p202 = pneg %p201
      $region30: #{tpu_custom_call.1} parent=5 // pred_check_branch
        %204 = sbr.rel (%p202) target = $region32
      $region31: #{tpu_custom_call.1} parent=5 // pred_region
        // Predicated region
        $region33: #{tpu_custom_call.1} parent=31 // pred_check
          %p205 = pneg %p38
        $region34: #{tpu_custom_call.1} parent=31 // pred_check_branch
          %207 = sbr.rel (%p205) target = $region36
        $region35: #{tpu_custom_call.1} parent=31 // pred_region
          %s208 = sand.u32 %s28, 1
          %s209 = scalar_lea.sflag [#allocation4], %s208
          %s210 = sand.u32 %s28, 1
          %s211 = smul.addr %s210, 256
          %s212 = scalar_lea.vmem [#allocation3], %s211
          %s214 = ssub.s32 4096, 4096
          %215 = vsyncadd %s209, %s214
          %s216 = smul.addr %s18, 32
          %s217 = smul.addr %s216, 128
          %s218 = scalar_lea.hbm %s0, %s217
          %s219 = sshll.u32 %s212, 4
          %s220 = int_to_ptr.vmem [resolvable:$true] %s219
          %225 = dma.hbm_to_vmem [thread:$0]  %s218, 4096, %s220, %s209, 128, 128, 8
        $region36: #{tpu_custom_call.1} parent=31 // pred_fallthru
          _
      $region32: #{tpu_custom_call.1} parent=5 // pred_fallthru
        _
      %p226 = scmp.le.s32.totalorder 1, %s18
      %p227 = scmp.lt.s32.totalorder %s18, 3
      %p228 = pnand %p226, %p227
      %p229 = pneg %p228
      // Predicated region
      $region37: #{tpu_custom_call.1} parent=5 // pred_check
        _
      $region38: #{tpu_custom_call.1} parent=5 // pred_check_branch
        %231 = sbr.rel (%p228) target = $region40
      $region39: #{tpu_custom_call.1} parent=5 // pred_region
        %s232 = ssub.s32 %s18, 1
        %s233 = sand.u32 %s31, 1
        %s234 = scalar_lea.sflag [#allocation4], %s233
        %s235 = sand.u32 %s31, 1
        %s236 = smul.addr %s235, 256
        %s237 = scalar_lea.vmem [#allocation3], %s236
        // Predicated region
        $region41: #{tpu_custom_call.1} parent=39 // pred_check
          %p238 = pneg %p44
        $region42: #{tpu_custom_call.1} parent=39 // pred_check_branch
          %240 = sbr.rel (%p238) target = $region44
        $region43: #{tpu_custom_call.1} parent=39 // pred_region
          %241 = dma.done %s234, 4096
        $region44: #{tpu_custom_call.1} parent=39 // pred_fallthru
          _
        // Predicated region
        $region45: #{tpu_custom_call.1} parent=39 // pred_check
          %p242 = pneg %p65
        $region46: #{tpu_custom_call.1} parent=39 // pred_check_branch
          %244 = sbr.rel (%p242) target = $region48
        $region47: #{tpu_custom_call.1} parent=39 // pred_region
          %245 = dma.done [#allocation7], 9216
        $region48: #{tpu_custom_call.1} parent=39 // pred_fallthru
          _
        // Predicated region
        $region49: #{tpu_custom_call.1} parent=39 // pred_check
          %p246 = pneg %p107
        $region50: #{tpu_custom_call.1} parent=39 // pred_check_branch
          %248 = sbr.rel (%p246) target = $region52
        $region51: #{tpu_custom_call.1} parent=39 // pred_region
          %249 = dma.done [#allocation7], 9216
        $region52: #{tpu_custom_call.1} parent=39 // pred_fallthru
          _
        %s250 = sand.u32 %s31, 1
        %s251 = scalar_lea.sflag [#allocation4], %s250
        %s252 = sand.u32 %s31, 1
        %s253 = smul.addr %s252, 256
        %s254 = scalar_lea.vmem [#allocation3], %s253
        %p255 = pneg %p44
        %p256 = pneg %p41
        %p257 = pneg %p65
        %p258 = pneg %p62
        %p259 = pneg %p86
        %p260 = pneg %p83
        %p261 = pneg %p107
        %p262 = pneg %p104
        %p263 = pneg %p128
        %p264 = pneg %p125
        %p265 = pneg %p154
        %p266 = pneg %p151
        %s267 = sand.u32 %s141, 1
        %s268 = scalar_lea.sflag [#allocation5], %s267
        %s269 = sand.u32 %s141, 1
        %s270 = smul.addr %s269, 256
        %s271 = scalar_lea.vmem [#allocation9], %s270
        %273 = vst [vmem:[#allocation2] sm:$0xf] 0
        %274 = vst [vmem:[#allocation2 + $0x4] sm:$0xf] 0
        %275 = vst [vmem:[#allocation2 + $0x8] sm:$0x1] 0
        %s276 = scalar_lea.vmem [#allocation2], 204
        %277 = vst [vmem:[%s276] sm:$0xf] 0
        %278 = vst [vmem:[%s276 + $0x4] sm:$0xf] 0
        %279 = vst [vmem:[%s276 + $0x8] sm:$0x1] 0
        %vm280 = vcmask 1040384
        %vm281 = vsmask.f32 256
        %vm282 = vmand %vm280, %vm281
        %v283 = vld [vmem:[#allocation2] sm:$0x1]
        %v284 = vsel %vm282, 0, %v283
        %285 = vst [vmem:[#allocation2] sm:$0x1] %v284
        %v286 = vld [vmem:[#allocation2 + $0xc] sm:$0x1]
        %v287 = vsel %vm282, 0, %v286
        %288 = vst [vmem:[#allocation2 + $0xc] sm:$0x1] %v287
        %v289 = vld [vmem:[#allocation2 + $0x18] sm:$0x1]
        %v290 = vsel %vm282, 0, %v289
        %291 = vst [vmem:[#allocation2 + $0x18] sm:$0x1] %v290
        %v292 = vld [vmem:[#allocation2 + $0x24] sm:$0x1]
        %v293 = vsel %vm282, 0, %v292
        %294 = vst [vmem:[#allocation2 + $0x24] sm:$0x1] %v293
        %v295 = vld [vmem:[#allocation2 + $0x30] sm:$0x1]
        %v296 = vsel %vm282, 0, %v295
        %297 = vst [vmem:[#allocation2 + $0x30] sm:$0x1] %v296
        %v298 = vld [vmem:[#allocation2 + $0x3c] sm:$0x1]
        %v299 = vsel %vm282, 0, %v298
        %300 = vst [vmem:[#allocation2 + $0x3c] sm:$0x1] %v299
        %v301 = vld [vmem:[#allocation2 + $0x48] sm:$0x1]
        %v302 = vsel %vm282, 0, %v301
        %303 = vst [vmem:[#allocation2 + $0x48] sm:$0x1] %v302
        %v304 = vld [vmem:[#allocation2 + $0x54] sm:$0x1]
        %v305 = vsel %vm282, 0, %v304
        %306 = vst [vmem:[#allocation2 + $0x54] sm:$0x1] %v305
        %v307 = vld [vmem:[#allocation2 + $0x60] sm:$0x1]
        %v308 = vsel %vm282, 0, %v307
        %309 = vst [vmem:[#allocation2 + $0x60] sm:$0x1] %v308
        %v310 = vld [vmem:[#allocation2 + $0x6c] sm:$0x1]
        %v311 = vsel %vm282, 0, %v310
        %312 = vst [vmem:[#allocation2 + $0x6c] sm:$0x1] %v311
        %v313 = vld [vmem:[#allocation2 + $0x78] sm:$0x1]
        %v314 = vsel %vm282, 0, %v313
        %315 = vst [vmem:[#allocation2 + $0x78] sm:$0x1] %v314
        %v316 = vld [vmem:[#allocation2 + $0x84] sm:$0x1]
        %v317 = vsel %vm282, 0, %v316
        %318 = vst [vmem:[#allocation2 + $0x84] sm:$0x1] %v317
        %v319 = vld [vmem:[#allocation2 + $0x90] sm:$0x1]
        %v320 = vsel %vm282, 0, %v319
        %321 = vst [vmem:[#allocation2 + $0x90] sm:$0x1] %v320
        %v322 = vld [vmem:[#allocation2 + $0x9c] sm:$0x1]
        %v323 = vsel %vm282, 0, %v322
        %324 = vst [vmem:[#allocation2 + $0x9c] sm:$0x1] %v323
        %v325 = vld [vmem:[#allocation2 + $0xa8] sm:$0x1]
        %v326 = vsel %vm282, 0, %v325
        %327 = vst [vmem:[#allocation2 + $0xa8] sm:$0x1] %v326
        %v328 = vld [vmem:[#allocation2 + $0xb4] sm:$0x1]
        %v329 = vsel %vm282, 0, %v328
        %330 = vst [vmem:[#allocation2 + $0xb4] sm:$0x1] %v329
        %v331 = vld [vmem:[#allocation2 + $0xc0] sm:$0x1]
        %v332 = vsel %vm282, 0, %v331
        %333 = vst [vmem:[#allocation2 + $0xc0] sm:$0x1] %v332
        %v334 = vld [vmem:[#allocation2 + $0xcc] sm:$0x1]
        %v335 = vsel %vm282, 0, %v334
        %336 = vst [vmem:[#allocation2 + $0xcc] sm:$0x1] %v335
        %vm337 = vsmask.f32 7938
        %vm338 = vmand %vm280, %vm337
        %v339 = vld [vmem:[#allocation2 + $0x8] sm:$0x1]
        %v340 = vsel %vm338, 0, %v339
        %341 = vst [vmem:[#allocation2 + $0x8] sm:$0x1] %v340
        %v342 = vld [vmem:[#allocation2 + $0x14] sm:$0x1]
        %v343 = vsel %vm338, 0, %v342
        %344 = vst [vmem:[#allocation2 + $0x14] sm:$0x1] %v343
        %v345 = vld [vmem:[#allocation2 + $0x20] sm:$0x1]
        %v346 = vsel %vm338, 0, %v345
        %347 = vst [vmem:[#allocation2 + $0x20] sm:$0x1] %v346
        %v348 = vld [vmem:[#allocation2 + $0x2c] sm:$0x1]
        %v349 = vsel %vm338, 0, %v348
        %350 = vst [vmem:[#allocation2 + $0x2c] sm:$0x1] %v349
        %v351 = vld [vmem:[#allocation2 + $0x38] sm:$0x1]
        %v352 = vsel %vm338, 0, %v351
        %353 = vst [vmem:[#allocation2 + $0x38] sm:$0x1] %v352
        %v354 = vld [vmem:[#allocation2 + $0x44] sm:$0x1]
        %v355 = vsel %vm338, 0, %v354
        %356 = vst [vmem:[#allocation2 + $0x44] sm:$0x1] %v355
        %v357 = vld [vmem:[#allocation2 + $0x50] sm:$0x1]
        %v358 = vsel %vm338, 0, %v357
        %359 = vst [vmem:[#allocation2 + $0x50] sm:$0x1] %v358
        %v360 = vld [vmem:[#allocation2 + $0x5c] sm:$0x1]
        %v361 = vsel %vm338, 0, %v360
        %362 = vst [vmem:[#allocation2 + $0x5c] sm:$0x1] %v361
        %v363 = vld [vmem:[#allocation2 + $0x68] sm:$0x1]
        %v364 = vsel %vm338, 0, %v363
        %365 = vst [vmem:[#allocation2 + $0x68] sm:$0x1] %v364
        %v366 = vld [vmem:[#allocation2 + $0x74] sm:$0x1]
        %v367 = vsel %vm338, 0, %v366
        %368 = vst [vmem:[#allocation2 + $0x74] sm:$0x1] %v367
        %v369 = vld [vmem:[#allocation2 + $0x80] sm:$0x1]
        %v370 = vsel %vm338, 0, %v369
        %371 = vst [vmem:[#allocation2 + $0x80] sm:$0x1] %v370
        %v372 = vld [vmem:[#allocation2 + $0x8c] sm:$0x1]
        %v373 = vsel %vm338, 0, %v372
        %374 = vst [vmem:[#allocation2 + $0x8c] sm:$0x1] %v373
        %v375 = vld [vmem:[#allocation2 + $0x98] sm:$0x1]
        %v376 = vsel %vm338, 0, %v375
        %377 = vst [vmem:[#allocation2 + $0x98] sm:$0x1] %v376
        %v378 = vld [vmem:[#allocation2 + $0xa4] sm:$0x1]
        %v379 = vsel %vm338, 0, %v378
        %380 = vst [vmem:[#allocation2 + $0xa4] sm:$0x1] %v379
        %v381 = vld [vmem:[#allocation2 + $0xb0] sm:$0x1]
        %v382 = vsel %vm338, 0, %v381
        %383 = vst [vmem:[#allocation2 + $0xb0] sm:$0x1] %v382
        %v384 = vld [vmem:[#allocation2 + $0xbc] sm:$0x1]
        %v385 = vsel %vm338, 0, %v384
        %386 = vst [vmem:[#allocation2 + $0xbc] sm:$0x1] %v385
        %v387 = vld [vmem:[#allocation2 + $0xc8] sm:$0x1]
        %v388 = vsel %vm338, 0, %v387
        %389 = vst [vmem:[#allocation2 + $0xc8] sm:$0x1] %v388
        %v390 = vld [vmem:[#allocation2 + $0xd4] sm:$0x1]
        %v391 = vsel %vm338, 0, %v390
        %392 = vst [vmem:[#allocation2 + $0xd4] sm:$0x1] %v391
        %v393 = vld [vmem:[%s237] sm:$0xff]
        %v394 = vld [vmem:[%s237 + $0x8] sm:$0xff]
        %v395 = vld [vmem:[%s237 + $0x10] sm:$0xff]
        %v396 = vld [vmem:[%s237 + $0x18] sm:$0xff]
        %v397 = vld [vmem:[%s237 + $0x20] sm:$0xff]
        %v398 = vld [vmem:[%s237 + $0x28] sm:$0xff]
        %v399 = vld [vmem:[%s237 + $0x30] sm:$0xff]
        %v400 = vld [vmem:[%s237 + $0x38] sm:$0xff]
        %v401 = vld [vmem:[%s237 + $0x40] sm:$0xff]
        %v402 = vld [vmem:[%s237 + $0x48] sm:$0xff]
        %v403 = vld [vmem:[%s237 + $0x50] sm:$0xff]
        %v404 = vld [vmem:[%s237 + $0x58] sm:$0xff]
        %v405 = vld [vmem:[%s237 + $0x60] sm:$0xff]
        %v406 = vld [vmem:[%s237 + $0x68] sm:$0xff]
        %v407 = vld [vmem:[%s237 + $0x70] sm:$0xff]
        %v408 = vld [vmem:[%s237 + $0x78] sm:$0xff]
        %v409 = vld [vmem:[%s237 + $0x80] sm:$0xff]
        %v410 = vld [vmem:[%s237 + $0x88] sm:$0xff]
        %v411 = vld [vmem:[%s237 + $0x90] sm:$0xff]
        %v412 = vld [vmem:[%s237 + $0x98] sm:$0xff]
        %v413 = vld [vmem:[%s237 + $0xa0] sm:$0xff]
        %v414 = vld [vmem:[%s237 + $0xa8] sm:$0xff]
        %v415 = vld [vmem:[%s237 + $0xb0] sm:$0xff]
        %v416 = vld [vmem:[%s237 + $0xb8] sm:$0xff]
        %v417 = vld [vmem:[%s237 + $0xc0] sm:$0xff]
        %v418 = vld [vmem:[%s237 + $0xc8] sm:$0xff]
        %v419 = vld [vmem:[%s237 + $0xd0] sm:$0xff]
        %v420 = vld [vmem:[%s237 + $0xd8] sm:$0xff]
        %v421 = vld [vmem:[%s237 + $0xe0] sm:$0xff]
        %v422 = vld [vmem:[%s237 + $0xe8] sm:$0xff]
        %v423 = vld [vmem:[%s237 + $0xf0] sm:$0xff]
        %v424 = vld [vmem:[%s237 + $0xf8] sm:$0xff]
        %v425 = vpack.c.bf16 %v394, %v393
        %v426 = vpack.c.bf16 %v396, %v395
        %v427 = vpack.c.bf16 %v398, %v397
        %v428 = vpack.c.bf16 %v400, %v399
        %v429 = vpack.c.bf16 %v402, %v401
        %v430 = vpack.c.bf16 %v404, %v403
        %v431 = vpack.c.bf16 %v406, %v405
        %v432 = vpack.c.bf16 %v408, %v407
        %v433 = vpack.c.bf16 %v410, %v409
        %v434 = vpack.c.bf16 %v412, %v411
        %v435 = vpack.c.bf16 %v414, %v413
        %v436 = vpack.c.bf16 %v416, %v415
        %v437 = vpack.c.bf16 %v418, %v417
        %v438 = vpack.c.bf16 %v420, %v419
        %v439 = vpack.c.bf16 %v422, %v421
        %v440 = vpack.c.bf16 %v424, %v423
        %v457 = vunpack.c.l.b16 %v425
        %v458 = vunpack.c.h.b16 %v425
        %v459 = vunpack.c.l.b16 %v426
        %v460 = vunpack.c.h.b16 %v426
        %v461 = vunpack.c.l.b16 %v427
        %v462 = vunpack.c.h.b16 %v427
        %v463 = vunpack.c.l.b16 %v428
        %v464 = vunpack.c.h.b16 %v428
        %v465 = vunpack.c.l.b16 %v429
        %v466 = vunpack.c.h.b16 %v429
        %v467 = vunpack.c.l.b16 %v430
        %v468 = vunpack.c.h.b16 %v430
        %v469 = vunpack.c.l.b16 %v431
        %v470 = vunpack.c.h.b16 %v431
        %v471 = vunpack.c.l.b16 %v432
        %v472 = vunpack.c.h.b16 %v432
        %v473 = vunpack.c.l.b16 %v433
        %v474 = vunpack.c.h.b16 %v433
        %v475 = vunpack.c.l.b16 %v434
        %v476 = vunpack.c.h.b16 %v434
        %v477 = vunpack.c.l.b16 %v435
        %v478 = vunpack.c.h.b16 %v435
        %v479 = vunpack.c.l.b16 %v436
        %v480 = vunpack.c.h.b16 %v436
        %v481 = vunpack.c.l.b16 %v437
        %v482 = vunpack.c.h.b16 %v437
        %v483 = vunpack.c.l.b16 %v438
        %v484 = vunpack.c.h.b16 %v438
        %v485 = vunpack.c.l.b16 %v439
        %v486 = vunpack.c.h.b16 %v439
        %v487 = vunpack.c.l.b16 %v440
        %v488 = vunpack.c.h.b16 %v440
        %v489 = vpack.c.b16 %v457, %v457
        %v490 = vpack.c.b16 %v458, %v458
        %v491 = vpack.c.b16 %v459, %v459
        %v492 = vpack.c.b16 %v460, %v460
        %v493 = vpack.c.b16 %v461, %v461
        %v494 = vpack.c.b16 %v462, %v462
        %v495 = vpack.c.b16 %v463, %v463
        %v496 = vpack.c.b16 %v464, %v464
        %v497 = vpack.c.b16 %v465, %v465
        %v498 = vpack.c.b16 %v466, %v466
        %v499 = vpack.c.b16 %v467, %v467
        %v500 = vpack.c.b16 %v468, %v468
        %v501 = vpack.c.b16 %v469, %v469
        %v502 = vpack.c.b16 %v470, %v470
        %v503 = vpack.c.b16 %v471, %v471
        %v504 = vpack.c.b16 %v472, %v472
        %v505 = vpack.c.b16 %v473, %v473
        %v506 = vpack.c.b16 %v474, %v474
        %v507 = vpack.c.b16 %v475, %v475
        %v508 = vpack.c.b16 %v476, %v476
        %v509 = vpack.c.b16 %v477, %v477
        %v510 = vpack.c.b16 %v478, %v478
        %v511 = vpack.c.b16 %v479, %v479
        %v512 = vpack.c.b16 %v480, %v480
        %v513 = vpack.c.b16 %v481, %v481
        %v514 = vpack.c.b16 %v482, %v482
        %v515 = vpack.c.b16 %v483, %v483
        %v516 = vpack.c.b16 %v484, %v484
        %v517 = vpack.c.b16 %v485, %v485
        %v518 = vpack.c.b16 %v486, %v486
        %v519 = vpack.c.b16 %v487, %v487
        %v520 = vpack.c.b16 %v488, %v488
        %vm521 = vsmask.f32 4368
        %vm522 = vmor %vm281, %vm521
        %v524 = vshrl.u32 %v489, 16
        %v526 = vrot.slane %v524, 7
        %v527 = vshll.u32 %v489, 16
        %v529 = vor.u32 %v526, %v527
        %v530 = vrot.slane %v526, 4
        %v532 = vshrl.u32 %v490, 16
        %v534 = vrot.slane %v532, 7
        %v535 = vshll.u32 %v490, 16
        %v537 = vor.u32 %v534, %v535
        %v538 = vsel %vm522, %v530, %v537
        %v539 = vrot.slane %v534, 4
        %v541 = vshrl.u32 %v491, 16
        %v543 = vrot.slane %v541, 7
        %v544 = vshll.u32 %v491, 16
        %v546 = vor.u32 %v543, %v544
        %v547 = vrot.slane %v543, 4
        %v549 = vshrl.u32 %v492, 16
        %v551 = vrot.slane %v549, 7
        %v552 = vshll.u32 %v492, 16
        %v554 = vor.u32 %v551, %v552
        %v555 = vsel %vm522, %v547, %v554
        %v556 = vrot.slane %v551, 4
        %v558 = vshrl.u32 %v493, 16
        %v560 = vrot.slane %v558, 7
        %v561 = vshll.u32 %v493, 16
        %v563 = vor.u32 %v560, %v561
        %v564 = vrot.slane %v560, 4
        %v566 = vshrl.u32 %v494, 16
        %v568 = vrot.slane %v566, 7
        %v569 = vshll.u32 %v494, 16
        %v571 = vor.u32 %v568, %v569
        %v572 = vsel %vm522, %v564, %v571
        %v573 = vrot.slane %v568, 4
        %v575 = vshrl.u32 %v495, 16
        %v577 = vrot.slane %v575, 7
        %v578 = vshll.u32 %v495, 16
        %v580 = vor.u32 %v577, %v578
        %v581 = vrot.slane %v577, 4
        %v583 = vshrl.u32 %v496, 16
        %v585 = vrot.slane %v583, 7
        %v586 = vshll.u32 %v496, 16
        %v588 = vor.u32 %v585, %v586
        %v589 = vsel %vm522, %v581, %v588
        %v590 = vrot.slane %v585, 4
        %v592 = vshrl.u32 %v497, 16
        %v594 = vrot.slane %v592, 7
        %v595 = vshll.u32 %v497, 16
        %v597 = vor.u32 %v594, %v595
        %v598 = vrot.slane %v594, 4
        %v600 = vshrl.u32 %v498, 16
        %v602 = vrot.slane %v600, 7
        %v603 = vshll.u32 %v498, 16
        %v605 = vor.u32 %v602, %v603
        %v606 = vsel %vm522, %v598, %v605
        %v607 = vrot.slane %v602, 4
        %v609 = vshrl.u32 %v499, 16
        %v611 = vrot.slane %v609, 7
        %v612 = vshll.u32 %v499, 16
        %v614 = vor.u32 %v611, %v612
        %v615 = vrot.slane %v611, 4
        %v617 = vshrl.u32 %v500, 16
        %v619 = vrot.slane %v617, 7
        %v620 = vshll.u32 %v500, 16
        %v622 = vor.u32 %v619, %v620
        %v623 = vsel %vm522, %v615, %v622
        %v624 = vrot.slane %v619, 4
        %v626 = vshrl.u32 %v501, 16
        %v628 = vrot.slane %v626, 7
        %v629 = vshll.u32 %v501, 16
        %v631 = vor.u32 %v628, %v629
        %v632 = vrot.slane %v628, 4
        %v634 = vshrl.u32 %v502, 16
        %v636 = vrot.slane %v634, 7
        %v637 = vshll.u32 %v502, 16
        %v639 = vor.u32 %v636, %v637
        %v640 = vsel %vm522, %v632, %v639
        %v641 = vrot.slane %v636, 4
        %v643 = vshrl.u32 %v503, 16
        %v645 = vrot.slane %v643, 7
        %v646 = vshll.u32 %v503, 16
        %v648 = vor.u32 %v645, %v646
        %v649 = vrot.slane %v645, 4
        %v651 = vshrl.u32 %v504, 16
        %v653 = vrot.slane %v651, 7
        %v654 = vshll.u32 %v504, 16
        %v656 = vor.u32 %v653, %v654
        %v657 = vsel %vm522, %v649, %v656
        %v658 = vrot.slane %v653, 4
        %v660 = vshrl.u32 %v505, 16
        %v662 = vrot.slane %v660, 7
        %v663 = vshll.u32 %v505, 16
        %v665 = vor.u32 %v662, %v663
        %v666 = vrot.slane %v662, 4
        %v668 = vshrl.u32 %v506, 16
        %v670 = vrot.slane %v668, 7
        %v671 = vshll.u32 %v506, 16
        %v673 = vor.u32 %v670, %v671
        %v674 = vsel %vm522, %v666, %v673
        %v675 = vrot.slane %v670, 4
        %v677 = vshrl.u32 %v507, 16
        %v679 = vrot.slane %v677, 7
        %v680 = vshll.u32 %v507, 16
        %v682 = vor.u32 %v679, %v680
        %v683 = vrot.slane %v679, 4
        %v685 = vshrl.u32 %v508, 16
        %v687 = vrot.slane %v685, 7
        %v688 = vshll.u32 %v508, 16
        %v690 = vor.u32 %v687, %v688
        %v691 = vsel %vm522, %v683, %v690
        %v692 = vrot.slane %v687, 4
        %v694 = vshrl.u32 %v509, 16
        %v696 = vrot.slane %v694, 7
        %v697 = vshll.u32 %v509, 16
        %v699 = vor.u32 %v696, %v697
        %v700 = vrot.slane %v696, 4
        %v702 = vshrl.u32 %v510, 16
        %v704 = vrot.slane %v702, 7
        %v705 = vshll.u32 %v510, 16
        %v707 = vor.u32 %v704, %v705
        %v708 = vsel %vm522, %v700, %v707
        %v709 = vrot.slane %v704, 4
        %v711 = vshrl.u32 %v511, 16
        %v713 = vrot.slane %v711, 7
        %v714 = vshll.u32 %v511, 16
        %v716 = vor.u32 %v713, %v714
        %v717 = vrot.slane %v713, 4
        %v719 = vshrl.u32 %v512, 16
        %v721 = vrot.slane %v719, 7
        %v722 = vshll.u32 %v512, 16
        %v724 = vor.u32 %v721, %v722
        %v725 = vsel %vm522, %v717, %v724
        %v726 = vrot.slane %v721, 4
        %v728 = vshrl.u32 %v513, 16
        %v730 = vrot.slane %v728, 7
        %v731 = vshll.u32 %v513, 16
        %v733 = vor.u32 %v730, %v731
        %v734 = vrot.slane %v730, 4
        %v736 = vshrl.u32 %v514, 16
        %v738 = vrot.slane %v736, 7
        %v739 = vshll.u32 %v514, 16
        %v741 = vor.u32 %v738, %v739
        %v742 = vsel %vm522, %v734, %v741
        %v743 = vrot.slane %v738, 4
        %v745 = vshrl.u32 %v515, 16
        %v747 = vrot.slane %v745, 7
        %v748 = vshll.u32 %v515, 16
        %v750 = vor.u32 %v747, %v748
        %v751 = vrot.slane %v747, 4
        %v753 = vshrl.u32 %v516, 16
        %v755 = vrot.slane %v753, 7
        %v756 = vshll.u32 %v516, 16
        %v758 = vor.u32 %v755, %v756
        %v759 = vsel %vm522, %v751, %v758
        %v760 = vrot.slane %v755, 4
        %v762 = vshrl.u32 %v517, 16
        %v764 = vrot.slane %v762, 7
        %v765 = vshll.u32 %v517, 16
        %v767 = vor.u32 %v764, %v765
        %v768 = vrot.slane %v764, 4
        %v770 = vshrl.u32 %v518, 16
        %v772 = vrot.slane %v770, 7
        %v773 = vshll.u32 %v518, 16
        %v775 = vor.u32 %v772, %v773
        %v776 = vsel %vm522, %v768, %v775
        %v777 = vrot.slane %v772, 4
        %v779 = vshrl.u32 %v519, 16
        %v781 = vrot.slane %v779, 7
        %v782 = vshll.u32 %v519, 16
        %v784 = vor.u32 %v781, %v782
        %v785 = vrot.slane %v781, 4
        %v787 = vshrl.u32 %v520, 16
        %v789 = vrot.slane %v787, 7
        %v790 = vshll.u32 %v520, 16
        %v792 = vor.u32 %v789, %v790
        %v793 = vsel %vm522, %v785, %v792
        %v794 = vrot.slane %v789, 4
        %s843 = scalar_lea.vmem [#allocation2], 12
        %vm844 = vcmask 1043456
        %vm845 = vmand %vm844, %vm337
        %v846 = vld [vmem:[%s843] sm:$0xf]
        %v847 = vsel %vm845, %v529, %v846
        %848 = vst [vmem:[%s843] sm:$0xf] %v847
        %849 = vst [vmem:[%s843 + $0x4] sm:$0xf] %v538
        %v850 = vld [vmem:[%s843 + $0x8] sm:$0x1]
        %v851 = vsel %vm282, %v539, %v850
        %852 = vst [vmem:[%s843 + $0x8] sm:$0x1] %v851
        %v853 = vld [vmem:[%s843 + $0xc] sm:$0xf]
        %v854 = vsel %vm845, %v546, %v853
        %855 = vst [vmem:[%s843 + $0xc] sm:$0xf] %v854
        %856 = vst [vmem:[%s843 + $0x10] sm:$0xf] %v555
        %v857 = vld [vmem:[%s843 + $0x14] sm:$0x1]
        %v858 = vsel %vm282, %v556, %v857
        %859 = vst [vmem:[%s843 + $0x14] sm:$0x1] %v858
        %v860 = vld [vmem:[%s843 + $0x18] sm:$0xf]
        %v861 = vsel %vm845, %v563, %v860
        %862 = vst [vmem:[%s843 + $0x18] sm:$0xf] %v861
        %863 = vst [vmem:[%s843 + $0x1c] sm:$0xf] %v572
        %v864 = vld [vmem:[%s843 + $0x20] sm:$0x1]
        %v865 = vsel %vm282, %v573, %v864
        %866 = vst [vmem:[%s843 + $0x20] sm:$0x1] %v865
        %v867 = vld [vmem:[%s843 + $0x24] sm:$0xf]
        %v868 = vsel %vm845, %v580, %v867
        %869 = vst [vmem:[%s843 + $0x24] sm:$0xf] %v868
        %870 = vst [vmem:[%s843 + $0x28] sm:$0xf] %v589
        %v871 = vld [vmem:[%s843 + $0x2c] sm:$0x1]
        %v872 = vsel %vm282, %v590, %v871
        %873 = vst [vmem:[%s843 + $0x2c] sm:$0x1] %v872
        %v874 = vld [vmem:[%s843 + $0x30] sm:$0xf]
        %v875 = vsel %vm845, %v597, %v874
        %876 = vst [vmem:[%s843 + $0x30] sm:$0xf] %v875
        %877 = vst [vmem:[%s843 + $0x34] sm:$0xf] %v606
        %v878 = vld [vmem:[%s843 + $0x38] sm:$0x1]
        %v879 = vsel %vm282, %v607, %v878
        %880 = vst [vmem:[%s843 + $0x38] sm:$0x1] %v879
        %v881 = vld [vmem:[%s843 + $0x3c] sm:$0xf]
        %v882 = vsel %vm845, %v614, %v881
        %883 = vst [vmem:[%s843 + $0x3c] sm:$0xf] %v882
        %884 = vst [vmem:[%s843 + $0x40] sm:$0xf] %v623
        %v885 = vld [vmem:[%s843 + $0x44] sm:$0x1]
        %v886 = vsel %vm282, %v624, %v885
        %887 = vst [vmem:[%s843 + $0x44] sm:$0x1] %v886
        %v888 = vld [vmem:[%s843 + $0x48] sm:$0xf]
        %v889 = vsel %vm845, %v631, %v888
        %890 = vst [vmem:[%s843 + $0x48] sm:$0xf] %v889
        %891 = vst [vmem:[%s843 + $0x4c] sm:$0xf] %v640
        %v892 = vld [vmem:[%s843 + $0x50] sm:$0x1]
        %v893 = vsel %vm282, %v641, %v892
        %894 = vst [vmem:[%s843 + $0x50] sm:$0x1] %v893
        %v895 = vld [vmem:[%s843 + $0x54] sm:$0xf]
        %v896 = vsel %vm845, %v648, %v895
        %897 = vst [vmem:[%s843 + $0x54] sm:$0xf] %v896
        %898 = vst [vmem:[%s843 + $0x58] sm:$0xf] %v657
        %v899 = vld [vmem:[%s843 + $0x5c] sm:$0x1]
        %v900 = vsel %vm282, %v658, %v899
        %901 = vst [vmem:[%s843 + $0x5c] sm:$0x1] %v900
        %v902 = vld [vmem:[%s843 + $0x60] sm:$0xf]
        %v903 = vsel %vm845, %v665, %v902
        %904 = vst [vmem:[%s843 + $0x60] sm:$0xf] %v903
        %905 = vst [vmem:[%s843 + $0x64] sm:$0xf] %v674
        %v906 = vld [vmem:[%s843 + $0x68] sm:$0x1]
        %v907 = vsel %vm282, %v675, %v906
        %908 = vst [vmem:[%s843 + $0x68] sm:$0x1] %v907
        %v909 = vld [vmem:[%s843 + $0x6c] sm:$0xf]
        %v910 = vsel %vm845, %v682, %v909
        %911 = vst [vmem:[%s843 + $0x6c] sm:$0xf] %v910
        %912 = vst [vmem:[%s843 + $0x70] sm:$0xf] %v691
        %v913 = vld [vmem:[%s843 + $0x74] sm:$0x1]
        %v914 = vsel %vm282, %v692, %v913
        %915 = vst [vmem:[%s843 + $0x74] sm:$0x1] %v914
        %v916 = vld [vmem:[%s843 + $0x78] sm:$0xf]
        %v917 = vsel %vm845, %v699, %v916
        %918 = vst [vmem:[%s843 + $0x78] sm:$0xf] %v917
        %919 = vst [vmem:[%s843 + $0x7c] sm:$0xf] %v708
        %v920 = vld [vmem:[%s843 + $0x80] sm:$0x1]
        %v921 = vsel %vm282, %v709, %v920
        %922 = vst [vmem:[%s843 + $0x80] sm:$0x1] %v921
        %v923 = vld [vmem:[%s843 + $0x84] sm:$0xf]
        %v924 = vsel %vm845, %v716, %v923
        %925 = vst [vmem:[%s843 + $0x84] sm:$0xf] %v924
        %926 = vst [vmem:[%s843 + $0x88] sm:$0xf] %v725
        %v927 = vld [vmem:[%s843 + $0x8c] sm:$0x1]
        %v928 = vsel %vm282, %v726, %v927
        %929 = vst [vmem:[%s843 + $0x8c] sm:$0x1] %v928
        %v930 = vld [vmem:[%s843 + $0x90] sm:$0xf]
        %v931 = vsel %vm845, %v733, %v930
        %932 = vst [vmem:[%s843 + $0x90] sm:$0xf] %v931
        %933 = vst [vmem:[%s843 + $0x94] sm:$0xf] %v742
        %v934 = vld [vmem:[%s843 + $0x98] sm:$0x1]
        %v935 = vsel %vm282, %v743, %v934
        %936 = vst [vmem:[%s843 + $0x98] sm:$0x1] %v935
        %v937 = vld [vmem:[%s843 + $0x9c] sm:$0xf]
        %v938 = vsel %vm845, %v750, %v937
        %939 = vst [vmem:[%s843 + $0x9c] sm:$0xf] %v938
        %940 = vst [vmem:[%s843 + $0xa0] sm:$0xf] %v759
        %v941 = vld [vmem:[%s843 + $0xa4] sm:$0x1]
        %v942 = vsel %vm282, %v760, %v941
        %943 = vst [vmem:[%s843 + $0xa4] sm:$0x1] %v942
        %v944 = vld [vmem:[%s843 + $0xa8] sm:$0xf]
        %v945 = vsel %vm845, %v767, %v944
        %946 = vst [vmem:[%s843 + $0xa8] sm:$0xf] %v945
        %947 = vst [vmem:[%s843 + $0xac] sm:$0xf] %v776
        %v948 = vld [vmem:[%s843 + $0xb0] sm:$0x1]
        %v949 = vsel %vm282, %v777, %v948
        %950 = vst [vmem:[%s843 + $0xb0] sm:$0x1] %v949
        %v951 = vld [vmem:[%s843 + $0xb4] sm:$0xf]
        %v952 = vsel %vm845, %v784, %v951
        %953 = vst [vmem:[%s843 + $0xb4] sm:$0xf] %v952
        %954 = vst [vmem:[%s843 + $0xb8] sm:$0xf] %v793
        %v955 = vld [vmem:[%s843 + $0xbc] sm:$0x1]
        %v956 = vsel %vm282, %v794, %v955
        %957 = vst [vmem:[%s843 + $0xbc] sm:$0x1] %v956
        %v958 = vld [vmem:[#allocation2] sm:$0xf]
        %v959 = vld [vmem:[#allocation2 + $0x4] sm:$0xf]
        %v960 = vld [vmem:[#allocation2 + $0xc] sm:$0xf]
        %v961 = vld [vmem:[#allocation2 + $0x10] sm:$0xf]
        %v962 = vld [vmem:[#allocation2 + $0x18] sm:$0xf]
        %v963 = vld [vmem:[#allocation2 + $0x1c] sm:$0xf]
        %v964 = vld [vmem:[#allocation2 + $0x24] sm:$0xf]
        %v965 = vld [vmem:[#allocation2 + $0x28] sm:$0xf]
        %v966 = vld [vmem:[#allocation2 + $0x30] sm:$0xf]
        %v967 = vld [vmem:[#allocation2 + $0x34] sm:$0xf]
        %v968 = vld [vmem:[#allocation2 + $0x3c] sm:$0xf]
        %v969 = vld [vmem:[#allocation2 + $0x40] sm:$0xf]
        %v970 = vld [vmem:[#allocation2 + $0x48] sm:$0xf]
        %v971 = vld [vmem:[#allocation2 + $0x4c] sm:$0xf]
        %v972 = vld [vmem:[#allocation2 + $0x54] sm:$0xf]
        %v973 = vld [vmem:[#allocation2 + $0x58] sm:$0xf]
        %v974 = vld [vmem:[#allocation2 + $0x60] sm:$0xf]
        %v975 = vld [vmem:[#allocation2 + $0x64] sm:$0xf]
        %v976 = vld [vmem:[#allocation2 + $0x6c] sm:$0xf]
        %v977 = vld [vmem:[#allocation2 + $0x70] sm:$0xf]
        %v978 = vld [vmem:[#allocation2 + $0x78] sm:$0xf]
        %v979 = vld [vmem:[#allocation2 + $0x7c] sm:$0xf]
        %v980 = vld [vmem:[#allocation2 + $0x84] sm:$0xf]
        %v981 = vld [vmem:[#allocation2 + $0x88] sm:$0xf]
        %v982 = vld [vmem:[#allocation2 + $0x90] sm:$0xf]
        %v983 = vld [vmem:[#allocation2 + $0x94] sm:$0xf]
        %v984 = vld [vmem:[#allocation2 + $0x9c] sm:$0xf]
        %v985 = vld [vmem:[#allocation2 + $0xa0] sm:$0xf]
        %v986 = vld [vmem:[#allocation2 + $0xa8] sm:$0xf]
        %v987 = vld [vmem:[#allocation2 + $0xac] sm:$0xf]
        %v988 = vld [vmem:[#allocation2 + $0xb4] sm:$0xf]
        %v989 = vld [vmem:[#allocation2 + $0xb8] sm:$0xf]
        %v990 = vld [vmem:[#allocation6] sm:$0xf]
        %v991 = vld [vmem:[#allocation6 + $0x4] sm:$0xf]
        %v992 = vld [vmem:[#allocation6 + $0x8] sm:$0xf]
        %v993 = vld [vmem:[#allocation6 + $0xc] sm:$0xf]
        %v994 = vld [vmem:[#allocation6 + $0x10] sm:$0xf]
        %v995 = vld [vmem:[#allocation6 + $0x14] sm:$0xf]
        %v996 = vld [vmem:[#allocation6 + $0x18] sm:$0xf]
        %v997 = vld [vmem:[#allocation6 + $0x1c] sm:$0xf]
        %v998 = vld [vmem:[#allocation6 + $0x20] sm:$0xf]
        %v999 = vld [vmem:[#allocation6 + $0x24] sm:$0xf]
        %v1000 = vld [vmem:[#allocation6 + $0x28] sm:$0xf]
        %v1001 = vld [vmem:[#allocation6 + $0x2c] sm:$0xf]
        %v1002 = vld [vmem:[#allocation6 + $0x30] sm:$0xf]
        %v1003 = vld [vmem:[#allocation6 + $0x34] sm:$0xf]
        %v1004 = vld [vmem:[#allocation6 + $0x38] sm:$0xf]
        %v1005 = vld [vmem:[#allocation6 + $0x3c] sm:$0xf]
        %v1006 = vld [vmem:[#allocation2 + $0x8] sm:$0x1]
        %v1007 = vld [vmem:[#allocation2 + $0x14] sm:$0x1]
        %v1008 = vld [vmem:[#allocation2 + $0x20] sm:$0x1]
        %v1009 = vld [vmem:[#allocation2 + $0x2c] sm:$0x1]
        %v1010 = vld [vmem:[#allocation2 + $0x38] sm:$0x1]
        %v1011 = vld [vmem:[#allocation2 + $0x44] sm:$0x1]
        %v1012 = vld [vmem:[#allocation2 + $0x50] sm:$0x1]
        %v1013 = vld [vmem:[#allocation2 + $0x5c] sm:$0x1]
        %v1014 = vld [vmem:[#allocation2 + $0x68] sm:$0x1]
        %v1015 = vld [vmem:[#allocation2 + $0x74] sm:$0x1]
        %v1016 = vld [vmem:[#allocation2 + $0x80] sm:$0x1]
        %v1017 = vld [vmem:[#allocation2 + $0x8c] sm:$0x1]
        %v1018 = vld [vmem:[#allocation2 + $0x98] sm:$0x1]
        %v1019 = vld [vmem:[#allocation2 + $0xa4] sm:$0x1]
        %v1020 = vld [vmem:[#allocation2 + $0xb0] sm:$0x1]
        %v1021 = vld [vmem:[#allocation2 + $0xbc] sm:$0x1]
        %vm1022 = vsmask.f32 3328
        %vm1023 = vsmask.f32 7440
        %vm1024 = vmor %vm1022, %vm1023
        %v1026 = vshrl.u32 %v958, 16
        %v1028 = vrot.slane %v1026, 4
        %v1029 = vshll.u32 %v958, 16
        %v1031 = vrot.slane %v1029, 5
        %v1032 = vor.u32 %v1028, %v1031
        %v1033 = vrot.slane %v1032, 4
        %v1035 = vshll.u32 %v959, 16
        %v1037 = vrot.slane %v1035, 5
        %v1038 = vsel %vm1024, %v1033, %v1037
        %v1039 = vshrl.u32 %v959, 16
        %v1041 = vrot.slane %v1039, 4
        %v1042 = vor.u32 %v1041, %v1037
        %v1043 = vrot.slane %v1042, 4
        %v1045 = vshll.u32 %v1006, 16
        %v1047 = vrot.slane %v1045, 5
        %v1048 = vsel %vm1024, %v1043, %v1047
        %v1050 = vshrl.u32 %v960, 16
        %v1052 = vrot.slane %v1050, 4
        %v1053 = vshll.u32 %v960, 16
        %v1055 = vrot.slane %v1053, 5
        %v1056 = vor.u32 %v1052, %v1055
        %v1057 = vrot.slane %v1056, 4
        %v1059 = vshll.u32 %v961, 16
        %v1061 = vrot.slane %v1059, 5
        %v1062 = vsel %vm1024, %v1057, %v1061
        %v1063 = vshrl.u32 %v961, 16
        %v1065 = vrot.slane %v1063, 4
        %v1066 = vor.u32 %v1065, %v1061
        %v1067 = vrot.slane %v1066, 4
        %v1069 = vshll.u32 %v1007, 16
        %v1071 = vrot.slane %v1069, 5
        %v1072 = vsel %vm1024, %v1067, %v1071
        %v1074 = vshrl.u32 %v962, 16
        %v1076 = vrot.slane %v1074, 4
        %v1077 = vshll.u32 %v962, 16
        %v1079 = vrot.slane %v1077, 5
        %v1080 = vor.u32 %v1076, %v1079
        %v1081 = vrot.slane %v1080, 4
        %v1083 = vshll.u32 %v963, 16
        %v1085 = vrot.slane %v1083, 5
        %v1086 = vsel %vm1024, %v1081, %v1085
        %v1087 = vshrl.u32 %v963, 16
        %v1089 = vrot.slane %v1087, 4
        %v1090 = vor.u32 %v1089, %v1085
        %v1091 = vrot.slane %v1090, 4
        %v1093 = vshll.u32 %v1008, 16
        %v1095 = vrot.slane %v1093, 5
        %v1096 = vsel %vm1024, %v1091, %v1095
        %v1098 = vshrl.u32 %v964, 16
        %v1100 = vrot.slane %v1098, 4
        %v1101 = vshll.u32 %v964, 16
        %v1103 = vrot.slane %v1101, 5
        %v1104 = vor.u32 %v1100, %v1103
        %v1105 = vrot.slane %v1104, 4
        %v1107 = vshll.u32 %v965, 16
        %v1109 = vrot.slane %v1107, 5
        %v1110 = vsel %vm1024, %v1105, %v1109
        %v1111 = vshrl.u32 %v965, 16
        %v1113 = vrot.slane %v1111, 4
        %v1114 = vor.u32 %v1113, %v1109
        %v1115 = vrot.slane %v1114, 4
        %v1117 = vshll.u32 %v1009, 16
        %v1119 = vrot.slane %v1117, 5
        %v1120 = vsel %vm1024, %v1115, %v1119
        %v1122 = vshrl.u32 %v966, 16
        %v1124 = vrot.slane %v1122, 4
        %v1125 = vshll.u32 %v966, 16
        %v1127 = vrot.slane %v1125, 5
        %v1128 = vor.u32 %v1124, %v1127
        %v1129 = vrot.slane %v1128, 4
        %v1131 = vshll.u32 %v967, 16
        %v1133 = vrot.slane %v1131, 5
        %v1134 = vsel %vm1024, %v1129, %v1133
        %v1135 = vshrl.u32 %v967, 16
        %v1137 = vrot.slane %v1135, 4
        %v1138 = vor.u32 %v1137, %v1133
        %v1139 = vrot.slane %v1138, 4
        %v1141 = vshll.u32 %v1010, 16
        %v1143 = vrot.slane %v1141, 5
        %v1144 = vsel %vm1024, %v1139, %v1143
        %v1146 = vshrl.u32 %v968, 16
        %v1148 = vrot.slane %v1146, 4
        %v1149 = vshll.u32 %v968, 16
        %v1151 = vrot.slane %v1149, 5
        %v1152 = vor.u32 %v1148, %v1151
        %v1153 = vrot.slane %v1152, 4
        %v1155 = vshll.u32 %v969, 16
        %v1157 = vrot.slane %v1155, 5
        %v1158 = vsel %vm1024, %v1153, %v1157
        %v1159 = vshrl.u32 %v969, 16
        %v1161 = vrot.slane %v1159, 4
        %v1162 = vor.u32 %v1161, %v1157
        %v1163 = vrot.slane %v1162, 4
        %v1165 = vshll.u32 %v1011, 16
        %v1167 = vrot.slane %v1165, 5
        %v1168 = vsel %vm1024, %v1163, %v1167
        %v1170 = vshrl.u32 %v970, 16
        %v1172 = vrot.slane %v1170, 4
        %v1173 = vshll.u32 %v970, 16
        %v1175 = vrot.slane %v1173, 5
        %v1176 = vor.u32 %v1172, %v1175
        %v1177 = vrot.slane %v1176, 4
        %v1179 = vshll.u32 %v971, 16
        %v1181 = vrot.slane %v1179, 5
        %v1182 = vsel %vm1024, %v1177, %v1181
        %v1183 = vshrl.u32 %v971, 16
        %v1185 = vrot.slane %v1183, 4
        %v1186 = vor.u32 %v1185, %v1181
        %v1187 = vrot.slane %v1186, 4
        %v1189 = vshll.u32 %v1012, 16
        %v1191 = vrot.slane %v1189, 5
        %v1192 = vsel %vm1024, %v1187, %v1191
        %v1194 = vshrl.u32 %v972, 16
        %v1196 = vrot.slane %v1194, 4
        %v1197 = vshll.u32 %v972, 16
        %v1199 = vrot.slane %v1197, 5
        %v1200 = vor.u32 %v1196, %v1199
        %v1201 = vrot.slane %v1200, 4
        %v1203 = vshll.u32 %v973, 16
        %v1205 = vrot.slane %v1203, 5
        %v1206 = vsel %vm1024, %v1201, %v1205
        %v1207 = vshrl.u32 %v973, 16
        %v1209 = vrot.slane %v1207, 4
        %v1210 = vor.u32 %v1209, %v1205
        %v1211 = vrot.slane %v1210, 4
        %v1213 = vshll.u32 %v1013, 16
        %v1215 = vrot.slane %v1213, 5
        %v1216 = vsel %vm1024, %v1211, %v1215
        %v1218 = vshrl.u32 %v974, 16
        %v1220 = vrot.slane %v1218, 4
        %v1221 = vshll.u32 %v974, 16
        %v1223 = vrot.slane %v1221, 5
        %v1224 = vor.u32 %v1220, %v1223
        %v1225 = vrot.slane %v1224, 4
        %v1227 = vshll.u32 %v975, 16
        %v1229 = vrot.slane %v1227, 5
        %v1230 = vsel %vm1024, %v1225, %v1229
        %v1231 = vshrl.u32 %v975, 16
        %v1233 = vrot.slane %v1231, 4
        %v1234 = vor.u32 %v1233, %v1229
        %v1235 = vrot.slane %v1234, 4
        %v1237 = vshll.u32 %v1014, 16
        %v1239 = vrot.slane %v1237, 5
        %v1240 = vsel %vm1024, %v1235, %v1239
        %v1242 = vshrl.u32 %v976, 16
        %v1244 = vrot.slane %v1242, 4
        %v1245 = vshll.u32 %v976, 16
        %v1247 = vrot.slane %v1245, 5
        %v1248 = vor.u32 %v1244, %v1247
        %v1249 = vrot.slane %v1248, 4
        %v1251 = vshll.u32 %v977, 16
        %v1253 = vrot.slane %v1251, 5
        %v1254 = vsel %vm1024, %v1249, %v1253
        %v1255 = vshrl.u32 %v977, 16
        %v1257 = vrot.slane %v1255, 4
        %v1258 = vor.u32 %v1257, %v1253
        %v1259 = vrot.slane %v1258, 4
        %v1261 = vshll.u32 %v1015, 16
        %v1263 = vrot.slane %v1261, 5
        %v1264 = vsel %vm1024, %v1259, %v1263
        %v1266 = vshrl.u32 %v978, 16
        %v1268 = vrot.slane %v1266, 4
        %v1269 = vshll.u32 %v978, 16
        %v1271 = vrot.slane %v1269, 5
        %v1272 = vor.u32 %v1268, %v1271
        %v1273 = vrot.slane %v1272, 4
        %v1275 = vshll.u32 %v979, 16
        %v1277 = vrot.slane %v1275, 5
        %v1278 = vsel %vm1024, %v1273, %v1277
        %v1279 = vshrl.u32 %v979, 16
        %v1281 = vrot.slane %v1279, 4
        %v1282 = vor.u32 %v1281, %v1277
        %v1283 = vrot.slane %v1282, 4
        %v1285 = vshll.u32 %v1016, 16
        %v1287 = vrot.slane %v1285, 5
        %v1288 = vsel %vm1024, %v1283, %v1287
        %v1290 = vshrl.u32 %v980, 16
        %v1292 = vrot.slane %v1290, 4
        %v1293 = vshll.u32 %v980, 16
        %v1295 = vrot.slane %v1293, 5
        %v1296 = vor.u32 %v1292, %v1295
        %v1297 = vrot.slane %v1296, 4
        %v1299 = vshll.u32 %v981, 16
        %v1301 = vrot.slane %v1299, 5
        %v1302 = vsel %vm1024, %v1297, %v1301
        %v1303 = vshrl.u32 %v981, 16
        %v1305 = vrot.slane %v1303, 4
        %v1306 = vor.u32 %v1305, %v1301
        %v1307 = vrot.slane %v1306, 4
        %v1309 = vshll.u32 %v1017, 16
        %v1311 = vrot.slane %v1309, 5
        %v1312 = vsel %vm1024, %v1307, %v1311
        %v1314 = vshrl.u32 %v982, 16
        %v1316 = vrot.slane %v1314, 4
        %v1317 = vshll.u32 %v982, 16
        %v1319 = vrot.slane %v1317, 5
        %v1320 = vor.u32 %v1316, %v1319
        %v1321 = vrot.slane %v1320, 4
        %v1323 = vshll.u32 %v983, 16
        %v1325 = vrot.slane %v1323, 5
        %v1326 = vsel %vm1024, %v1321, %v1325
        %v1327 = vshrl.u32 %v983, 16
        %v1329 = vrot.slane %v1327, 4
        %v1330 = vor.u32 %v1329, %v1325
        %v1331 = vrot.slane %v1330, 4
        %v1333 = vshll.u32 %v1018, 16
        %v1335 = vrot.slane %v1333, 5
        %v1336 = vsel %vm1024, %v1331, %v1335
        %v1338 = vshrl.u32 %v984, 16
        %v1340 = vrot.slane %v1338, 4
        %v1341 = vshll.u32 %v984, 16
        %v1343 = vrot.slane %v1341, 5
        %v1344 = vor.u32 %v1340, %v1343
        %v1345 = vrot.slane %v1344, 4
        %v1347 = vshll.u32 %v985, 16
        %v1349 = vrot.slane %v1347, 5
        %v1350 = vsel %vm1024, %v1345, %v1349
        %v1351 = vshrl.u32 %v985, 16
        %v1353 = vrot.slane %v1351, 4
        %v1354 = vor.u32 %v1353, %v1349
        %v1355 = vrot.slane %v1354, 4
        %v1357 = vshll.u32 %v1019, 16
        %v1359 = vrot.slane %v1357, 5
        %v1360 = vsel %vm1024, %v1355, %v1359
        %v1362 = vshrl.u32 %v986, 16
        %v1364 = vrot.slane %v1362, 4
        %v1365 = vshll.u32 %v986, 16
        %v1367 = vrot.slane %v1365, 5
        %v1368 = vor.u32 %v1364, %v1367
        %v1369 = vrot.slane %v1368, 4
        %v1371 = vshll.u32 %v987, 16
        %v1373 = vrot.slane %v1371, 5
        %v1374 = vsel %vm1024, %v1369, %v1373
        %v1375 = vshrl.u32 %v987, 16
        %v1377 = vrot.slane %v1375, 4
        %v1378 = vor.u32 %v1377, %v1373
        %v1379 = vrot.slane %v1378, 4
        %v1381 = vshll.u32 %v1020, 16
        %v1383 = vrot.slane %v1381, 5
        %v1384 = vsel %vm1024, %v1379, %v1383
        %v1386 = vshrl.u32 %v988, 16
        %v1388 = vrot.slane %v1386, 4
        %v1389 = vshll.u32 %v988, 16
        %v1391 = vrot.slane %v1389, 5
        %v1392 = vor.u32 %v1388, %v1391
        %v1393 = vrot.slane %v1392, 4
        %v1395 = vshll.u32 %v989, 16
        %v1397 = vrot.slane %v1395, 5
        %v1398 = vsel %vm1024, %v1393, %v1397
        %v1399 = vshrl.u32 %v989, 16
        %v1401 = vrot.slane %v1399, 4
        %v1402 = vor.u32 %v1401, %v1397
        %v1403 = vrot.slane %v1402, 4
        %v1405 = vshll.u32 %v1021, 16
        %v1407 = vrot.slane %v1405, 5
        %v1408 = vsel %vm1024, %v1403, %v1407
        %v1409 = vld [vmem:[#allocation6 + $0x40] sm:$0xf]
        %v1410 = vld [vmem:[#allocation6 + $0x44] sm:$0xf]
        %v1411 = vld [vmem:[#allocation6 + $0x48] sm:$0xf]
        %v1412 = vld [vmem:[#allocation6 + $0x4c] sm:$0xf]
        %v1413 = vld [vmem:[#allocation6 + $0x50] sm:$0xf]
        %v1414 = vld [vmem:[#allocation6 + $0x54] sm:$0xf]
        %v1415 = vld [vmem:[#allocation6 + $0x58] sm:$0xf]
        %v1416 = vld [vmem:[#allocation6 + $0x5c] sm:$0xf]
        %v1417 = vld [vmem:[#allocation6 + $0x60] sm:$0xf]
        %v1418 = vld [vmem:[#allocation6 + $0x64] sm:$0xf]
        %v1419 = vld [vmem:[#allocation6 + $0x68] sm:$0xf]
        %v1420 = vld [vmem:[#allocation6 + $0x6c] sm:$0xf]
        %v1421 = vld [vmem:[#allocation6 + $0x70] sm:$0xf]
        %v1422 = vld [vmem:[#allocation6 + $0x74] sm:$0xf]
        %v1423 = vld [vmem:[#allocation6 + $0x78] sm:$0xf]
        %v1424 = vld [vmem:[#allocation6 + $0x7c] sm:$0xf]
        %v1425 = vunpack.c.l.b16 %v1038
        %v1426 = vunpack.c.l.b16 %v1048
        %v1427 = vunpack.c.l.b16 %v1062
        %v1428 = vunpack.c.l.b16 %v1072
        %v1429 = vunpack.c.l.b16 %v1086
        %v1430 = vunpack.c.l.b16 %v1096
        %v1431 = vunpack.c.l.b16 %v1110
        %v1432 = vunpack.c.l.b16 %v1120
        %v1433 = vunpack.c.l.b16 %v1134
        %v1434 = vunpack.c.l.b16 %v1144
        %v1435 = vunpack.c.l.b16 %v1158
        %v1436 = vunpack.c.l.b16 %v1168
        %v1437 = vunpack.c.l.b16 %v1182
        %v1438 = vunpack.c.l.b16 %v1192
        %v1439 = vunpack.c.l.b16 %v1206
        %v1440 = vunpack.c.l.b16 %v1216
        %v1441 = vunpack.c.l.b16 %v1230
        %v1442 = vunpack.c.l.b16 %v1240
        %v1443 = vunpack.c.l.b16 %v1254
        %v1444 = vunpack.c.l.b16 %v1264
        %v1445 = vunpack.c.l.b16 %v1278
        %v1446 = vunpack.c.l.b16 %v1288
        %v1447 = vunpack.c.l.b16 %v1302
        %v1448 = vunpack.c.l.b16 %v1312
        %v1449 = vunpack.c.l.b16 %v1326
        %v1450 = vunpack.c.l.b16 %v1336
        %v1451 = vunpack.c.l.b16 %v1350
        %v1452 = vunpack.c.l.b16 %v1360
        %v1453 = vunpack.c.l.b16 %v1374
        %v1454 = vunpack.c.l.b16 %v1384
        %v1455 = vunpack.c.l.b16 %v1398
        %v1456 = vunpack.c.l.b16 %v1408
        %v1457 = vpack.c.b16 %v1426, %v1425
        %v1458 = vpack.c.b16 %v1428, %v1427
        %v1459 = vpack.c.b16 %v1430, %v1429
        %v1460 = vpack.c.b16 %v1432, %v1431
        %v1461 = vpack.c.b16 %v1434, %v1433
        %v1462 = vpack.c.b16 %v1436, %v1435
        %v1463 = vpack.c.b16 %v1438, %v1437
        %v1464 = vpack.c.b16 %v1440, %v1439
        %v1465 = vpack.c.b16 %v1442, %v1441
        %v1466 = vpack.c.b16 %v1444, %v1443
        %v1467 = vpack.c.b16 %v1446, %v1445
        %v1468 = vpack.c.b16 %v1448, %v1447
        %v1469 = vpack.c.b16 %v1450, %v1449
        %v1470 = vpack.c.b16 %v1452, %v1451
        %v1471 = vpack.c.b16 %v1454, %v1453
        %v1472 = vpack.c.b16 %v1456, %v1455
        %v1505 = vunpack.c.l.b16 %v1409
        %v1506 = vunpack.c.l.b16 %v1410
        %v1507 = vunpack.c.l.b16 %v1411
        %v1508 = vunpack.c.l.b16 %v1412
        %v1509 = vunpack.c.l.b16 %v1413
        %v1510 = vunpack.c.l.b16 %v1414
        %v1511 = vunpack.c.l.b16 %v1415
        %v1512 = vunpack.c.l.b16 %v1416
        %v1513 = vunpack.c.l.b16 %v1417
        %v1514 = vunpack.c.l.b16 %v1418
        %v1515 = vunpack.c.l.b16 %v1419
        %v1516 = vunpack.c.l.b16 %v1420
        %v1517 = vunpack.c.l.b16 %v1421
        %v1518 = vunpack.c.l.b16 %v1422
        %v1519 = vunpack.c.l.b16 %v1423
        %v1520 = vunpack.c.l.b16 %v1424
        %v1521 = vpack.c.b16 %v1506, %v1505
        %v1522 = vpack.c.b16 %v1508, %v1507
        %v1523 = vpack.c.b16 %v1510, %v1509
        %v1524 = vpack.c.b16 %v1512, %v1511
        %v1525 = vpack.c.b16 %v1514, %v1513
        %v1526 = vpack.c.b16 %v1516, %v1515
        %v1527 = vpack.c.b16 %v1518, %v1517
        %v1528 = vpack.c.b16 %v1520, %v1519
        %1537 = vmatprep.subr.bf16.mxu0 0
        %1538 = vmatpush1.bf16.msra.mxu0 %v1521
        %1539 = vmatprep.subr.bf16.mxu0 0
        %1540 = vmatpush1.bf16.msra.mxu0 %v1522
        %1541 = vmatprep.subr.bf16.mxu0 0
        %1542 = vmatpush1.bf16.msra.mxu0 %v1523
        %1543 = vmatprep.subr.bf16.mxu0 0
        %1544 = vmatpush1.bf16.msra.mxu0 %v1524
        %1545 = vmatprep.subr.bf16.mxu0 0
        %1546 = vmatpush1.bf16.msra.mxu0 %v1525
        %1547 = vmatprep.subr.bf16.mxu0 0
        %1548 = vmatpush1.bf16.msra.mxu0 %v1526
        %1549 = vmatprep.subr.bf16.mxu0 0
        %1550 = vmatpush1.bf16.msra.mxu0 %v1527
        %1551 = vmatprep.subr.bf16.mxu0 0
        %1552 = vmatpush1.bf16.msra.mxu0 %v1528
        %1553 = vmatprep.subr.bf16.mxu0 0
        %1554 = vmatpush1.bf16.msra.mxu0 0
        %1555 = vmatprep.subr.bf16.mxu0 0
        %1556 = vmatpush1.bf16.msra.mxu0 0
        %1557 = vmatprep.subr.bf16.mxu0 0
        %1558 = vmatpush1.bf16.msra.mxu0 0
        %1559 = vmatprep.subr.bf16.mxu0 0
        %1560 = vmatpush1.bf16.msra.mxu0 0
        %1561 = vmatprep.subr.bf16.mxu0 0
        %1562 = vmatpush1.bf16.msra.mxu0 0
        %1563 = vmatprep.subr.bf16.mxu0 0
        %1564 = vmatpush1.bf16.msra.mxu0 0
        %1565 = vmatprep.subr.bf16.mxu0 0
        %1566 = vmatpush1.bf16.msra.mxu0 0
        %1567 = vmatprep.subr.bf16.mxu0 0
        %1568 = vmatpush1.bf16.msra.mxu0 0
        %1569 = vmatprep.mubr.bf16.mxu0 0
        %1570 = vmatmul.mubr.bf16.gmra.mrb[0].mxu0 %v1457
        %v1571 = vpop.f32.mrb[0].mxu0
        %v1572 = vadd.f32 0.0, %v1571
        %v1573 = vpop.f32.mrb[0].mxu0
        %v1574 = vpop.f32.mrb[0].mxu0
        %v1575 = vadd.f32 0.0, %v1574
        %v1576 = vpop.f32.mrb[0].mxu0
        %1577 = vmatprep.mubr.bf16.mxu0 0
        %1578 = vmatmul.mubr.bf16.gmra.mrb[0].mxu0 %v1458
        %v1579 = vpop.f32.mrb[0].mxu0
        %v1580 = vadd.f32 0.0, %v1579
        %v1581 = vpop.f32.mrb[0].mxu0
        %v1582 = vpop.f32.mrb[0].mxu0
        %v1583 = vadd.f32 0.0, %v1582
        %v1584 = vpop.f32.mrb[0].mxu0
        %1585 = vmatprep.mubr.bf16.mxu0 0
        %1586 = vmatmul.mubr.bf16.gmra.mrb[0].mxu0 %v1459
        %v1587 = vpop.f32.mrb[0].mxu0
        %v1588 = vadd.f32 0.0, %v1587
        %v1589 = vpop.f32.mrb[0].mxu0
        %v1590 = vpop.f32.mrb[0].mxu0
        %v1591 = vadd.f32 0.0, %v1590
        %v1592 = vpop.f32.mrb[0].mxu0
        %1593 = vmatprep.mubr.bf16.mxu0 0
        %1594 = vmatmul.mubr.bf16.gmra.mrb[0].mxu0 %v1460
        %v1595 = vpop.f32.mrb[0].mxu0
        %v1596 = vadd.f32 0.0, %v1595
        %v1597 = vpop.f32.mrb[0].mxu0
        %v1598 = vpop.f32.mrb[0].mxu0
        %v1599 = vadd.f32 0.0, %v1598
        %v1600 = vpop.f32.mrb[0].mxu0
        %1601 = vmatprep.mubr.bf16.mxu0 0
        %1602 = vmatmul.mubr.bf16.gmra.mrb[0].mxu0 %v1461
        %v1603 = vpop.f32.mrb[0].mxu0
        %v1604 = vadd.f32 0.0, %v1603
        %v1605 = vpop.f32.mrb[0].mxu0
        %v1606 = vpop.f32.mrb[0].mxu0
        %v1607 = vadd.f32 0.0, %v1606
        %v1608 = vpop.f32.mrb[0].mxu0
        %1609 = vmatprep.mubr.bf16.mxu0 0
        %1610 = vmatmul.mubr.bf16.gmra.mrb[0].mxu0 %v1462
        %v1611 = vpop.f32.mrb[0].mxu0
        %v1612 = vadd.f32 0.0, %v1611
        %v1613 = vpop.f32.mrb[0].mxu0
        %v1614 = vpop.f32.mrb[0].mxu0
        %v1615 = vadd.f32 0.0, %v1614
        %v1616 = vpop.f32.mrb[0].mxu0
        %1617 = vmatprep.mubr.bf16.mxu0 0
        %1618 = vmatmul.mubr.bf16.gmra.mrb[0].mxu0 %v1463
        %v1619 = vpop.f32.mrb[0].mxu0
        %v1620 = vadd.f32 0.0, %v1619
        %v1621 = vpop.f32.mrb[0].mxu0
        %v1622 = vpop.f32.mrb[0].mxu0
        %v1623 = vadd.f32 0.0, %v1622
        %v1624 = vpop.f32.mrb[0].mxu0
        %1625 = vmatprep.mubr.bf16.mxu0 0
        %1626 = vmatmul.mubr.bf16.gmra.mrb[0].mxu0 %v1464
        %v1627 = vpop.f32.mrb[0].mxu0
        %v1628 = vadd.f32 0.0, %v1627
        %v1629 = vpop.f32.mrb[0].mxu0
        %v1630 = vpop.f32.mrb[0].mxu0
        %v1631 = vadd.f32 0.0, %v1630
        %v1632 = vpop.f32.mrb[0].mxu0
        %1633 = vmatprep.mubr.bf16.mxu0 0
        %1634 = vmatmul.mubr.bf16.gmra.mrb[0].mxu0 %v1465
        %v1635 = vpop.f32.mrb[0].mxu0
        %v1636 = vadd.f32 0.0, %v1635
        %v1637 = vpop.f32.mrb[0].mxu0
        %v1638 = vpop.f32.mrb[0].mxu0
        %v1639 = vadd.f32 0.0, %v1638
        %v1640 = vpop.f32.mrb[0].mxu0
        %1641 = vmatprep.mubr.bf16.mxu0 0
        %1642 = vmatmul.mubr.bf16.gmra.mrb[0].mxu0 %v1466
        %v1643 = vpop.f32.mrb[0].mxu0
        %v1644 = vadd.f32 0.0, %v1643
        %v1645 = vpop.f32.mrb[0].mxu0
        %v1646 = vpop.f32.mrb[0].mxu0
        %v1647 = vadd.f32 0.0, %v1646
        %v1648 = vpop.f32.mrb[0].mxu0
        %1649 = vmatprep.mubr.bf16.mxu0 0
        %1650 = vmatmul.mubr.bf16.gmra.mrb[0].mxu0 %v1467
        %v1651 = vpop.f32.mrb[0].mxu0
        %v1652 = vadd.f32 0.0, %v1651
        %v1653 = vpop.f32.mrb[0].mxu0
        %v1654 = vpop.f32.mrb[0].mxu0
        %v1655 = vadd.f32 0.0, %v1654
        %v1656 = vpop.f32.mrb[0].mxu0
        %1657 = vmatprep.mubr.bf16.mxu0 0
        %1658 = vmatmul.mubr.bf16.gmra.mrb[0].mxu0 %v1468
        %v1659 = vpop.f32.mrb[0].mxu0
        %v1660 = vadd.f32 0.0, %v1659
        %v1661 = vpop.f32.mrb[0].mxu0
        %v1662 = vpop.f32.mrb[0].mxu0
        %v1663 = vadd.f32 0.0, %v1662
        %v1664 = vpop.f32.mrb[0].mxu0
        %1665 = vmatprep.mubr.bf16.mxu0 0
        %1666 = vmatmul.mubr.bf16.gmra.mrb[0].mxu0 %v1469
        %v1667 = vpop.f32.mrb[0].mxu0
        %v1668 = vadd.f32 0.0, %v1667
        %v1669 = vpop.f32.mrb[0].mxu0
        %v1670 = vpop.f32.mrb[0].mxu0
        %v1671 = vadd.f32 0.0, %v1670
        %v1672 = vpop.f32.mrb[0].mxu0
        %1673 = vmatprep.mubr.bf16.mxu0 0
        %1674 = vmatmul.mubr.bf16.gmra.mrb[0].mxu0 %v1470
        %v1675 = vpop.f32.mrb[0].mxu0
        %v1676 = vadd.f32 0.0, %v1675
        %v1677 = vpop.f32.mrb[0].mxu0
        %v1678 = vpop.f32.mrb[0].mxu0
        %v1679 = vadd.f32 0.0, %v1678
        %v1680 = vpop.f32.mrb[0].mxu0
        %1681 = vmatprep.mubr.bf16.mxu0 0
        %1682 = vmatmul.mubr.bf16.gmra.mrb[0].mxu0 %v1471
        %v1683 = vpop.f32.mrb[0].mxu0
        %v1684 = vadd.f32 0.0, %v1683
        %v1685 = vpop.f32.mrb[0].mxu0
        %v1686 = vpop.f32.mrb[0].mxu0
        %v1687 = vadd.f32 0.0, %v1686
        %v1688 = vpop.f32.mrb[0].mxu0
        %1689 = vmatprep.mubr.bf16.mxu0 0
        %1690 = vmatmul.mubr.bf16.gmra.mrb[0].mxu0 %v1472
        %v1691 = vpop.f32.mrb[0].mxu0
        %v1692 = vadd.f32 0.0, %v1691
        %v1693 = vpop.f32.mrb[0].mxu0
        %v1694 = vpop.f32.mrb[0].mxu0
        %v1695 = vadd.f32 0.0, %v1694
        %v1696 = vpop.f32.mrb[0].mxu0
        %1697 = vdwg.mxu0
        %v1730 = vunpack.c.l.b16 %v958
        %v1731 = vunpack.c.l.b16 %v959
        %v1732 = vunpack.c.l.b16 %v960
        %v1733 = vunpack.c.l.b16 %v961
        %v1734 = vunpack.c.l.b16 %v962
        %v1735 = vunpack.c.l.b16 %v963
        %v1736 = vunpack.c.l.b16 %v964
        %v1737 = vunpack.c.l.b16 %v965
        %v1738 = vunpack.c.l.b16 %v966
        %v1739 = vunpack.c.l.b16 %v967
        %v1740 = vunpack.c.l.b16 %v968
        %v1741 = vunpack.c.l.b16 %v969
        %v1742 = vunpack.c.l.b16 %v970
        %v1743 = vunpack.c.l.b16 %v971
        %v1744 = vunpack.c.l.b16 %v972
        %v1745 = vunpack.c.l.b16 %v973
        %v1746 = vunpack.c.l.b16 %v974
        %v1747 = vunpack.c.l.b16 %v975
        %v1748 = vunpack.c.l.b16 %v976
        %v1749 = vunpack.c.l.b16 %v977
        %v1750 = vunpack.c.l.b16 %v978
        %v1751 = vunpack.c.l.b16 %v979
        %v1752 = vunpack.c.l.b16 %v980
        %v1753 = vunpack.c.l.b16 %v981
        %v1754 = vunpack.c.l.b16 %v982
        %v1755 = vunpack.c.l.b16 %v983
        %v1756 = vunpack.c.l.b16 %v984
        %v1757 = vunpack.c.l.b16 %v985
        %v1758 = vunpack.c.l.b16 %v986
        %v1759 = vunpack.c.l.b16 %v987
        %v1760 = vunpack.c.l.b16 %v988
        %v1761 = vunpack.c.l.b16 %v989
        %v1762 = vpack.c.b16 %v1731, %v1730
        %v1763 = vpack.c.b16 %v1733, %v1732
        %v1764 = vpack.c.b16 %v1735, %v1734
        %v1765 = vpack.c.b16 %v1737, %v1736
        %v1766 = vpack.c.b16 %v1739, %v1738
        %v1767 = vpack.c.b16 %v1741, %v1740
        %v1768 = vpack.c.b16 %v1743, %v1742
        %v1769 = vpack.c.b16 %v1745, %v1744
        %v1770 = vpack.c.b16 %v1747, %v1746
        %v1771 = vpack.c.b16 %v1749, %v1748
        %v1772 = vpack.c.b16 %v1751, %v1750
        %v1773 = vpack.c.b16 %v1753, %v1752
        %v1774 = vpack.c.b16 %v1755, %v1754
        %v1775 = vpack.c.b16 %v1757, %v1756
        %v1776 = vpack.c.b16 %v1759, %v1758
        %v1777 = vpack.c.b16 %v1761, %v1760
        %v1810 = vunpack.c.l.b16 %v990
        %v1811 = vunpack.c.l.b16 %v991
        %v1812 = vunpack.c.l.b16 %v992
        %v1813 = vunpack.c.l.b16 %v993
        %v1814 = vunpack.c.l.b16 %v994
        %v1815 = vunpack.c.l.b16 %v995
        %v1816 = vunpack.c.l.b16 %v996
        %v1817 = vunpack.c.l.b16 %v997
        %v1818 = vunpack.c.l.b16 %v998
        %v1819 = vunpack.c.l.b16 %v999
        %v1820 = vunpack.c.l.b16 %v1000
        %v1821 = vunpack.c.l.b16 %v1001
        %v1822 = vunpack.c.l.b16 %v1002
        %v1823 = vunpack.c.l.b16 %v1003
        %v1824 = vunpack.c.l.b16 %v1004
        %v1825 = vunpack.c.l.b16 %v1005
        %v1826 = vpack.c.b16 %v1811, %v1810
        %v1827 = vpack.c.b16 %v1813, %v1812
        %v1828 = vpack.c.b16 %v1815, %v1814
        %v1829 = vpack.c.b16 %v1817, %v1816
        %v1830 = vpack.c.b16 %v1819, %v1818
        %v1831 = vpack.c.b16 %v1821, %v1820
        %v1832 = vpack.c.b16 %v1823, %v1822
        %v1833 = vpack.c.b16 %v1825, %v1824
        %1842 = vmatprep.subr.bf16.mxu0 0
        %1843 = vmatpush1.bf16.msra.mxu0 %v1826
        %1844 = vmatprep.subr.bf16.mxu0 0
        %1845 = vmatpush1.bf16.msra.mxu0 %v1827
        %1846 = vmatprep.subr.bf16.mxu0 0
        %1847 = vmatpush1.bf16.msra.mxu0 %v1828
        %1848 = vmatprep.subr.bf16.mxu0 0
        %1849 = vmatpush1.bf16.msra.mxu0 %v1829
        %1850 = vmatprep.subr.bf16.mxu0 0
        %1851 = vmatpush1.bf16.msra.mxu0 %v1830
        %1852 = vmatprep.subr.bf16.mxu0 0
        %1853 = vmatpush1.bf16.msra.mxu0 %v1831
        %1854 = vmatprep.subr.bf16.mxu0 0
        %1855 = vmatpush1.bf16.msra.mxu0 %v1832
        %1856 = vmatprep.subr.bf16.mxu0 0
        %1857 = vmatpush1.bf16.msra.mxu0 %v1833
        %1858 = vmatprep.subr.bf16.mxu0 0
        %1859 = vmatpush1.bf16.msra.mxu0 0
        %1860 = vmatprep.subr.bf16.mxu0 0
        %1861 = vmatpush1.bf16.msra.mxu0 0
        %1862 = vmatprep.subr.bf16.mxu0 0
        %1863 = vmatpush1.bf16.msra.mxu0 0
        %1864 = vmatprep.subr.bf16.mxu0 0
        %1865 = vmatpush1.bf16.msra.mxu0 0
        %1866 = vmatprep.subr.bf16.mxu0 0
        %1867 = vmatpush1.bf16.msra.mxu0 0
        %1868 = vmatprep.subr.bf16.mxu0 0
        %1869 = vmatpush1.bf16.msra.mxu0 0
        %1870 = vmatprep.subr.bf16.mxu0 0
        %1871 = vmatpush1.bf16.msra.mxu0 0
        %1872 = vmatprep.subr.bf16.mxu0 0
        %1873 = vmatpush1.bf16.msra.mxu0 0
        %1874 = vmatprep.mubr.bf16.mxu0 0
        %1875 = vmatmul.mubr.bf16.gmra.mrb[0].mxu0 %v1762
        %v1876 = vpop.f32.mrb[0].mxu0
        %v1877 = vadd.f32 %v1572, %v1876
        %v1878 = vpop.f32.mrb[0].mxu0
        %v1879 = vpop.f32.mrb[0].mxu0
        %v1880 = vadd.f32 %v1575, %v1879
        %v1881 = vpop.f32.mrb[0].mxu0
        %1882 = vmatprep.mubr.bf16.mxu0 0
        %1883 = vmatmul.mubr.bf16.gmra.mrb[0].mxu0 %v1763
        %v1884 = vpop.f32.mrb[0].mxu0
        %v1885 = vadd.f32 %v1580, %v1884
        %v1886 = vpop.f32.mrb[0].mxu0
        %v1887 = vpop.f32.mrb[0].mxu0
        %v1888 = vadd.f32 %v1583, %v1887
        %v1889 = vpop.f32.mrb[0].mxu0
        %1890 = vmatprep.mubr.bf16.mxu0 0
        %1891 = vmatmul.mubr.bf16.gmra.mrb[0].mxu0 %v1764
        %v1892 = vpop.f32.mrb[0].mxu0
        %v1893 = vadd.f32 %v1588, %v1892
        %v1894 = vpop.f32.mrb[0].mxu0
        %v1895 = vpop.f32.mrb[0].mxu0
        %v1896 = vadd.f32 %v1591, %v1895
        %v1897 = vpop.f32.mrb[0].mxu0
        %1898 = vmatprep.mubr.bf16.mxu0 0
        %1899 = vmatmul.mubr.bf16.gmra.mrb[0].mxu0 %v1765
        %v1900 = vpop.f32.mrb[0].mxu0
        %v1901 = vadd.f32 %v1596, %v1900
        %v1902 = vpop.f32.mrb[0].mxu0
        %v1903 = vpop.f32.mrb[0].mxu0
        %v1904 = vadd.f32 %v1599, %v1903
        %v1905 = vpop.f32.mrb[0].mxu0
        %1906 = vmatprep.mubr.bf16.mxu0 0
        %1907 = vmatmul.mubr.bf16.gmra.mrb[0].mxu0 %v1766
        %v1908 = vpop.f32.mrb[0].mxu0
        %v1909 = vadd.f32 %v1604, %v1908
        %v1910 = vpop.f32.mrb[0].mxu0
        %v1911 = vpop.f32.mrb[0].mxu0
        %v1912 = vadd.f32 %v1607, %v1911
        %v1913 = vpop.f32.mrb[0].mxu0
        %1914 = vmatprep.mubr.bf16.mxu0 0
        %1915 = vmatmul.mubr.bf16.gmra.mrb[0].mxu0 %v1767
        %v1916 = vpop.f32.mrb[0].mxu0
        %v1917 = vadd.f32 %v1612, %v1916
        %v1918 = vpop.f32.mrb[0].mxu0
        %v1919 = vpop.f32.mrb[0].mxu0
        %v1920 = vadd.f32 %v1615, %v1919
        %v1921 = vpop.f32.mrb[0].mxu0
        %1922 = vmatprep.mubr.bf16.mxu0 0
        %1923 = vmatmul.mubr.bf16.gmra.mrb[0].mxu0 %v1768
        %v1924 = vpop.f32.mrb[0].mxu0
        %v1925 = vadd.f32 %v1620, %v1924
        %v1926 = vpop.f32.mrb[0].mxu0
        %v1927 = vpop.f32.mrb[0].mxu0
        %v1928 = vadd.f32 %v1623, %v1927
        %v1929 = vpop.f32.mrb[0].mxu0
        %1930 = vmatprep.mubr.bf16.mxu0 0
        %1931 = vmatmul.mubr.bf16.gmra.mrb[0].mxu0 %v1769
        %v1932 = vpop.f32.mrb[0].mxu0
        %v1933 = vadd.f32 %v1628, %v1932
        %v1934 = vpop.f32.mrb[0].mxu0
        %v1935 = vpop.f32.mrb[0].mxu0
        %v1936 = vadd.f32 %v1631, %v1935
        %v1937 = vpop.f32.mrb[0].mxu0
        %1938 = vmatprep.mubr.bf16.mxu0 0
        %1939 = vmatmul.mubr.bf16.gmra.mrb[0].mxu0 %v1770
        %v1940 = vpop.f32.mrb[0].mxu0
        %v1941 = vadd.f32 %v1636, %v1940
        %v1942 = vpop.f32.mrb[0].mxu0
        %v1943 = vpop.f32.mrb[0].mxu0
        %v1944 = vadd.f32 %v1639, %v1943
        %v1945 = vpop.f32.mrb[0].mxu0
        %1946 = vmatprep.mubr.bf16.mxu0 0
        %1947 = vmatmul.mubr.bf16.gmra.mrb[0].mxu0 %v1771
        %v1948 = vpop.f32.mrb[0].mxu0
        %v1949 = vadd.f32 %v1644, %v1948
        %v1950 = vpop.f32.mrb[0].mxu0
        %v1951 = vpop.f32.mrb[0].mxu0
        %v1952 = vadd.f32 %v1647, %v1951
        %v1953 = vpop.f32.mrb[0].mxu0
        %1954 = vmatprep.mubr.bf16.mxu0 0
        %1955 = vmatmul.mubr.bf16.gmra.mrb[0].mxu0 %v1772
        %v1956 = vpop.f32.mrb[0].mxu0
        %v1957 = vadd.f32 %v1652, %v1956
        %v1958 = vpop.f32.mrb[0].mxu0
        %v1959 = vpop.f32.mrb[0].mxu0
        %v1960 = vadd.f32 %v1655, %v1959
        %v1961 = vpop.f32.mrb[0].mxu0
        %1962 = vmatprep.mubr.bf16.mxu0 0
        %1963 = vmatmul.mubr.bf16.gmra.mrb[0].mxu0 %v1773
        %v1964 = vpop.f32.mrb[0].mxu0
        %v1965 = vadd.f32 %v1660, %v1964
        %v1966 = vpop.f32.mrb[0].mxu0
        %v1967 = vpop.f32.mrb[0].mxu0
        %v1968 = vadd.f32 %v1663, %v1967
        %v1969 = vpop.f32.mrb[0].mxu0
        %1970 = vmatprep.mubr.bf16.mxu0 0
        %1971 = vmatmul.mubr.bf16.gmra.mrb[0].mxu0 %v1774
        %v1972 = vpop.f32.mrb[0].mxu0
        %v1973 = vadd.f32 %v1668, %v1972
        %v1974 = vpop.f32.mrb[0].mxu0
        %v1975 = vpop.f32.mrb[0].mxu0
        %v1976 = vadd.f32 %v1671, %v1975
        %v1977 = vpop.f32.mrb[0].mxu0
        %1978 = vmatprep.mubr.bf16.mxu0 0
        %1979 = vmatmul.mubr.bf16.gmra.mrb[0].mxu0 %v1775
        %v1980 = vpop.f32.mrb[0].mxu0
        %v1981 = vadd.f32 %v1676, %v1980
        %v1982 = vpop.f32.mrb[0].mxu0
        %v1983 = vpop.f32.mrb[0].mxu0
        %v1984 = vadd.f32 %v1679, %v1983
        %v1985 = vpop.f32.mrb[0].mxu0
        %1986 = vmatprep.mubr.bf16.mxu0 0
        %1987 = vmatmul.mubr.bf16.gmra.mrb[0].mxu0 %v1776
        %v1988 = vpop.f32.mrb[0].mxu0
        %v1989 = vadd.f32 %v1684, %v1988
        %v1990 = vpop.f32.mrb[0].mxu0
        %v1991 = vpop.f32.mrb[0].mxu0
        %v1992 = vadd.f32 %v1687, %v1991
        %v1993 = vpop.f32.mrb[0].mxu0
        %1994 = vmatprep.mubr.bf16.mxu0 0
        %1995 = vmatmul.mubr.bf16.gmra.mrb[0].mxu0 %v1777
        %v1996 = vpop.f32.mrb[0].mxu0
        %v1997 = vadd.f32 %v1692, %v1996
        %v1998 = vpop.f32.mrb[0].mxu0
        %v1999 = vpop.f32.mrb[0].mxu0
        %v2000 = vadd.f32 %v1695, %v1999
        %v2001 = vpop.f32.mrb[0].mxu0
        %2002 = vdwg.mxu0
        %v2003 = vld [vmem:[#allocation2] sm:$0xe]
        %v2004 = vld [vmem:[#allocation2 + $0xc] sm:$0xe]
        %v2005 = vld [vmem:[#allocation2 + $0x18] sm:$0xe]
        %v2006 = vld [vmem:[#allocation2 + $0x24] sm:$0xe]
        %v2007 = vld [vmem:[#allocation2 + $0x30] sm:$0xe]
        %v2008 = vld [vmem:[#allocation2 + $0x3c] sm:$0xe]
        %v2009 = vld [vmem:[#allocation2 + $0x48] sm:$0xe]
        %v2010 = vld [vmem:[#allocation2 + $0x54] sm:$0xe]
        %v2011 = vld [vmem:[#allocation2 + $0x60] sm:$0xe]
        %v2012 = vld [vmem:[#allocation2 + $0x6c] sm:$0xe]
        %v2013 = vld [vmem:[#allocation2 + $0x78] sm:$0xe]
        %v2014 = vld [vmem:[#allocation2 + $0x84] sm:$0xe]
        %v2015 = vld [vmem:[#allocation2 + $0x90] sm:$0xe]
        %v2016 = vld [vmem:[#allocation2 + $0x9c] sm:$0xe]
        %v2017 = vld [vmem:[#allocation2 + $0xa8] sm:$0xe]
        %v2018 = vld [vmem:[#allocation2 + $0xb4] sm:$0xe]
        %vm2051 = vcmask 1042432
        %vm2052 = vcmask 1046532
        %vm2053 = vmor %vm2051, %vm2052
        %v2054 = vrot.slane %v2003, 5
        %v2055 = vrot.slane %v2054, 4
        %v2056 = vrot.slane %v959, 5
        %v2057 = vsel %vm2053, %v2055, %v2056
        %v2058 = vrot.slane %v2056, 4
        %v2059 = vrot.slane %v1006, 5
        %v2060 = vsel %vm2053, %v2058, %v2059
        %v2061 = vrot.slane %v2004, 5
        %v2062 = vrot.slane %v2061, 4
        %v2063 = vrot.slane %v961, 5
        %v2064 = vsel %vm2053, %v2062, %v2063
        %v2065 = vrot.slane %v2063, 4
        %v2066 = vrot.slane %v1007, 5
        %v2067 = vsel %vm2053, %v2065, %v2066
        %v2068 = vrot.slane %v2005, 5
        %v2069 = vrot.slane %v2068, 4
        %v2070 = vrot.slane %v963, 5
        %v2071 = vsel %vm2053, %v2069, %v2070
        %v2072 = vrot.slane %v2070, 4
        %v2073 = vrot.slane %v1008, 5
        %v2074 = vsel %vm2053, %v2072, %v2073
        %v2075 = vrot.slane %v2006, 5
        %v2076 = vrot.slane %v2075, 4
        %v2077 = vrot.slane %v965, 5
        %v2078 = vsel %vm2053, %v2076, %v2077
        %v2079 = vrot.slane %v2077, 4
        %v2080 = vrot.slane %v1009, 5
        %v2081 = vsel %vm2053, %v2079, %v2080
        %v2082 = vrot.slane %v2007, 5
        %v2083 = vrot.slane %v2082, 4
        %v2084 = vrot.slane %v967, 5
        %v2085 = vsel %vm2053, %v2083, %v2084
        %v2086 = vrot.slane %v2084, 4
        %v2087 = vrot.slane %v1010, 5
        %v2088 = vsel %vm2053, %v2086, %v2087
        %v2089 = vrot.slane %v2008, 5
        %v2090 = vrot.slane %v2089, 4
        %v2091 = vrot.slane %v969, 5
        %v2092 = vsel %vm2053, %v2090, %v2091
        %v2093 = vrot.slane %v2091, 4
        %v2094 = vrot.slane %v1011, 5
        %v2095 = vsel %vm2053, %v2093, %v2094
        %v2096 = vrot.slane %v2009, 5
        %v2097 = vrot.slane %v2096, 4
        %v2098 = vrot.slane %v971, 5
        %v2099 = vsel %vm2053, %v2097, %v2098
        %v2100 = vrot.slane %v2098, 4
        %v2101 = vrot.slane %v1012, 5
        %v2102 = vsel %vm2053, %v2100, %v2101
        %v2103 = vrot.slane %v2010, 5
        %v2104 = vrot.slane %v2103, 4
        %v2105 = vrot.slane %v973, 5
        %v2106 = vsel %vm2053, %v2104, %v2105
        %v2107 = vrot.slane %v2105, 4
        %v2108 = vrot.slane %v1013, 5
        %v2109 = vsel %vm2053, %v2107, %v2108
        %v2110 = vrot.slane %v2011, 5
        %v2111 = vrot.slane %v2110, 4
        %v2112 = vrot.slane %v975, 5
        %v2113 = vsel %vm2053, %v2111, %v2112
        %v2114 = vrot.slane %v2112, 4
        %v2115 = vrot.slane %v1014, 5
        %v2116 = vsel %vm2053, %v2114, %v2115
        %v2117 = vrot.slane %v2012, 5
        %v2118 = vrot.slane %v2117, 4
        %v2119 = vrot.slane %v977, 5
        %v2120 = vsel %vm2053, %v2118, %v2119
        %v2121 = vrot.slane %v2119, 4
        %v2122 = vrot.slane %v1015, 5
        %v2123 = vsel %vm2053, %v2121, %v2122
        %v2124 = vrot.slane %v2013, 5
        %v2125 = vrot.slane %v2124, 4
        %v2126 = vrot.slane %v979, 5
        %v2127 = vsel %vm2053, %v2125, %v2126
        %v2128 = vrot.slane %v2126, 4
        %v2129 = vrot.slane %v1016, 5
        %v2130 = vsel %vm2053, %v2128, %v2129
        %v2131 = vrot.slane %v2014, 5
        %v2132 = vrot.slane %v2131, 4
        %v2133 = vrot.slane %v981, 5
        %v2134 = vsel %vm2053, %v2132, %v2133
        %v2135 = vrot.slane %v2133, 4
        %v2136 = vrot.slane %v1017, 5
        %v2137 = vsel %vm2053, %v2135, %v2136
        %v2138 = vrot.slane %v2015, 5
        %v2139 = vrot.slane %v2138, 4
        %v2140 = vrot.slane %v983, 5
        %v2141 = vsel %vm2053, %v2139, %v2140
        %v2142 = vrot.slane %v2140, 4
        %v2143 = vrot.slane %v1018, 5
        %v2144 = vsel %vm2053, %v2142, %v2143
        %v2145 = vrot.slane %v2016, 5
        %v2146 = vrot.slane %v2145, 4
        %v2147 = vrot.slane %v985, 5
        %v2148 = vsel %vm2053, %v2146, %v2147
        %v2149 = vrot.slane %v2147, 4
        %v2150 = vrot.slane %v1019, 5
        %v2151 = vsel %vm2053, %v2149, %v2150
        %v2152 = vrot.slane %v2017, 5
        %v2153 = vrot.slane %v2152, 4
        %v2154 = vrot.slane %v987, 5
        %v2155 = vsel %vm2053, %v2153, %v2154
        %v2156 = vrot.slane %v2154, 4
        %v2157 = vrot.slane %v1020, 5
        %v2158 = vsel %vm2053, %v2156, %v2157
        %v2159 = vrot.slane %v2018, 5
        %v2160 = vrot.slane %v2159, 4
        %v2161 = vrot.slane %v989, 5
        %v2162 = vsel %vm2053, %v2160, %v2161
        %v2163 = vrot.slane %v2161, 4
        %v2164 = vrot.slane %v1021, 5
        %v2165 = vsel %vm2053, %v2163, %v2164
        %v2166 = vld [vmem:[#allocation6 + $0x80] sm:$0xf]
        %v2167 = vld [vmem:[#allocation6 + $0x84] sm:$0xf]
        %v2168 = vld [vmem:[#allocation6 + $0x88] sm:$0xf]
        %v2169 = vld [vmem:[#allocation6 + $0x8c] sm:$0xf]
        %v2170 = vld [vmem:[#allocation6 + $0x90] sm:$0xf]
        %v2171 = vld [vmem:[#allocation6 + $0x94] sm:$0xf]
        %v2172 = vld [vmem:[#allocation6 + $0x98] sm:$0xf]
        %v2173 = vld [vmem:[#allocation6 + $0x9c] sm:$0xf]
        %v2174 = vld [vmem:[#allocation6 + $0xa0] sm:$0xf]
        %v2175 = vld [vmem:[#allocation6 + $0xa4] sm:$0xf]
        %v2176 = vld [vmem:[#allocation6 + $0xa8] sm:$0xf]
        %v2177 = vld [vmem:[#allocation6 + $0xac] sm:$0xf]
        %v2178 = vld [vmem:[#allocation6 + $0xb0] sm:$0xf]
        %v2179 = vld [vmem:[#allocation6 + $0xb4] sm:$0xf]
        %v2180 = vld [vmem:[#allocation6 + $0xb8] sm:$0xf]
        %v2181 = vld [vmem:[#allocation6 + $0xbc] sm:$0xf]
        %v2182 = vunpack.c.l.b16 %v2057
        %v2183 = vunpack.c.l.b16 %v2060
        %v2184 = vunpack.c.l.b16 %v2064
        %v2185 = vunpack.c.l.b16 %v2067
        %v2186 = vunpack.c.l.b16 %v2071
        %v2187 = vunpack.c.l.b16 %v2074
        %v2188 = vunpack.c.l.b16 %v2078
        %v2189 = vunpack.c.l.b16 %v2081
        %v2190 = vunpack.c.l.b16 %v2085
        %v2191 = vunpack.c.l.b16 %v2088
        %v2192 = vunpack.c.l.b16 %v2092
        %v2193 = vunpack.c.l.b16 %v2095
        %v2194 = vunpack.c.l.b16 %v2099
        %v2195 = vunpack.c.l.b16 %v2102
        %v2196 = vunpack.c.l.b16 %v2106
        %v2197 = vunpack.c.l.b16 %v2109
        %v2198 = vunpack.c.l.b16 %v2113
        %v2199 = vunpack.c.l.b16 %v2116
        %v2200 = vunpack.c.l.b16 %v2120
        %v2201 = vunpack.c.l.b16 %v2123
        %v2202 = vunpack.c.l.b16 %v2127
        %v2203 = vunpack.c.l.b16 %v2130
        %v2204 = vunpack.c.l.b16 %v2134
        %v2205 = vunpack.c.l.b16 %v2137
        %v2206 = vunpack.c.l.b16 %v2141
        %v2207 = vunpack.c.l.b16 %v2144
        %v2208 = vunpack.c.l.b16 %v2148
        %v2209 = vunpack.c.l.b16 %v2151
        %v2210 = vunpack.c.l.b16 %v2155
        %v2211 = vunpack.c.l.b16 %v2158
        %v2212 = vunpack.c.l.b16 %v2162
        %v2213 = vunpack.c.l.b16 %v2165
        %v2214 = vpack.c.b16 %v2183, %v2182
        %v2215 = vpack.c.b16 %v2185, %v2184
        %v2216 = vpack.c.b16 %v2187, %v2186
        %v2217 = vpack.c.b16 %v2189, %v2188
        %v2218 = vpack.c.b16 %v2191, %v2190
        %v2219 = vpack.c.b16 %v2193, %v2192
        %v2220 = vpack.c.b16 %v2195, %v2194
        %v2221 = vpack.c.b16 %v2197, %v2196
        %v2222 = vpack.c.b16 %v2199, %v2198
        %v2223 = vpack.c.b16 %v2201, %v2200
        %v2224 = vpack.c.b16 %v2203, %v2202
        %v2225 = vpack.c.b16 %v2205, %v2204
        %v2226 = vpack.c.b16 %v2207, %v2206
        %v2227 = vpack.c.b16 %v2209, %v2208
        %v2228 = vpack.c.b16 %v2211, %v2210
        %v2229 = vpack.c.b16 %v2213, %v2212
        %v2262 = vunpack.c.l.b16 %v2166
        %v2263 = vunpack.c.l.b16 %v2167
        %v2264 = vunpack.c.l.b16 %v2168
        %v2265 = vunpack.c.l.b16 %v2169
        %v2266 = vunpack.c.l.b16 %v2170
        %v2267 = vunpack.c.l.b16 %v2171
        %v2268 = vunpack.c.l.b16 %v2172
        %v2269 = vunpack.c.l.b16 %v2173
        %v2270 = vunpack.c.l.b16 %v2174
        %v2271 = vunpack.c.l.b16 %v2175
        %v2272 = vunpack.c.l.b16 %v2176
        %v2273 = vunpack.c.l.b16 %v2177
        %v2274 = vunpack.c.l.b16 %v2178
        %v2275 = vunpack.c.l.b16 %v2179
        %v2276 = vunpack.c.l.b16 %v2180
        %v2277 = vunpack.c.l.b16 %v2181
        %v2278 = vpack.c.b16 %v2263, %v2262
        %v2279 = vpack.c.b16 %v2265, %v2264
        %v2280 = vpack.c.b16 %v2267, %v2266
        %v2281 = vpack.c.b16 %v2269, %v2268
        %v2282 = vpack.c.b16 %v2271, %v2270
        %v2283 = vpack.c.b16 %v2273, %v2272
        %v2284 = vpack.c.b16 %v2275, %v2274
        %v2285 = vpack.c.b16 %v2277, %v2276
        %2294 = vmatprep.subr.bf16.mxu0 0
        %2295 = vmatpush1.bf16.msra.mxu0 %v2278
        %2296 = vmatprep.subr.bf16.mxu0 0
        %2297 = vmatpush1.bf16.msra.mxu0 %v2279
        %2298 = vmatprep.subr.bf16.mxu0 0
        %2299 = vmatpush1.bf16.msra.mxu0 %v2280
        %2300 = vmatprep.subr.bf16.mxu0 0
        %2301 = vmatpush1.bf16.msra.mxu0 %v2281
        %2302 = vmatprep.subr.bf16.mxu0 0
        %2303 = vmatpush1.bf16.msra.mxu0 %v2282
        %2304 = vmatprep.subr.bf16.mxu0 0
        %2305 = vmatpush1.bf16.msra.mxu0 %v2283
        %2306 = vmatprep.subr.bf16.mxu0 0
        %2307 = vmatpush1.bf16.msra.mxu0 %v2284
        %2308 = vmatprep.subr.bf16.mxu0 0
        %2309 = vmatpush1.bf16.msra.mxu0 %v2285
        %2310 = vmatprep.subr.bf16.mxu0 0
        %2311 = vmatpush1.bf16.msra.mxu0 0
        %2312 = vmatprep.subr.bf16.mxu0 0
        %2313 = vmatpush1.bf16.msra.mxu0 0
        %2314 = vmatprep.subr.bf16.mxu0 0
        %2315 = vmatpush1.bf16.msra.mxu0 0
        %2316 = vmatprep.subr.bf16.mxu0 0
        %2317 = vmatpush1.bf16.msra.mxu0 0
        %2318 = vmatprep.subr.bf16.mxu0 0
        %2319 = vmatpush1.bf16.msra.mxu0 0
        %2320 = vmatprep.subr.bf16.mxu0 0
        %2321 = vmatpush1.bf16.msra.mxu0 0
        %2322 = vmatprep.subr.bf16.mxu0 0
        %2323 = vmatpush1.bf16.msra.mxu0 0
        %2324 = vmatprep.subr.bf16.mxu0 0
        %2325 = vmatpush1.bf16.msra.mxu0 0
        %2326 = vmatprep.mubr.bf16.mxu0 0
        %2327 = vmatmul.mubr.bf16.gmra.mrb[0].mxu0 %v2214
        %v2328 = vpop.f32.mrb[0].mxu0
        %v2329 = vadd.f32 0.0, %v2328
        %v2330 = vpop.f32.mrb[0].mxu0
        %v2331 = vpop.f32.mrb[0].mxu0
        %v2332 = vadd.f32 0.0, %v2331
        %v2333 = vpop.f32.mrb[0].mxu0
        %2334 = vmatprep.mubr.bf16.mxu0 0
        %2335 = vmatmul.mubr.bf16.gmra.mrb[0].mxu0 %v2215
        %v2336 = vpop.f32.mrb[0].mxu0
        %v2337 = vadd.f32 0.0, %v2336
        %v2338 = vpop.f32.mrb[0].mxu0
        %v2339 = vpop.f32.mrb[0].mxu0
        %v2340 = vadd.f32 0.0, %v2339
        %v2341 = vpop.f32.mrb[0].mxu0
        %2342 = vmatprep.mubr.bf16.mxu0 0
        %2343 = vmatmul.mubr.bf16.gmra.mrb[0].mxu0 %v2216
        %v2344 = vpop.f32.mrb[0].mxu0
        %v2345 = vadd.f32 0.0, %v2344
        %v2346 = vpop.f32.mrb[0].mxu0
        %v2347 = vpop.f32.mrb[0].mxu0
        %v2348 = vadd.f32 0.0, %v2347
        %v2349 = vpop.f32.mrb[0].mxu0
        %2350 = vmatprep.mubr.bf16.mxu0 0
        %2351 = vmatmul.mubr.bf16.gmra.mrb[0].mxu0 %v2217
        %v2352 = vpop.f32.mrb[0].mxu0
        %v2353 = vadd.f32 0.0, %v2352
        %v2354 = vpop.f32.mrb[0].mxu0
        %v2355 = vpop.f32.mrb[0].mxu0
        %v2356 = vadd.f32 0.0, %v2355
        %v2357 = vpop.f32.mrb[0].mxu0
        %2358 = vmatprep.mubr.bf16.mxu0 0
        %2359 = vmatmul.mubr.bf16.gmra.mrb[0].mxu0 %v2218
        %v2360 = vpop.f32.mrb[0].mxu0
        %v2361 = vadd.f32 0.0, %v2360
        %v2362 = vpop.f32.mrb[0].mxu0
        %v2363 = vpop.f32.mrb[0].mxu0
        %v2364 = vadd.f32 0.0, %v2363
        %v2365 = vpop.f32.mrb[0].mxu0
        %2366 = vmatprep.mubr.bf16.mxu0 0
        %2367 = vmatmul.mubr.bf16.gmra.mrb[0].mxu0 %v2219
        %v2368 = vpop.f32.mrb[0].mxu0
        %v2369 = vadd.f32 0.0, %v2368
        %v2370 = vpop.f32.mrb[0].mxu0
        %v2371 = vpop.f32.mrb[0].mxu0
        %v2372 = vadd.f32 0.0, %v2371
        %v2373 = vpop.f32.mrb[0].mxu0
        %2374 = vmatprep.mubr.bf16.mxu0 0
        %2375 = vmatmul.mubr.bf16.gmra.mrb[0].mxu0 %v2220
        %v2376 = vpop.f32.mrb[0].mxu0
        %v2377 = vadd.f32 0.0, %v2376
        %v2378 = vpop.f32.mrb[0].mxu0
        %v2379 = vpop.f32.mrb[0].mxu0
        %v2380 = vadd.f32 0.0, %v2379
        %v2381 = vpop.f32.mrb[0].mxu0
        %2382 = vmatprep.mubr.bf16.mxu0 0
        %2383 = vmatmul.mubr.bf16.gmra.mrb[0].mxu0 %v2221
        %v2384 = vpop.f32.mrb[0].mxu0
        %v2385 = vadd.f32 0.0, %v2384
        %v2386 = vpop.f32.mrb[0].mxu0
        %v2387 = vpop.f32.mrb[0].mxu0
        %v2388 = vadd.f32 0.0, %v2387
        %v2389 = vpop.f32.mrb[0].mxu0
        %2390 = vmatprep.mubr.bf16.mxu0 0
        %2391 = vmatmul.mubr.bf16.gmra.mrb[0].mxu0 %v2222
        %v2392 = vpop.f32.mrb[0].mxu0
        %v2393 = vadd.f32 0.0, %v2392
        %v2394 = vpop.f32.mrb[0].mxu0
        %v2395 = vpop.f32.mrb[0].mxu0
        %v2396 = vadd.f32 0.0, %v2395
        %v2397 = vpop.f32.mrb[0].mxu0
        %2398 = vmatprep.mubr.bf16.mxu0 0
        %2399 = vmatmul.mubr.bf16.gmra.mrb[0].mxu0 %v2223
        %v2400 = vpop.f32.mrb[0].mxu0
        %v2401 = vadd.f32 0.0, %v2400
        %v2402 = vpop.f32.mrb[0].mxu0
        %v2403 = vpop.f32.mrb[0].mxu0
        %v2404 = vadd.f32 0.0, %v2403
        %v2405 = vpop.f32.mrb[0].mxu0
        %2406 = vmatprep.mubr.bf16.mxu0 0
        %2407 = vmatmul.mubr.bf16.gmra.mrb[0].mxu0 %v2224
        %v2408 = vpop.f32.mrb[0].mxu0
        %v2409 = vadd.f32 0.0, %v2408
        %v2410 = vpop.f32.mrb[0].mxu0
        %v2411 = vpop.f32.mrb[0].mxu0
        %v2412 = vadd.f32 0.0, %v2411
        %v2413 = vpop.f32.mrb[0].mxu0
        %2414 = vmatprep.mubr.bf16.mxu0 0
        %2415 = vmatmul.mubr.bf16.gmra.mrb[0].mxu0 %v2225
        %v2416 = vpop.f32.mrb[0].mxu0
        %v2417 = vadd.f32 0.0, %v2416
        %v2418 = vpop.f32.mrb[0].mxu0
        %v2419 = vpop.f32.mrb[0].mxu0
        %v2420 = vadd.f32 0.0, %v2419
        %v2421 = vpop.f32.mrb[0].mxu0
        %2422 = vmatprep.mubr.bf16.mxu0 0
        %2423 = vmatmul.mubr.bf16.gmra.mrb[0].mxu0 %v2226
        %v2424 = vpop.f32.mrb[0].mxu0
        %v2425 = vadd.f32 0.0, %v2424
        %v2426 = vpop.f32.mrb[0].mxu0
        %v2427 = vpop.f32.mrb[0].mxu0
        %v2428 = vadd.f32 0.0, %v2427
        %v2429 = vpop.f32.mrb[0].mxu0
        %2430 = vmatprep.mubr.bf16.mxu0 0
        %2431 = vmatmul.mubr.bf16.gmra.mrb[0].mxu0 %v2227
        %v2432 = vpop.f32.mrb[0].mxu0
        %v2433 = vadd.f32 0.0, %v2432
        %v2434 = vpop.f32.mrb[0].mxu0
        %v2435 = vpop.f32.mrb[0].mxu0
        %v2436 = vadd.f32 0.0, %v2435
        %v2437 = vpop.f32.mrb[0].mxu0
        %2438 = vmatprep.mubr.bf16.mxu0 0
        %2439 = vmatmul.mubr.bf16.gmra.mrb[0].mxu0 %v2228
        %v2440 = vpop.f32.mrb[0].mxu0
        %v2441 = vadd.f32 0.0, %v2440
        %v2442 = vpop.f32.mrb[0].mxu0
        %v2443 = vpop.f32.mrb[0].mxu0
        %v2444 = vadd.f32 0.0, %v2443
        %v2445 = vpop.f32.mrb[0].mxu0
        %2446 = vmatprep.mubr.bf16.mxu0 0
        %2447 = vmatmul.mubr.bf16.gmra.mrb[0].mxu0 %v2229
        %v2448 = vpop.f32.mrb[0].mxu0
        %v2449 = vadd.f32 0.0, %v2448
        %v2450 = vpop.f32.mrb[0].mxu0
        %v2451 = vpop.f32.mrb[0].mxu0
        %v2452 = vadd.f32 0.0, %v2451
        %v2453 = vpop.f32.mrb[0].mxu0
        %2454 = vdwg.mxu0
        %v2455 = vadd.f32 %v1877, %v2329
        %v2456 = vadd.f32 %v1880, %v2332
        %v2457 = vadd.f32 %v1885, %v2337
        %v2458 = vadd.f32 %v1888, %v2340
        %v2459 = vadd.f32 %v1893, %v2345
        %v2460 = vadd.f32 %v1896, %v2348
        %v2461 = vadd.f32 %v1901, %v2353
        %v2462 = vadd.f32 %v1904, %v2356
        %v2463 = vadd.f32 %v1909, %v2361
        %v2464 = vadd.f32 %v1912, %v2364
        %v2465 = vadd.f32 %v1917, %v2369
        %v2466 = vadd.f32 %v1920, %v2372
        %v2467 = vadd.f32 %v1925, %v2377
        %v2468 = vadd.f32 %v1928, %v2380
        %v2469 = vadd.f32 %v1933, %v2385
        %v2470 = vadd.f32 %v1936, %v2388
        %v2471 = vadd.f32 %v1941, %v2393
        %v2472 = vadd.f32 %v1944, %v2396
        %v2473 = vadd.f32 %v1949, %v2401
        %v2474 = vadd.f32 %v1952, %v2404
        %v2475 = vadd.f32 %v1957, %v2409
        %v2476 = vadd.f32 %v1960, %v2412
        %v2477 = vadd.f32 %v1965, %v2417
        %v2478 = vadd.f32 %v1968, %v2420
        %v2479 = vadd.f32 %v1973, %v2425
        %v2480 = vadd.f32 %v1976, %v2428
        %v2481 = vadd.f32 %v1981, %v2433
        %v2482 = vadd.f32 %v1984, %v2436
        %v2483 = vadd.f32 %v1989, %v2441
        %v2484 = vadd.f32 %v1992, %v2444
        %v2485 = vadd.f32 %v1997, %v2449
        %v2486 = vadd.f32 %v2000, %v2452
        %v2487 = vld [vmem:[%s843] sm:$0xf]
        %v2488 = vld [vmem:[%s843 + $0x4] sm:$0xf]
        %v2489 = vld [vmem:[%s843 + $0xc] sm:$0xf]
        %v2490 = vld [vmem:[%s843 + $0x10] sm:$0xf]
        %v2491 = vld [vmem:[%s843 + $0x18] sm:$0xf]
        %v2492 = vld [vmem:[%s843 + $0x1c] sm:$0xf]
        %v2493 = vld [vmem:[%s843 + $0x24] sm:$0xf]
        %v2494 = vld [vmem:[%s843 + $0x28] sm:$0xf]
        %v2495 = vld [vmem:[%s843 + $0x30] sm:$0xf]
        %v2496 = vld [vmem:[%s843 + $0x34] sm:$0xf]
        %v2497 = vld [vmem:[%s843 + $0x3c] sm:$0xf]
        %v2498 = vld [vmem:[%s843 + $0x40] sm:$0xf]
        %v2499 = vld [vmem:[%s843 + $0x48] sm:$0xf]
        %v2500 = vld [vmem:[%s843 + $0x4c] sm:$0xf]
        %v2501 = vld [vmem:[%s843 + $0x54] sm:$0xf]
        %v2502 = vld [vmem:[%s843 + $0x58] sm:$0xf]
        %v2503 = vld [vmem:[%s843 + $0x60] sm:$0xf]
        %v2504 = vld [vmem:[%s843 + $0x64] sm:$0xf]
        %v2505 = vld [vmem:[%s843 + $0x6c] sm:$0xf]
        %v2506 = vld [vmem:[%s843 + $0x70] sm:$0xf]
        %v2507 = vld [vmem:[%s843 + $0x78] sm:$0xf]
        %v2508 = vld [vmem:[%s843 + $0x7c] sm:$0xf]
        %v2509 = vld [vmem:[%s843 + $0x84] sm:$0xf]
        %v2510 = vld [vmem:[%s843 + $0x88] sm:$0xf]
        %v2511 = vld [vmem:[%s843 + $0x90] sm:$0xf]
        %v2512 = vld [vmem:[%s843 + $0x94] sm:$0xf]
        %v2513 = vld [vmem:[%s843 + $0x9c] sm:$0xf]
        %v2514 = vld [vmem:[%s843 + $0xa0] sm:$0xf]
        %v2515 = vld [vmem:[%s843 + $0xa8] sm:$0xf]
        %v2516 = vld [vmem:[%s843 + $0xac] sm:$0xf]
        %v2517 = vld [vmem:[%s843 + $0xb4] sm:$0xf]
        %v2518 = vld [vmem:[%s843 + $0xb8] sm:$0xf]
        %v2519 = vld [vmem:[#allocation6 + $0xc0] sm:$0xf]
        %v2520 = vld [vmem:[#allocation6 + $0xc4] sm:$0xf]
        %v2521 = vld [vmem:[#allocation6 + $0xc8] sm:$0xf]
        %v2522 = vld [vmem:[#allocation6 + $0xcc] sm:$0xf]
        %v2523 = vld [vmem:[#allocation6 + $0xd0] sm:$0xf]
        %v2524 = vld [vmem:[#allocation6 + $0xd4] sm:$0xf]
        %v2525 = vld [vmem:[#allocation6 + $0xd8] sm:$0xf]
        %v2526 = vld [vmem:[#allocation6 + $0xdc] sm:$0xf]
        %v2527 = vld [vmem:[#allocation6 + $0xe0] sm:$0xf]
        %v2528 = vld [vmem:[#allocation6 + $0xe4] sm:$0xf]
        %v2529 = vld [vmem:[#allocation6 + $0xe8] sm:$0xf]
        %v2530 = vld [vmem:[#allocation6 + $0xec] sm:$0xf]
        %v2531 = vld [vmem:[#allocation6 + $0xf0] sm:$0xf]
        %v2532 = vld [vmem:[#allocation6 + $0xf4] sm:$0xf]
        %v2533 = vld [vmem:[#allocation6 + $0xf8] sm:$0xf]
        %v2534 = vld [vmem:[#allocation6 + $0xfc] sm:$0xf]
        %v2567 = vunpack.c.l.b16 %v2487
        %v2568 = vunpack.c.l.b16 %v2488
        %v2569 = vunpack.c.l.b16 %v2489
        %v2570 = vunpack.c.l.b16 %v2490
        %v2571 = vunpack.c.l.b16 %v2491
        %v2572 = vunpack.c.l.b16 %v2492
        %v2573 = vunpack.c.l.b16 %v2493
        %v2574 = vunpack.c.l.b16 %v2494
        %v2575 = vunpack.c.l.b16 %v2495
        %v2576 = vunpack.c.l.b16 %v2496
        %v2577 = vunpack.c.l.b16 %v2497
        %v2578 = vunpack.c.l.b16 %v2498
        %v2579 = vunpack.c.l.b16 %v2499
        %v2580 = vunpack.c.l.b16 %v2500
        %v2581 = vunpack.c.l.b16 %v2501
        %v2582 = vunpack.c.l.b16 %v2502
        %v2583 = vunpack.c.l.b16 %v2503
        %v2584 = vunpack.c.l.b16 %v2504
        %v2585 = vunpack.c.l.b16 %v2505
        %v2586 = vunpack.c.l.b16 %v2506
        %v2587 = vunpack.c.l.b16 %v2507
        %v2588 = vunpack.c.l.b16 %v2508
        %v2589 = vunpack.c.l.b16 %v2509
        %v2590 = vunpack.c.l.b16 %v2510
        %v2591 = vunpack.c.l.b16 %v2511
        %v2592 = vunpack.c.l.b16 %v2512
        %v2593 = vunpack.c.l.b16 %v2513
        %v2594 = vunpack.c.l.b16 %v2514
        %v2595 = vunpack.c.l.b16 %v2515
        %v2596 = vunpack.c.l.b16 %v2516
        %v2597 = vunpack.c.l.b16 %v2517
        %v2598 = vunpack.c.l.b16 %v2518
        %v2599 = vpack.c.b16 %v2568, %v2567
        %v2600 = vpack.c.b16 %v2570, %v2569
        %v2601 = vpack.c.b16 %v2572, %v2571
        %v2602 = vpack.c.b16 %v2574, %v2573
        %v2603 = vpack.c.b16 %v2576, %v2575
        %v2604 = vpack.c.b16 %v2578, %v2577
        %v2605 = vpack.c.b16 %v2580, %v2579
        %v2606 = vpack.c.b16 %v2582, %v2581
        %v2607 = vpack.c.b16 %v2584, %v2583
        %v2608 = vpack.c.b16 %v2586, %v2585
        %v2609 = vpack.c.b16 %v2588, %v2587
        %v2610 = vpack.c.b16 %v2590, %v2589
        %v2611 = vpack.c.b16 %v2592, %v2591
        %v2612 = vpack.c.b16 %v2594, %v2593
        %v2613 = vpack.c.b16 %v2596, %v2595
        %v2614 = vpack.c.b16 %v2598, %v2597
        %v2647 = vunpack.c.l.b16 %v2519
        %v2648 = vunpack.c.l.b16 %v2520
        %v2649 = vunpack.c.l.b16 %v2521
        %v2650 = vunpack.c.l.b16 %v2522
        %v2651 = vunpack.c.l.b16 %v2523
        %v2652 = vunpack.c.l.b16 %v2524
        %v2653 = vunpack.c.l.b16 %v2525
        %v2654 = vunpack.c.l.b16 %v2526
        %v2655 = vunpack.c.l.b16 %v2527
        %v2656 = vunpack.c.l.b16 %v2528
        %v2657 = vunpack.c.l.b16 %v2529
        %v2658 = vunpack.c.l.b16 %v2530
        %v2659 = vunpack.c.l.b16 %v2531
        %v2660 = vunpack.c.l.b16 %v2532
        %v2661 = vunpack.c.l.b16 %v2533
        %v2662 = vunpack.c.l.b16 %v2534
        %v2663 = vpack.c.b16 %v2648, %v2647
        %v2664 = vpack.c.b16 %v2650, %v2649
        %v2665 = vpack.c.b16 %v2652, %v2651
        %v2666 = vpack.c.b16 %v2654, %v2653
        %v2667 = vpack.c.b16 %v2656, %v2655
        %v2668 = vpack.c.b16 %v2658, %v2657
        %v2669 = vpack.c.b16 %v2660, %v2659
        %v2670 = vpack.c.b16 %v2662, %v2661
        %2679 = vmatprep.subr.bf16.mxu0 0
        %2680 = vmatpush1.bf16.msra.mxu0 %v2663
        %2681 = vmatprep.subr.bf16.mxu0 0
        %2682 = vmatpush1.bf16.msra.mxu0 %v2664
        %2683 = vmatprep.subr.bf16.mxu0 0
        %2684 = vmatpush1.bf16.msra.mxu0 %v2665
        %2685 = vmatprep.subr.bf16.mxu0 0
        %2686 = vmatpush1.bf16.msra.mxu0 %v2666
        %2687 = vmatprep.subr.bf16.mxu0 0
        %2688 = vmatpush1.bf16.msra.mxu0 %v2667
        %2689 = vmatprep.subr.bf16.mxu0 0
        %2690 = vmatpush1.bf16.msra.mxu0 %v2668
        %2691 = vmatprep.subr.bf16.mxu0 0
        %2692 = vmatpush1.bf16.msra.mxu0 %v2669
        %2693 = vmatprep.subr.bf16.mxu0 0
        %2694 = vmatpush1.bf16.msra.mxu0 %v2670
        %2695 = vmatprep.subr.bf16.mxu0 0
        %2696 = vmatpush1.bf16.msra.mxu0 0
        %2697 = vmatprep.subr.bf16.mxu0 0
        %2698 = vmatpush1.bf16.msra.mxu0 0
        %2699 = vmatprep.subr.bf16.mxu0 0
        %2700 = vmatpush1.bf16.msra.mxu0 0
        %2701 = vmatprep.subr.bf16.mxu0 0
        %2702 = vmatpush1.bf16.msra.mxu0 0
        %2703 = vmatprep.subr.bf16.mxu0 0
        %2704 = vmatpush1.bf16.msra.mxu0 0
        %2705 = vmatprep.subr.bf16.mxu0 0
        %2706 = vmatpush1.bf16.msra.mxu0 0
        %2707 = vmatprep.subr.bf16.mxu0 0
        %2708 = vmatpush1.bf16.msra.mxu0 0
        %2709 = vmatprep.subr.bf16.mxu0 0
        %2710 = vmatpush1.bf16.msra.mxu0 0
        %2711 = vmatprep.mubr.bf16.mxu0 0
        %2712 = vmatmul.mubr.bf16.gmra.mrb[0].mxu0 %v2599
        %v2713 = vpop.f32.mrb[0].mxu0
        %v2714 = vadd.f32 0.0, %v2713
        %v2715 = vpop.f32.mrb[0].mxu0
        %v2716 = vpop.f32.mrb[0].mxu0
        %v2717 = vadd.f32 0.0, %v2716
        %v2718 = vpop.f32.mrb[0].mxu0
        %2719 = vmatprep.mubr.bf16.mxu0 0
        %2720 = vmatmul.mubr.bf16.gmra.mrb[0].mxu0 %v2600
        %v2721 = vpop.f32.mrb[0].mxu0
        %v2722 = vadd.f32 0.0, %v2721
        %v2723 = vpop.f32.mrb[0].mxu0
        %v2724 = vpop.f32.mrb[0].mxu0
        %v2725 = vadd.f32 0.0, %v2724
        %v2726 = vpop.f32.mrb[0].mxu0
        %2727 = vmatprep.mubr.bf16.mxu0 0
        %2728 = vmatmul.mubr.bf16.gmra.mrb[0].mxu0 %v2601
        %v2729 = vpop.f32.mrb[0].mxu0
        %v2730 = vadd.f32 0.0, %v2729
        %v2731 = vpop.f32.mrb[0].mxu0
        %v2732 = vpop.f32.mrb[0].mxu0
        %v2733 = vadd.f32 0.0, %v2732
        %v2734 = vpop.f32.mrb[0].mxu0
        %2735 = vmatprep.mubr.bf16.mxu0 0
        %2736 = vmatmul.mubr.bf16.gmra.mrb[0].mxu0 %v2602
        %v2737 = vpop.f32.mrb[0].mxu0
        %v2738 = vadd.f32 0.0, %v2737
        %v2739 = vpop.f32.mrb[0].mxu0
        %v2740 = vpop.f32.mrb[0].mxu0
        %v2741 = vadd.f32 0.0, %v2740
        %v2742 = vpop.f32.mrb[0].mxu0
        %2743 = vmatprep.mubr.bf16.mxu0 0
        %2744 = vmatmul.mubr.bf16.gmra.mrb[0].mxu0 %v2603
        %v2745 = vpop.f32.mrb[0].mxu0
        %v2746 = vadd.f32 0.0, %v2745
        %v2747 = vpop.f32.mrb[0].mxu0
        %v2748 = vpop.f32.mrb[0].mxu0
        %v2749 = vadd.f32 0.0, %v2748
        %v2750 = vpop.f32.mrb[0].mxu0
        %2751 = vmatprep.mubr.bf16.mxu0 0
        %2752 = vmatmul.mubr.bf16.gmra.mrb[0].mxu0 %v2604
        %v2753 = vpop.f32.mrb[0].mxu0
        %v2754 = vadd.f32 0.0, %v2753
        %v2755 = vpop.f32.mrb[0].mxu0
        %v2756 = vpop.f32.mrb[0].mxu0
        %v2757 = vadd.f32 0.0, %v2756
        %v2758 = vpop.f32.mrb[0].mxu0
        %2759 = vmatprep.mubr.bf16.mxu0 0
        %2760 = vmatmul.mubr.bf16.gmra.mrb[0].mxu0 %v2605
        %v2761 = vpop.f32.mrb[0].mxu0
        %v2762 = vadd.f32 0.0, %v2761
        %v2763 = vpop.f32.mrb[0].mxu0
        %v2764 = vpop.f32.mrb[0].mxu0
        %v2765 = vadd.f32 0.0, %v2764
        %v2766 = vpop.f32.mrb[0].mxu0
        %2767 = vmatprep.mubr.bf16.mxu0 0
        %2768 = vmatmul.mubr.bf16.gmra.mrb[0].mxu0 %v2606
        %v2769 = vpop.f32.mrb[0].mxu0
        %v2770 = vadd.f32 0.0, %v2769
        %v2771 = vpop.f32.mrb[0].mxu0
        %v2772 = vpop.f32.mrb[0].mxu0
        %v2773 = vadd.f32 0.0, %v2772
        %v2774 = vpop.f32.mrb[0].mxu0
        %2775 = vmatprep.mubr.bf16.mxu0 0
        %2776 = vmatmul.mubr.bf16.gmra.mrb[0].mxu0 %v2607
        %v2777 = vpop.f32.mrb[0].mxu0
        %v2778 = vadd.f32 0.0, %v2777
        %v2779 = vpop.f32.mrb[0].mxu0
        %v2780 = vpop.f32.mrb[0].mxu0
        %v2781 = vadd.f32 0.0, %v2780
        %v2782 = vpop.f32.mrb[0].mxu0
        %2783 = vmatprep.mubr.bf16.mxu0 0
        %2784 = vmatmul.mubr.bf16.gmra.mrb[0].mxu0 %v2608
        %v2785 = vpop.f32.mrb[0].mxu0
        %v2786 = vadd.f32 0.0, %v2785
        %v2787 = vpop.f32.mrb[0].mxu0
        %v2788 = vpop.f32.mrb[0].mxu0
        %v2789 = vadd.f32 0.0, %v2788
        %v2790 = vpop.f32.mrb[0].mxu0
        %2791 = vmatprep.mubr.bf16.mxu0 0
        %2792 = vmatmul.mubr.bf16.gmra.mrb[0].mxu0 %v2609
        %v2793 = vpop.f32.mrb[0].mxu0
        %v2794 = vadd.f32 0.0, %v2793
        %v2795 = vpop.f32.mrb[0].mxu0
        %v2796 = vpop.f32.mrb[0].mxu0
        %v2797 = vadd.f32 0.0, %v2796
        %v2798 = vpop.f32.mrb[0].mxu0
        %2799 = vmatprep.mubr.bf16.mxu0 0
        %2800 = vmatmul.mubr.bf16.gmra.mrb[0].mxu0 %v2610
        %v2801 = vpop.f32.mrb[0].mxu0
        %v2802 = vadd.f32 0.0, %v2801
        %v2803 = vpop.f32.mrb[0].mxu0
        %v2804 = vpop.f32.mrb[0].mxu0
        %v2805 = vadd.f32 0.0, %v2804
        %v2806 = vpop.f32.mrb[0].mxu0
        %2807 = vmatprep.mubr.bf16.mxu0 0
        %2808 = vmatmul.mubr.bf16.gmra.mrb[0].mxu0 %v2611
        %v2809 = vpop.f32.mrb[0].mxu0
        %v2810 = vadd.f32 0.0, %v2809
        %v2811 = vpop.f32.mrb[0].mxu0
        %v2812 = vpop.f32.mrb[0].mxu0
        %v2813 = vadd.f32 0.0, %v2812
        %v2814 = vpop.f32.mrb[0].mxu0
        %2815 = vmatprep.mubr.bf16.mxu0 0
        %2816 = vmatmul.mubr.bf16.gmra.mrb[0].mxu0 %v2612
        %v2817 = vpop.f32.mrb[0].mxu0
        %v2818 = vadd.f32 0.0, %v2817
        %v2819 = vpop.f32.mrb[0].mxu0
        %v2820 = vpop.f32.mrb[0].mxu0
        %v2821 = vadd.f32 0.0, %v2820
        %v2822 = vpop.f32.mrb[0].mxu0
        %2823 = vmatprep.mubr.bf16.mxu0 0
        %2824 = vmatmul.mubr.bf16.gmra.mrb[0].mxu0 %v2613
        %v2825 = vpop.f32.mrb[0].mxu0
        %v2826 = vadd.f32 0.0, %v2825
        %v2827 = vpop.f32.mrb[0].mxu0
        %v2828 = vpop.f32.mrb[0].mxu0
        %v2829 = vadd.f32 0.0, %v2828
        %v2830 = vpop.f32.mrb[0].mxu0
        %2831 = vmatprep.mubr.bf16.mxu0 0
        %2832 = vmatmul.mubr.bf16.gmra.mrb[0].mxu0 %v2614
        %v2833 = vpop.f32.mrb[0].mxu0
        %v2834 = vadd.f32 0.0, %v2833
        %v2835 = vpop.f32.mrb[0].mxu0
        %v2836 = vpop.f32.mrb[0].mxu0
        %v2837 = vadd.f32 0.0, %v2836
        %v2838 = vpop.f32.mrb[0].mxu0
        %2839 = vdwg.mxu0
        %v2840 = vadd.f32 %v2455, %v2714
        %v2841 = vadd.f32 %v2456, %v2717
        %v2842 = vadd.f32 %v2457, %v2722
        %v2843 = vadd.f32 %v2458, %v2725
        %v2844 = vadd.f32 %v2459, %v2730
        %v2845 = vadd.f32 %v2460, %v2733
        %v2846 = vadd.f32 %v2461, %v2738
        %v2847 = vadd.f32 %v2462, %v2741
        %v2848 = vadd.f32 %v2463, %v2746
        %v2849 = vadd.f32 %v2464, %v2749
        %v2850 = vadd.f32 %v2465, %v2754
        %v2851 = vadd.f32 %v2466, %v2757
        %v2852 = vadd.f32 %v2467, %v2762
        %v2853 = vadd.f32 %v2468, %v2765
        %v2854 = vadd.f32 %v2469, %v2770
        %v2855 = vadd.f32 %v2470, %v2773
        %v2856 = vadd.f32 %v2471, %v2778
        %v2857 = vadd.f32 %v2472, %v2781
        %v2858 = vadd.f32 %v2473, %v2786
        %v2859 = vadd.f32 %v2474, %v2789
        %v2860 = vadd.f32 %v2475, %v2794
        %v2861 = vadd.f32 %v2476, %v2797
        %v2862 = vadd.f32 %v2477, %v2802
        %v2863 = vadd.f32 %v2478, %v2805
        %v2864 = vadd.f32 %v2479, %v2810
        %v2865 = vadd.f32 %v2480, %v2813
        %v2866 = vadd.f32 %v2481, %v2818
        %v2867 = vadd.f32 %v2482, %v2821
        %v2868 = vadd.f32 %v2483, %v2826
        %v2869 = vadd.f32 %v2484, %v2829
        %v2870 = vadd.f32 %v2485, %v2834
        %v2871 = vadd.f32 %v2486, %v2837
        %v2872 = vld [vmem:[%s843] sm:$0xf]
        %v2873 = vld [vmem:[%s843 + $0x4] sm:$0xf]
        %v2874 = vld [vmem:[%s843 + $0x8] sm:$0x1]
        %v2875 = vld [vmem:[%s843 + $0xc] sm:$0xf]
        %v2876 = vld [vmem:[%s843 + $0x10] sm:$0xf]
        %v2877 = vld [vmem:[%s843 + $0x14] sm:$0x1]
        %v2878 = vld [vmem:[%s843 + $0x18] sm:$0xf]
        %v2879 = vld [vmem:[%s843 + $0x1c] sm:$0xf]
        %v2880 = vld [vmem:[%s843 + $0x20] sm:$0x1]
        %v2881 = vld [vmem:[%s843 + $0x24] sm:$0xf]
        %v2882 = vld [vmem:[%s843 + $0x28] sm:$0xf]
        %v2883 = vld [vmem:[%s843 + $0x2c] sm:$0x1]
        %v2884 = vld [vmem:[%s843 + $0x30] sm:$0xf]
        %v2885 = vld [vmem:[%s843 + $0x34] sm:$0xf]
        %v2886 = vld [vmem:[%s843 + $0x38] sm:$0x1]
        %v2887 = vld [vmem:[%s843 + $0x3c] sm:$0xf]
        %v2888 = vld [vmem:[%s843 + $0x40] sm:$0xf]
        %v2889 = vld [vmem:[%s843 + $0x44] sm:$0x1]
        %v2890 = vld [vmem:[%s843 + $0x48] sm:$0xf]
        %v2891 = vld [vmem:[%s843 + $0x4c] sm:$0xf]
        %v2892 = vld [vmem:[%s843 + $0x50] sm:$0x1]
        %v2893 = vld [vmem:[%s843 + $0x54] sm:$0xf]
        %v2894 = vld [vmem:[%s843 + $0x58] sm:$0xf]
        %v2895 = vld [vmem:[%s843 + $0x5c] sm:$0x1]
        %v2896 = vld [vmem:[%s843 + $0x60] sm:$0xf]
        %v2897 = vld [vmem:[%s843 + $0x64] sm:$0xf]
        %v2898 = vld [vmem:[%s843 + $0x68] sm:$0x1]
        %v2899 = vld [vmem:[%s843 + $0x6c] sm:$0xf]
        %v2900 = vld [vmem:[%s843 + $0x70] sm:$0xf]
        %v2901 = vld [vmem:[%s843 + $0x74] sm:$0x1]
        %v2902 = vld [vmem:[%s843 + $0x78] sm:$0xf]
        %v2903 = vld [vmem:[%s843 + $0x7c] sm:$0xf]
        %v2904 = vld [vmem:[%s843 + $0x80] sm:$0x1]
        %v2905 = vld [vmem:[%s843 + $0x84] sm:$0xf]
        %v2906 = vld [vmem:[%s843 + $0x88] sm:$0xf]
        %v2907 = vld [vmem:[%s843 + $0x8c] sm:$0x1]
        %v2908 = vld [vmem:[%s843 + $0x90] sm:$0xf]
        %v2909 = vld [vmem:[%s843 + $0x94] sm:$0xf]
        %v2910 = vld [vmem:[%s843 + $0x98] sm:$0x1]
        %v2911 = vld [vmem:[%s843 + $0x9c] sm:$0xf]
        %v2912 = vld [vmem:[%s843 + $0xa0] sm:$0xf]
        %v2913 = vld [vmem:[%s843 + $0xa4] sm:$0x1]
        %v2914 = vld [vmem:[%s843 + $0xa8] sm:$0xf]
        %v2915 = vld [vmem:[%s843 + $0xac] sm:$0xf]
        %v2916 = vld [vmem:[%s843 + $0xb0] sm:$0x1]
        %v2917 = vld [vmem:[%s843 + $0xb4] sm:$0xf]
        %v2918 = vld [vmem:[%s843 + $0xb8] sm:$0xf]
        %v2919 = vld [vmem:[%s843 + $0xbc] sm:$0x1]
        %v2921 = vshrl.u32 %v2872, 16
        %v2923 = vrot.slane %v2921, 4
        %v2924 = vshll.u32 %v2872, 16
        %v2926 = vrot.slane %v2924, 5
        %v2927 = vor.u32 %v2923, %v2926
        %v2928 = vrot.slane %v2927, 4
        %v2930 = vshll.u32 %v2873, 16
        %v2932 = vrot.slane %v2930, 5
        %v2933 = vsel %vm1024, %v2928, %v2932
        %v2934 = vshrl.u32 %v2873, 16
        %v2936 = vrot.slane %v2934, 4
        %v2937 = vor.u32 %v2936, %v2932
        %v2938 = vrot.slane %v2937, 4
        %v2940 = vshll.u32 %v2874, 16
        %v2942 = vrot.slane %v2940, 5
        %v2943 = vsel %vm1024, %v2938, %v2942
        %v2945 = vshrl.u32 %v2875, 16
        %v2947 = vrot.slane %v2945, 4
        %v2948 = vshll.u32 %v2875, 16
        %v2950 = vrot.slane %v2948, 5
        %v2951 = vor.u32 %v2947, %v2950
        %v2952 = vrot.slane %v2951, 4
        %v2954 = vshll.u32 %v2876, 16
        %v2956 = vrot.slane %v2954, 5
        %v2957 = vsel %vm1024, %v2952, %v2956
        %v2958 = vshrl.u32 %v2876, 16
        %v2960 = vrot.slane %v2958, 4
        %v2961 = vor.u32 %v2960, %v2956
        %v2962 = vrot.slane %v2961, 4
        %v2964 = vshll.u32 %v2877, 16
        %v2966 = vrot.slane %v2964, 5
        %v2967 = vsel %vm1024, %v2962, %v2966
        %v2969 = vshrl.u32 %v2878, 16
        %v2971 = vrot.slane %v2969, 4
        %v2972 = vshll.u32 %v2878, 16
        %v2974 = vrot.slane %v2972, 5
        %v2975 = vor.u32 %v2971, %v2974
        %v2976 = vrot.slane %v2975, 4
        %v2978 = vshll.u32 %v2879, 16
        %v2980 = vrot.slane %v2978, 5
        %v2981 = vsel %vm1024, %v2976, %v2980
        %v2982 = vshrl.u32 %v2879, 16
        %v2984 = vrot.slane %v2982, 4
        %v2985 = vor.u32 %v2984, %v2980
        %v2986 = vrot.slane %v2985, 4
        %v2988 = vshll.u32 %v2880, 16
        %v2990 = vrot.slane %v2988, 5
        %v2991 = vsel %vm1024, %v2986, %v2990
        %v2993 = vshrl.u32 %v2881, 16
        %v2995 = vrot.slane %v2993, 4
        %v2996 = vshll.u32 %v2881, 16
        %v2998 = vrot.slane %v2996, 5
        %v2999 = vor.u32 %v2995, %v2998
        %v3000 = vrot.slane %v2999, 4
        %v3002 = vshll.u32 %v2882, 16
        %v3004 = vrot.slane %v3002, 5
        %v3005 = vsel %vm1024, %v3000, %v3004
        %v3006 = vshrl.u32 %v2882, 16
        %v3008 = vrot.slane %v3006, 4
        %v3009 = vor.u32 %v3008, %v3004
        %v3010 = vrot.slane %v3009, 4
        %v3012 = vshll.u32 %v2883, 16
        %v3014 = vrot.slane %v3012, 5
        %v3015 = vsel %vm1024, %v3010, %v3014
        %v3017 = vshrl.u32 %v2884, 16
        %v3019 = vrot.slane %v3017, 4
        %v3020 = vshll.u32 %v2884, 16
        %v3022 = vrot.slane %v3020, 5
        %v3023 = vor.u32 %v3019, %v3022
        %v3024 = vrot.slane %v3023, 4
        %v3026 = vshll.u32 %v2885, 16
        %v3028 = vrot.slane %v3026, 5
        %v3029 = vsel %vm1024, %v3024, %v3028
        %v3030 = vshrl.u32 %v2885, 16
        %v3032 = vrot.slane %v3030, 4
        %v3033 = vor.u32 %v3032, %v3028
        %v3034 = vrot.slane %v3033, 4
        %v3036 = vshll.u32 %v2886, 16
        %v3038 = vrot.slane %v3036, 5
        %v3039 = vsel %vm1024, %v3034, %v3038
        %v3041 = vshrl.u32 %v2887, 16
        %v3043 = vrot.slane %v3041, 4
        %v3044 = vshll.u32 %v2887, 16
        %v3046 = vrot.slane %v3044, 5
        %v3047 = vor.u32 %v3043, %v3046
        %v3048 = vrot.slane %v3047, 4
        %v3050 = vshll.u32 %v2888, 16
        %v3052 = vrot.slane %v3050, 5
        %v3053 = vsel %vm1024, %v3048, %v3052
        %v3054 = vshrl.u32 %v2888, 16
        %v3056 = vrot.slane %v3054, 4
        %v3057 = vor.u32 %v3056, %v3052
        %v3058 = vrot.slane %v3057, 4
        %v3060 = vshll.u32 %v2889, 16
        %v3062 = vrot.slane %v3060, 5
        %v3063 = vsel %vm1024, %v3058, %v3062
        %v3065 = vshrl.u32 %v2890, 16
        %v3067 = vrot.slane %v3065, 4
        %v3068 = vshll.u32 %v2890, 16
        %v3070 = vrot.slane %v3068, 5
        %v3071 = vor.u32 %v3067, %v3070
        %v3072 = vrot.slane %v3071, 4
        %v3074 = vshll.u32 %v2891, 16
        %v3076 = vrot.slane %v3074, 5
        %v3077 = vsel %vm1024, %v3072, %v3076
        %v3078 = vshrl.u32 %v2891, 16
        %v3080 = vrot.slane %v3078, 4
        %v3081 = vor.u32 %v3080, %v3076
        %v3082 = vrot.slane %v3081, 4
        %v3084 = vshll.u32 %v2892, 16
        %v3086 = vrot.slane %v3084, 5
        %v3087 = vsel %vm1024, %v3082, %v3086
        %v3089 = vshrl.u32 %v2893, 16
        %v3091 = vrot.slane %v3089, 4
        %v3092 = vshll.u32 %v2893, 16
        %v3094 = vrot.slane %v3092, 5
        %v3095 = vor.u32 %v3091, %v3094
        %v3096 = vrot.slane %v3095, 4
        %v3098 = vshll.u32 %v2894, 16
        %v3100 = vrot.slane %v3098, 5
        %v3101 = vsel %vm1024, %v3096, %v3100
        %v3102 = vshrl.u32 %v2894, 16
        %v3104 = vrot.slane %v3102, 4
        %v3105 = vor.u32 %v3104, %v3100
        %v3106 = vrot.slane %v3105, 4
        %v3108 = vshll.u32 %v2895, 16
        %v3110 = vrot.slane %v3108, 5
        %v3111 = vsel %vm1024, %v3106, %v3110
        %v3113 = vshrl.u32 %v2896, 16
        %v3115 = vrot.slane %v3113, 4
        %v3116 = vshll.u32 %v2896, 16
        %v3118 = vrot.slane %v3116, 5
        %v3119 = vor.u32 %v3115, %v3118
        %v3120 = vrot.slane %v3119, 4
        %v3122 = vshll.u32 %v2897, 16
        %v3124 = vrot.slane %v3122, 5
        %v3125 = vsel %vm1024, %v3120, %v3124
        %v3126 = vshrl.u32 %v2897, 16
        %v3128 = vrot.slane %v3126, 4
        %v3129 = vor.u32 %v3128, %v3124
        %v3130 = vrot.slane %v3129, 4
        %v3132 = vshll.u32 %v2898, 16
        %v3134 = vrot.slane %v3132, 5
        %v3135 = vsel %vm1024, %v3130, %v3134
        %v3137 = vshrl.u32 %v2899, 16
        %v3139 = vrot.slane %v3137, 4
        %v3140 = vshll.u32 %v2899, 16
        %v3142 = vrot.slane %v3140, 5
        %v3143 = vor.u32 %v3139, %v3142
        %v3144 = vrot.slane %v3143, 4
        %v3146 = vshll.u32 %v2900, 16
        %v3148 = vrot.slane %v3146, 5
        %v3149 = vsel %vm1024, %v3144, %v3148
        %v3150 = vshrl.u32 %v2900, 16
        %v3152 = vrot.slane %v3150, 4
        %v3153 = vor.u32 %v3152, %v3148
        %v3154 = vrot.slane %v3153, 4
        %v3156 = vshll.u32 %v2901, 16
        %v3158 = vrot.slane %v3156, 5
        %v3159 = vsel %vm1024, %v3154, %v3158
        %v3161 = vshrl.u32 %v2902, 16
        %v3163 = vrot.slane %v3161, 4
        %v3164 = vshll.u32 %v2902, 16
        %v3166 = vrot.slane %v3164, 5
        %v3167 = vor.u32 %v3163, %v3166
        %v3168 = vrot.slane %v3167, 4
        %v3170 = vshll.u32 %v2903, 16
        %v3172 = vrot.slane %v3170, 5
        %v3173 = vsel %vm1024, %v3168, %v3172
        %v3174 = vshrl.u32 %v2903, 16
        %v3176 = vrot.slane %v3174, 4
        %v3177 = vor.u32 %v3176, %v3172
        %v3178 = vrot.slane %v3177, 4
        %v3180 = vshll.u32 %v2904, 16
        %v3182 = vrot.slane %v3180, 5
        %v3183 = vsel %vm1024, %v3178, %v3182
        %v3185 = vshrl.u32 %v2905, 16
        %v3187 = vrot.slane %v3185, 4
        %v3188 = vshll.u32 %v2905, 16
        %v3190 = vrot.slane %v3188, 5
        %v3191 = vor.u32 %v3187, %v3190
        %v3192 = vrot.slane %v3191, 4
        %v3194 = vshll.u32 %v2906, 16
        %v3196 = vrot.slane %v3194, 5
        %v3197 = vsel %vm1024, %v3192, %v3196
        %v3198 = vshrl.u32 %v2906, 16
        %v3200 = vrot.slane %v3198, 4
        %v3201 = vor.u32 %v3200, %v3196
        %v3202 = vrot.slane %v3201, 4
        %v3204 = vshll.u32 %v2907, 16
        %v3206 = vrot.slane %v3204, 5
        %v3207 = vsel %vm1024, %v3202, %v3206
        %v3209 = vshrl.u32 %v2908, 16
        %v3211 = vrot.slane %v3209, 4
        %v3212 = vshll.u32 %v2908, 16
        %v3214 = vrot.slane %v3212, 5
        %v3215 = vor.u32 %v3211, %v3214
        %v3216 = vrot.slane %v3215, 4
        %v3218 = vshll.u32 %v2909, 16
        %v3220 = vrot.slane %v3218, 5
        %v3221 = vsel %vm1024, %v3216, %v3220
        %v3222 = vshrl.u32 %v2909, 16
        %v3224 = vrot.slane %v3222, 4
        %v3225 = vor.u32 %v3224, %v3220
        %v3226 = vrot.slane %v3225, 4
        %v3228 = vshll.u32 %v2910, 16
        %v3230 = vrot.slane %v3228, 5
        %v3231 = vsel %vm1024, %v3226, %v3230
        %v3233 = vshrl.u32 %v2911, 16
        %v3235 = vrot.slane %v3233, 4
        %v3236 = vshll.u32 %v2911, 16
        %v3238 = vrot.slane %v3236, 5
        %v3239 = vor.u32 %v3235, %v3238
        %v3240 = vrot.slane %v3239, 4
        %v3242 = vshll.u32 %v2912, 16
        %v3244 = vrot.slane %v3242, 5
        %v3245 = vsel %vm1024, %v3240, %v3244
        %v3246 = vshrl.u32 %v2912, 16
        %v3248 = vrot.slane %v3246, 4
        %v3249 = vor.u32 %v3248, %v3244
        %v3250 = vrot.slane %v3249, 4
        %v3252 = vshll.u32 %v2913, 16
        %v3254 = vrot.slane %v3252, 5
        %v3255 = vsel %vm1024, %v3250, %v3254
        %v3257 = vshrl.u32 %v2914, 16
        %v3259 = vrot.slane %v3257, 4
        %v3260 = vshll.u32 %v2914, 16
        %v3262 = vrot.slane %v3260, 5
        %v3263 = vor.u32 %v3259, %v3262
        %v3264 = vrot.slane %v3263, 4
        %v3266 = vshll.u32 %v2915, 16
        %v3268 = vrot.slane %v3266, 5
        %v3269 = vsel %vm1024, %v3264, %v3268
        %v3270 = vshrl.u32 %v2915, 16
        %v3272 = vrot.slane %v3270, 4
        %v3273 = vor.u32 %v3272, %v3268
        %v3274 = vrot.slane %v3273, 4
        %v3276 = vshll.u32 %v2916, 16
        %v3278 = vrot.slane %v3276, 5
        %v3279 = vsel %vm1024, %v3274, %v3278
        %v3281 = vshrl.u32 %v2917, 16
        %v3283 = vrot.slane %v3281, 4
        %v3284 = vshll.u32 %v2917, 16
        %v3286 = vrot.slane %v3284, 5
        %v3287 = vor.u32 %v3283, %v3286
        %v3288 = vrot.slane %v3287, 4
        %v3290 = vshll.u32 %v2918, 16
        %v3292 = vrot.slane %v3290, 5
        %v3293 = vsel %vm1024, %v3288, %v3292
        %v3294 = vshrl.u32 %v2918, 16
        %v3296 = vrot.slane %v3294, 4
        %v3297 = vor.u32 %v3296, %v3292
        %v3298 = vrot.slane %v3297, 4
        %v3300 = vshll.u32 %v2919, 16
        %v3302 = vrot.slane %v3300, 5
        %v3303 = vsel %vm1024, %v3298, %v3302
        %v3304 = vld [vmem:[#allocation6 + $0x100] sm:$0xf]
        %v3305 = vld [vmem:[#allocation6 + $0x104] sm:$0xf]
        %v3306 = vld [vmem:[#allocation6 + $0x108] sm:$0xf]
        %v3307 = vld [vmem:[#allocation6 + $0x10c] sm:$0xf]
        %v3308 = vld [vmem:[#allocation6 + $0x110] sm:$0xf]
        %v3309 = vld [vmem:[#allocation6 + $0x114] sm:$0xf]
        %v3310 = vld [vmem:[#allocation6 + $0x118] sm:$0xf]
        %v3311 = vld [vmem:[#allocation6 + $0x11c] sm:$0xf]
        %v3312 = vld [vmem:[#allocation6 + $0x120] sm:$0xf]
        %v3313 = vld [vmem:[#allocation6 + $0x124] sm:$0xf]
        %v3314 = vld [vmem:[#allocation6 + $0x128] sm:$0xf]
        %v3315 = vld [vmem:[#allocation6 + $0x12c] sm:$0xf]
        %v3316 = vld [vmem:[#allocation6 + $0x130] sm:$0xf]
        %v3317 = vld [vmem:[#allocation6 + $0x134] sm:$0xf]
        %v3318 = vld [vmem:[#allocation6 + $0x138] sm:$0xf]
        %v3319 = vld [vmem:[#allocation6 + $0x13c] sm:$0xf]
        %v3320 = vunpack.c.l.b16 %v2933
        %v3321 = vunpack.c.l.b16 %v2943
        %v3322 = vunpack.c.l.b16 %v2957
        %v3323 = vunpack.c.l.b16 %v2967
        %v3324 = vunpack.c.l.b16 %v2981
        %v3325 = vunpack.c.l.b16 %v2991
        %v3326 = vunpack.c.l.b16 %v3005
        %v3327 = vunpack.c.l.b16 %v3015
        %v3328 = vunpack.c.l.b16 %v3029
        %v3329 = vunpack.c.l.b16 %v3039
        %v3330 = vunpack.c.l.b16 %v3053
        %v3331 = vunpack.c.l.b16 %v3063
        %v3332 = vunpack.c.l.b16 %v3077
        %v3333 = vunpack.c.l.b16 %v3087
        %v3334 = vunpack.c.l.b16 %v3101
        %v3335 = vunpack.c.l.b16 %v3111
        %v3336 = vunpack.c.l.b16 %v3125
        %v3337 = vunpack.c.l.b16 %v3135
        %v3338 = vunpack.c.l.b16 %v3149
        %v3339 = vunpack.c.l.b16 %v3159
        %v3340 = vunpack.c.l.b16 %v3173
        %v3341 = vunpack.c.l.b16 %v3183
        %v3342 = vunpack.c.l.b16 %v3197
        %v3343 = vunpack.c.l.b16 %v3207
        %v3344 = vunpack.c.l.b16 %v3221
        %v3345 = vunpack.c.l.b16 %v3231
        %v3346 = vunpack.c.l.b16 %v3245
        %v3347 = vunpack.c.l.b16 %v3255
        %v3348 = vunpack.c.l.b16 %v3269
        %v3349 = vunpack.c.l.b16 %v3279
        %v3350 = vunpack.c.l.b16 %v3293
        %v3351 = vunpack.c.l.b16 %v3303
        %v3352 = vpack.c.b16 %v3321, %v3320
        %v3353 = vpack.c.b16 %v3323, %v3322
        %v3354 = vpack.c.b16 %v3325, %v3324
        %v3355 = vpack.c.b16 %v3327, %v3326
        %v3356 = vpack.c.b16 %v3329, %v3328
        %v3357 = vpack.c.b16 %v3331, %v3330
        %v3358 = vpack.c.b16 %v3333, %v3332
        %v3359 = vpack.c.b16 %v3335, %v3334
        %v3360 = vpack.c.b16 %v3337, %v3336
        %v3361 = vpack.c.b16 %v3339, %v3338
        %v3362 = vpack.c.b16 %v3341, %v3340
        %v3363 = vpack.c.b16 %v3343, %v3342
        %v3364 = vpack.c.b16 %v3345, %v3344
        %v3365 = vpack.c.b16 %v3347, %v3346
        %v3366 = vpack.c.b16 %v3349, %v3348
        %v3367 = vpack.c.b16 %v3351, %v3350
        %v3400 = vunpack.c.l.b16 %v3304
        %v3401 = vunpack.c.l.b16 %v3305
        %v3402 = vunpack.c.l.b16 %v3306
        %v3403 = vunpack.c.l.b16 %v3307
        %v3404 = vunpack.c.l.b16 %v3308
        %v3405 = vunpack.c.l.b16 %v3309
        %v3406 = vunpack.c.l.b16 %v3310
        %v3407 = vunpack.c.l.b16 %v3311
        %v3408 = vunpack.c.l.b16 %v3312
        %v3409 = vunpack.c.l.b16 %v3313
        %v3410 = vunpack.c.l.b16 %v3314
        %v3411 = vunpack.c.l.b16 %v3315
        %v3412 = vunpack.c.l.b16 %v3316
        %v3413 = vunpack.c.l.b16 %v3317
        %v3414 = vunpack.c.l.b16 %v3318
        %v3415 = vunpack.c.l.b16 %v3319
        %v3416 = vpack.c.b16 %v3401, %v3400
        %v3417 = vpack.c.b16 %v3403, %v3402
        %v3418 = vpack.c.b16 %v3405, %v3404
        %v3419 = vpack.c.b16 %v3407, %v3406
        %v3420 = vpack.c.b16 %v3409, %v3408
        %v3421 = vpack.c.b16 %v3411, %v3410
        %v3422 = vpack.c.b16 %v3413, %v3412
        %v3423 = vpack.c.b16 %v3415, %v3414
        %3432 = vmatprep.subr.bf16.mxu0 0
        %3433 = vmatpush1.bf16.msra.mxu0 %v3416
        %3434 = vmatprep.subr.bf16.mxu0 0
        %3435 = vmatpush1.bf16.msra.mxu0 %v3417
        %3436 = vmatprep.subr.bf16.mxu0 0
        %3437 = vmatpush1.bf16.msra.mxu0 %v3418
        %3438 = vmatprep.subr.bf16.mxu0 0
        %3439 = vmatpush1.bf16.msra.mxu0 %v3419
        %3440 = vmatprep.subr.bf16.mxu0 0
        %3441 = vmatpush1.bf16.msra.mxu0 %v3420
        %3442 = vmatprep.subr.bf16.mxu0 0
        %3443 = vmatpush1.bf16.msra.mxu0 %v3421
        %3444 = vmatprep.subr.bf16.mxu0 0
        %3445 = vmatpush1.bf16.msra.mxu0 %v3422
        %3446 = vmatprep.subr.bf16.mxu0 0
        %3447 = vmatpush1.bf16.msra.mxu0 %v3423
        %3448 = vmatprep.subr.bf16.mxu0 0
        %3449 = vmatpush1.bf16.msra.mxu0 0
        %3450 = vmatprep.subr.bf16.mxu0 0
        %3451 = vmatpush1.bf16.msra.mxu0 0
        %3452 = vmatprep.subr.bf16.mxu0 0
        %3453 = vmatpush1.bf16.msra.mxu0 0
        %3454 = vmatprep.subr.bf16.mxu0 0
        %3455 = vmatpush1.bf16.msra.mxu0 0
        %3456 = vmatprep.subr.bf16.mxu0 0
        %3457 = vmatpush1.bf16.msra.mxu0 0
        %3458 = vmatprep.subr.bf16.mxu0 0
        %3459 = vmatpush1.bf16.msra.mxu0 0
        %3460 = vmatprep.subr.bf16.mxu0 0
        %3461 = vmatpush1.bf16.msra.mxu0 0
        %3462 = vmatprep.subr.bf16.mxu0 0
        %3463 = vmatpush1.bf16.msra.mxu0 0
        %3464 = vmatprep.mubr.bf16.mxu0 0
        %3465 = vmatmul.mubr.bf16.gmra.mrb[0].mxu0 %v3352
        %v3466 = vpop.f32.mrb[0].mxu0
        %v3467 = vadd.f32 0.0, %v3466
        %v3468 = vpop.f32.mrb[0].mxu0
        %v3469 = vpop.f32.mrb[0].mxu0
        %v3470 = vadd.f32 0.0, %v3469
        %v3471 = vpop.f32.mrb[0].mxu0
        %3472 = vmatprep.mubr.bf16.mxu0 0
        %3473 = vmatmul.mubr.bf16.gmra.mrb[0].mxu0 %v3353
        %v3474 = vpop.f32.mrb[0].mxu0
        %v3475 = vadd.f32 0.0, %v3474
        %v3476 = vpop.f32.mrb[0].mxu0
        %v3477 = vpop.f32.mrb[0].mxu0
        %v3478 = vadd.f32 0.0, %v3477
        %v3479 = vpop.f32.mrb[0].mxu0
        %3480 = vmatprep.mubr.bf16.mxu0 0
        %3481 = vmatmul.mubr.bf16.gmra.mrb[0].mxu0 %v3354
        %v3482 = vpop.f32.mrb[0].mxu0
        %v3483 = vadd.f32 0.0, %v3482
        %v3484 = vpop.f32.mrb[0].mxu0
        %v3485 = vpop.f32.mrb[0].mxu0
        %v3486 = vadd.f32 0.0, %v3485
        %v3487 = vpop.f32.mrb[0].mxu0
        %3488 = vmatprep.mubr.bf16.mxu0 0
        %3489 = vmatmul.mubr.bf16.gmra.mrb[0].mxu0 %v3355
        %v3490 = vpop.f32.mrb[0].mxu0
        %v3491 = vadd.f32 0.0, %v3490
        %v3492 = vpop.f32.mrb[0].mxu0
        %v3493 = vpop.f32.mrb[0].mxu0
        %v3494 = vadd.f32 0.0, %v3493
        %v3495 = vpop.f32.mrb[0].mxu0
        %3496 = vmatprep.mubr.bf16.mxu0 0
        %3497 = vmatmul.mubr.bf16.gmra.mrb[0].mxu0 %v3356
        %v3498 = vpop.f32.mrb[0].mxu0
        %v3499 = vadd.f32 0.0, %v3498
        %v3500 = vpop.f32.mrb[0].mxu0
        %v3501 = vpop.f32.mrb[0].mxu0
        %v3502 = vadd.f32 0.0, %v3501
        %v3503 = vpop.f32.mrb[0].mxu0
        %3504 = vmatprep.mubr.bf16.mxu0 0
        %3505 = vmatmul.mubr.bf16.gmra.mrb[0].mxu0 %v3357
        %v3506 = vpop.f32.mrb[0].mxu0
        %v3507 = vadd.f32 0.0, %v3506
        %v3508 = vpop.f32.mrb[0].mxu0
        %v3509 = vpop.f32.mrb[0].mxu0
        %v3510 = vadd.f32 0.0, %v3509
        %v3511 = vpop.f32.mrb[0].mxu0
        %3512 = vmatprep.mubr.bf16.mxu0 0
        %3513 = vmatmul.mubr.bf16.gmra.mrb[0].mxu0 %v3358
        %v3514 = vpop.f32.mrb[0].mxu0
        %v3515 = vadd.f32 0.0, %v3514
        %v3516 = vpop.f32.mrb[0].mxu0
        %v3517 = vpop.f32.mrb[0].mxu0
        %v3518 = vadd.f32 0.0, %v3517
        %v3519 = vpop.f32.mrb[0].mxu0
        %3520 = vmatprep.mubr.bf16.mxu0 0
        %3521 = vmatmul.mubr.bf16.gmra.mrb[0].mxu0 %v3359
        %v3522 = vpop.f32.mrb[0].mxu0
        %v3523 = vadd.f32 0.0, %v3522
        %v3524 = vpop.f32.mrb[0].mxu0
        %v3525 = vpop.f32.mrb[0].mxu0
        %v3526 = vadd.f32 0.0, %v3525
        %v3527 = vpop.f32.mrb[0].mxu0
        %3528 = vmatprep.mubr.bf16.mxu0 0
        %3529 = vmatmul.mubr.bf16.gmra.mrb[0].mxu0 %v3360
        %v3530 = vpop.f32.mrb[0].mxu0
        %v3531 = vadd.f32 0.0, %v3530
        %v3532 = vpop.f32.mrb[0].mxu0
        %v3533 = vpop.f32.mrb[0].mxu0
        %v3534 = vadd.f32 0.0, %v3533
        %v3535 = vpop.f32.mrb[0].mxu0
        %3536 = vmatprep.mubr.bf16.mxu0 0
        %3537 = vmatmul.mubr.bf16.gmra.mrb[0].mxu0 %v3361
        %v3538 = vpop.f32.mrb[0].mxu0
        %v3539 = vadd.f32 0.0, %v3538
        %v3540 = vpop.f32.mrb[0].mxu0
        %v3541 = vpop.f32.mrb[0].mxu0
        %v3542 = vadd.f32 0.0, %v3541
        %v3543 = vpop.f32.mrb[0].mxu0
        %3544 = vmatprep.mubr.bf16.mxu0 0
        %3545 = vmatmul.mubr.bf16.gmra.mrb[0].mxu0 %v3362
        %v3546 = vpop.f32.mrb[0].mxu0
        %v3547 = vadd.f32 0.0, %v3546
        %v3548 = vpop.f32.mrb[0].mxu0
        %v3549 = vpop.f32.mrb[0].mxu0
        %v3550 = vadd.f32 0.0, %v3549
        %v3551 = vpop.f32.mrb[0].mxu0
        %3552 = vmatprep.mubr.bf16.mxu0 0
        %3553 = vmatmul.mubr.bf16.gmra.mrb[0].mxu0 %v3363
        %v3554 = vpop.f32.mrb[0].mxu0
        %v3555 = vadd.f32 0.0, %v3554
        %v3556 = vpop.f32.mrb[0].mxu0
        %v3557 = vpop.f32.mrb[0].mxu0
        %v3558 = vadd.f32 0.0, %v3557
        %v3559 = vpop.f32.mrb[0].mxu0
        %3560 = vmatprep.mubr.bf16.mxu0 0
        %3561 = vmatmul.mubr.bf16.gmra.mrb[0].mxu0 %v3364
        %v3562 = vpop.f32.mrb[0].mxu0
        %v3563 = vadd.f32 0.0, %v3562
        %v3564 = vpop.f32.mrb[0].mxu0
        %v3565 = vpop.f32.mrb[0].mxu0
        %v3566 = vadd.f32 0.0, %v3565
        %v3567 = vpop.f32.mrb[0].mxu0
        %3568 = vmatprep.mubr.bf16.mxu0 0
        %3569 = vmatmul.mubr.bf16.gmra.mrb[0].mxu0 %v3365
        %v3570 = vpop.f32.mrb[0].mxu0
        %v3571 = vadd.f32 0.0, %v3570
        %v3572 = vpop.f32.mrb[0].mxu0
        %v3573 = vpop.f32.mrb[0].mxu0
        %v3574 = vadd.f32 0.0, %v3573
        %v3575 = vpop.f32.mrb[0].mxu0
        %3576 = vmatprep.mubr.bf16.mxu0 0
        %3577 = vmatmul.mubr.bf16.gmra.mrb[0].mxu0 %v3366
        %v3578 = vpop.f32.mrb[0].mxu0
        %v3579 = vadd.f32 0.0, %v3578
        %v3580 = vpop.f32.mrb[0].mxu0
        %v3581 = vpop.f32.mrb[0].mxu0
        %v3582 = vadd.f32 0.0, %v3581
        %v3583 = vpop.f32.mrb[0].mxu0
        %3584 = vmatprep.mubr.bf16.mxu0 0
        %3585 = vmatmul.mubr.bf16.gmra.mrb[0].mxu0 %v3367
        %v3586 = vpop.f32.mrb[0].mxu0
        %v3587 = vadd.f32 0.0, %v3586
        %v3588 = vpop.f32.mrb[0].mxu0
        %v3589 = vpop.f32.mrb[0].mxu0
        %v3590 = vadd.f32 0.0, %v3589
        %v3591 = vpop.f32.mrb[0].mxu0
        %3592 = vdwg.mxu0
        %v3593 = vadd.f32 %v2840, %v3467
        %v3594 = vadd.f32 %v2841, %v3470
        %v3595 = vadd.f32 %v2842, %v3475
        %v3596 = vadd.f32 %v2843, %v3478
        %v3597 = vadd.f32 %v2844, %v3483
        %v3598 = vadd.f32 %v2845, %v3486
        %v3599 = vadd.f32 %v2846, %v3491
        %v3600 = vadd.f32 %v2847, %v3494
        %v3601 = vadd.f32 %v2848, %v3499
        %v3602 = vadd.f32 %v2849, %v3502
        %v3603 = vadd.f32 %v2850, %v3507
        %v3604 = vadd.f32 %v2851, %v3510
        %v3605 = vadd.f32 %v2852, %v3515
        %v3606 = vadd.f32 %v2853, %v3518
        %v3607 = vadd.f32 %v2854, %v3523
        %v3608 = vadd.f32 %v2855, %v3526
        %v3609 = vadd.f32 %v2856, %v3531
        %v3610 = vadd.f32 %v2857, %v3534
        %v3611 = vadd.f32 %v2858, %v3539
        %v3612 = vadd.f32 %v2859, %v3542
        %v3613 = vadd.f32 %v2860, %v3547
        %v3614 = vadd.f32 %v2861, %v3550
        %v3615 = vadd.f32 %v2862, %v3555
        %v3616 = vadd.f32 %v2863, %v3558
        %v3617 = vadd.f32 %v2864, %v3563
        %v3618 = vadd.f32 %v2865, %v3566
        %v3619 = vadd.f32 %v2866, %v3571
        %v3620 = vadd.f32 %v2867, %v3574
        %v3621 = vadd.f32 %v2868, %v3579
        %v3622 = vadd.f32 %v2869, %v3582
        %v3623 = vadd.f32 %v2870, %v3587
        %v3624 = vadd.f32 %v2871, %v3590
        %v3625 = vld [vmem:[%s843] sm:$0xe]
        %v3626 = vld [vmem:[%s843 + $0xc] sm:$0xe]
        %v3627 = vld [vmem:[%s843 + $0x18] sm:$0xe]
        %v3628 = vld [vmem:[%s843 + $0x24] sm:$0xe]
        %v3629 = vld [vmem:[%s843 + $0x30] sm:$0xe]
        %v3630 = vld [vmem:[%s843 + $0x3c] sm:$0xe]
        %v3631 = vld [vmem:[%s843 + $0x48] sm:$0xe]
        %v3632 = vld [vmem:[%s843 + $0x54] sm:$0xe]
        %v3633 = vld [vmem:[%s843 + $0x60] sm:$0xe]
        %v3634 = vld [vmem:[%s843 + $0x6c] sm:$0xe]
        %v3635 = vld [vmem:[%s843 + $0x78] sm:$0xe]
        %v3636 = vld [vmem:[%s843 + $0x84] sm:$0xe]
        %v3637 = vld [vmem:[%s843 + $0x90] sm:$0xe]
        %v3638 = vld [vmem:[%s843 + $0x9c] sm:$0xe]
        %v3639 = vld [vmem:[%s843 + $0xa8] sm:$0xe]
        %v3640 = vld [vmem:[%s843 + $0xb4] sm:$0xe]
        %v3689 = vrot.slane %v3625, 5
        %v3690 = vrot.slane %v3689, 4
        %v3691 = vrot.slane %v2873, 5
        %v3692 = vsel %vm2053, %v3690, %v3691
        %v3693 = vrot.slane %v3691, 4
        %v3694 = vrot.slane %v2874, 5
        %v3695 = vsel %vm2053, %v3693, %v3694
        %v3696 = vrot.slane %v3626, 5
        %v3697 = vrot.slane %v3696, 4
        %v3698 = vrot.slane %v2876, 5
        %v3699 = vsel %vm2053, %v3697, %v3698
        %v3700 = vrot.slane %v3698, 4
        %v3701 = vrot.slane %v2877, 5
        %v3702 = vsel %vm2053, %v3700, %v3701
        %v3703 = vrot.slane %v3627, 5
        %v3704 = vrot.slane %v3703, 4
        %v3705 = vrot.slane %v2879, 5
        %v3706 = vsel %vm2053, %v3704, %v3705
        %v3707 = vrot.slane %v3705, 4
        %v3708 = vrot.slane %v2880, 5
        %v3709 = vsel %vm2053, %v3707, %v3708
        %v3710 = vrot.slane %v3628, 5
        %v3711 = vrot.slane %v3710, 4
        %v3712 = vrot.slane %v2882, 5
        %v3713 = vsel %vm2053, %v3711, %v3712
        %v3714 = vrot.slane %v3712, 4
        %v3715 = vrot.slane %v2883, 5
        %v3716 = vsel %vm2053, %v3714, %v3715
        %v3717 = vrot.slane %v3629, 5
        %v3718 = vrot.slane %v3717, 4
        %v3719 = vrot.slane %v2885, 5
        %v3720 = vsel %vm2053, %v3718, %v3719
        %v3721 = vrot.slane %v3719, 4
        %v3722 = vrot.slane %v2886, 5
        %v3723 = vsel %vm2053, %v3721, %v3722
        %v3724 = vrot.slane %v3630, 5
        %v3725 = vrot.slane %v3724, 4
        %v3726 = vrot.slane %v2888, 5
        %v3727 = vsel %vm2053, %v3725, %v3726
        %v3728 = vrot.slane %v3726, 4
        %v3729 = vrot.slane %v2889, 5
        %v3730 = vsel %vm2053, %v3728, %v3729
        %v3731 = vrot.slane %v3631, 5
        %v3732 = vrot.slane %v3731, 4
        %v3733 = vrot.slane %v2891, 5
        %v3734 = vsel %vm2053, %v3732, %v3733
        %v3735 = vrot.slane %v3733, 4
        %v3736 = vrot.slane %v2892, 5
        %v3737 = vsel %vm2053, %v3735, %v3736
        %v3738 = vrot.slane %v3632, 5
        %v3739 = vrot.slane %v3738, 4
        %v3740 = vrot.slane %v2894, 5
        %v3741 = vsel %vm2053, %v3739, %v3740
        %v3742 = vrot.slane %v3740, 4
        %v3743 = vrot.slane %v2895, 5
        %v3744 = vsel %vm2053, %v3742, %v3743
        %v3745 = vrot.slane %v3633, 5
        %v3746 = vrot.slane %v3745, 4
        %v3747 = vrot.slane %v2897, 5
        %v3748 = vsel %vm2053, %v3746, %v3747
        %v3749 = vrot.slane %v3747, 4
        %v3750 = vrot.slane %v2898, 5
        %v3751 = vsel %vm2053, %v3749, %v3750
        %v3752 = vrot.slane %v3634, 5
        %v3753 = vrot.slane %v3752, 4
        %v3754 = vrot.slane %v2900, 5
        %v3755 = vsel %vm2053, %v3753, %v3754
        %v3756 = vrot.slane %v3754, 4
        %v3757 = vrot.slane %v2901, 5
        %v3758 = vsel %vm2053, %v3756, %v3757
        %v3759 = vrot.slane %v3635, 5
        %v3760 = vrot.slane %v3759, 4
        %v3761 = vrot.slane %v2903, 5
        %v3762 = vsel %vm2053, %v3760, %v3761
        %v3763 = vrot.slane %v3761, 4
        %v3764 = vrot.slane %v2904, 5
        %v3765 = vsel %vm2053, %v3763, %v3764
        %v3766 = vrot.slane %v3636, 5
        %v3767 = vrot.slane %v3766, 4
        %v3768 = vrot.slane %v2906, 5
        %v3769 = vsel %vm2053, %v3767, %v3768
        %v3770 = vrot.slane %v3768, 4
        %v3771 = vrot.slane %v2907, 5
        %v3772 = vsel %vm2053, %v3770, %v3771
        %v3773 = vrot.slane %v3637, 5
        %v3774 = vrot.slane %v3773, 4
        %v3775 = vrot.slane %v2909, 5
        %v3776 = vsel %vm2053, %v3774, %v3775
        %v3777 = vrot.slane %v3775, 4
        %v3778 = vrot.slane %v2910, 5
        %v3779 = vsel %vm2053, %v3777, %v3778
        %v3780 = vrot.slane %v3638, 5
        %v3781 = vrot.slane %v3780, 4
        %v3782 = vrot.slane %v2912, 5
        %v3783 = vsel %vm2053, %v3781, %v3782
        %v3784 = vrot.slane %v3782, 4
        %v3785 = vrot.slane %v2913, 5
        %v3786 = vsel %vm2053, %v3784, %v3785
        %v3787 = vrot.slane %v3639, 5
        %v3788 = vrot.slane %v3787, 4
        %v3789 = vrot.slane %v2915, 5
        %v3790 = vsel %vm2053, %v3788, %v3789
        %v3791 = vrot.slane %v3789, 4
        %v3792 = vrot.slane %v2916, 5
        %v3793 = vsel %vm2053, %v3791, %v3792
        %v3794 = vrot.slane %v3640, 5
        %v3795 = vrot.slane %v3794, 4
        %v3796 = vrot.slane %v2918, 5
        %v3797 = vsel %vm2053, %v3795, %v3796
        %v3798 = vrot.slane %v3796, 4
        %v3799 = vrot.slane %v2919, 5
        %v3800 = vsel %vm2053, %v3798, %v3799
        %v3801 = vld [vmem:[#allocation6 + $0x140] sm:$0xf]
        %v3802 = vld [vmem:[#allocation6 + $0x144] sm:$0xf]
        %v3803 = vld [vmem:[#allocation6 + $0x148] sm:$0xf]
        %v3804 = vld [vmem:[#allocation6 + $0x14c] sm:$0xf]
        %v3805 = vld [vmem:[#allocation6 + $0x150] sm:$0xf]
        %v3806 = vld [vmem:[#allocation6 + $0x154] sm:$0xf]
        %v3807 = vld [vmem:[#allocation6 + $0x158] sm:$0xf]
        %v3808 = vld [vmem:[#allocation6 + $0x15c] sm:$0xf]
        %v3809 = vld [vmem:[#allocation6 + $0x160] sm:$0xf]
        %v3810 = vld [vmem:[#allocation6 + $0x164] sm:$0xf]
        %v3811 = vld [vmem:[#allocation6 + $0x168] sm:$0xf]
        %v3812 = vld [vmem:[#allocation6 + $0x16c] sm:$0xf]
        %v3813 = vld [vmem:[#allocation6 + $0x170] sm:$0xf]
        %v3814 = vld [vmem:[#allocation6 + $0x174] sm:$0xf]
        %v3815 = vld [vmem:[#allocation6 + $0x178] sm:$0xf]
        %v3816 = vld [vmem:[#allocation6 + $0x17c] sm:$0xf]
        %v3817 = vunpack.c.l.b16 %v3692
        %v3818 = vunpack.c.l.b16 %v3695
        %v3819 = vunpack.c.l.b16 %v3699
        %v3820 = vunpack.c.l.b16 %v3702
        %v3821 = vunpack.c.l.b16 %v3706
        %v3822 = vunpack.c.l.b16 %v3709
        %v3823 = vunpack.c.l.b16 %v3713
        %v3824 = vunpack.c.l.b16 %v3716
        %v3825 = vunpack.c.l.b16 %v3720
        %v3826 = vunpack.c.l.b16 %v3723
        %v3827 = vunpack.c.l.b16 %v3727
        %v3828 = vunpack.c.l.b16 %v3730
        %v3829 = vunpack.c.l.b16 %v3734
        %v3830 = vunpack.c.l.b16 %v3737
        %v3831 = vunpack.c.l.b16 %v3741
        %v3832 = vunpack.c.l.b16 %v3744
        %v3833 = vunpack.c.l.b16 %v3748
        %v3834 = vunpack.c.l.b16 %v3751
        %v3835 = vunpack.c.l.b16 %v3755
        %v3836 = vunpack.c.l.b16 %v3758
        %v3837 = vunpack.c.l.b16 %v3762
        %v3838 = vunpack.c.l.b16 %v3765
        %v3839 = vunpack.c.l.b16 %v3769
        %v3840 = vunpack.c.l.b16 %v3772
        %v3841 = vunpack.c.l.b16 %v3776
        %v3842 = vunpack.c.l.b16 %v3779
        %v3843 = vunpack.c.l.b16 %v3783
        %v3844 = vunpack.c.l.b16 %v3786
        %v3845 = vunpack.c.l.b16 %v3790
        %v3846 = vunpack.c.l.b16 %v3793
        %v3847 = vunpack.c.l.b16 %v3797
        %v3848 = vunpack.c.l.b16 %v3800
        %v3849 = vpack.c.b16 %v3818, %v3817
        %v3850 = vpack.c.b16 %v3820, %v3819
        %v3851 = vpack.c.b16 %v3822, %v3821
        %v3852 = vpack.c.b16 %v3824, %v3823
        %v3853 = vpack.c.b16 %v3826, %v3825
        %v3854 = vpack.c.b16 %v3828, %v3827
        %v3855 = vpack.c.b16 %v3830, %v3829
        %v3856 = vpack.c.b16 %v3832, %v3831
        %v3857 = vpack.c.b16 %v3834, %v3833
        %v3858 = vpack.c.b16 %v3836, %v3835
        %v3859 = vpack.c.b16 %v3838, %v3837
        %v3860 = vpack.c.b16 %v3840, %v3839
        %v3861 = vpack.c.b16 %v3842, %v3841
        %v3862 = vpack.c.b16 %v3844, %v3843
        %v3863 = vpack.c.b16 %v3846, %v3845
        %v3864 = vpack.c.b16 %v3848, %v3847
        %v3897 = vunpack.c.l.b16 %v3801
        %v3898 = vunpack.c.l.b16 %v3802
        %v3899 = vunpack.c.l.b16 %v3803
        %v3900 = vunpack.c.l.b16 %v3804
        %v3901 = vunpack.c.l.b16 %v3805
        %v3902 = vunpack.c.l.b16 %v3806
        %v3903 = vunpack.c.l.b16 %v3807
        %v3904 = vunpack.c.l.b16 %v3808
        %v3905 = vunpack.c.l.b16 %v3809
        %v3906 = vunpack.c.l.b16 %v3810
        %v3907 = vunpack.c.l.b16 %v3811
        %v3908 = vunpack.c.l.b16 %v3812
        %v3909 = vunpack.c.l.b16 %v3813
        %v3910 = vunpack.c.l.b16 %v3814
        %v3911 = vunpack.c.l.b16 %v3815
        %v3912 = vunpack.c.l.b16 %v3816
        %v3913 = vpack.c.b16 %v3898, %v3897
        %v3914 = vpack.c.b16 %v3900, %v3899
        %v3915 = vpack.c.b16 %v3902, %v3901
        %v3916 = vpack.c.b16 %v3904, %v3903
        %v3917 = vpack.c.b16 %v3906, %v3905
        %v3918 = vpack.c.b16 %v3908, %v3907
        %v3919 = vpack.c.b16 %v3910, %v3909
        %v3920 = vpack.c.b16 %v3912, %v3911
        %3929 = vmatprep.subr.bf16.mxu0 0
        %3930 = vmatpush1.bf16.msra.mxu0 %v3913
        %3931 = vmatprep.subr.bf16.mxu0 0
        %3932 = vmatpush1.bf16.msra.mxu0 %v3914
        %3933 = vmatprep.subr.bf16.mxu0 0
        %3934 = vmatpush1.bf16.msra.mxu0 %v3915
        %3935 = vmatprep.subr.bf16.mxu0 0
        %3936 = vmatpush1.bf16.msra.mxu0 %v3916
        %3937 = vmatprep.subr.bf16.mxu0 0
        %3938 = vmatpush1.bf16.msra.mxu0 %v3917
        %3939 = vmatprep.subr.bf16.mxu0 0
        %3940 = vmatpush1.bf16.msra.mxu0 %v3918
        %3941 = vmatprep.subr.bf16.mxu0 0
        %3942 = vmatpush1.bf16.msra.mxu0 %v3919
        %3943 = vmatprep.subr.bf16.mxu0 0
        %3944 = vmatpush1.bf16.msra.mxu0 %v3920
        %3945 = vmatprep.subr.bf16.mxu0 0
        %3946 = vmatpush1.bf16.msra.mxu0 0
        %3947 = vmatprep.subr.bf16.mxu0 0
        %3948 = vmatpush1.bf16.msra.mxu0 0
        %3949 = vmatprep.subr.bf16.mxu0 0
        %3950 = vmatpush1.bf16.msra.mxu0 0
        %3951 = vmatprep.subr.bf16.mxu0 0
        %3952 = vmatpush1.bf16.msra.mxu0 0
        %3953 = vmatprep.subr.bf16.mxu0 0
        %3954 = vmatpush1.bf16.msra.mxu0 0
        %3955 = vmatprep.subr.bf16.mxu0 0
        %3956 = vmatpush1.bf16.msra.mxu0 0
        %3957 = vmatprep.subr.bf16.mxu0 0
        %3958 = vmatpush1.bf16.msra.mxu0 0
        %3959 = vmatprep.subr.bf16.mxu0 0
        %3960 = vmatpush1.bf16.msra.mxu0 0
        %3961 = vmatprep.mubr.bf16.mxu0 0
        %3962 = vmatmul.mubr.bf16.gmra.mrb[0].mxu0 %v3849
        %v3963 = vpop.f32.mrb[0].mxu0
        %v3964 = vadd.f32 0.0, %v3963
        %v3965 = vpop.f32.mrb[0].mxu0
        %v3966 = vpop.f32.mrb[0].mxu0
        %v3967 = vadd.f32 0.0, %v3966
        %v3968 = vpop.f32.mrb[0].mxu0
        %3969 = vmatprep.mubr.bf16.mxu0 0
        %3970 = vmatmul.mubr.bf16.gmra.mrb[0].mxu0 %v3850
        %v3971 = vpop.f32.mrb[0].mxu0
        %v3972 = vadd.f32 0.0, %v3971
        %v3973 = vpop.f32.mrb[0].mxu0
        %v3974 = vpop.f32.mrb[0].mxu0
        %v3975 = vadd.f32 0.0, %v3974
        %v3976 = vpop.f32.mrb[0].mxu0
        %3977 = vmatprep.mubr.bf16.mxu0 0
        %3978 = vmatmul.mubr.bf16.gmra.mrb[0].mxu0 %v3851
        %v3979 = vpop.f32.mrb[0].mxu0
        %v3980 = vadd.f32 0.0, %v3979
        %v3981 = vpop.f32.mrb[0].mxu0
        %v3982 = vpop.f32.mrb[0].mxu0
        %v3983 = vadd.f32 0.0, %v3982
        %v3984 = vpop.f32.mrb[0].mxu0
        %3985 = vmatprep.mubr.bf16.mxu0 0
        %3986 = vmatmul.mubr.bf16.gmra.mrb[0].mxu0 %v3852
        %v3987 = vpop.f32.mrb[0].mxu0
        %v3988 = vadd.f32 0.0, %v3987
        %v3989 = vpop.f32.mrb[0].mxu0
        %v3990 = vpop.f32.mrb[0].mxu0
        %v3991 = vadd.f32 0.0, %v3990
        %v3992 = vpop.f32.mrb[0].mxu0
        %3993 = vmatprep.mubr.bf16.mxu0 0
        %3994 = vmatmul.mubr.bf16.gmra.mrb[0].mxu0 %v3853
        %v3995 = vpop.f32.mrb[0].mxu0
        %v3996 = vadd.f32 0.0, %v3995
        %v3997 = vpop.f32.mrb[0].mxu0
        %v3998 = vpop.f32.mrb[0].mxu0
        %v3999 = vadd.f32 0.0, %v3998
        %v4000 = vpop.f32.mrb[0].mxu0
        %4001 = vmatprep.mubr.bf16.mxu0 0
        %4002 = vmatmul.mubr.bf16.gmra.mrb[0].mxu0 %v3854
        %v4003 = vpop.f32.mrb[0].mxu0
        %v4004 = vadd.f32 0.0, %v4003
        %v4005 = vpop.f32.mrb[0].mxu0
        %v4006 = vpop.f32.mrb[0].mxu0
        %v4007 = vadd.f32 0.0, %v4006
        %v4008 = vpop.f32.mrb[0].mxu0
        %4009 = vmatprep.mubr.bf16.mxu0 0
        %4010 = vmatmul.mubr.bf16.gmra.mrb[0].mxu0 %v3855
        %v4011 = vpop.f32.mrb[0].mxu0
        %v4012 = vadd.f32 0.0, %v4011
        %v4013 = vpop.f32.mrb[0].mxu0
        %v4014 = vpop.f32.mrb[0].mxu0
        %v4015 = vadd.f32 0.0, %v4014
        %v4016 = vpop.f32.mrb[0].mxu0
        %4017 = vmatprep.mubr.bf16.mxu0 0
        %4018 = vmatmul.mubr.bf16.gmra.mrb[0].mxu0 %v3856
        %v4019 = vpop.f32.mrb[0].mxu0
        %v4020 = vadd.f32 0.0, %v4019
        %v4021 = vpop.f32.mrb[0].mxu0
        %v4022 = vpop.f32.mrb[0].mxu0
        %v4023 = vadd.f32 0.0, %v4022
        %v4024 = vpop.f32.mrb[0].mxu0
        %4025 = vmatprep.mubr.bf16.mxu0 0
        %4026 = vmatmul.mubr.bf16.gmra.mrb[0].mxu0 %v3857
        %v4027 = vpop.f32.mrb[0].mxu0
        %v4028 = vadd.f32 0.0, %v4027
        %v4029 = vpop.f32.mrb[0].mxu0
        %v4030 = vpop.f32.mrb[0].mxu0
        %v4031 = vadd.f32 0.0, %v4030
        %v4032 = vpop.f32.mrb[0].mxu0
        %4033 = vmatprep.mubr.bf16.mxu0 0
        %4034 = vmatmul.mubr.bf16.gmra.mrb[0].mxu0 %v3858
        %v4035 = vpop.f32.mrb[0].mxu0
        %v4036 = vadd.f32 0.0, %v4035
        %v4037 = vpop.f32.mrb[0].mxu0
        %v4038 = vpop.f32.mrb[0].mxu0
        %v4039 = vadd.f32 0.0, %v4038
        %v4040 = vpop.f32.mrb[0].mxu0
        %4041 = vmatprep.mubr.bf16.mxu0 0
        %4042 = vmatmul.mubr.bf16.gmra.mrb[0].mxu0 %v3859
        %v4043 = vpop.f32.mrb[0].mxu0
        %v4044 = vadd.f32 0.0, %v4043
        %v4045 = vpop.f32.mrb[0].mxu0
        %v4046 = vpop.f32.mrb[0].mxu0
        %v4047 = vadd.f32 0.0, %v4046
        %v4048 = vpop.f32.mrb[0].mxu0
        %4049 = vmatprep.mubr.bf16.mxu0 0
        %4050 = vmatmul.mubr.bf16.gmra.mrb[0].mxu0 %v3860
        %v4051 = vpop.f32.mrb[0].mxu0
        %v4052 = vadd.f32 0.0, %v4051
        %v4053 = vpop.f32.mrb[0].mxu0
        %v4054 = vpop.f32.mrb[0].mxu0
        %v4055 = vadd.f32 0.0, %v4054
        %v4056 = vpop.f32.mrb[0].mxu0
        %4057 = vmatprep.mubr.bf16.mxu0 0
        %4058 = vmatmul.mubr.bf16.gmra.mrb[0].mxu0 %v3861
        %v4059 = vpop.f32.mrb[0].mxu0
        %v4060 = vadd.f32 0.0, %v4059
        %v4061 = vpop.f32.mrb[0].mxu0
        %v4062 = vpop.f32.mrb[0].mxu0
        %v4063 = vadd.f32 0.0, %v4062
        %v4064 = vpop.f32.mrb[0].mxu0
        %4065 = vmatprep.mubr.bf16.mxu0 0
        %4066 = vmatmul.mubr.bf16.gmra.mrb[0].mxu0 %v3862
        %v4067 = vpop.f32.mrb[0].mxu0
        %v4068 = vadd.f32 0.0, %v4067
        %v4069 = vpop.f32.mrb[0].mxu0
        %v4070 = vpop.f32.mrb[0].mxu0
        %v4071 = vadd.f32 0.0, %v4070
        %v4072 = vpop.f32.mrb[0].mxu0
        %4073 = vmatprep.mubr.bf16.mxu0 0
        %4074 = vmatmul.mubr.bf16.gmra.mrb[0].mxu0 %v3863
        %v4075 = vpop.f32.mrb[0].mxu0
        %v4076 = vadd.f32 0.0, %v4075
        %v4077 = vpop.f32.mrb[0].mxu0
        %v4078 = vpop.f32.mrb[0].mxu0
        %v4079 = vadd.f32 0.0, %v4078
        %v4080 = vpop.f32.mrb[0].mxu0
        %4081 = vmatprep.mubr.bf16.mxu0 0
        %4082 = vmatmul.mubr.bf16.gmra.mrb[0].mxu0 %v3864
        %v4083 = vpop.f32.mrb[0].mxu0
        %v4084 = vadd.f32 0.0, %v4083
        %v4085 = vpop.f32.mrb[0].mxu0
        %v4086 = vpop.f32.mrb[0].mxu0
        %v4087 = vadd.f32 0.0, %v4086
        %v4088 = vpop.f32.mrb[0].mxu0
        %4089 = vdwg.mxu0
        %v4090 = vadd.f32 %v3593, %v3964
        %v4091 = vadd.f32 %v3594, %v3967
        %v4092 = vadd.f32 %v3595, %v3972
        %v4093 = vadd.f32 %v3596, %v3975
        %v4094 = vadd.f32 %v3597, %v3980
        %v4095 = vadd.f32 %v3598, %v3983
        %v4096 = vadd.f32 %v3599, %v3988
        %v4097 = vadd.f32 %v3600, %v3991
        %v4098 = vadd.f32 %v3601, %v3996
        %v4099 = vadd.f32 %v3602, %v3999
        %v4100 = vadd.f32 %v3603, %v4004
        %v4101 = vadd.f32 %v3604, %v4007
        %v4102 = vadd.f32 %v3605, %v4012
        %v4103 = vadd.f32 %v3606, %v4015
        %v4104 = vadd.f32 %v3607, %v4020
        %v4105 = vadd.f32 %v3608, %v4023
        %v4106 = vadd.f32 %v3609, %v4028
        %v4107 = vadd.f32 %v3610, %v4031
        %v4108 = vadd.f32 %v3611, %v4036
        %v4109 = vadd.f32 %v3612, %v4039
        %v4110 = vadd.f32 %v3613, %v4044
        %v4111 = vadd.f32 %v3614, %v4047
        %v4112 = vadd.f32 %v3615, %v4052
        %v4113 = vadd.f32 %v3616, %v4055
        %v4114 = vadd.f32 %v3617, %v4060
        %v4115 = vadd.f32 %v3618, %v4063
        %v4116 = vadd.f32 %v3619, %v4068
        %v4117 = vadd.f32 %v3620, %v4071
        %v4118 = vadd.f32 %v3621, %v4076
        %v4119 = vadd.f32 %v3622, %v4079
        %v4120 = vadd.f32 %v3623, %v4084
        %v4121 = vadd.f32 %v3624, %v4087
        %s4122 = scalar_lea.vmem [#allocation2], 24
        %v4123 = vld [vmem:[%s4122] sm:$0xf]
        %v4124 = vld [vmem:[%s4122 + $0x4] sm:$0xf]
        %v4125 = vld [vmem:[%s4122 + $0xc] sm:$0xf]
        %v4126 = vld [vmem:[%s4122 + $0x10] sm:$0xf]
        %v4127 = vld [vmem:[%s4122 + $0x18] sm:$0xf]
        %v4128 = vld [vmem:[%s4122 + $0x1c] sm:$0xf]
        %v4129 = vld [vmem:[%s4122 + $0x24] sm:$0xf]
        %v4130 = vld [vmem:[%s4122 + $0x28] sm:$0xf]
        %v4131 = vld [vmem:[%s4122 + $0x30] sm:$0xf]
        %v4132 = vld [vmem:[%s4122 + $0x34] sm:$0xf]
        %v4133 = vld [vmem:[%s4122 + $0x3c] sm:$0xf]
        %v4134 = vld [vmem:[%s4122 + $0x40] sm:$0xf]
        %v4135 = vld [vmem:[%s4122 + $0x48] sm:$0xf]
        %v4136 = vld [vmem:[%s4122 + $0x4c] sm:$0xf]
        %v4137 = vld [vmem:[%s4122 + $0x54] sm:$0xf]
        %v4138 = vld [vmem:[%s4122 + $0x58] sm:$0xf]
        %v4139 = vld [vmem:[%s4122 + $0x60] sm:$0xf]
        %v4140 = vld [vmem:[%s4122 + $0x64] sm:$0xf]
        %v4141 = vld [vmem:[%s4122 + $0x6c] sm:$0xf]
        %v4142 = vld [vmem:[%s4122 + $0x70] sm:$0xf]
        %v4143 = vld [vmem:[%s4122 + $0x78] sm:$0xf]
        %v4144 = vld [vmem:[%s4122 + $0x7c] sm:$0xf]
        %v4145 = vld [vmem:[%s4122 + $0x84] sm:$0xf]
        %v4146 = vld [vmem:[%s4122 + $0x88] sm:$0xf]
        %v4147 = vld [vmem:[%s4122 + $0x90] sm:$0xf]
        %v4148 = vld [vmem:[%s4122 + $0x94] sm:$0xf]
        %v4149 = vld [vmem:[%s4122 + $0x9c] sm:$0xf]
        %v4150 = vld [vmem:[%s4122 + $0xa0] sm:$0xf]
        %v4151 = vld [vmem:[%s4122 + $0xa8] sm:$0xf]
        %v4152 = vld [vmem:[%s4122 + $0xac] sm:$0xf]
        %v4153 = vld [vmem:[%s4122 + $0xb4] sm:$0xf]
        %v4154 = vld [vmem:[%s4122 + $0xb8] sm:$0xf]
        %v4155 = vld [vmem:[#allocation6 + $0x180] sm:$0xf]
        %v4156 = vld [vmem:[#allocation6 + $0x184] sm:$0xf]
        %v4157 = vld [vmem:[#allocation6 + $0x188] sm:$0xf]
        %v4158 = vld [vmem:[#allocation6 + $0x18c] sm:$0xf]
        %v4159 = vld [vmem:[#allocation6 + $0x190] sm:$0xf]
        %v4160 = vld [vmem:[#allocation6 + $0x194] sm:$0xf]
        %v4161 = vld [vmem:[#allocation6 + $0x198] sm:$0xf]
        %v4162 = vld [vmem:[#allocation6 + $0x19c] sm:$0xf]
        %v4163 = vld [vmem:[#allocation6 + $0x1a0] sm:$0xf]
        %v4164 = vld [vmem:[#allocation6 + $0x1a4] sm:$0xf]
        %v4165 = vld [vmem:[#allocation6 + $0x1a8] sm:$0xf]
        %v4166 = vld [vmem:[#allocation6 + $0x1ac] sm:$0xf]
        %v4167 = vld [vmem:[#allocation6 + $0x1b0] sm:$0xf]
        %v4168 = vld [vmem:[#allocation6 + $0x1b4] sm:$0xf]
        %v4169 = vld [vmem:[#allocation6 + $0x1b8] sm:$0xf]
        %v4170 = vld [vmem:[#allocation6 + $0x1bc] sm:$0xf]
        %v4203 = vunpack.c.l.b16 %v4123
        %v4204 = vunpack.c.l.b16 %v4124
        %v4205 = vunpack.c.l.b16 %v4125
        %v4206 = vunpack.c.l.b16 %v4126
        %v4207 = vunpack.c.l.b16 %v4127
        %v4208 = vunpack.c.l.b16 %v4128
        %v4209 = vunpack.c.l.b16 %v4129
        %v4210 = vunpack.c.l.b16 %v4130
        %v4211 = vunpack.c.l.b16 %v4131
        %v4212 = vunpack.c.l.b16 %v4132
        %v4213 = vunpack.c.l.b16 %v4133
        %v4214 = vunpack.c.l.b16 %v4134
        %v4215 = vunpack.c.l.b16 %v4135
        %v4216 = vunpack.c.l.b16 %v4136
        %v4217 = vunpack.c.l.b16 %v4137
        %v4218 = vunpack.c.l.b16 %v4138
        %v4219 = vunpack.c.l.b16 %v4139
        %v4220 = vunpack.c.l.b16 %v4140
        %v4221 = vunpack.c.l.b16 %v4141
        %v4222 = vunpack.c.l.b16 %v4142
        %v4223 = vunpack.c.l.b16 %v4143
        %v4224 = vunpack.c.l.b16 %v4144
        %v4225 = vunpack.c.l.b16 %v4145
        %v4226 = vunpack.c.l.b16 %v4146
        %v4227 = vunpack.c.l.b16 %v4147
        %v4228 = vunpack.c.l.b16 %v4148
        %v4229 = vunpack.c.l.b16 %v4149
        %v4230 = vunpack.c.l.b16 %v4150
        %v4231 = vunpack.c.l.b16 %v4151
        %v4232 = vunpack.c.l.b16 %v4152
        %v4233 = vunpack.c.l.b16 %v4153
        %v4234 = vunpack.c.l.b16 %v4154
        %v4235 = vpack.c.b16 %v4204, %v4203
        %v4236 = vpack.c.b16 %v4206, %v4205
        %v4237 = vpack.c.b16 %v4208, %v4207
        %v4238 = vpack.c.b16 %v4210, %v4209
        %v4239 = vpack.c.b16 %v4212, %v4211
        %v4240 = vpack.c.b16 %v4214, %v4213
        %v4241 = vpack.c.b16 %v4216, %v4215
        %v4242 = vpack.c.b16 %v4218, %v4217
        %v4243 = vpack.c.b16 %v4220, %v4219
        %v4244 = vpack.c.b16 %v4222, %v4221
        %v4245 = vpack.c.b16 %v4224, %v4223
        %v4246 = vpack.c.b16 %v4226, %v4225
        %v4247 = vpack.c.b16 %v4228, %v4227
        %v4248 = vpack.c.b16 %v4230, %v4229
        %v4249 = vpack.c.b16 %v4232, %v4231
        %v4250 = vpack.c.b16 %v4234, %v4233
        %v4283 = vunpack.c.l.b16 %v4155
        %v4284 = vunpack.c.l.b16 %v4156
        %v4285 = vunpack.c.l.b16 %v4157
        %v4286 = vunpack.c.l.b16 %v4158
        %v4287 = vunpack.c.l.b16 %v4159
        %v4288 = vunpack.c.l.b16 %v4160
        %v4289 = vunpack.c.l.b16 %v4161
        %v4290 = vunpack.c.l.b16 %v4162
        %v4291 = vunpack.c.l.b16 %v4163
        %v4292 = vunpack.c.l.b16 %v4164
        %v4293 = vunpack.c.l.b16 %v4165
        %v4294 = vunpack.c.l.b16 %v4166
        %v4295 = vunpack.c.l.b16 %v4167
        %v4296 = vunpack.c.l.b16 %v4168
        %v4297 = vunpack.c.l.b16 %v4169
        %v4298 = vunpack.c.l.b16 %v4170
        %v4299 = vpack.c.b16 %v4284, %v4283
        %v4300 = vpack.c.b16 %v4286, %v4285
        %v4301 = vpack.c.b16 %v4288, %v4287
        %v4302 = vpack.c.b16 %v4290, %v4289
        %v4303 = vpack.c.b16 %v4292, %v4291
        %v4304 = vpack.c.b16 %v4294, %v4293
        %v4305 = vpack.c.b16 %v4296, %v4295
        %v4306 = vpack.c.b16 %v4298, %v4297
        %4315 = vmatprep.subr.bf16.mxu0 0
        %4316 = vmatpush1.bf16.msra.mxu0 %v4299
        %4317 = vmatprep.subr.bf16.mxu0 0
        %4318 = vmatpush1.bf16.msra.mxu0 %v4300
        %4319 = vmatprep.subr.bf16.mxu0 0
        %4320 = vmatpush1.bf16.msra.mxu0 %v4301
        %4321 = vmatprep.subr.bf16.mxu0 0
        %4322 = vmatpush1.bf16.msra.mxu0 %v4302
        %4323 = vmatprep.subr.bf16.mxu0 0
        %4324 = vmatpush1.bf16.msra.mxu0 %v4303
        %4325 = vmatprep.subr.bf16.mxu0 0
        %4326 = vmatpush1.bf16.msra.mxu0 %v4304
        %4327 = vmatprep.subr.bf16.mxu0 0
        %4328 = vmatpush1.bf16.msra.mxu0 %v4305
        %4329 = vmatprep.subr.bf16.mxu0 0
        %4330 = vmatpush1.bf16.msra.mxu0 %v4306
        %4331 = vmatprep.subr.bf16.mxu0 0
        %4332 = vmatpush1.bf16.msra.mxu0 0
        %4333 = vmatprep.subr.bf16.mxu0 0
        %4334 = vmatpush1.bf16.msra.mxu0 0
        %4335 = vmatprep.subr.bf16.mxu0 0
        %4336 = vmatpush1.bf16.msra.mxu0 0
        %4337 = vmatprep.subr.bf16.mxu0 0
        %4338 = vmatpush1.bf16.msra.mxu0 0
        %4339 = vmatprep.subr.bf16.mxu0 0
        %4340 = vmatpush1.bf16.msra.mxu0 0
        %4341 = vmatprep.subr.bf16.mxu0 0
        %4342 = vmatpush1.bf16.msra.mxu0 0
        %4343 = vmatprep.subr.bf16.mxu0 0
        %4344 = vmatpush1.bf16.msra.mxu0 0
        %4345 = vmatprep.subr.bf16.mxu0 0
        %4346 = vmatpush1.bf16.msra.mxu0 0
        %4347 = vmatprep.mubr.bf16.mxu0 0
        %4348 = vmatmul.mubr.bf16.gmra.mrb[0].mxu0 %v4235
        %v4349 = vpop.f32.mrb[0].mxu0
        %v4350 = vadd.f32 0.0, %v4349
        %v4351 = vpop.f32.mrb[0].mxu0
        %v4352 = vpop.f32.mrb[0].mxu0
        %v4353 = vadd.f32 0.0, %v4352
        %v4354 = vpop.f32.mrb[0].mxu0
        %4355 = vmatprep.mubr.bf16.mxu0 0
        %4356 = vmatmul.mubr.bf16.gmra.mrb[0].mxu0 %v4236
        %v4357 = vpop.f32.mrb[0].mxu0
        %v4358 = vadd.f32 0.0, %v4357
        %v4359 = vpop.f32.mrb[0].mxu0
        %v4360 = vpop.f32.mrb[0].mxu0
        %v4361 = vadd.f32 0.0, %v4360
        %v4362 = vpop.f32.mrb[0].mxu0
        %4363 = vmatprep.mubr.bf16.mxu0 0
        %4364 = vmatmul.mubr.bf16.gmra.mrb[0].mxu0 %v4237
        %v4365 = vpop.f32.mrb[0].mxu0
        %v4366 = vadd.f32 0.0, %v4365
        %v4367 = vpop.f32.mrb[0].mxu0
        %v4368 = vpop.f32.mrb[0].mxu0
        %v4369 = vadd.f32 0.0, %v4368
        %v4370 = vpop.f32.mrb[0].mxu0
        %4371 = vmatprep.mubr.bf16.mxu0 0
        %4372 = vmatmul.mubr.bf16.gmra.mrb[0].mxu0 %v4238
        %v4373 = vpop.f32.mrb[0].mxu0
        %v4374 = vadd.f32 0.0, %v4373
        %v4375 = vpop.f32.mrb[0].mxu0
        %v4376 = vpop.f32.mrb[0].mxu0
        %v4377 = vadd.f32 0.0, %v4376
        %v4378 = vpop.f32.mrb[0].mxu0
        %4379 = vmatprep.mubr.bf16.mxu0 0
        %4380 = vmatmul.mubr.bf16.gmra.mrb[0].mxu0 %v4239
        %v4381 = vpop.f32.mrb[0].mxu0
        %v4382 = vadd.f32 0.0, %v4381
        %v4383 = vpop.f32.mrb[0].mxu0
        %v4384 = vpop.f32.mrb[0].mxu0
        %v4385 = vadd.f32 0.0, %v4384
        %v4386 = vpop.f32.mrb[0].mxu0
        %4387 = vmatprep.mubr.bf16.mxu0 0
        %4388 = vmatmul.mubr.bf16.gmra.mrb[0].mxu0 %v4240
        %v4389 = vpop.f32.mrb[0].mxu0
        %v4390 = vadd.f32 0.0, %v4389
        %v4391 = vpop.f32.mrb[0].mxu0
        %v4392 = vpop.f32.mrb[0].mxu0
        %v4393 = vadd.f32 0.0, %v4392
        %v4394 = vpop.f32.mrb[0].mxu0
        %4395 = vmatprep.mubr.bf16.mxu0 0
        %4396 = vmatmul.mubr.bf16.gmra.mrb[0].mxu0 %v4241
        %v4397 = vpop.f32.mrb[0].mxu0
        %v4398 = vadd.f32 0.0, %v4397
        %v4399 = vpop.f32.mrb[0].mxu0
        %v4400 = vpop.f32.mrb[0].mxu0
        %v4401 = vadd.f32 0.0, %v4400
        %v4402 = vpop.f32.mrb[0].mxu0
        %4403 = vmatprep.mubr.bf16.mxu0 0
        %4404 = vmatmul.mubr.bf16.gmra.mrb[0].mxu0 %v4242
        %v4405 = vpop.f32.mrb[0].mxu0
        %v4406 = vadd.f32 0.0, %v4405
        %v4407 = vpop.f32.mrb[0].mxu0
        %v4408 = vpop.f32.mrb[0].mxu0
        %v4409 = vadd.f32 0.0, %v4408
        %v4410 = vpop.f32.mrb[0].mxu0
        %4411 = vmatprep.mubr.bf16.mxu0 0
        %4412 = vmatmul.mubr.bf16.gmra.mrb[0].mxu0 %v4243
        %v4413 = vpop.f32.mrb[0].mxu0
        %v4414 = vadd.f32 0.0, %v4413
        %v4415 = vpop.f32.mrb[0].mxu0
        %v4416 = vpop.f32.mrb[0].mxu0
        %v4417 = vadd.f32 0.0, %v4416
        %v4418 = vpop.f32.mrb[0].mxu0
        %4419 = vmatprep.mubr.bf16.mxu0 0
        %4420 = vmatmul.mubr.bf16.gmra.mrb[0].mxu0 %v4244
        %v4421 = vpop.f32.mrb[0].mxu0
        %v4422 = vadd.f32 0.0, %v4421
        %v4423 = vpop.f32.mrb[0].mxu0
        %v4424 = vpop.f32.mrb[0].mxu0
        %v4425 = vadd.f32 0.0, %v4424
        %v4426 = vpop.f32.mrb[0].mxu0
        %4427 = vmatprep.mubr.bf16.mxu0 0
        %4428 = vmatmul.mubr.bf16.gmra.mrb[0].mxu0 %v4245
        %v4429 = vpop.f32.mrb[0].mxu0
        %v4430 = vadd.f32 0.0, %v4429
        %v4431 = vpop.f32.mrb[0].mxu0
        %v4432 = vpop.f32.mrb[0].mxu0
        %v4433 = vadd.f32 0.0, %v4432
        %v4434 = vpop.f32.mrb[0].mxu0
        %4435 = vmatprep.mubr.bf16.mxu0 0
        %4436 = vmatmul.mubr.bf16.gmra.mrb[0].mxu0 %v4246
        %v4437 = vpop.f32.mrb[0].mxu0
        %v4438 = vadd.f32 0.0, %v4437
        %v4439 = vpop.f32.mrb[0].mxu0
        %v4440 = vpop.f32.mrb[0].mxu0
        %v4441 = vadd.f32 0.0, %v4440
        %v4442 = vpop.f32.mrb[0].mxu0
        %4443 = vmatprep.mubr.bf16.mxu0 0
        %4444 = vmatmul.mubr.bf16.gmra.mrb[0].mxu0 %v4247
        %v4445 = vpop.f32.mrb[0].mxu0
        %v4446 = vadd.f32 0.0, %v4445
        %v4447 = vpop.f32.mrb[0].mxu0
        %v4448 = vpop.f32.mrb[0].mxu0
        %v4449 = vadd.f32 0.0, %v4448
        %v4450 = vpop.f32.mrb[0].mxu0
        %4451 = vmatprep.mubr.bf16.mxu0 0
        %4452 = vmatmul.mubr.bf16.gmra.mrb[0].mxu0 %v4248
        %v4453 = vpop.f32.mrb[0].mxu0
        %v4454 = vadd.f32 0.0, %v4453
        %v4455 = vpop.f32.mrb[0].mxu0
        %v4456 = vpop.f32.mrb[0].mxu0
        %v4457 = vadd.f32 0.0, %v4456
        %v4458 = vpop.f32.mrb[0].mxu0
        %4459 = vmatprep.mubr.bf16.mxu0 0
        %4460 = vmatmul.mubr.bf16.gmra.mrb[0].mxu0 %v4249
        %v4461 = vpop.f32.mrb[0].mxu0
        %v4462 = vadd.f32 0.0, %v4461
        %v4463 = vpop.f32.mrb[0].mxu0
        %v4464 = vpop.f32.mrb[0].mxu0
        %v4465 = vadd.f32 0.0, %v4464
        %v4466 = vpop.f32.mrb[0].mxu0
        %4467 = vmatprep.mubr.bf16.mxu0 0
        %4468 = vmatmul.mubr.bf16.gmra.mrb[0].mxu0 %v4250
        %v4469 = vpop.f32.mrb[0].mxu0
        %v4470 = vadd.f32 0.0, %v4469
        %v4471 = vpop.f32.mrb[0].mxu0
        %v4472 = vpop.f32.mrb[0].mxu0
        %v4473 = vadd.f32 0.0, %v4472
        %v4474 = vpop.f32.mrb[0].mxu0
        %4475 = vdwg.mxu0
        %v4476 = vadd.f32 %v4090, %v4350
        %v4477 = vadd.f32 %v4091, %v4353
        %v4478 = vadd.f32 %v4092, %v4358
        %v4479 = vadd.f32 %v4093, %v4361
        %v4480 = vadd.f32 %v4094, %v4366
        %v4481 = vadd.f32 %v4095, %v4369
        %v4482 = vadd.f32 %v4096, %v4374
        %v4483 = vadd.f32 %v4097, %v4377
        %v4484 = vadd.f32 %v4098, %v4382
        %v4485 = vadd.f32 %v4099, %v4385
        %v4486 = vadd.f32 %v4100, %v4390
        %v4487 = vadd.f32 %v4101, %v4393
        %v4488 = vadd.f32 %v4102, %v4398
        %v4489 = vadd.f32 %v4103, %v4401
        %v4490 = vadd.f32 %v4104, %v4406
        %v4491 = vadd.f32 %v4105, %v4409
        %v4492 = vadd.f32 %v4106, %v4414
        %v4493 = vadd.f32 %v4107, %v4417
        %v4494 = vadd.f32 %v4108, %v4422
        %v4495 = vadd.f32 %v4109, %v4425
        %v4496 = vadd.f32 %v4110, %v4430
        %v4497 = vadd.f32 %v4111, %v4433
        %v4498 = vadd.f32 %v4112, %v4438
        %v4499 = vadd.f32 %v4113, %v4441
        %v4500 = vadd.f32 %v4114, %v4446
        %v4501 = vadd.f32 %v4115, %v4449
        %v4502 = vadd.f32 %v4116, %v4454
        %v4503 = vadd.f32 %v4117, %v4457
        %v4504 = vadd.f32 %v4118, %v4462
        %v4505 = vadd.f32 %v4119, %v4465
        %v4506 = vadd.f32 %v4120, %v4470
        %v4507 = vadd.f32 %v4121, %v4473
        %v4508 = vld [vmem:[%s4122] sm:$0xf]
        %v4509 = vld [vmem:[%s4122 + $0x4] sm:$0xf]
        %v4510 = vld [vmem:[%s4122 + $0x8] sm:$0x1]
        %v4511 = vld [vmem:[%s4122 + $0xc] sm:$0xf]
        %v4512 = vld [vmem:[%s4122 + $0x10] sm:$0xf]
        %v4513 = vld [vmem:[%s4122 + $0x14] sm:$0x1]
        %v4514 = vld [vmem:[%s4122 + $0x18] sm:$0xf]
        %v4515 = vld [vmem:[%s4122 + $0x1c] sm:$0xf]
        %v4516 = vld [vmem:[%s4122 + $0x20] sm:$0x1]
        %v4517 = vld [vmem:[%s4122 + $0x24] sm:$0xf]
        %v4518 = vld [vmem:[%s4122 + $0x28] sm:$0xf]
        %v4519 = vld [vmem:[%s4122 + $0x2c] sm:$0x1]
        %v4520 = vld [vmem:[%s4122 + $0x30] sm:$0xf]
        %v4521 = vld [vmem:[%s4122 + $0x34] sm:$0xf]
        %v4522 = vld [vmem:[%s4122 + $0x38] sm:$0x1]
        %v4523 = vld [vmem:[%s4122 + $0x3c] sm:$0xf]
        %v4524 = vld [vmem:[%s4122 + $0x40] sm:$0xf]
        %v4525 = vld [vmem:[%s4122 + $0x44] sm:$0x1]
        %v4526 = vld [vmem:[%s4122 + $0x48] sm:$0xf]
        %v4527 = vld [vmem:[%s4122 + $0x4c] sm:$0xf]
        %v4528 = vld [vmem:[%s4122 + $0x50] sm:$0x1]
        %v4529 = vld [vmem:[%s4122 + $0x54] sm:$0xf]
        %v4530 = vld [vmem:[%s4122 + $0x58] sm:$0xf]
        %v4531 = vld [vmem:[%s4122 + $0x5c] sm:$0x1]
        %v4532 = vld [vmem:[%s4122 + $0x60] sm:$0xf]
        %v4533 = vld [vmem:[%s4122 + $0x64] sm:$0xf]
        %v4534 = vld [vmem:[%s4122 + $0x68] sm:$0x1]
        %v4535 = vld [vmem:[%s4122 + $0x6c] sm:$0xf]
        %v4536 = vld [vmem:[%s4122 + $0x70] sm:$0xf]
        %v4537 = vld [vmem:[%s4122 + $0x74] sm:$0x1]
        %v4538 = vld [vmem:[%s4122 + $0x78] sm:$0xf]
        %v4539 = vld [vmem:[%s4122 + $0x7c] sm:$0xf]
        %v4540 = vld [vmem:[%s4122 + $0x80] sm:$0x1]
        %v4541 = vld [vmem:[%s4122 + $0x84] sm:$0xf]
        %v4542 = vld [vmem:[%s4122 + $0x88] sm:$0xf]
        %v4543 = vld [vmem:[%s4122 + $0x8c] sm:$0x1]
        %v4544 = vld [vmem:[%s4122 + $0x90] sm:$0xf]
        %v4545 = vld [vmem:[%s4122 + $0x94] sm:$0xf]
        %v4546 = vld [vmem:[%s4122 + $0x98] sm:$0x1]
        %v4547 = vld [vmem:[%s4122 + $0x9c] sm:$0xf]
        %v4548 = vld [vmem:[%s4122 + $0xa0] sm:$0xf]
        %v4549 = vld [vmem:[%s4122 + $0xa4] sm:$0x1]
        %v4550 = vld [vmem:[%s4122 + $0xa8] sm:$0xf]
        %v4551 = vld [vmem:[%s4122 + $0xac] sm:$0xf]
        %v4552 = vld [vmem:[%s4122 + $0xb0] sm:$0x1]
        %v4553 = vld [vmem:[%s4122 + $0xb4] sm:$0xf]
        %v4554 = vld [vmem:[%s4122 + $0xb8] sm:$0xf]
        %v4555 = vld [vmem:[%s4122 + $0xbc] sm:$0x1]
        %v4557 = vshrl.u32 %v4508, 16
        %v4559 = vrot.slane %v4557, 4
        %v4560 = vshll.u32 %v4508, 16
        %v4562 = vrot.slane %v4560, 5
        %v4563 = vor.u32 %v4559, %v4562
        %v4564 = vrot.slane %v4563, 4
        %v4566 = vshll.u32 %v4509, 16
        %v4568 = vrot.slane %v4566, 5
        %v4569 = vsel %vm1024, %v4564, %v4568
        %v4570 = vshrl.u32 %v4509, 16
        %v4572 = vrot.slane %v4570, 4
        %v4573 = vor.u32 %v4572, %v4568
        %v4574 = vrot.slane %v4573, 4
        %v4576 = vshll.u32 %v4510, 16
        %v4578 = vrot.slane %v4576, 5
        %v4579 = vsel %vm1024, %v4574, %v4578
        %v4581 = vshrl.u32 %v4511, 16
        %v4583 = vrot.slane %v4581, 4
        %v4584 = vshll.u32 %v4511, 16
        %v4586 = vrot.slane %v4584, 5
        %v4587 = vor.u32 %v4583, %v4586
        %v4588 = vrot.slane %v4587, 4
        %v4590 = vshll.u32 %v4512, 16
        %v4592 = vrot.slane %v4590, 5
        %v4593 = vsel %vm1024, %v4588, %v4592
        %v4594 = vshrl.u32 %v4512, 16
        %v4596 = vrot.slane %v4594, 4
        %v4597 = vor.u32 %v4596, %v4592
        %v4598 = vrot.slane %v4597, 4
        %v4600 = vshll.u32 %v4513, 16
        %v4602 = vrot.slane %v4600, 5
        %v4603 = vsel %vm1024, %v4598, %v4602
        %v4605 = vshrl.u32 %v4514, 16
        %v4607 = vrot.slane %v4605, 4
        %v4608 = vshll.u32 %v4514, 16
        %v4610 = vrot.slane %v4608, 5
        %v4611 = vor.u32 %v4607, %v4610
        %v4612 = vrot.slane %v4611, 4
        %v4614 = vshll.u32 %v4515, 16
        %v4616 = vrot.slane %v4614, 5
        %v4617 = vsel %vm1024, %v4612, %v4616
        %v4618 = vshrl.u32 %v4515, 16
        %v4620 = vrot.slane %v4618, 4
        %v4621 = vor.u32 %v4620, %v4616
        %v4622 = vrot.slane %v4621, 4
        %v4624 = vshll.u32 %v4516, 16
        %v4626 = vrot.slane %v4624, 5
        %v4627 = vsel %vm1024, %v4622, %v4626
        %v4629 = vshrl.u32 %v4517, 16
        %v4631 = vrot.slane %v4629, 4
        %v4632 = vshll.u32 %v4517, 16
        %v4634 = vrot.slane %v4632, 5
        %v4635 = vor.u32 %v4631, %v4634
        %v4636 = vrot.slane %v4635, 4
        %v4638 = vshll.u32 %v4518, 16
        %v4640 = vrot.slane %v4638, 5
        %v4641 = vsel %vm1024, %v4636, %v4640
        %v4642 = vshrl.u32 %v4518, 16
        %v4644 = vrot.slane %v4642, 4
        %v4645 = vor.u32 %v4644, %v4640
        %v4646 = vrot.slane %v4645, 4
        %v4648 = vshll.u32 %v4519, 16
        %v4650 = vrot.slane %v4648, 5
        %v4651 = vsel %vm1024, %v4646, %v4650
        %v4653 = vshrl.u32 %v4520, 16
        %v4655 = vrot.slane %v4653, 4
        %v4656 = vshll.u32 %v4520, 16
        %v4658 = vrot.slane %v4656, 5
        %v4659 = vor.u32 %v4655, %v4658
        %v4660 = vrot.slane %v4659, 4
        %v4662 = vshll.u32 %v4521, 16
        %v4664 = vrot.slane %v4662, 5
        %v4665 = vsel %vm1024, %v4660, %v4664
        %v4666 = vshrl.u32 %v4521, 16
        %v4668 = vrot.slane %v4666, 4
        %v4669 = vor.u32 %v4668, %v4664
        %v4670 = vrot.slane %v4669, 4
        %v4672 = vshll.u32 %v4522, 16
        %v4674 = vrot.slane %v4672, 5
        %v4675 = vsel %vm1024, %v4670, %v4674
        %v4677 = vshrl.u32 %v4523, 16
        %v4679 = vrot.slane %v4677, 4
        %v4680 = vshll.u32 %v4523, 16
        %v4682 = vrot.slane %v4680, 5
        %v4683 = vor.u32 %v4679, %v4682
        %v4684 = vrot.slane %v4683, 4
        %v4686 = vshll.u32 %v4524, 16
        %v4688 = vrot.slane %v4686, 5
        %v4689 = vsel %vm1024, %v4684, %v4688
        %v4690 = vshrl.u32 %v4524, 16
        %v4692 = vrot.slane %v4690, 4
        %v4693 = vor.u32 %v4692, %v4688
        %v4694 = vrot.slane %v4693, 4
        %v4696 = vshll.u32 %v4525, 16
        %v4698 = vrot.slane %v4696, 5
        %v4699 = vsel %vm1024, %v4694, %v4698
        %v4701 = vshrl.u32 %v4526, 16
        %v4703 = vrot.slane %v4701, 4
        %v4704 = vshll.u32 %v4526, 16
        %v4706 = vrot.slane %v4704, 5
        %v4707 = vor.u32 %v4703, %v4706
        %v4708 = vrot.slane %v4707, 4
        %v4710 = vshll.u32 %v4527, 16
        %v4712 = vrot.slane %v4710, 5
        %v4713 = vsel %vm1024, %v4708, %v4712
        %v4714 = vshrl.u32 %v4527, 16
        %v4716 = vrot.slane %v4714, 4
        %v4717 = vor.u32 %v4716, %v4712
        %v4718 = vrot.slane %v4717, 4
        %v4720 = vshll.u32 %v4528, 16
        %v4722 = vrot.slane %v4720, 5
        %v4723 = vsel %vm1024, %v4718, %v4722
        %v4725 = vshrl.u32 %v4529, 16
        %v4727 = vrot.slane %v4725, 4
        %v4728 = vshll.u32 %v4529, 16
        %v4730 = vrot.slane %v4728, 5
        %v4731 = vor.u32 %v4727, %v4730
        %v4732 = vrot.slane %v4731, 4
        %v4734 = vshll.u32 %v4530, 16
        %v4736 = vrot.slane %v4734, 5
        %v4737 = vsel %vm1024, %v4732, %v4736
        %v4738 = vshrl.u32 %v4530, 16
        %v4740 = vrot.slane %v4738, 4
        %v4741 = vor.u32 %v4740, %v4736
        %v4742 = vrot.slane %v4741, 4
        %v4744 = vshll.u32 %v4531, 16
        %v4746 = vrot.slane %v4744, 5
        %v4747 = vsel %vm1024, %v4742, %v4746
        %v4749 = vshrl.u32 %v4532, 16
        %v4751 = vrot.slane %v4749, 4
        %v4752 = vshll.u32 %v4532, 16
        %v4754 = vrot.slane %v4752, 5
        %v4755 = vor.u32 %v4751, %v4754
        %v4756 = vrot.slane %v4755, 4
        %v4758 = vshll.u32 %v4533, 16
        %v4760 = vrot.slane %v4758, 5
        %v4761 = vsel %vm1024, %v4756, %v4760
        %v4762 = vshrl.u32 %v4533, 16
        %v4764 = vrot.slane %v4762, 4
        %v4765 = vor.u32 %v4764, %v4760
        %v4766 = vrot.slane %v4765, 4
        %v4768 = vshll.u32 %v4534, 16
        %v4770 = vrot.slane %v4768, 5
        %v4771 = vsel %vm1024, %v4766, %v4770
        %v4773 = vshrl.u32 %v4535, 16
        %v4775 = vrot.slane %v4773, 4
        %v4776 = vshll.u32 %v4535, 16
        %v4778 = vrot.slane %v4776, 5
        %v4779 = vor.u32 %v4775, %v4778
        %v4780 = vrot.slane %v4779, 4
        %v4782 = vshll.u32 %v4536, 16
        %v4784 = vrot.slane %v4782, 5
        %v4785 = vsel %vm1024, %v4780, %v4784
        %v4786 = vshrl.u32 %v4536, 16
        %v4788 = vrot.slane %v4786, 4
        %v4789 = vor.u32 %v4788, %v4784
        %v4790 = vrot.slane %v4789, 4
        %v4792 = vshll.u32 %v4537, 16
        %v4794 = vrot.slane %v4792, 5
        %v4795 = vsel %vm1024, %v4790, %v4794
        %v4797 = vshrl.u32 %v4538, 16
        %v4799 = vrot.slane %v4797, 4
        %v4800 = vshll.u32 %v4538, 16
        %v4802 = vrot.slane %v4800, 5
        %v4803 = vor.u32 %v4799, %v4802
        %v4804 = vrot.slane %v4803, 4
        %v4806 = vshll.u32 %v4539, 16
        %v4808 = vrot.slane %v4806, 5
        %v4809 = vsel %vm1024, %v4804, %v4808
        %v4810 = vshrl.u32 %v4539, 16
        %v4812 = vrot.slane %v4810, 4
        %v4813 = vor.u32 %v4812, %v4808
        %v4814 = vrot.slane %v4813, 4
        %v4816 = vshll.u32 %v4540, 16
        %v4818 = vrot.slane %v4816, 5
        %v4819 = vsel %vm1024, %v4814, %v4818
        %v4821 = vshrl.u32 %v4541, 16
        %v4823 = vrot.slane %v4821, 4
        %v4824 = vshll.u32 %v4541, 16
        %v4826 = vrot.slane %v4824, 5
        %v4827 = vor.u32 %v4823, %v4826
        %v4828 = vrot.slane %v4827, 4
        %v4830 = vshll.u32 %v4542, 16
        %v4832 = vrot.slane %v4830, 5
        %v4833 = vsel %vm1024, %v4828, %v4832
        %v4834 = vshrl.u32 %v4542, 16
        %v4836 = vrot.slane %v4834, 4
        %v4837 = vor.u32 %v4836, %v4832
        %v4838 = vrot.slane %v4837, 4
        %v4840 = vshll.u32 %v4543, 16
        %v4842 = vrot.slane %v4840, 5
        %v4843 = vsel %vm1024, %v4838, %v4842
        %v4845 = vshrl.u32 %v4544, 16
        %v4847 = vrot.slane %v4845, 4
        %v4848 = vshll.u32 %v4544, 16
        %v4850 = vrot.slane %v4848, 5
        %v4851 = vor.u32 %v4847, %v4850
        %v4852 = vrot.slane %v4851, 4
        %v4854 = vshll.u32 %v4545, 16
        %v4856 = vrot.slane %v4854, 5
        %v4857 = vsel %vm1024, %v4852, %v4856
        %v4858 = vshrl.u32 %v4545, 16
        %v4860 = vrot.slane %v4858, 4
        %v4861 = vor.u32 %v4860, %v4856
        %v4862 = vrot.slane %v4861, 4
        %v4864 = vshll.u32 %v4546, 16
        %v4866 = vrot.slane %v4864, 5
        %v4867 = vsel %vm1024, %v4862, %v4866
        %v4869 = vshrl.u32 %v4547, 16
        %v4871 = vrot.slane %v4869, 4
        %v4872 = vshll.u32 %v4547, 16
        %v4874 = vrot.slane %v4872, 5
        %v4875 = vor.u32 %v4871, %v4874
        %v4876 = vrot.slane %v4875, 4
        %v4878 = vshll.u32 %v4548, 16
        %v4880 = vrot.slane %v4878, 5
        %v4881 = vsel %vm1024, %v4876, %v4880
        %v4882 = vshrl.u32 %v4548, 16
        %v4884 = vrot.slane %v4882, 4
        %v4885 = vor.u32 %v4884, %v4880
        %v4886 = vrot.slane %v4885, 4
        %v4888 = vshll.u32 %v4549, 16
        %v4890 = vrot.slane %v4888, 5
        %v4891 = vsel %vm1024, %v4886, %v4890
        %v4893 = vshrl.u32 %v4550, 16
        %v4895 = vrot.slane %v4893, 4
        %v4896 = vshll.u32 %v4550, 16
        %v4898 = vrot.slane %v4896, 5
        %v4899 = vor.u32 %v4895, %v4898
        %v4900 = vrot.slane %v4899, 4
        %v4902 = vshll.u32 %v4551, 16
        %v4904 = vrot.slane %v4902, 5
        %v4905 = vsel %vm1024, %v4900, %v4904
        %v4906 = vshrl.u32 %v4551, 16
        %v4908 = vrot.slane %v4906, 4
        %v4909 = vor.u32 %v4908, %v4904
        %v4910 = vrot.slane %v4909, 4
        %v4912 = vshll.u32 %v4552, 16
        %v4914 = vrot.slane %v4912, 5
        %v4915 = vsel %vm1024, %v4910, %v4914
        %v4917 = vshrl.u32 %v4553, 16
        %v4919 = vrot.slane %v4917, 4
        %v4920 = vshll.u32 %v4553, 16
        %v4922 = vrot.slane %v4920, 5
        %v4923 = vor.u32 %v4919, %v4922
        %v4924 = vrot.slane %v4923, 4
        %v4926 = vshll.u32 %v4554, 16
        %v4928 = vrot.slane %v4926, 5
        %v4929 = vsel %vm1024, %v4924, %v4928
        %v4930 = vshrl.u32 %v4554, 16
        %v4932 = vrot.slane %v4930, 4
        %v4933 = vor.u32 %v4932, %v4928
        %v4934 = vrot.slane %v4933, 4
        %v4936 = vshll.u32 %v4555, 16
        %v4938 = vrot.slane %v4936, 5
        %v4939 = vsel %vm1024, %v4934, %v4938
        %v4940 = vld [vmem:[#allocation6 + $0x1c0] sm:$0xf]
        %v4941 = vld [vmem:[#allocation6 + $0x1c4] sm:$0xf]
        %v4942 = vld [vmem:[#allocation6 + $0x1c8] sm:$0xf]
        %v4943 = vld [vmem:[#allocation6 + $0x1cc] sm:$0xf]
        %v4944 = vld [vmem:[#allocation6 + $0x1d0] sm:$0xf]
        %v4945 = vld [vmem:[#allocation6 + $0x1d4] sm:$0xf]
        %v4946 = vld [vmem:[#allocation6 + $0x1d8] sm:$0xf]
        %v4947 = vld [vmem:[#allocation6 + $0x1dc] sm:$0xf]
        %v4948 = vld [vmem:[#allocation6 + $0x1e0] sm:$0xf]
        %v4949 = vld [vmem:[#allocation6 + $0x1e4] sm:$0xf]
        %v4950 = vld [vmem:[#allocation6 + $0x1e8] sm:$0xf]
        %v4951 = vld [vmem:[#allocation6 + $0x1ec] sm:$0xf]
        %v4952 = vld [vmem:[#allocation6 + $0x1f0] sm:$0xf]
        %v4953 = vld [vmem:[#allocation6 + $0x1f4] sm:$0xf]
        %v4954 = vld [vmem:[#allocation6 + $0x1f8] sm:$0xf]
        %v4955 = vld [vmem:[#allocation6 + $0x1fc] sm:$0xf]
        %v4956 = vunpack.c.l.b16 %v4569
        %v4957 = vunpack.c.l.b16 %v4579
        %v4958 = vunpack.c.l.b16 %v4593
        %v4959 = vunpack.c.l.b16 %v4603
        %v4960 = vunpack.c.l.b16 %v4617
        %v4961 = vunpack.c.l.b16 %v4627
        %v4962 = vunpack.c.l.b16 %v4641
        %v4963 = vunpack.c.l.b16 %v4651
        %v4964 = vunpack.c.l.b16 %v4665
        %v4965 = vunpack.c.l.b16 %v4675
        %v4966 = vunpack.c.l.b16 %v4689
        %v4967 = vunpack.c.l.b16 %v4699
        %v4968 = vunpack.c.l.b16 %v4713
        %v4969 = vunpack.c.l.b16 %v4723
        %v4970 = vunpack.c.l.b16 %v4737
        %v4971 = vunpack.c.l.b16 %v4747
        %v4972 = vunpack.c.l.b16 %v4761
        %v4973 = vunpack.c.l.b16 %v4771
        %v4974 = vunpack.c.l.b16 %v4785
        %v4975 = vunpack.c.l.b16 %v4795
        %v4976 = vunpack.c.l.b16 %v4809
        %v4977 = vunpack.c.l.b16 %v4819
        %v4978 = vunpack.c.l.b16 %v4833
        %v4979 = vunpack.c.l.b16 %v4843
        %v4980 = vunpack.c.l.b16 %v4857
        %v4981 = vunpack.c.l.b16 %v4867
        %v4982 = vunpack.c.l.b16 %v4881
        %v4983 = vunpack.c.l.b16 %v4891
        %v4984 = vunpack.c.l.b16 %v4905
        %v4985 = vunpack.c.l.b16 %v4915
        %v4986 = vunpack.c.l.b16 %v4929
        %v4987 = vunpack.c.l.b16 %v4939
        %v4988 = vpack.c.b16 %v4957, %v4956
        %v4989 = vpack.c.b16 %v4959, %v4958
        %v4990 = vpack.c.b16 %v4961, %v4960
        %v4991 = vpack.c.b16 %v4963, %v4962
        %v4992 = vpack.c.b16 %v4965, %v4964
        %v4993 = vpack.c.b16 %v4967, %v4966
        %v4994 = vpack.c.b16 %v4969, %v4968
        %v4995 = vpack.c.b16 %v4971, %v4970
        %v4996 = vpack.c.b16 %v4973, %v4972
        %v4997 = vpack.c.b16 %v4975, %v4974
        %v4998 = vpack.c.b16 %v4977, %v4976
        %v4999 = vpack.c.b16 %v4979, %v4978
        %v5000 = vpack.c.b16 %v4981, %v4980
        %v5001 = vpack.c.b16 %v4983, %v4982
        %v5002 = vpack.c.b16 %v4985, %v4984
        %v5003 = vpack.c.b16 %v4987, %v4986
        %v5036 = vunpack.c.l.b16 %v4940
        %v5037 = vunpack.c.l.b16 %v4941
        %v5038 = vunpack.c.l.b16 %v4942
        %v5039 = vunpack.c.l.b16 %v4943
        %v5040 = vunpack.c.l.b16 %v4944
        %v5041 = vunpack.c.l.b16 %v4945
        %v5042 = vunpack.c.l.b16 %v4946
        %v5043 = vunpack.c.l.b16 %v4947
        %v5044 = vunpack.c.l.b16 %v4948
        %v5045 = vunpack.c.l.b16 %v4949
        %v5046 = vunpack.c.l.b16 %v4950
        %v5047 = vunpack.c.l.b16 %v4951
        %v5048 = vunpack.c.l.b16 %v4952
        %v5049 = vunpack.c.l.b16 %v4953
        %v5050 = vunpack.c.l.b16 %v4954
        %v5051 = vunpack.c.l.b16 %v4955
        %v5052 = vpack.c.b16 %v5037, %v5036
        %v5053 = vpack.c.b16 %v5039, %v5038
        %v5054 = vpack.c.b16 %v5041, %v5040
        %v5055 = vpack.c.b16 %v5043, %v5042
        %v5056 = vpack.c.b16 %v5045, %v5044
        %v5057 = vpack.c.b16 %v5047, %v5046
        %v5058 = vpack.c.b16 %v5049, %v5048
        %v5059 = vpack.c.b16 %v5051, %v5050
        %5068 = vmatprep.subr.bf16.mxu0 0
        %5069 = vmatpush1.bf16.msra.mxu0 %v5052
        %5070 = vmatprep.subr.bf16.mxu0 0
        %5071 = vmatpush1.bf16.msra.mxu0 %v5053
        %5072 = vmatprep.subr.bf16.mxu0 0
        %5073 = vmatpush1.bf16.msra.mxu0 %v5054
        %5074 = vmatprep.subr.bf16.mxu0 0
        %5075 = vmatpush1.bf16.msra.mxu0 %v5055
        %5076 = vmatprep.subr.bf16.mxu0 0
        %5077 = vmatpush1.bf16.msra.mxu0 %v5056
        %5078 = vmatprep.subr.bf16.mxu0 0
        %5079 = vmatpush1.bf16.msra.mxu0 %v5057
        %5080 = vmatprep.subr.bf16.mxu0 0
        %5081 = vmatpush1.bf16.msra.mxu0 %v5058
        %5082 = vmatprep.subr.bf16.mxu0 0
        %5083 = vmatpush1.bf16.msra.mxu0 %v5059
        %5084 = vmatprep.subr.bf16.mxu0 0
        %5085 = vmatpush1.bf16.msra.mxu0 0
        %5086 = vmatprep.subr.bf16.mxu0 0
        %5087 = vmatpush1.bf16.msra.mxu0 0
        %5088 = vmatprep.subr.bf16.mxu0 0
        %5089 = vmatpush1.bf16.msra.mxu0 0
        %5090 = vmatprep.subr.bf16.mxu0 0
        %5091 = vmatpush1.bf16.msra.mxu0 0
        %5092 = vmatprep.subr.bf16.mxu0 0
        %5093 = vmatpush1.bf16.msra.mxu0 0
        %5094 = vmatprep.subr.bf16.mxu0 0
        %5095 = vmatpush1.bf16.msra.mxu0 0
        %5096 = vmatprep.subr.bf16.mxu0 0
        %5097 = vmatpush1.bf16.msra.mxu0 0
        %5098 = vmatprep.subr.bf16.mxu0 0
        %5099 = vmatpush1.bf16.msra.mxu0 0
        %5100 = vmatprep.mubr.bf16.mxu0 0
        %5101 = vmatmul.mubr.bf16.gmra.mrb[0].mxu0 %v4988
        %v5102 = vpop.f32.mrb[0].mxu0
        %v5103 = vadd.f32 0.0, %v5102
        %v5104 = vpop.f32.mrb[0].mxu0
        %v5105 = vpop.f32.mrb[0].mxu0
        %v5106 = vadd.f32 0.0, %v5105
        %v5107 = vpop.f32.mrb[0].mxu0
        %5108 = vmatprep.mubr.bf16.mxu0 0
        %5109 = vmatmul.mubr.bf16.gmra.mrb[0].mxu0 %v4989
        %v5110 = vpop.f32.mrb[0].mxu0
        %v5111 = vadd.f32 0.0, %v5110
        %v5112 = vpop.f32.mrb[0].mxu0
        %v5113 = vpop.f32.mrb[0].mxu0
        %v5114 = vadd.f32 0.0, %v5113
        %v5115 = vpop.f32.mrb[0].mxu0
        %5116 = vmatprep.mubr.bf16.mxu0 0
        %5117 = vmatmul.mubr.bf16.gmra.mrb[0].mxu0 %v4990
        %v5118 = vpop.f32.mrb[0].mxu0
        %v5119 = vadd.f32 0.0, %v5118
        %v5120 = vpop.f32.mrb[0].mxu0
        %v5121 = vpop.f32.mrb[0].mxu0
        %v5122 = vadd.f32 0.0, %v5121
        %v5123 = vpop.f32.mrb[0].mxu0
        %5124 = vmatprep.mubr.bf16.mxu0 0
        %5125 = vmatmul.mubr.bf16.gmra.mrb[0].mxu0 %v4991
        %v5126 = vpop.f32.mrb[0].mxu0
        %v5127 = vadd.f32 0.0, %v5126
        %v5128 = vpop.f32.mrb[0].mxu0
        %v5129 = vpop.f32.mrb[0].mxu0
        %v5130 = vadd.f32 0.0, %v5129
        %v5131 = vpop.f32.mrb[0].mxu0
        %5132 = vmatprep.mubr.bf16.mxu0 0
        %5133 = vmatmul.mubr.bf16.gmra.mrb[0].mxu0 %v4992
        %v5134 = vpop.f32.mrb[0].mxu0
        %v5135 = vadd.f32 0.0, %v5134
        %v5136 = vpop.f32.mrb[0].mxu0
        %v5137 = vpop.f32.mrb[0].mxu0
        %v5138 = vadd.f32 0.0, %v5137
        %v5139 = vpop.f32.mrb[0].mxu0
        %5140 = vmatprep.mubr.bf16.mxu0 0
        %5141 = vmatmul.mubr.bf16.gmra.mrb[0].mxu0 %v4993
        %v5142 = vpop.f32.mrb[0].mxu0
        %v5143 = vadd.f32 0.0, %v5142
        %v5144 = vpop.f32.mrb[0].mxu0
        %v5145 = vpop.f32.mrb[0].mxu0
        %v5146 = vadd.f32 0.0, %v5145
        %v5147 = vpop.f32.mrb[0].mxu0
        %5148 = vmatprep.mubr.bf16.mxu0 0
        %5149 = vmatmul.mubr.bf16.gmra.mrb[0].mxu0 %v4994
        %v5150 = vpop.f32.mrb[0].mxu0
        %v5151 = vadd.f32 0.0, %v5150
        %v5152 = vpop.f32.mrb[0].mxu0
        %v5153 = vpop.f32.mrb[0].mxu0
        %v5154 = vadd.f32 0.0, %v5153
        %v5155 = vpop.f32.mrb[0].mxu0
        %5156 = vmatprep.mubr.bf16.mxu0 0
        %5157 = vmatmul.mubr.bf16.gmra.mrb[0].mxu0 %v4995
        %v5158 = vpop.f32.mrb[0].mxu0
        %v5159 = vadd.f32 0.0, %v5158
        %v5160 = vpop.f32.mrb[0].mxu0
        %v5161 = vpop.f32.mrb[0].mxu0
        %v5162 = vadd.f32 0.0, %v5161
        %v5163 = vpop.f32.mrb[0].mxu0
        %5164 = vmatprep.mubr.bf16.mxu0 0
        %5165 = vmatmul.mubr.bf16.gmra.mrb[0].mxu0 %v4996
        %v5166 = vpop.f32.mrb[0].mxu0
        %v5167 = vadd.f32 0.0, %v5166
        %v5168 = vpop.f32.mrb[0].mxu0
        %v5169 = vpop.f32.mrb[0].mxu0
        %v5170 = vadd.f32 0.0, %v5169
        %v5171 = vpop.f32.mrb[0].mxu0
        %5172 = vmatprep.mubr.bf16.mxu0 0
        %5173 = vmatmul.mubr.bf16.gmra.mrb[0].mxu0 %v4997
        %v5174 = vpop.f32.mrb[0].mxu0
        %v5175 = vadd.f32 0.0, %v5174
        %v5176 = vpop.f32.mrb[0].mxu0
        %v5177 = vpop.f32.mrb[0].mxu0
        %v5178 = vadd.f32 0.0, %v5177
        %v5179 = vpop.f32.mrb[0].mxu0
        %5180 = vmatprep.mubr.bf16.mxu0 0
        %5181 = vmatmul.mubr.bf16.gmra.mrb[0].mxu0 %v4998
        %v5182 = vpop.f32.mrb[0].mxu0
        %v5183 = vadd.f32 0.0, %v5182
        %v5184 = vpop.f32.mrb[0].mxu0
        %v5185 = vpop.f32.mrb[0].mxu0
        %v5186 = vadd.f32 0.0, %v5185
        %v5187 = vpop.f32.mrb[0].mxu0
        %5188 = vmatprep.mubr.bf16.mxu0 0
        %5189 = vmatmul.mubr.bf16.gmra.mrb[0].mxu0 %v4999
        %v5190 = vpop.f32.mrb[0].mxu0
        %v5191 = vadd.f32 0.0, %v5190
        %v5192 = vpop.f32.mrb[0].mxu0
        %v5193 = vpop.f32.mrb[0].mxu0
        %v5194 = vadd.f32 0.0, %v5193
        %v5195 = vpop.f32.mrb[0].mxu0
        %5196 = vmatprep.mubr.bf16.mxu0 0
        %5197 = vmatmul.mubr.bf16.gmra.mrb[0].mxu0 %v5000
        %v5198 = vpop.f32.mrb[0].mxu0
        %v5199 = vadd.f32 0.0, %v5198
        %v5200 = vpop.f32.mrb[0].mxu0
        %v5201 = vpop.f32.mrb[0].mxu0
        %v5202 = vadd.f32 0.0, %v5201
        %v5203 = vpop.f32.mrb[0].mxu0
        %5204 = vmatprep.mubr.bf16.mxu0 0
        %5205 = vmatmul.mubr.bf16.gmra.mrb[0].mxu0 %v5001
        %v5206 = vpop.f32.mrb[0].mxu0
        %v5207 = vadd.f32 0.0, %v5206
        %v5208 = vpop.f32.mrb[0].mxu0
        %v5209 = vpop.f32.mrb[0].mxu0
        %v5210 = vadd.f32 0.0, %v5209
        %v5211 = vpop.f32.mrb[0].mxu0
        %5212 = vmatprep.mubr.bf16.mxu0 0
        %5213 = vmatmul.mubr.bf16.gmra.mrb[0].mxu0 %v5002
        %v5214 = vpop.f32.mrb[0].mxu0
        %v5215 = vadd.f32 0.0, %v5214
        %v5216 = vpop.f32.mrb[0].mxu0
        %v5217 = vpop.f32.mrb[0].mxu0
        %v5218 = vadd.f32 0.0, %v5217
        %v5219 = vpop.f32.mrb[0].mxu0
        %5220 = vmatprep.mubr.bf16.mxu0 0
        %5221 = vmatmul.mubr.bf16.gmra.mrb[0].mxu0 %v5003
        %v5222 = vpop.f32.mrb[0].mxu0
        %v5223 = vadd.f32 0.0, %v5222
        %v5224 = vpop.f32.mrb[0].mxu0
        %v5225 = vpop.f32.mrb[0].mxu0
        %v5226 = vadd.f32 0.0, %v5225
        %v5227 = vpop.f32.mrb[0].mxu0
        %5228 = vdwg.mxu0
        %v5229 = vadd.f32 %v4476, %v5103
        %v5230 = vadd.f32 %v4477, %v5106
        %v5231 = vadd.f32 %v4478, %v5111
        %v5232 = vadd.f32 %v4479, %v5114
        %v5233 = vadd.f32 %v4480, %v5119
        %v5234 = vadd.f32 %v4481, %v5122
        %v5235 = vadd.f32 %v4482, %v5127
        %v5236 = vadd.f32 %v4483, %v5130
        %v5237 = vadd.f32 %v4484, %v5135
        %v5238 = vadd.f32 %v4485, %v5138
        %v5239 = vadd.f32 %v4486, %v5143
        %v5240 = vadd.f32 %v4487, %v5146
        %v5241 = vadd.f32 %v4488, %v5151
        %v5242 = vadd.f32 %v4489, %v5154
        %v5243 = vadd.f32 %v4490, %v5159
        %v5244 = vadd.f32 %v4491, %v5162
        %v5245 = vadd.f32 %v4492, %v5167
        %v5246 = vadd.f32 %v4493, %v5170
        %v5247 = vadd.f32 %v4494, %v5175
        %v5248 = vadd.f32 %v4495, %v5178
        %v5249 = vadd.f32 %v4496, %v5183
        %v5250 = vadd.f32 %v4497, %v5186
        %v5251 = vadd.f32 %v4498, %v5191
        %v5252 = vadd.f32 %v4499, %v5194
        %v5253 = vadd.f32 %v4500, %v5199
        %v5254 = vadd.f32 %v4501, %v5202
        %v5255 = vadd.f32 %v4502, %v5207
        %v5256 = vadd.f32 %v4503, %v5210
        %v5257 = vadd.f32 %v4504, %v5215
        %v5258 = vadd.f32 %v4505, %v5218
        %v5259 = vadd.f32 %v4506, %v5223
        %v5260 = vadd.f32 %v4507, %v5226
        %v5261 = vld [vmem:[%s4122] sm:$0xe]
        %v5262 = vld [vmem:[%s4122 + $0xc] sm:$0xe]
        %v5263 = vld [vmem:[%s4122 + $0x18] sm:$0xe]
        %v5264 = vld [vmem:[%s4122 + $0x24] sm:$0xe]
        %v5265 = vld [vmem:[%s4122 + $0x30] sm:$0xe]
        %v5266 = vld [vmem:[%s4122 + $0x3c] sm:$0xe]
        %v5267 = vld [vmem:[%s4122 + $0x48] sm:$0xe]
        %v5268 = vld [vmem:[%s4122 + $0x54] sm:$0xe]
        %v5269 = vld [vmem:[%s4122 + $0x60] sm:$0xe]
        %v5270 = vld [vmem:[%s4122 + $0x6c] sm:$0xe]
        %v5271 = vld [vmem:[%s4122 + $0x78] sm:$0xe]
        %v5272 = vld [vmem:[%s4122 + $0x84] sm:$0xe]
        %v5273 = vld [vmem:[%s4122 + $0x90] sm:$0xe]
        %v5274 = vld [vmem:[%s4122 + $0x9c] sm:$0xe]
        %v5275 = vld [vmem:[%s4122 + $0xa8] sm:$0xe]
        %v5276 = vld [vmem:[%s4122 + $0xb4] sm:$0xe]
        %v5325 = vrot.slane %v5261, 5
        %v5326 = vrot.slane %v5325, 4
        %v5327 = vrot.slane %v4509, 5
        %v5328 = vsel %vm2053, %v5326, %v5327
        %v5329 = vrot.slane %v5327, 4
        %v5330 = vrot.slane %v4510, 5
        %v5331 = vsel %vm2053, %v5329, %v5330
        %v5332 = vrot.slane %v5262, 5
        %v5333 = vrot.slane %v5332, 4
        %v5334 = vrot.slane %v4512, 5
        %v5335 = vsel %vm2053, %v5333, %v5334
        %v5336 = vrot.slane %v5334, 4
        %v5337 = vrot.slane %v4513, 5
        %v5338 = vsel %vm2053, %v5336, %v5337
        %v5339 = vrot.slane %v5263, 5
        %v5340 = vrot.slane %v5339, 4
        %v5341 = vrot.slane %v4515, 5
        %v5342 = vsel %vm2053, %v5340, %v5341
        %v5343 = vrot.slane %v5341, 4
        %v5344 = vrot.slane %v4516, 5
        %v5345 = vsel %vm2053, %v5343, %v5344
        %v5346 = vrot.slane %v5264, 5
        %v5347 = vrot.slane %v5346, 4
        %v5348 = vrot.slane %v4518, 5
        %v5349 = vsel %vm2053, %v5347, %v5348
        %v5350 = vrot.slane %v5348, 4
        %v5351 = vrot.slane %v4519, 5
        %v5352 = vsel %vm2053, %v5350, %v5351
        %v5353 = vrot.slane %v5265, 5
        %v5354 = vrot.slane %v5353, 4
        %v5355 = vrot.slane %v4521, 5
        %v5356 = vsel %vm2053, %v5354, %v5355
        %v5357 = vrot.slane %v5355, 4
        %v5358 = vrot.slane %v4522, 5
        %v5359 = vsel %vm2053, %v5357, %v5358
        %v5360 = vrot.slane %v5266, 5
        %v5361 = vrot.slane %v5360, 4
        %v5362 = vrot.slane %v4524, 5
        %v5363 = vsel %vm2053, %v5361, %v5362
        %v5364 = vrot.slane %v5362, 4
        %v5365 = vrot.slane %v4525, 5
        %v5366 = vsel %vm2053, %v5364, %v5365
        %v5367 = vrot.slane %v5267, 5
        %v5368 = vrot.slane %v5367, 4
        %v5369 = vrot.slane %v4527, 5
        %v5370 = vsel %vm2053, %v5368, %v5369
        %v5371 = vrot.slane %v5369, 4
        %v5372 = vrot.slane %v4528, 5
        %v5373 = vsel %vm2053, %v5371, %v5372
        %v5374 = vrot.slane %v5268, 5
        %v5375 = vrot.slane %v5374, 4
        %v5376 = vrot.slane %v4530, 5
        %v5377 = vsel %vm2053, %v5375, %v5376
        %v5378 = vrot.slane %v5376, 4
        %v5379 = vrot.slane %v4531, 5
        %v5380 = vsel %vm2053, %v5378, %v5379
        %v5381 = vrot.slane %v5269, 5
        %v5382 = vrot.slane %v5381, 4
        %v5383 = vrot.slane %v4533, 5
        %v5384 = vsel %vm2053, %v5382, %v5383
        %v5385 = vrot.slane %v5383, 4
        %v5386 = vrot.slane %v4534, 5
        %v5387 = vsel %vm2053, %v5385, %v5386
        %v5388 = vrot.slane %v5270, 5
        %v5389 = vrot.slane %v5388, 4
        %v5390 = vrot.slane %v4536, 5
        %v5391 = vsel %vm2053, %v5389, %v5390
        %v5392 = vrot.slane %v5390, 4
        %v5393 = vrot.slane %v4537, 5
        %v5394 = vsel %vm2053, %v5392, %v5393
        %v5395 = vrot.slane %v5271, 5
        %v5396 = vrot.slane %v5395, 4
        %v5397 = vrot.slane %v4539, 5
        %v5398 = vsel %vm2053, %v5396, %v5397
        %v5399 = vrot.slane %v5397, 4
        %v5400 = vrot.slane %v4540, 5
        %v5401 = vsel %vm2053, %v5399, %v5400
        %v5402 = vrot.slane %v5272, 5
        %v5403 = vrot.slane %v5402, 4
        %v5404 = vrot.slane %v4542, 5
        %v5405 = vsel %vm2053, %v5403, %v5404
        %v5406 = vrot.slane %v5404, 4
        %v5407 = vrot.slane %v4543, 5
        %v5408 = vsel %vm2053, %v5406, %v5407
        %v5409 = vrot.slane %v5273, 5
        %v5410 = vrot.slane %v5409, 4
        %v5411 = vrot.slane %v4545, 5
        %v5412 = vsel %vm2053, %v5410, %v5411
        %v5413 = vrot.slane %v5411, 4
        %v5414 = vrot.slane %v4546, 5
        %v5415 = vsel %vm2053, %v5413, %v5414
        %v5416 = vrot.slane %v5274, 5
        %v5417 = vrot.slane %v5416, 4
        %v5418 = vrot.slane %v4548, 5
        %v5419 = vsel %vm2053, %v5417, %v5418
        %v5420 = vrot.slane %v5418, 4
        %v5421 = vrot.slane %v4549, 5
        %v5422 = vsel %vm2053, %v5420, %v5421
        %v5423 = vrot.slane %v5275, 5
        %v5424 = vrot.slane %v5423, 4
        %v5425 = vrot.slane %v4551, 5
        %v5426 = vsel %vm2053, %v5424, %v5425
        %v5427 = vrot.slane %v5425, 4
        %v5428 = vrot.slane %v4552, 5
        %v5429 = vsel %vm2053, %v5427, %v5428
        %v5430 = vrot.slane %v5276, 5
        %v5431 = vrot.slane %v5430, 4
        %v5432 = vrot.slane %v4554, 5
        %v5433 = vsel %vm2053, %v5431, %v5432
        %v5434 = vrot.slane %v5432, 4
        %v5435 = vrot.slane %v4555, 5
        %v5436 = vsel %vm2053, %v5434, %v5435
        %v5437 = vld [vmem:[#allocation6 + $0x200] sm:$0xf]
        %v5438 = vld [vmem:[#allocation6 + $0x204] sm:$0xf]
        %v5439 = vld [vmem:[#allocation6 + $0x208] sm:$0xf]
        %v5440 = vld [vmem:[#allocation6 + $0x20c] sm:$0xf]
        %v5441 = vld [vmem:[#allocation6 + $0x210] sm:$0xf]
        %v5442 = vld [vmem:[#allocation6 + $0x214] sm:$0xf]
        %v5443 = vld [vmem:[#allocation6 + $0x218] sm:$0xf]
        %v5444 = vld [vmem:[#allocation6 + $0x21c] sm:$0xf]
        %v5445 = vld [vmem:[#allocation6 + $0x220] sm:$0xf]
        %v5446 = vld [vmem:[#allocation6 + $0x224] sm:$0xf]
        %v5447 = vld [vmem:[#allocation6 + $0x228] sm:$0xf]
        %v5448 = vld [vmem:[#allocation6 + $0x22c] sm:$0xf]
        %v5449 = vld [vmem:[#allocation6 + $0x230] sm:$0xf]
        %v5450 = vld [vmem:[#allocation6 + $0x234] sm:$0xf]
        %v5451 = vld [vmem:[#allocation6 + $0x238] sm:$0xf]
        %v5452 = vld [vmem:[#allocation6 + $0x23c] sm:$0xf]
        %v5453 = vunpack.c.l.b16 %v5328
        %v5454 = vunpack.c.l.b16 %v5331
        %v5455 = vunpack.c.l.b16 %v5335
        %v5456 = vunpack.c.l.b16 %v5338
        %v5457 = vunpack.c.l.b16 %v5342
        %v5458 = vunpack.c.l.b16 %v5345
        %v5459 = vunpack.c.l.b16 %v5349
        %v5460 = vunpack.c.l.b16 %v5352
        %v5461 = vunpack.c.l.b16 %v5356
        %v5462 = vunpack.c.l.b16 %v5359
        %v5463 = vunpack.c.l.b16 %v5363
        %v5464 = vunpack.c.l.b16 %v5366
        %v5465 = vunpack.c.l.b16 %v5370
        %v5466 = vunpack.c.l.b16 %v5373
        %v5467 = vunpack.c.l.b16 %v5377
        %v5468 = vunpack.c.l.b16 %v5380
        %v5469 = vunpack.c.l.b16 %v5384
        %v5470 = vunpack.c.l.b16 %v5387
        %v5471 = vunpack.c.l.b16 %v5391
        %v5472 = vunpack.c.l.b16 %v5394
        %v5473 = vunpack.c.l.b16 %v5398
        %v5474 = vunpack.c.l.b16 %v5401
        %v5475 = vunpack.c.l.b16 %v5405
        %v5476 = vunpack.c.l.b16 %v5408
        %v5477 = vunpack.c.l.b16 %v5412
        %v5478 = vunpack.c.l.b16 %v5415
        %v5479 = vunpack.c.l.b16 %v5419
        %v5480 = vunpack.c.l.b16 %v5422
        %v5481 = vunpack.c.l.b16 %v5426
        %v5482 = vunpack.c.l.b16 %v5429
        %v5483 = vunpack.c.l.b16 %v5433
        %v5484 = vunpack.c.l.b16 %v5436
        %v5485 = vpack.c.b16 %v5454, %v5453
        %v5486 = vpack.c.b16 %v5456, %v5455
        %v5487 = vpack.c.b16 %v5458, %v5457
        %v5488 = vpack.c.b16 %v5460, %v5459
        %v5489 = vpack.c.b16 %v5462, %v5461
        %v5490 = vpack.c.b16 %v5464, %v5463
        %v5491 = vpack.c.b16 %v5466, %v5465
        %v5492 = vpack.c.b16 %v5468, %v5467
        %v5493 = vpack.c.b16 %v5470, %v5469
        %v5494 = vpack.c.b16 %v5472, %v5471
        %v5495 = vpack.c.b16 %v5474, %v5473
        %v5496 = vpack.c.b16 %v5476, %v5475
        %v5497 = vpack.c.b16 %v5478, %v5477
        %v5498 = vpack.c.b16 %v5480, %v5479
        %v5499 = vpack.c.b16 %v5482, %v5481
        %v5500 = vpack.c.b16 %v5484, %v5483
        %v5533 = vunpack.c.l.b16 %v5437
        %v5534 = vunpack.c.l.b16 %v5438
        %v5535 = vunpack.c.l.b16 %v5439
        %v5536 = vunpack.c.l.b16 %v5440
        %v5537 = vunpack.c.l.b16 %v5441
        %v5538 = vunpack.c.l.b16 %v5442
        %v5539 = vunpack.c.l.b16 %v5443
        %v5540 = vunpack.c.l.b16 %v5444
        %v5541 = vunpack.c.l.b16 %v5445
        %v5542 = vunpack.c.l.b16 %v5446
        %v5543 = vunpack.c.l.b16 %v5447
        %v5544 = vunpack.c.l.b16 %v5448
        %v5545 = vunpack.c.l.b16 %v5449
        %v5546 = vunpack.c.l.b16 %v5450
        %v5547 = vunpack.c.l.b16 %v5451
        %v5548 = vunpack.c.l.b16 %v5452
        %v5549 = vpack.c.b16 %v5534, %v5533
        %v5550 = vpack.c.b16 %v5536, %v5535
        %v5551 = vpack.c.b16 %v5538, %v5537
        %v5552 = vpack.c.b16 %v5540, %v5539
        %v5553 = vpack.c.b16 %v5542, %v5541
        %v5554 = vpack.c.b16 %v5544, %v5543
        %v5555 = vpack.c.b16 %v5546, %v5545
        %v5556 = vpack.c.b16 %v5548, %v5547
        %5565 = vmatprep.subr.bf16.mxu0 0
        %5566 = vmatpush1.bf16.msra.mxu0 %v5549
        %5567 = vmatprep.subr.bf16.mxu0 0
        %5568 = vmatpush1.bf16.msra.mxu0 %v5550
        %5569 = vmatprep.subr.bf16.mxu0 0
        %5570 = vmatpush1.bf16.msra.mxu0 %v5551
        %5571 = vmatprep.subr.bf16.mxu0 0
        %5572 = vmatpush1.bf16.msra.mxu0 %v5552
        %5573 = vmatprep.subr.bf16.mxu0 0
        %5574 = vmatpush1.bf16.msra.mxu0 %v5553
        %5575 = vmatprep.subr.bf16.mxu0 0
        %5576 = vmatpush1.bf16.msra.mxu0 %v5554
        %5577 = vmatprep.subr.bf16.mxu0 0
        %5578 = vmatpush1.bf16.msra.mxu0 %v5555
        %5579 = vmatprep.subr.bf16.mxu0 0
        %5580 = vmatpush1.bf16.msra.mxu0 %v5556
        %5581 = vmatprep.subr.bf16.mxu0 0
        %5582 = vmatpush1.bf16.msra.mxu0 0
        %5583 = vmatprep.subr.bf16.mxu0 0
        %5584 = vmatpush1.bf16.msra.mxu0 0
        %5585 = vmatprep.subr.bf16.mxu0 0
        %5586 = vmatpush1.bf16.msra.mxu0 0
        %5587 = vmatprep.subr.bf16.mxu0 0
        %5588 = vmatpush1.bf16.msra.mxu0 0
        %5589 = vmatprep.subr.bf16.mxu0 0
        %5590 = vmatpush1.bf16.msra.mxu0 0
        %5591 = vmatprep.subr.bf16.mxu0 0
        %5592 = vmatpush1.bf16.msra.mxu0 0
        %5593 = vmatprep.subr.bf16.mxu0 0
        %5594 = vmatpush1.bf16.msra.mxu0 0
        %5595 = vmatprep.subr.bf16.mxu0 0
        %5596 = vmatpush1.bf16.msra.mxu0 0
        %5597 = vmatprep.mubr.bf16.mxu0 0
        %5598 = vmatmul.mubr.bf16.gmra.mrb[0].mxu0 %v5485
        %v5599 = vpop.f32.mrb[0].mxu0
        %v5600 = vadd.f32 0.0, %v5599
        %v5601 = vpop.f32.mrb[0].mxu0
        %v5602 = vpop.f32.mrb[0].mxu0
        %v5603 = vadd.f32 0.0, %v5602
        %v5604 = vpop.f32.mrb[0].mxu0
        %5605 = vmatprep.mubr.bf16.mxu0 0
        %5606 = vmatmul.mubr.bf16.gmra.mrb[0].mxu0 %v5486
        %v5607 = vpop.f32.mrb[0].mxu0
        %v5608 = vadd.f32 0.0, %v5607
        %v5609 = vpop.f32.mrb[0].mxu0
        %v5610 = vpop.f32.mrb[0].mxu0
        %v5611 = vadd.f32 0.0, %v5610
        %v5612 = vpop.f32.mrb[0].mxu0
        %5613 = vmatprep.mubr.bf16.mxu0 0
        %5614 = vmatmul.mubr.bf16.gmra.mrb[0].mxu0 %v5487
        %v5615 = vpop.f32.mrb[0].mxu0
        %v5616 = vadd.f32 0.0, %v5615
        %v5617 = vpop.f32.mrb[0].mxu0
        %v5618 = vpop.f32.mrb[0].mxu0
        %v5619 = vadd.f32 0.0, %v5618
        %v5620 = vpop.f32.mrb[0].mxu0
        %5621 = vmatprep.mubr.bf16.mxu0 0
        %5622 = vmatmul.mubr.bf16.gmra.mrb[0].mxu0 %v5488
        %v5623 = vpop.f32.mrb[0].mxu0
        %v5624 = vadd.f32 0.0, %v5623
        %v5625 = vpop.f32.mrb[0].mxu0
        %v5626 = vpop.f32.mrb[0].mxu0
        %v5627 = vadd.f32 0.0, %v5626
        %v5628 = vpop.f32.mrb[0].mxu0
        %5629 = vmatprep.mubr.bf16.mxu0 0
        %5630 = vmatmul.mubr.bf16.gmra.mrb[0].mxu0 %v5489
        %v5631 = vpop.f32.mrb[0].mxu0
        %v5632 = vadd.f32 0.0, %v5631
        %v5633 = vpop.f32.mrb[0].mxu0
        %v5634 = vpop.f32.mrb[0].mxu0
        %v5635 = vadd.f32 0.0, %v5634
        %v5636 = vpop.f32.mrb[0].mxu0
        %5637 = vmatprep.mubr.bf16.mxu0 0
        %5638 = vmatmul.mubr.bf16.gmra.mrb[0].mxu0 %v5490
        %v5639 = vpop.f32.mrb[0].mxu0
        %v5640 = vadd.f32 0.0, %v5639
        %v5641 = vpop.f32.mrb[0].mxu0
        %v5642 = vpop.f32.mrb[0].mxu0
        %v5643 = vadd.f32 0.0, %v5642
        %v5644 = vpop.f32.mrb[0].mxu0
        %5645 = vmatprep.mubr.bf16.mxu0 0
        %5646 = vmatmul.mubr.bf16.gmra.mrb[0].mxu0 %v5491
        %v5647 = vpop.f32.mrb[0].mxu0
        %v5648 = vadd.f32 0.0, %v5647
        %v5649 = vpop.f32.mrb[0].mxu0
        %v5650 = vpop.f32.mrb[0].mxu0
        %v5651 = vadd.f32 0.0, %v5650
        %v5652 = vpop.f32.mrb[0].mxu0
        %5653 = vmatprep.mubr.bf16.mxu0 0
        %5654 = vmatmul.mubr.bf16.gmra.mrb[0].mxu0 %v5492
        %v5655 = vpop.f32.mrb[0].mxu0
        %v5656 = vadd.f32 0.0, %v5655
        %v5657 = vpop.f32.mrb[0].mxu0
        %v5658 = vpop.f32.mrb[0].mxu0
        %v5659 = vadd.f32 0.0, %v5658
        %v5660 = vpop.f32.mrb[0].mxu0
        %5661 = vmatprep.mubr.bf16.mxu0 0
        %5662 = vmatmul.mubr.bf16.gmra.mrb[0].mxu0 %v5493
        %v5663 = vpop.f32.mrb[0].mxu0
        %v5664 = vadd.f32 0.0, %v5663
        %v5665 = vpop.f32.mrb[0].mxu0
        %v5666 = vpop.f32.mrb[0].mxu0
        %v5667 = vadd.f32 0.0, %v5666
        %v5668 = vpop.f32.mrb[0].mxu0
        %5669 = vmatprep.mubr.bf16.mxu0 0
        %5670 = vmatmul.mubr.bf16.gmra.mrb[0].mxu0 %v5494
        %v5671 = vpop.f32.mrb[0].mxu0
        %v5672 = vadd.f32 0.0, %v5671
        %v5673 = vpop.f32.mrb[0].mxu0
        %v5674 = vpop.f32.mrb[0].mxu0
        %v5675 = vadd.f32 0.0, %v5674
        %v5676 = vpop.f32.mrb[0].mxu0
        %5677 = vmatprep.mubr.bf16.mxu0 0
        %5678 = vmatmul.mubr.bf16.gmra.mrb[0].mxu0 %v5495
        %v5679 = vpop.f32.mrb[0].mxu0
        %v5680 = vadd.f32 0.0, %v5679
        %v5681 = vpop.f32.mrb[0].mxu0
        %v5682 = vpop.f32.mrb[0].mxu0
        %v5683 = vadd.f32 0.0, %v5682
        %v5684 = vpop.f32.mrb[0].mxu0
        %5685 = vmatprep.mubr.bf16.mxu0 0
        %5686 = vmatmul.mubr.bf16.gmra.mrb[0].mxu0 %v5496
        %v5687 = vpop.f32.mrb[0].mxu0
        %v5688 = vadd.f32 0.0, %v5687
        %v5689 = vpop.f32.mrb[0].mxu0
        %v5690 = vpop.f32.mrb[0].mxu0
        %v5691 = vadd.f32 0.0, %v5690
        %v5692 = vpop.f32.mrb[0].mxu0
        %5693 = vmatprep.mubr.bf16.mxu0 0
        %5694 = vmatmul.mubr.bf16.gmra.mrb[0].mxu0 %v5497
        %v5695 = vpop.f32.mrb[0].mxu0
        %v5696 = vadd.f32 0.0, %v5695
        %v5697 = vpop.f32.mrb[0].mxu0
        %v5698 = vpop.f32.mrb[0].mxu0
        %v5699 = vadd.f32 0.0, %v5698
        %v5700 = vpop.f32.mrb[0].mxu0
        %5701 = vmatprep.mubr.bf16.mxu0 0
        %5702 = vmatmul.mubr.bf16.gmra.mrb[0].mxu0 %v5498
        %v5703 = vpop.f32.mrb[0].mxu0
        %v5704 = vadd.f32 0.0, %v5703
        %v5705 = vpop.f32.mrb[0].mxu0
        %v5706 = vpop.f32.mrb[0].mxu0
        %v5707 = vadd.f32 0.0, %v5706
        %v5708 = vpop.f32.mrb[0].mxu0
        %5709 = vmatprep.mubr.bf16.mxu0 0
        %5710 = vmatmul.mubr.bf16.gmra.mrb[0].mxu0 %v5499
        %v5711 = vpop.f32.mrb[0].mxu0
        %v5712 = vadd.f32 0.0, %v5711
        %v5713 = vpop.f32.mrb[0].mxu0
        %v5714 = vpop.f32.mrb[0].mxu0
        %v5715 = vadd.f32 0.0, %v5714
        %v5716 = vpop.f32.mrb[0].mxu0
        %5717 = vmatprep.mubr.bf16.mxu0 0
        %5718 = vmatmul.mubr.bf16.gmra.mrb[0].mxu0 %v5500
        %v5719 = vpop.f32.mrb[0].mxu0
        %v5720 = vadd.f32 0.0, %v5719
        %v5721 = vpop.f32.mrb[0].mxu0
        %v5722 = vpop.f32.mrb[0].mxu0
        %v5723 = vadd.f32 0.0, %v5722
        %v5724 = vpop.f32.mrb[0].mxu0
        %5725 = vdwg.mxu0
        %v5726 = vadd.f32 %v5229, %v5600
        %v5727 = vadd.f32 %v5230, %v5603
        %v5728 = vadd.f32 %v5231, %v5608
        %v5729 = vadd.f32 %v5232, %v5611
        %v5730 = vadd.f32 %v5233, %v5616
        %v5731 = vadd.f32 %v5234, %v5619
        %v5732 = vadd.f32 %v5235, %v5624
        %v5733 = vadd.f32 %v5236, %v5627
        %v5734 = vadd.f32 %v5237, %v5632
        %v5735 = vadd.f32 %v5238, %v5635
        %v5736 = vadd.f32 %v5239, %v5640
        %v5737 = vadd.f32 %v5240, %v5643
        %v5738 = vadd.f32 %v5241, %v5648
        %v5739 = vadd.f32 %v5242, %v5651
        %v5740 = vadd.f32 %v5243, %v5656
        %v5741 = vadd.f32 %v5244, %v5659
        %v5742 = vadd.f32 %v5245, %v5664
        %v5743 = vadd.f32 %v5246, %v5667
        %v5744 = vadd.f32 %v5247, %v5672
        %v5745 = vadd.f32 %v5248, %v5675
        %v5746 = vadd.f32 %v5249, %v5680
        %v5747 = vadd.f32 %v5250, %v5683
        %v5748 = vadd.f32 %v5251, %v5688
        %v5749 = vadd.f32 %v5252, %v5691
        %v5750 = vadd.f32 %v5253, %v5696
        %v5751 = vadd.f32 %v5254, %v5699
        %v5752 = vadd.f32 %v5255, %v5704
        %v5753 = vadd.f32 %v5256, %v5707
        %v5754 = vadd.f32 %v5257, %v5712
        %v5755 = vadd.f32 %v5258, %v5715
        %v5756 = vadd.f32 %v5259, %v5720
        %v5757 = vadd.f32 %v5260, %v5723
        %v5758 = vld [vmem:[%s2] sm:$0x1]
        %v5760 = vlaneseq
        %v5761 = vshrl.u32 %v5760, 7
        %v5762 = vsub.s32 0, %v5761
        %v5763 = vrot.slane %v5758, %v5762
        %v5765 = vadd.f32 %v5726, %v5763
        %v5766 = vadd.f32 %v5727, %v5763
        %v5767 = vadd.f32 %v5728, %v5763
        %v5768 = vadd.f32 %v5729, %v5763
        %v5769 = vadd.f32 %v5730, %v5763
        %v5770 = vadd.f32 %v5731, %v5763
        %v5771 = vadd.f32 %v5732, %v5763
        %v5772 = vadd.f32 %v5733, %v5763
        %v5773 = vadd.f32 %v5734, %v5763
        %v5774 = vadd.f32 %v5735, %v5763
        %v5775 = vadd.f32 %v5736, %v5763
        %v5776 = vadd.f32 %v5737, %v5763
        %v5777 = vadd.f32 %v5738, %v5763
        %v5778 = vadd.f32 %v5739, %v5763
        %v5779 = vadd.f32 %v5740, %v5763
        %v5780 = vadd.f32 %v5741, %v5763
        %v5781 = vadd.f32 %v5742, %v5763
        %v5782 = vadd.f32 %v5743, %v5763
        %v5783 = vadd.f32 %v5744, %v5763
        %v5784 = vadd.f32 %v5745, %v5763
        %v5785 = vadd.f32 %v5746, %v5763
        %v5786 = vadd.f32 %v5747, %v5763
        %v5787 = vadd.f32 %v5748, %v5763
        %v5788 = vadd.f32 %v5749, %v5763
        %v5789 = vadd.f32 %v5750, %v5763
        %v5790 = vadd.f32 %v5751, %v5763
        %v5791 = vadd.f32 %v5752, %v5763
        %v5792 = vadd.f32 %v5753, %v5763
        %v5793 = vadd.f32 %v5754, %v5763
        %v5794 = vadd.f32 %v5755, %v5763
        %v5795 = vadd.f32 %v5756, %v5763
        %v5796 = vadd.f32 %v5757, %v5763
        %v5797 = vmax.f32 %v5765, 0.0
        %v5798 = vmax.f32 %v5766, 0.0
        %v5799 = vmax.f32 %v5767, 0.0
        %v5800 = vmax.f32 %v5768, 0.0
        %v5801 = vmax.f32 %v5769, 0.0
        %v5802 = vmax.f32 %v5770, 0.0
        %v5803 = vmax.f32 %v5771, 0.0
        %v5804 = vmax.f32 %v5772, 0.0
        %v5805 = vmax.f32 %v5773, 0.0
        %v5806 = vmax.f32 %v5774, 0.0
        %v5807 = vmax.f32 %v5775, 0.0
        %v5808 = vmax.f32 %v5776, 0.0
        %v5809 = vmax.f32 %v5777, 0.0
        %v5810 = vmax.f32 %v5778, 0.0
        %v5811 = vmax.f32 %v5779, 0.0
        %v5812 = vmax.f32 %v5780, 0.0
        %v5813 = vmax.f32 %v5781, 0.0
        %v5814 = vmax.f32 %v5782, 0.0
        %v5815 = vmax.f32 %v5783, 0.0
        %v5816 = vmax.f32 %v5784, 0.0
        %v5817 = vmax.f32 %v5785, 0.0
        %v5818 = vmax.f32 %v5786, 0.0
        %v5819 = vmax.f32 %v5787, 0.0
        %v5820 = vmax.f32 %v5788, 0.0
        %v5821 = vmax.f32 %v5789, 0.0
        %v5822 = vmax.f32 %v5790, 0.0
        %v5823 = vmax.f32 %v5791, 0.0
        %v5824 = vmax.f32 %v5792, 0.0
        %v5825 = vmax.f32 %v5793, 0.0
        %v5826 = vmax.f32 %v5794, 0.0
        %v5827 = vmax.f32 %v5795, 0.0
        %v5828 = vmax.f32 %v5796, 0.0
        %v5829 = vpack.c.bf16 %v5798, %v5797
        %v5830 = vpack.c.bf16 %v5800, %v5799
        %v5831 = vpack.c.bf16 %v5802, %v5801
        %v5832 = vpack.c.bf16 %v5804, %v5803
        %v5833 = vpack.c.bf16 %v5806, %v5805
        %v5834 = vpack.c.bf16 %v5808, %v5807
        %v5835 = vpack.c.bf16 %v5810, %v5809
        %v5836 = vpack.c.bf16 %v5812, %v5811
        %v5837 = vpack.c.bf16 %v5814, %v5813
        %v5838 = vpack.c.bf16 %v5816, %v5815
        %v5839 = vpack.c.bf16 %v5818, %v5817
        %v5840 = vpack.c.bf16 %v5820, %v5819
        %v5841 = vpack.c.bf16 %v5822, %v5821
        %v5842 = vpack.c.bf16 %v5824, %v5823
        %v5843 = vpack.c.bf16 %v5826, %v5825
        %v5844 = vpack.c.bf16 %v5828, %v5827
        %v5861 = vunpack.c.l.b16 %v5829
        %v5862 = vunpack.c.h.b16 %v5829
        %v5863 = vunpack.c.l.b16 %v5830
        %v5864 = vunpack.c.h.b16 %v5830
        %v5865 = vunpack.c.l.b16 %v5831
        %v5866 = vunpack.c.h.b16 %v5831
        %v5867 = vunpack.c.l.b16 %v5832
        %v5868 = vunpack.c.h.b16 %v5832
        %v5869 = vunpack.c.l.b16 %v5833
        %v5870 = vunpack.c.h.b16 %v5833
        %v5871 = vunpack.c.l.b16 %v5834
        %v5872 = vunpack.c.h.b16 %v5834
        %v5873 = vunpack.c.l.b16 %v5835
        %v5874 = vunpack.c.h.b16 %v5835
        %v5875 = vunpack.c.l.b16 %v5836
        %v5876 = vunpack.c.h.b16 %v5836
        %v5877 = vunpack.c.l.b16 %v5837
        %v5878 = vunpack.c.h.b16 %v5837
        %v5879 = vunpack.c.l.b16 %v5838
        %v5880 = vunpack.c.h.b16 %v5838
        %v5881 = vunpack.c.l.b16 %v5839
        %v5882 = vunpack.c.h.b16 %v5839
        %v5883 = vunpack.c.l.b16 %v5840
        %v5884 = vunpack.c.h.b16 %v5840
        %v5885 = vunpack.c.l.b16 %v5841
        %v5886 = vunpack.c.h.b16 %v5841
        %v5887 = vunpack.c.l.b16 %v5842
        %v5888 = vunpack.c.h.b16 %v5842
        %v5889 = vunpack.c.l.b16 %v5843
        %v5890 = vunpack.c.h.b16 %v5843
        %v5891 = vunpack.c.l.b16 %v5844
        %v5892 = vunpack.c.h.b16 %v5844
        %v5893 = vpack.c.b16 %v5861, %v5861
        %v5894 = vpack.c.b16 %v5862, %v5862
        %v5895 = vpack.c.b16 %v5863, %v5863
        %v5896 = vpack.c.b16 %v5864, %v5864
        %v5897 = vpack.c.b16 %v5865, %v5865
        %v5898 = vpack.c.b16 %v5866, %v5866
        %v5899 = vpack.c.b16 %v5867, %v5867
        %v5900 = vpack.c.b16 %v5868, %v5868
        %v5901 = vpack.c.b16 %v5869, %v5869
        %v5902 = vpack.c.b16 %v5870, %v5870
        %v5903 = vpack.c.b16 %v5871, %v5871
        %v5904 = vpack.c.b16 %v5872, %v5872
        %v5905 = vpack.c.b16 %v5873, %v5873
        %v5906 = vpack.c.b16 %v5874, %v5874
        %v5907 = vpack.c.b16 %v5875, %v5875
        %v5908 = vpack.c.b16 %v5876, %v5876
        %v5909 = vpack.c.b16 %v5877, %v5877
        %v5910 = vpack.c.b16 %v5878, %v5878
        %v5911 = vpack.c.b16 %v5879, %v5879
        %v5912 = vpack.c.b16 %v5880, %v5880
        %v5913 = vpack.c.b16 %v5881, %v5881
        %v5914 = vpack.c.b16 %v5882, %v5882
        %v5915 = vpack.c.b16 %v5883, %v5883
        %v5916 = vpack.c.b16 %v5884, %v5884
        %v5917 = vpack.c.b16 %v5885, %v5885
        %v5918 = vpack.c.b16 %v5886, %v5886
        %v5919 = vpack.c.b16 %v5887, %v5887
        %v5920 = vpack.c.b16 %v5888, %v5888
        %v5921 = vpack.c.b16 %v5889, %v5889
        %v5922 = vpack.c.b16 %v5890, %v5890
        %v5923 = vpack.c.b16 %v5891, %v5891
        %v5924 = vpack.c.b16 %v5892, %v5892
        %v5926 = vshrl.u32 %v5893, 16
        %v5928 = vrot.slane %v5926, 7
        %v5929 = vshll.u32 %v5893, 16
        %v5931 = vor.u32 %v5928, %v5929
        %v5932 = vrot.slane %v5928, 4
        %v5934 = vshrl.u32 %v5894, 16
        %v5936 = vrot.slane %v5934, 7
        %v5937 = vshll.u32 %v5894, 16
        %v5939 = vor.u32 %v5936, %v5937
        %v5940 = vsel %vm522, %v5932, %v5939
        %v5941 = vrot.slane %v5936, 4
        %v5943 = vshrl.u32 %v5895, 16
        %v5945 = vrot.slane %v5943, 7
        %v5946 = vshll.u32 %v5895, 16
        %v5948 = vor.u32 %v5945, %v5946
        %v5949 = vrot.slane %v5945, 4
        %v5951 = vshrl.u32 %v5896, 16
        %v5953 = vrot.slane %v5951, 7
        %v5954 = vshll.u32 %v5896, 16
        %v5956 = vor.u32 %v5953, %v5954
        %v5957 = vsel %vm522, %v5949, %v5956
        %v5958 = vrot.slane %v5953, 4
        %v5960 = vshrl.u32 %v5897, 16
        %v5962 = vrot.slane %v5960, 7
        %v5963 = vshll.u32 %v5897, 16
        %v5965 = vor.u32 %v5962, %v5963
        %v5966 = vrot.slane %v5962, 4
        %v5968 = vshrl.u32 %v5898, 16
        %v5970 = vrot.slane %v5968, 7
        %v5971 = vshll.u32 %v5898, 16
        %v5973 = vor.u32 %v5970, %v5971
        %v5974 = vsel %vm522, %v5966, %v5973
        %v5975 = vrot.slane %v5970, 4
        %v5977 = vshrl.u32 %v5899, 16
        %v5979 = vrot.slane %v5977, 7
        %v5980 = vshll.u32 %v5899, 16
        %v5982 = vor.u32 %v5979, %v5980
        %v5983 = vrot.slane %v5979, 4
        %v5985 = vshrl.u32 %v5900, 16
        %v5987 = vrot.slane %v5985, 7
        %v5988 = vshll.u32 %v5900, 16
        %v5990 = vor.u32 %v5987, %v5988
        %v5991 = vsel %vm522, %v5983, %v5990
        %v5992 = vrot.slane %v5987, 4
        %v5994 = vshrl.u32 %v5901, 16
        %v5996 = vrot.slane %v5994, 7
        %v5997 = vshll.u32 %v5901, 16
        %v5999 = vor.u32 %v5996, %v5997
        %v6000 = vrot.slane %v5996, 4
        %v6002 = vshrl.u32 %v5902, 16
        %v6004 = vrot.slane %v6002, 7
        %v6005 = vshll.u32 %v5902, 16
        %v6007 = vor.u32 %v6004, %v6005
        %v6008 = vsel %vm522, %v6000, %v6007
        %v6009 = vrot.slane %v6004, 4
        %v6011 = vshrl.u32 %v5903, 16
        %v6013 = vrot.slane %v6011, 7
        %v6014 = vshll.u32 %v5903, 16
        %v6016 = vor.u32 %v6013, %v6014
        %v6017 = vrot.slane %v6013, 4
        %v6019 = vshrl.u32 %v5904, 16
        %v6021 = vrot.slane %v6019, 7
        %v6022 = vshll.u32 %v5904, 16
        %v6024 = vor.u32 %v6021, %v6022
        %v6025 = vsel %vm522, %v6017, %v6024
        %v6026 = vrot.slane %v6021, 4
        %v6028 = vshrl.u32 %v5905, 16
        %v6030 = vrot.slane %v6028, 7
        %v6031 = vshll.u32 %v5905, 16
        %v6033 = vor.u32 %v6030, %v6031
        %v6034 = vrot.slane %v6030, 4
        %v6036 = vshrl.u32 %v5906, 16
        %v6038 = vrot.slane %v6036, 7
        %v6039 = vshll.u32 %v5906, 16
        %v6041 = vor.u32 %v6038, %v6039
        %v6042 = vsel %vm522, %v6034, %v6041
        %v6043 = vrot.slane %v6038, 4
        %v6045 = vshrl.u32 %v5907, 16
        %v6047 = vrot.slane %v6045, 7
        %v6048 = vshll.u32 %v5907, 16
        %v6050 = vor.u32 %v6047, %v6048
        %v6051 = vrot.slane %v6047, 4
        %v6053 = vshrl.u32 %v5908, 16
        %v6055 = vrot.slane %v6053, 7
        %v6056 = vshll.u32 %v5908, 16
        %v6058 = vor.u32 %v6055, %v6056
        %v6059 = vsel %vm522, %v6051, %v6058
        %v6060 = vrot.slane %v6055, 4
        %v6062 = vshrl.u32 %v5909, 16
        %v6064 = vrot.slane %v6062, 7
        %v6065 = vshll.u32 %v5909, 16
        %v6067 = vor.u32 %v6064, %v6065
        %v6068 = vrot.slane %v6064, 4
        %v6070 = vshrl.u32 %v5910, 16
        %v6072 = vrot.slane %v6070, 7
        %v6073 = vshll.u32 %v5910, 16
        %v6075 = vor.u32 %v6072, %v6073
        %v6076 = vsel %vm522, %v6068, %v6075
        %v6077 = vrot.slane %v6072, 4
        %v6079 = vshrl.u32 %v5911, 16
        %v6081 = vrot.slane %v6079, 7
        %v6082 = vshll.u32 %v5911, 16
        %v6084 = vor.u32 %v6081, %v6082
        %v6085 = vrot.slane %v6081, 4
        %v6087 = vshrl.u32 %v5912, 16
        %v6089 = vrot.slane %v6087, 7
        %v6090 = vshll.u32 %v5912, 16
        %v6092 = vor.u32 %v6089, %v6090
        %v6093 = vsel %vm522, %v6085, %v6092
        %v6094 = vrot.slane %v6089, 4
        %v6096 = vshrl.u32 %v5913, 16
        %v6098 = vrot.slane %v6096, 7
        %v6099 = vshll.u32 %v5913, 16
        %v6101 = vor.u32 %v6098, %v6099
        %v6102 = vrot.slane %v6098, 4
        %v6104 = vshrl.u32 %v5914, 16
        %v6106 = vrot.slane %v6104, 7
        %v6107 = vshll.u32 %v5914, 16
        %v6109 = vor.u32 %v6106, %v6107
        %v6110 = vsel %vm522, %v6102, %v6109
        %v6111 = vrot.slane %v6106, 4
        %v6113 = vshrl.u32 %v5915, 16
        %v6115 = vrot.slane %v6113, 7
        %v6116 = vshll.u32 %v5915, 16
        %v6118 = vor.u32 %v6115, %v6116
        %v6119 = vrot.slane %v6115, 4
        %v6121 = vshrl.u32 %v5916, 16
        %v6123 = vrot.slane %v6121, 7
        %v6124 = vshll.u32 %v5916, 16
        %v6126 = vor.u32 %v6123, %v6124
        %v6127 = vsel %vm522, %v6119, %v6126
        %v6128 = vrot.slane %v6123, 4
        %v6130 = vshrl.u32 %v5917, 16
        %v6132 = vrot.slane %v6130, 7
        %v6133 = vshll.u32 %v5917, 16
        %v6135 = vor.u32 %v6132, %v6133
        %v6136 = vrot.slane %v6132, 4
        %v6138 = vshrl.u32 %v5918, 16
        %v6140 = vrot.slane %v6138, 7
        %v6141 = vshll.u32 %v5918, 16
        %v6143 = vor.u32 %v6140, %v6141
        %v6144 = vsel %vm522, %v6136, %v6143
        %v6145 = vrot.slane %v6140, 4
        %v6147 = vshrl.u32 %v5919, 16
        %v6149 = vrot.slane %v6147, 7
        %v6150 = vshll.u32 %v5919, 16
        %v6152 = vor.u32 %v6149, %v6150
        %v6153 = vrot.slane %v6149, 4
        %v6155 = vshrl.u32 %v5920, 16
        %v6157 = vrot.slane %v6155, 7
        %v6158 = vshll.u32 %v5920, 16
        %v6160 = vor.u32 %v6157, %v6158
        %v6161 = vsel %vm522, %v6153, %v6160
        %v6162 = vrot.slane %v6157, 4
        %v6164 = vshrl.u32 %v5921, 16
        %v6166 = vrot.slane %v6164, 7
        %v6167 = vshll.u32 %v5921, 16
        %v6169 = vor.u32 %v6166, %v6167
        %v6170 = vrot.slane %v6166, 4
        %v6172 = vshrl.u32 %v5922, 16
        %v6174 = vrot.slane %v6172, 7
        %v6175 = vshll.u32 %v5922, 16
        %v6177 = vor.u32 %v6174, %v6175
        %v6178 = vsel %vm522, %v6170, %v6177
        %v6179 = vrot.slane %v6174, 4
        %v6181 = vshrl.u32 %v5923, 16
        %v6183 = vrot.slane %v6181, 7
        %v6184 = vshll.u32 %v5923, 16
        %v6186 = vor.u32 %v6183, %v6184
        %v6187 = vrot.slane %v6183, 4
        %v6189 = vshrl.u32 %v5924, 16
        %v6191 = vrot.slane %v6189, 7
        %v6192 = vshll.u32 %v5924, 16
        %v6194 = vor.u32 %v6191, %v6192
        %v6195 = vsel %vm522, %v6187, %v6194
        %v6196 = vrot.slane %v6191, 4
        %v6245 = vsel %vm845, %v5931, %v2872
        %6246 = vst [vmem:[%s843] sm:$0xf] %v6245
        %6247 = vst [vmem:[%s843 + $0x4] sm:$0xf] %v5940
        %v6248 = vld [vmem:[%s843 + $0x8] sm:$0x1]
        %v6249 = vsel %vm282, %v5941, %v6248
        %6250 = vst [vmem:[%s843 + $0x8] sm:$0x1] %v6249
        %v6251 = vld [vmem:[%s843 + $0xc] sm:$0xf]
        %v6252 = vsel %vm845, %v5948, %v6251
        %6253 = vst [vmem:[%s843 + $0xc] sm:$0xf] %v6252
        %6254 = vst [vmem:[%s843 + $0x10] sm:$0xf] %v5957
        %v6255 = vld [vmem:[%s843 + $0x14] sm:$0x1]
        %v6256 = vsel %vm282, %v5958, %v6255
        %6257 = vst [vmem:[%s843 + $0x14] sm:$0x1] %v6256
        %v6258 = vld [vmem:[%s843 + $0x18] sm:$0xf]
        %v6259 = vsel %vm845, %v5965, %v6258
        %6260 = vst [vmem:[%s843 + $0x18] sm:$0xf] %v6259
        %6261 = vst [vmem:[%s843 + $0x1c] sm:$0xf] %v5974
        %v6262 = vld [vmem:[%s843 + $0x20] sm:$0x1]
        %v6263 = vsel %vm282, %v5975, %v6262
        %6264 = vst [vmem:[%s843 + $0x20] sm:$0x1] %v6263
        %v6265 = vld [vmem:[%s843 + $0x24] sm:$0xf]
        %v6266 = vsel %vm845, %v5982, %v6265
        %6267 = vst [vmem:[%s843 + $0x24] sm:$0xf] %v6266
        %6268 = vst [vmem:[%s843 + $0x28] sm:$0xf] %v5991
        %v6269 = vld [vmem:[%s843 + $0x2c] sm:$0x1]
        %v6270 = vsel %vm282, %v5992, %v6269
        %6271 = vst [vmem:[%s843 + $0x2c] sm:$0x1] %v6270
        %v6272 = vld [vmem:[%s843 + $0x30] sm:$0xf]
        %v6273 = vsel %vm845, %v5999, %v6272
        %6274 = vst [vmem:[%s843 + $0x30] sm:$0xf] %v6273
        %6275 = vst [vmem:[%s843 + $0x34] sm:$0xf] %v6008
        %v6276 = vld [vmem:[%s843 + $0x38] sm:$0x1]
        %v6277 = vsel %vm282, %v6009, %v6276
        %6278 = vst [vmem:[%s843 + $0x38] sm:$0x1] %v6277
        %v6279 = vld [vmem:[%s843 + $0x3c] sm:$0xf]
        %v6280 = vsel %vm845, %v6016, %v6279
        %6281 = vst [vmem:[%s843 + $0x3c] sm:$0xf] %v6280
        %6282 = vst [vmem:[%s843 + $0x40] sm:$0xf] %v6025
        %v6283 = vld [vmem:[%s843 + $0x44] sm:$0x1]
        %v6284 = vsel %vm282, %v6026, %v6283
        %6285 = vst [vmem:[%s843 + $0x44] sm:$0x1] %v6284
        %v6286 = vld [vmem:[%s843 + $0x48] sm:$0xf]
        %v6287 = vsel %vm845, %v6033, %v6286
        %6288 = vst [vmem:[%s843 + $0x48] sm:$0xf] %v6287
        %6289 = vst [vmem:[%s843 + $0x4c] sm:$0xf] %v6042
        %v6290 = vld [vmem:[%s843 + $0x50] sm:$0x1]
        %v6291 = vsel %vm282, %v6043, %v6290
        %6292 = vst [vmem:[%s843 + $0x50] sm:$0x1] %v6291
        %v6293 = vld [vmem:[%s843 + $0x54] sm:$0xf]
        %v6294 = vsel %vm845, %v6050, %v6293
        %6295 = vst [vmem:[%s843 + $0x54] sm:$0xf] %v6294
        %6296 = vst [vmem:[%s843 + $0x58] sm:$0xf] %v6059
        %v6297 = vld [vmem:[%s843 + $0x5c] sm:$0x1]
        %v6298 = vsel %vm282, %v6060, %v6297
        %6299 = vst [vmem:[%s843 + $0x5c] sm:$0x1] %v6298
        %v6300 = vld [vmem:[%s843 + $0x60] sm:$0xf]
        %v6301 = vsel %vm845, %v6067, %v6300
        %6302 = vst [vmem:[%s843 + $0x60] sm:$0xf] %v6301
        %6303 = vst [vmem:[%s843 + $0x64] sm:$0xf] %v6076
        %v6304 = vld [vmem:[%s843 + $0x68] sm:$0x1]
        %v6305 = vsel %vm282, %v6077, %v6304
        %6306 = vst [vmem:[%s843 + $0x68] sm:$0x1] %v6305
        %v6307 = vld [vmem:[%s843 + $0x6c] sm:$0xf]
        %v6308 = vsel %vm845, %v6084, %v6307
        %6309 = vst [vmem:[%s843 + $0x6c] sm:$0xf] %v6308
        %6310 = vst [vmem:[%s843 + $0x70] sm:$0xf] %v6093
        %v6311 = vld [vmem:[%s843 + $0x74] sm:$0x1]
        %v6312 = vsel %vm282, %v6094, %v6311
        %6313 = vst [vmem:[%s843 + $0x74] sm:$0x1] %v6312
        %v6314 = vld [vmem:[%s843 + $0x78] sm:$0xf]
        %v6315 = vsel %vm845, %v6101, %v6314
        %6316 = vst [vmem:[%s843 + $0x78] sm:$0xf] %v6315
        %6317 = vst [vmem:[%s843 + $0x7c] sm:$0xf] %v6110
        %v6318 = vld [vmem:[%s843 + $0x80] sm:$0x1]
        %v6319 = vsel %vm282, %v6111, %v6318
        %6320 = vst [vmem:[%s843 + $0x80] sm:$0x1] %v6319
        %v6321 = vld [vmem:[%s843 + $0x84] sm:$0xf]
        %v6322 = vsel %vm845, %v6118, %v6321
        %6323 = vst [vmem:[%s843 + $0x84] sm:$0xf] %v6322
        %6324 = vst [vmem:[%s843 + $0x88] sm:$0xf] %v6127
        %v6325 = vld [vmem:[%s843 + $0x8c] sm:$0x1]
        %v6326 = vsel %vm282, %v6128, %v6325
        %6327 = vst [vmem:[%s843 + $0x8c] sm:$0x1] %v6326
        %v6328 = vld [vmem:[%s843 + $0x90] sm:$0xf]
        %v6329 = vsel %vm845, %v6135, %v6328
        %6330 = vst [vmem:[%s843 + $0x90] sm:$0xf] %v6329
        %6331 = vst [vmem:[%s843 + $0x94] sm:$0xf] %v6144
        %v6332 = vld [vmem:[%s843 + $0x98] sm:$0x1]
        %v6333 = vsel %vm282, %v6145, %v6332
        %6334 = vst [vmem:[%s843 + $0x98] sm:$0x1] %v6333
        %v6335 = vld [vmem:[%s843 + $0x9c] sm:$0xf]
        %v6336 = vsel %vm845, %v6152, %v6335
        %6337 = vst [vmem:[%s843 + $0x9c] sm:$0xf] %v6336
        %6338 = vst [vmem:[%s843 + $0xa0] sm:$0xf] %v6161
        %v6339 = vld [vmem:[%s843 + $0xa4] sm:$0x1]
        %v6340 = vsel %vm282, %v6162, %v6339
        %6341 = vst [vmem:[%s843 + $0xa4] sm:$0x1] %v6340
        %v6342 = vld [vmem:[%s843 + $0xa8] sm:$0xf]
        %v6343 = vsel %vm845, %v6169, %v6342
        %6344 = vst [vmem:[%s843 + $0xa8] sm:$0xf] %v6343
        %6345 = vst [vmem:[%s843 + $0xac] sm:$0xf] %v6178
        %v6346 = vld [vmem:[%s843 + $0xb0] sm:$0x1]
        %v6347 = vsel %vm282, %v6179, %v6346
        %6348 = vst [vmem:[%s843 + $0xb0] sm:$0x1] %v6347
        %v6349 = vld [vmem:[%s843 + $0xb4] sm:$0xf]
        %v6350 = vsel %vm845, %v6186, %v6349
        %6351 = vst [vmem:[%s843 + $0xb4] sm:$0xf] %v6350
        %6352 = vst [vmem:[%s843 + $0xb8] sm:$0xf] %v6195
        %v6353 = vld [vmem:[%s843 + $0xbc] sm:$0x1]
        %v6354 = vsel %vm282, %v6196, %v6353
        %6355 = vst [vmem:[%s843 + $0xbc] sm:$0x1] %v6354
        %v6356 = vld [vmem:[#allocation2] sm:$0xf]
        %v6357 = vld [vmem:[#allocation2 + $0x4] sm:$0xf]
        %v6358 = vld [vmem:[#allocation2 + $0xc] sm:$0xf]
        %v6359 = vld [vmem:[#allocation2 + $0x10] sm:$0xf]
        %v6360 = vld [vmem:[#allocation2 + $0x18] sm:$0xf]
        %v6361 = vld [vmem:[#allocation2 + $0x1c] sm:$0xf]
        %v6362 = vld [vmem:[#allocation2 + $0x24] sm:$0xf]
        %v6363 = vld [vmem:[#allocation2 + $0x28] sm:$0xf]
        %v6364 = vld [vmem:[#allocation2 + $0x30] sm:$0xf]
        %v6365 = vld [vmem:[#allocation2 + $0x34] sm:$0xf]
        %v6366 = vld [vmem:[#allocation2 + $0x3c] sm:$0xf]
        %v6367 = vld [vmem:[#allocation2 + $0x40] sm:$0xf]
        %v6368 = vld [vmem:[#allocation2 + $0x48] sm:$0xf]
        %v6369 = vld [vmem:[#allocation2 + $0x4c] sm:$0xf]
        %v6370 = vld [vmem:[#allocation2 + $0x54] sm:$0xf]
        %v6371 = vld [vmem:[#allocation2 + $0x58] sm:$0xf]
        %v6372 = vld [vmem:[#allocation2 + $0x60] sm:$0xf]
        %v6373 = vld [vmem:[#allocation2 + $0x64] sm:$0xf]
        %v6374 = vld [vmem:[#allocation2 + $0x6c] sm:$0xf]
        %v6375 = vld [vmem:[#allocation2 + $0x70] sm:$0xf]
        %v6376 = vld [vmem:[#allocation2 + $0x78] sm:$0xf]
        %v6377 = vld [vmem:[#allocation2 + $0x7c] sm:$0xf]
        %v6378 = vld [vmem:[#allocation2 + $0x84] sm:$0xf]
        %v6379 = vld [vmem:[#allocation2 + $0x88] sm:$0xf]
        %v6380 = vld [vmem:[#allocation2 + $0x90] sm:$0xf]
        %v6381 = vld [vmem:[#allocation2 + $0x94] sm:$0xf]
        %v6382 = vld [vmem:[#allocation2 + $0x9c] sm:$0xf]
        %v6383 = vld [vmem:[#allocation2 + $0xa0] sm:$0xf]
        %v6384 = vld [vmem:[#allocation2 + $0xa8] sm:$0xf]
        %v6385 = vld [vmem:[#allocation2 + $0xac] sm:$0xf]
        %v6386 = vld [vmem:[#allocation2 + $0xb4] sm:$0xf]
        %v6387 = vld [vmem:[#allocation2 + $0xb8] sm:$0xf]
        %v6388 = vld [vmem:[#allocation8] sm:$0xf]
        %v6389 = vld [vmem:[#allocation8 + $0x4] sm:$0xf]
        %v6390 = vld [vmem:[#allocation8 + $0x8] sm:$0xf]
        %v6391 = vld [vmem:[#allocation8 + $0xc] sm:$0xf]
        %v6392 = vld [vmem:[#allocation8 + $0x10] sm:$0xf]
        %v6393 = vld [vmem:[#allocation8 + $0x14] sm:$0xf]
        %v6394 = vld [vmem:[#allocation8 + $0x18] sm:$0xf]
        %v6395 = vld [vmem:[#allocation8 + $0x1c] sm:$0xf]
        %v6396 = vld [vmem:[#allocation8 + $0x20] sm:$0xf]
        %v6397 = vld [vmem:[#allocation8 + $0x24] sm:$0xf]
        %v6398 = vld [vmem:[#allocation8 + $0x28] sm:$0xf]
        %v6399 = vld [vmem:[#allocation8 + $0x2c] sm:$0xf]
        %v6400 = vld [vmem:[#allocation8 + $0x30] sm:$0xf]
        %v6401 = vld [vmem:[#allocation8 + $0x34] sm:$0xf]
        %v6402 = vld [vmem:[#allocation8 + $0x38] sm:$0xf]
        %v6403 = vld [vmem:[#allocation8 + $0x3c] sm:$0xf]
        %v6404 = vld [vmem:[#allocation2 + $0x8] sm:$0x1]
        %v6405 = vld [vmem:[#allocation2 + $0x14] sm:$0x1]
        %v6406 = vld [vmem:[#allocation2 + $0x20] sm:$0x1]
        %v6407 = vld [vmem:[#allocation2 + $0x2c] sm:$0x1]
        %v6408 = vld [vmem:[#allocation2 + $0x38] sm:$0x1]
        %v6409 = vld [vmem:[#allocation2 + $0x44] sm:$0x1]
        %v6410 = vld [vmem:[#allocation2 + $0x50] sm:$0x1]
        %v6411 = vld [vmem:[#allocation2 + $0x5c] sm:$0x1]
        %v6412 = vld [vmem:[#allocation2 + $0x68] sm:$0x1]
        %v6413 = vld [vmem:[#allocation2 + $0x74] sm:$0x1]
        %v6414 = vld [vmem:[#allocation2 + $0x80] sm:$0x1]
        %v6415 = vld [vmem:[#allocation2 + $0x8c] sm:$0x1]
        %v6416 = vld [vmem:[#allocation2 + $0x98] sm:$0x1]
        %v6417 = vld [vmem:[#allocation2 + $0xa4] sm:$0x1]
        %v6418 = vld [vmem:[#allocation2 + $0xb0] sm:$0x1]
        %v6419 = vld [vmem:[#allocation2 + $0xbc] sm:$0x1]
        %v6421 = vshrl.u32 %v6356, 16
        %v6423 = vrot.slane %v6421, 4
        %v6424 = vshll.u32 %v6356, 16
        %v6426 = vrot.slane %v6424, 5
        %v6427 = vor.u32 %v6423, %v6426
        %v6428 = vrot.slane %v6427, 4
        %v6430 = vshll.u32 %v6357, 16
        %v6432 = vrot.slane %v6430, 5
        %v6433 = vsel %vm1024, %v6428, %v6432
        %v6434 = vshrl.u32 %v6357, 16
        %v6436 = vrot.slane %v6434, 4
        %v6437 = vor.u32 %v6436, %v6432
        %v6438 = vrot.slane %v6437, 4
        %v6440 = vshll.u32 %v6404, 16
        %v6442 = vrot.slane %v6440, 5
        %v6443 = vsel %vm1024, %v6438, %v6442
        %v6445 = vshrl.u32 %v6358, 16
        %v6447 = vrot.slane %v6445, 4
        %v6448 = vshll.u32 %v6358, 16
        %v6450 = vrot.slane %v6448, 5
        %v6451 = vor.u32 %v6447, %v6450
        %v6452 = vrot.slane %v6451, 4
        %v6454 = vshll.u32 %v6359, 16
        %v6456 = vrot.slane %v6454, 5
        %v6457 = vsel %vm1024, %v6452, %v6456
        %v6458 = vshrl.u32 %v6359, 16
        %v6460 = vrot.slane %v6458, 4
        %v6461 = vor.u32 %v6460, %v6456
        %v6462 = vrot.slane %v6461, 4
        %v6464 = vshll.u32 %v6405, 16
        %v6466 = vrot.slane %v6464, 5
        %v6467 = vsel %vm1024, %v6462, %v6466
        %v6469 = vshrl.u32 %v6360, 16
        %v6471 = vrot.slane %v6469, 4
        %v6472 = vshll.u32 %v6360, 16
        %v6474 = vrot.slane %v6472, 5
        %v6475 = vor.u32 %v6471, %v6474
        %v6476 = vrot.slane %v6475, 4
        %v6478 = vshll.u32 %v6361, 16
        %v6480 = vrot.slane %v6478, 5
        %v6481 = vsel %vm1024, %v6476, %v6480
        %v6482 = vshrl.u32 %v6361, 16
        %v6484 = vrot.slane %v6482, 4
        %v6485 = vor.u32 %v6484, %v6480
        %v6486 = vrot.slane %v6485, 4
        %v6488 = vshll.u32 %v6406, 16
        %v6490 = vrot.slane %v6488, 5
        %v6491 = vsel %vm1024, %v6486, %v6490
        %v6493 = vshrl.u32 %v6362, 16
        %v6495 = vrot.slane %v6493, 4
        %v6496 = vshll.u32 %v6362, 16
        %v6498 = vrot.slane %v6496, 5
        %v6499 = vor.u32 %v6495, %v6498
        %v6500 = vrot.slane %v6499, 4
        %v6502 = vshll.u32 %v6363, 16
        %v6504 = vrot.slane %v6502, 5
        %v6505 = vsel %vm1024, %v6500, %v6504
        %v6506 = vshrl.u32 %v6363, 16
        %v6508 = vrot.slane %v6506, 4
        %v6509 = vor.u32 %v6508, %v6504
        %v6510 = vrot.slane %v6509, 4
        %v6512 = vshll.u32 %v6407, 16
        %v6514 = vrot.slane %v6512, 5
        %v6515 = vsel %vm1024, %v6510, %v6514
        %v6517 = vshrl.u32 %v6364, 16
        %v6519 = vrot.slane %v6517, 4
        %v6520 = vshll.u32 %v6364, 16
        %v6522 = vrot.slane %v6520, 5
        %v6523 = vor.u32 %v6519, %v6522
        %v6524 = vrot.slane %v6523, 4
        %v6526 = vshll.u32 %v6365, 16
        %v6528 = vrot.slane %v6526, 5
        %v6529 = vsel %vm1024, %v6524, %v6528
        %v6530 = vshrl.u32 %v6365, 16
        %v6532 = vrot.slane %v6530, 4
        %v6533 = vor.u32 %v6532, %v6528
        %v6534 = vrot.slane %v6533, 4
        %v6536 = vshll.u32 %v6408, 16
        %v6538 = vrot.slane %v6536, 5
        %v6539 = vsel %vm1024, %v6534, %v6538
        %v6541 = vshrl.u32 %v6366, 16
        %v6543 = vrot.slane %v6541, 4
        %v6544 = vshll.u32 %v6366, 16
        %v6546 = vrot.slane %v6544, 5
        %v6547 = vor.u32 %v6543, %v6546
        %v6548 = vrot.slane %v6547, 4
        %v6550 = vshll.u32 %v6367, 16
        %v6552 = vrot.slane %v6550, 5
        %v6553 = vsel %vm1024, %v6548, %v6552
        %v6554 = vshrl.u32 %v6367, 16
        %v6556 = vrot.slane %v6554, 4
        %v6557 = vor.u32 %v6556, %v6552
        %v6558 = vrot.slane %v6557, 4
        %v6560 = vshll.u32 %v6409, 16
        %v6562 = vrot.slane %v6560, 5
        %v6563 = vsel %vm1024, %v6558, %v6562
        %v6565 = vshrl.u32 %v6368, 16
        %v6567 = vrot.slane %v6565, 4
        %v6568 = vshll.u32 %v6368, 16
        %v6570 = vrot.slane %v6568, 5
        %v6571 = vor.u32 %v6567, %v6570
        %v6572 = vrot.slane %v6571, 4
        %v6574 = vshll.u32 %v6369, 16
        %v6576 = vrot.slane %v6574, 5
        %v6577 = vsel %vm1024, %v6572, %v6576
        %v6578 = vshrl.u32 %v6369, 16
        %v6580 = vrot.slane %v6578, 4
        %v6581 = vor.u32 %v6580, %v6576
        %v6582 = vrot.slane %v6581, 4
        %v6584 = vshll.u32 %v6410, 16
        %v6586 = vrot.slane %v6584, 5
        %v6587 = vsel %vm1024, %v6582, %v6586
        %v6589 = vshrl.u32 %v6370, 16
        %v6591 = vrot.slane %v6589, 4
        %v6592 = vshll.u32 %v6370, 16
        %v6594 = vrot.slane %v6592, 5
        %v6595 = vor.u32 %v6591, %v6594
        %v6596 = vrot.slane %v6595, 4
        %v6598 = vshll.u32 %v6371, 16
        %v6600 = vrot.slane %v6598, 5
        %v6601 = vsel %vm1024, %v6596, %v6600
        %v6602 = vshrl.u32 %v6371, 16
        %v6604 = vrot.slane %v6602, 4
        %v6605 = vor.u32 %v6604, %v6600
        %v6606 = vrot.slane %v6605, 4
        %v6608 = vshll.u32 %v6411, 16
        %v6610 = vrot.slane %v6608, 5
        %v6611 = vsel %vm1024, %v6606, %v6610
        %v6613 = vshrl.u32 %v6372, 16
        %v6615 = vrot.slane %v6613, 4
        %v6616 = vshll.u32 %v6372, 16
        %v6618 = vrot.slane %v6616, 5
        %v6619 = vor.u32 %v6615, %v6618
        %v6620 = vrot.slane %v6619, 4
        %v6622 = vshll.u32 %v6373, 16
        %v6624 = vrot.slane %v6622, 5
        %v6625 = vsel %vm1024, %v6620, %v6624
        %v6626 = vshrl.u32 %v6373, 16
        %v6628 = vrot.slane %v6626, 4
        %v6629 = vor.u32 %v6628, %v6624
        %v6630 = vrot.slane %v6629, 4
        %v6632 = vshll.u32 %v6412, 16
        %v6634 = vrot.slane %v6632, 5
        %v6635 = vsel %vm1024, %v6630, %v6634
        %v6637 = vshrl.u32 %v6374, 16
        %v6639 = vrot.slane %v6637, 4
        %v6640 = vshll.u32 %v6374, 16
        %v6642 = vrot.slane %v6640, 5
        %v6643 = vor.u32 %v6639, %v6642
        %v6644 = vrot.slane %v6643, 4
        %v6646 = vshll.u32 %v6375, 16
        %v6648 = vrot.slane %v6646, 5
        %v6649 = vsel %vm1024, %v6644, %v6648
        %v6650 = vshrl.u32 %v6375, 16
        %v6652 = vrot.slane %v6650, 4
        %v6653 = vor.u32 %v6652, %v6648
        %v6654 = vrot.slane %v6653, 4
        %v6656 = vshll.u32 %v6413, 16
        %v6658 = vrot.slane %v6656, 5
        %v6659 = vsel %vm1024, %v6654, %v6658
        %v6661 = vshrl.u32 %v6376, 16
        %v6663 = vrot.slane %v6661, 4
        %v6664 = vshll.u32 %v6376, 16
        %v6666 = vrot.slane %v6664, 5
        %v6667 = vor.u32 %v6663, %v6666
        %v6668 = vrot.slane %v6667, 4
        %v6670 = vshll.u32 %v6377, 16
        %v6672 = vrot.slane %v6670, 5
        %v6673 = vsel %vm1024, %v6668, %v6672
        %v6674 = vshrl.u32 %v6377, 16
        %v6676 = vrot.slane %v6674, 4
        %v6677 = vor.u32 %v6676, %v6672
        %v6678 = vrot.slane %v6677, 4
        %v6680 = vshll.u32 %v6414, 16
        %v6682 = vrot.slane %v6680, 5
        %v6683 = vsel %vm1024, %v6678, %v6682
        %v6685 = vshrl.u32 %v6378, 16
        %v6687 = vrot.slane %v6685, 4
        %v6688 = vshll.u32 %v6378, 16
        %v6690 = vrot.slane %v6688, 5
        %v6691 = vor.u32 %v6687, %v6690
        %v6692 = vrot.slane %v6691, 4
        %v6694 = vshll.u32 %v6379, 16
        %v6696 = vrot.slane %v6694, 5
        %v6697 = vsel %vm1024, %v6692, %v6696
        %v6698 = vshrl.u32 %v6379, 16
        %v6700 = vrot.slane %v6698, 4
        %v6701 = vor.u32 %v6700, %v6696
        %v6702 = vrot.slane %v6701, 4
        %v6704 = vshll.u32 %v6415, 16
        %v6706 = vrot.slane %v6704, 5
        %v6707 = vsel %vm1024, %v6702, %v6706
        %v6709 = vshrl.u32 %v6380, 16
        %v6711 = vrot.slane %v6709, 4
        %v6712 = vshll.u32 %v6380, 16
        %v6714 = vrot.slane %v6712, 5
        %v6715 = vor.u32 %v6711, %v6714
        %v6716 = vrot.slane %v6715, 4
        %v6718 = vshll.u32 %v6381, 16
        %v6720 = vrot.slane %v6718, 5
        %v6721 = vsel %vm1024, %v6716, %v6720
        %v6722 = vshrl.u32 %v6381, 16
        %v6724 = vrot.slane %v6722, 4
        %v6725 = vor.u32 %v6724, %v6720
        %v6726 = vrot.slane %v6725, 4
        %v6728 = vshll.u32 %v6416, 16
        %v6730 = vrot.slane %v6728, 5
        %v6731 = vsel %vm1024, %v6726, %v6730
        %v6733 = vshrl.u32 %v6382, 16
        %v6735 = vrot.slane %v6733, 4
        %v6736 = vshll.u32 %v6382, 16
        %v6738 = vrot.slane %v6736, 5
        %v6739 = vor.u32 %v6735, %v6738
        %v6740 = vrot.slane %v6739, 4
        %v6742 = vshll.u32 %v6383, 16
        %v6744 = vrot.slane %v6742, 5
        %v6745 = vsel %vm1024, %v6740, %v6744
        %v6746 = vshrl.u32 %v6383, 16
        %v6748 = vrot.slane %v6746, 4
        %v6749 = vor.u32 %v6748, %v6744
        %v6750 = vrot.slane %v6749, 4
        %v6752 = vshll.u32 %v6417, 16
        %v6754 = vrot.slane %v6752, 5
        %v6755 = vsel %vm1024, %v6750, %v6754
        %v6757 = vshrl.u32 %v6384, 16
        %v6759 = vrot.slane %v6757, 4
        %v6760 = vshll.u32 %v6384, 16
        %v6762 = vrot.slane %v6760, 5
        %v6763 = vor.u32 %v6759, %v6762
        %v6764 = vrot.slane %v6763, 4
        %v6766 = vshll.u32 %v6385, 16
        %v6768 = vrot.slane %v6766, 5
        %v6769 = vsel %vm1024, %v6764, %v6768
        %v6770 = vshrl.u32 %v6385, 16
        %v6772 = vrot.slane %v6770, 4
        %v6773 = vor.u32 %v6772, %v6768
        %v6774 = vrot.slane %v6773, 4
        %v6776 = vshll.u32 %v6418, 16
        %v6778 = vrot.slane %v6776, 5
        %v6779 = vsel %vm1024, %v6774, %v6778
        %v6781 = vshrl.u32 %v6386, 16
        %v6783 = vrot.slane %v6781, 4
        %v6784 = vshll.u32 %v6386, 16
        %v6786 = vrot.slane %v6784, 5
        %v6787 = vor.u32 %v6783, %v6786
        %v6788 = vrot.slane %v6787, 4
        %v6790 = vshll.u32 %v6387, 16
        %v6792 = vrot.slane %v6790, 5
        %v6793 = vsel %vm1024, %v6788, %v6792
        %v6794 = vshrl.u32 %v6387, 16
        %v6796 = vrot.slane %v6794, 4
        %v6797 = vor.u32 %v6796, %v6792
        %v6798 = vrot.slane %v6797, 4
        %v6800 = vshll.u32 %v6419, 16
        %v6802 = vrot.slane %v6800, 5
        %v6803 = vsel %vm1024, %v6798, %v6802
        %v6804 = vld [vmem:[#allocation8 + $0x40] sm:$0xf]
        %v6805 = vld [vmem:[#allocation8 + $0x44] sm:$0xf]
        %v6806 = vld [vmem:[#allocation8 + $0x48] sm:$0xf]
        %v6807 = vld [vmem:[#allocation8 + $0x4c] sm:$0xf]
        %v6808 = vld [vmem:[#allocation8 + $0x50] sm:$0xf]
        %v6809 = vld [vmem:[#allocation8 + $0x54] sm:$0xf]
        %v6810 = vld [vmem:[#allocation8 + $0x58] sm:$0xf]
        %v6811 = vld [vmem:[#allocation8 + $0x5c] sm:$0xf]
        %v6812 = vld [vmem:[#allocation8 + $0x60] sm:$0xf]
        %v6813 = vld [vmem:[#allocation8 + $0x64] sm:$0xf]
        %v6814 = vld [vmem:[#allocation8 + $0x68] sm:$0xf]
        %v6815 = vld [vmem:[#allocation8 + $0x6c] sm:$0xf]
        %v6816 = vld [vmem:[#allocation8 + $0x70] sm:$0xf]
        %v6817 = vld [vmem:[#allocation8 + $0x74] sm:$0xf]
        %v6818 = vld [vmem:[#allocation8 + $0x78] sm:$0xf]
        %v6819 = vld [vmem:[#allocation8 + $0x7c] sm:$0xf]
        %v6820 = vunpack.c.l.b16 %v6433
        %v6821 = vunpack.c.l.b16 %v6443
        %v6822 = vunpack.c.l.b16 %v6457
        %v6823 = vunpack.c.l.b16 %v6467
        %v6824 = vunpack.c.l.b16 %v6481
        %v6825 = vunpack.c.l.b16 %v6491
        %v6826 = vunpack.c.l.b16 %v6505
        %v6827 = vunpack.c.l.b16 %v6515
        %v6828 = vunpack.c.l.b16 %v6529
        %v6829 = vunpack.c.l.b16 %v6539
        %v6830 = vunpack.c.l.b16 %v6553
        %v6831 = vunpack.c.l.b16 %v6563
        %v6832 = vunpack.c.l.b16 %v6577
        %v6833 = vunpack.c.l.b16 %v6587
        %v6834 = vunpack.c.l.b16 %v6601
        %v6835 = vunpack.c.l.b16 %v6611
        %v6836 = vunpack.c.l.b16 %v6625
        %v6837 = vunpack.c.l.b16 %v6635
        %v6838 = vunpack.c.l.b16 %v6649
        %v6839 = vunpack.c.l.b16 %v6659
        %v6840 = vunpack.c.l.b16 %v6673
        %v6841 = vunpack.c.l.b16 %v6683
        %v6842 = vunpack.c.l.b16 %v6697
        %v6843 = vunpack.c.l.b16 %v6707
        %v6844 = vunpack.c.l.b16 %v6721
        %v6845 = vunpack.c.l.b16 %v6731
        %v6846 = vunpack.c.l.b16 %v6745
        %v6847 = vunpack.c.l.b16 %v6755
        %v6848 = vunpack.c.l.b16 %v6769
        %v6849 = vunpack.c.l.b16 %v6779
        %v6850 = vunpack.c.l.b16 %v6793
        %v6851 = vunpack.c.l.b16 %v6803
        %v6852 = vpack.c.b16 %v6821, %v6820
        %v6853 = vpack.c.b16 %v6823, %v6822
        %v6854 = vpack.c.b16 %v6825, %v6824
        %v6855 = vpack.c.b16 %v6827, %v6826
        %v6856 = vpack.c.b16 %v6829, %v6828
        %v6857 = vpack.c.b16 %v6831, %v6830
        %v6858 = vpack.c.b16 %v6833, %v6832
        %v6859 = vpack.c.b16 %v6835, %v6834
        %v6860 = vpack.c.b16 %v6837, %v6836
        %v6861 = vpack.c.b16 %v6839, %v6838
        %v6862 = vpack.c.b16 %v6841, %v6840
        %v6863 = vpack.c.b16 %v6843, %v6842
        %v6864 = vpack.c.b16 %v6845, %v6844
        %v6865 = vpack.c.b16 %v6847, %v6846
        %v6866 = vpack.c.b16 %v6849, %v6848
        %v6867 = vpack.c.b16 %v6851, %v6850
        %v6900 = vunpack.c.l.b16 %v6804
        %v6901 = vunpack.c.l.b16 %v6805
        %v6902 = vunpack.c.l.b16 %v6806
        %v6903 = vunpack.c.l.b16 %v6807
        %v6904 = vunpack.c.l.b16 %v6808
        %v6905 = vunpack.c.l.b16 %v6809
        %v6906 = vunpack.c.l.b16 %v6810
        %v6907 = vunpack.c.l.b16 %v6811
        %v6908 = vunpack.c.l.b16 %v6812
        %v6909 = vunpack.c.l.b16 %v6813
        %v6910 = vunpack.c.l.b16 %v6814
        %v6911 = vunpack.c.l.b16 %v6815
        %v6912 = vunpack.c.l.b16 %v6816
        %v6913 = vunpack.c.l.b16 %v6817
        %v6914 = vunpack.c.l.b16 %v6818
        %v6915 = vunpack.c.l.b16 %v6819
        %v6916 = vpack.c.b16 %v6901, %v6900
        %v6917 = vpack.c.b16 %v6903, %v6902
        %v6918 = vpack.c.b16 %v6905, %v6904
        %v6919 = vpack.c.b16 %v6907, %v6906
        %v6920 = vpack.c.b16 %v6909, %v6908
        %v6921 = vpack.c.b16 %v6911, %v6910
        %v6922 = vpack.c.b16 %v6913, %v6912
        %v6923 = vpack.c.b16 %v6915, %v6914
        %6932 = vmatprep.subr.bf16.mxu0 0
        %6933 = vmatpush1.bf16.msra.mxu0 %v6916
        %6934 = vmatprep.subr.bf16.mxu0 0
        %6935 = vmatpush1.bf16.msra.mxu0 %v6917
        %6936 = vmatprep.subr.bf16.mxu0 0
        %6937 = vmatpush1.bf16.msra.mxu0 %v6918
        %6938 = vmatprep.subr.bf16.mxu0 0
        %6939 = vmatpush1.bf16.msra.mxu0 %v6919
        %6940 = vmatprep.subr.bf16.mxu0 0
        %6941 = vmatpush1.bf16.msra.mxu0 %v6920
        %6942 = vmatprep.subr.bf16.mxu0 0
        %6943 = vmatpush1.bf16.msra.mxu0 %v6921
        %6944 = vmatprep.subr.bf16.mxu0 0
        %6945 = vmatpush1.bf16.msra.mxu0 %v6922
        %6946 = vmatprep.subr.bf16.mxu0 0
        %6947 = vmatpush1.bf16.msra.mxu0 %v6923
        %6948 = vmatprep.subr.bf16.mxu0 0
        %6949 = vmatpush1.bf16.msra.mxu0 0
        %6950 = vmatprep.subr.bf16.mxu0 0
        %6951 = vmatpush1.bf16.msra.mxu0 0
        %6952 = vmatprep.subr.bf16.mxu0 0
        %6953 = vmatpush1.bf16.msra.mxu0 0
        %6954 = vmatprep.subr.bf16.mxu0 0
        %6955 = vmatpush1.bf16.msra.mxu0 0
        %6956 = vmatprep.subr.bf16.mxu0 0
        %6957 = vmatpush1.bf16.msra.mxu0 0
        %6958 = vmatprep.subr.bf16.mxu0 0
        %6959 = vmatpush1.bf16.msra.mxu0 0
        %6960 = vmatprep.subr.bf16.mxu0 0
        %6961 = vmatpush1.bf16.msra.mxu0 0
        %6962 = vmatprep.subr.bf16.mxu0 0
        %6963 = vmatpush1.bf16.msra.mxu0 0
        %6964 = vmatprep.mubr.bf16.mxu0 0
        %6965 = vmatmul.mubr.bf16.gmra.mrb[0].mxu0 %v6852
        %v6966 = vpop.f32.mrb[0].mxu0
        %v6967 = vadd.f32 0.0, %v6966
        %v6968 = vpop.f32.mrb[0].mxu0
        %v6969 = vpop.f32.mrb[0].mxu0
        %v6970 = vadd.f32 0.0, %v6969
        %v6971 = vpop.f32.mrb[0].mxu0
        %6972 = vmatprep.mubr.bf16.mxu0 0
        %6973 = vmatmul.mubr.bf16.gmra.mrb[0].mxu0 %v6853
        %v6974 = vpop.f32.mrb[0].mxu0
        %v6975 = vadd.f32 0.0, %v6974
        %v6976 = vpop.f32.mrb[0].mxu0
        %v6977 = vpop.f32.mrb[0].mxu0
        %v6978 = vadd.f32 0.0, %v6977
        %v6979 = vpop.f32.mrb[0].mxu0
        %6980 = vmatprep.mubr.bf16.mxu0 0
        %6981 = vmatmul.mubr.bf16.gmra.mrb[0].mxu0 %v6854
        %v6982 = vpop.f32.mrb[0].mxu0
        %v6983 = vadd.f32 0.0, %v6982
        %v6984 = vpop.f32.mrb[0].mxu0
        %v6985 = vpop.f32.mrb[0].mxu0
        %v6986 = vadd.f32 0.0, %v6985
        %v6987 = vpop.f32.mrb[0].mxu0
        %6988 = vmatprep.mubr.bf16.mxu0 0
        %6989 = vmatmul.mubr.bf16.gmra.mrb[0].mxu0 %v6855
        %v6990 = vpop.f32.mrb[0].mxu0
        %v6991 = vadd.f32 0.0, %v6990
        %v6992 = vpop.f32.mrb[0].mxu0
        %v6993 = vpop.f32.mrb[0].mxu0
        %v6994 = vadd.f32 0.0, %v6993
        %v6995 = vpop.f32.mrb[0].mxu0
        %6996 = vmatprep.mubr.bf16.mxu0 0
        %6997 = vmatmul.mubr.bf16.gmra.mrb[0].mxu0 %v6856
        %v6998 = vpop.f32.mrb[0].mxu0
        %v6999 = vadd.f32 0.0, %v6998
        %v7000 = vpop.f32.mrb[0].mxu0
        %v7001 = vpop.f32.mrb[0].mxu0
        %v7002 = vadd.f32 0.0, %v7001
        %v7003 = vpop.f32.mrb[0].mxu0
        %7004 = vmatprep.mubr.bf16.mxu0 0
        %7005 = vmatmul.mubr.bf16.gmra.mrb[0].mxu0 %v6857
        %v7006 = vpop.f32.mrb[0].mxu0
        %v7007 = vadd.f32 0.0, %v7006
        %v7008 = vpop.f32.mrb[0].mxu0
        %v7009 = vpop.f32.mrb[0].mxu0
        %v7010 = vadd.f32 0.0, %v7009
        %v7011 = vpop.f32.mrb[0].mxu0
        %7012 = vmatprep.mubr.bf16.mxu0 0
        %7013 = vmatmul.mubr.bf16.gmra.mrb[0].mxu0 %v6858
        %v7014 = vpop.f32.mrb[0].mxu0
        %v7015 = vadd.f32 0.0, %v7014
        %v7016 = vpop.f32.mrb[0].mxu0
        %v7017 = vpop.f32.mrb[0].mxu0
        %v7018 = vadd.f32 0.0, %v7017
        %v7019 = vpop.f32.mrb[0].mxu0
        %7020 = vmatprep.mubr.bf16.mxu0 0
        %7021 = vmatmul.mubr.bf16.gmra.mrb[0].mxu0 %v6859
        %v7022 = vpop.f32.mrb[0].mxu0
        %v7023 = vadd.f32 0.0, %v7022
        %v7024 = vpop.f32.mrb[0].mxu0
        %v7025 = vpop.f32.mrb[0].mxu0
        %v7026 = vadd.f32 0.0, %v7025
        %v7027 = vpop.f32.mrb[0].mxu0
        %7028 = vmatprep.mubr.bf16.mxu0 0
        %7029 = vmatmul.mubr.bf16.gmra.mrb[0].mxu0 %v6860
        %v7030 = vpop.f32.mrb[0].mxu0
        %v7031 = vadd.f32 0.0, %v7030
        %v7032 = vpop.f32.mrb[0].mxu0
        %v7033 = vpop.f32.mrb[0].mxu0
        %v7034 = vadd.f32 0.0, %v7033
        %v7035 = vpop.f32.mrb[0].mxu0
        %7036 = vmatprep.mubr.bf16.mxu0 0
        %7037 = vmatmul.mubr.bf16.gmra.mrb[0].mxu0 %v6861
        %v7038 = vpop.f32.mrb[0].mxu0
        %v7039 = vadd.f32 0.0, %v7038
        %v7040 = vpop.f32.mrb[0].mxu0
        %v7041 = vpop.f32.mrb[0].mxu0
        %v7042 = vadd.f32 0.0, %v7041
        %v7043 = vpop.f32.mrb[0].mxu0
        %7044 = vmatprep.mubr.bf16.mxu0 0
        %7045 = vmatmul.mubr.bf16.gmra.mrb[0].mxu0 %v6862
        %v7046 = vpop.f32.mrb[0].mxu0
        %v7047 = vadd.f32 0.0, %v7046
        %v7048 = vpop.f32.mrb[0].mxu0
        %v7049 = vpop.f32.mrb[0].mxu0
        %v7050 = vadd.f32 0.0, %v7049
        %v7051 = vpop.f32.mrb[0].mxu0
        %7052 = vmatprep.mubr.bf16.mxu0 0
        %7053 = vmatmul.mubr.bf16.gmra.mrb[0].mxu0 %v6863
        %v7054 = vpop.f32.mrb[0].mxu0
        %v7055 = vadd.f32 0.0, %v7054
        %v7056 = vpop.f32.mrb[0].mxu0
        %v7057 = vpop.f32.mrb[0].mxu0
        %v7058 = vadd.f32 0.0, %v7057
        %v7059 = vpop.f32.mrb[0].mxu0
        %7060 = vmatprep.mubr.bf16.mxu0 0
        %7061 = vmatmul.mubr.bf16.gmra.mrb[0].mxu0 %v6864
        %v7062 = vpop.f32.mrb[0].mxu0
        %v7063 = vadd.f32 0.0, %v7062
        %v7064 = vpop.f32.mrb[0].mxu0
        %v7065 = vpop.f32.mrb[0].mxu0
        %v7066 = vadd.f32 0.0, %v7065
        %v7067 = vpop.f32.mrb[0].mxu0
        %7068 = vmatprep.mubr.bf16.mxu0 0
        %7069 = vmatmul.mubr.bf16.gmra.mrb[0].mxu0 %v6865
        %v7070 = vpop.f32.mrb[0].mxu0
        %v7071 = vadd.f32 0.0, %v7070
        %v7072 = vpop.f32.mrb[0].mxu0
        %v7073 = vpop.f32.mrb[0].mxu0
        %v7074 = vadd.f32 0.0, %v7073
        %v7075 = vpop.f32.mrb[0].mxu0
        %7076 = vmatprep.mubr.bf16.mxu0 0
        %7077 = vmatmul.mubr.bf16.gmra.mrb[0].mxu0 %v6866
        %v7078 = vpop.f32.mrb[0].mxu0
        %v7079 = vadd.f32 0.0, %v7078
        %v7080 = vpop.f32.mrb[0].mxu0
        %v7081 = vpop.f32.mrb[0].mxu0
        %v7082 = vadd.f32 0.0, %v7081
        %v7083 = vpop.f32.mrb[0].mxu0
        %7084 = vmatprep.mubr.bf16.mxu0 0
        %7085 = vmatmul.mubr.bf16.gmra.mrb[0].mxu0 %v6867
        %v7086 = vpop.f32.mrb[0].mxu0
        %v7087 = vadd.f32 0.0, %v7086
        %v7088 = vpop.f32.mrb[0].mxu0
        %v7089 = vpop.f32.mrb[0].mxu0
        %v7090 = vadd.f32 0.0, %v7089
        %v7091 = vpop.f32.mrb[0].mxu0
        %7092 = vdwg.mxu0
        %v7125 = vunpack.c.l.b16 %v6356
        %v7126 = vunpack.c.l.b16 %v6357
        %v7127 = vunpack.c.l.b16 %v6358
        %v7128 = vunpack.c.l.b16 %v6359
        %v7129 = vunpack.c.l.b16 %v6360
        %v7130 = vunpack.c.l.b16 %v6361
        %v7131 = vunpack.c.l.b16 %v6362
        %v7132 = vunpack.c.l.b16 %v6363
        %v7133 = vunpack.c.l.b16 %v6364
        %v7134 = vunpack.c.l.b16 %v6365
        %v7135 = vunpack.c.l.b16 %v6366
        %v7136 = vunpack.c.l.b16 %v6367
        %v7137 = vunpack.c.l.b16 %v6368
        %v7138 = vunpack.c.l.b16 %v6369
        %v7139 = vunpack.c.l.b16 %v6370
        %v7140 = vunpack.c.l.b16 %v6371
        %v7141 = vunpack.c.l.b16 %v6372
        %v7142 = vunpack.c.l.b16 %v6373
        %v7143 = vunpack.c.l.b16 %v6374
        %v7144 = vunpack.c.l.b16 %v6375
        %v7145 = vunpack.c.l.b16 %v6376
        %v7146 = vunpack.c.l.b16 %v6377
        %v7147 = vunpack.c.l.b16 %v6378
        %v7148 = vunpack.c.l.b16 %v6379
        %v7149 = vunpack.c.l.b16 %v6380
        %v7150 = vunpack.c.l.b16 %v6381
        %v7151 = vunpack.c.l.b16 %v6382
        %v7152 = vunpack.c.l.b16 %v6383
        %v7153 = vunpack.c.l.b16 %v6384
        %v7154 = vunpack.c.l.b16 %v6385
        %v7155 = vunpack.c.l.b16 %v6386
        %v7156 = vunpack.c.l.b16 %v6387
        %v7157 = vpack.c.b16 %v7126, %v7125
        %v7158 = vpack.c.b16 %v7128, %v7127
        %v7159 = vpack.c.b16 %v7130, %v7129
        %v7160 = vpack.c.b16 %v7132, %v7131
        %v7161 = vpack.c.b16 %v7134, %v7133
        %v7162 = vpack.c.b16 %v7136, %v7135
        %v7163 = vpack.c.b16 %v7138, %v7137
        %v7164 = vpack.c.b16 %v7140, %v7139
        %v7165 = vpack.c.b16 %v7142, %v7141
        %v7166 = vpack.c.b16 %v7144, %v7143
        %v7167 = vpack.c.b16 %v7146, %v7145
        %v7168 = vpack.c.b16 %v7148, %v7147
        %v7169 = vpack.c.b16 %v7150, %v7149
        %v7170 = vpack.c.b16 %v7152, %v7151
        %v7171 = vpack.c.b16 %v7154, %v7153
        %v7172 = vpack.c.b16 %v7156, %v7155
        %v7205 = vunpack.c.l.b16 %v6388
        %v7206 = vunpack.c.l.b16 %v6389
        %v7207 = vunpack.c.l.b16 %v6390
        %v7208 = vunpack.c.l.b16 %v6391
        %v7209 = vunpack.c.l.b16 %v6392
        %v7210 = vunpack.c.l.b16 %v6393
        %v7211 = vunpack.c.l.b16 %v6394
        %v7212 = vunpack.c.l.b16 %v6395
        %v7213 = vunpack.c.l.b16 %v6396
        %v7214 = vunpack.c.l.b16 %v6397
        %v7215 = vunpack.c.l.b16 %v6398
        %v7216 = vunpack.c.l.b16 %v6399
        %v7217 = vunpack.c.l.b16 %v6400
        %v7218 = vunpack.c.l.b16 %v6401
        %v7219 = vunpack.c.l.b16 %v6402
        %v7220 = vunpack.c.l.b16 %v6403
        %v7221 = vpack.c.b16 %v7206, %v7205
        %v7222 = vpack.c.b16 %v7208, %v7207
        %v7223 = vpack.c.b16 %v7210, %v7209
        %v7224 = vpack.c.b16 %v7212, %v7211
        %v7225 = vpack.c.b16 %v7214, %v7213
        %v7226 = vpack.c.b16 %v7216, %v7215
        %v7227 = vpack.c.b16 %v7218, %v7217
        %v7228 = vpack.c.b16 %v7220, %v7219
        %7237 = vmatprep.subr.bf16.mxu0 0
        %7238 = vmatpush1.bf16.msra.mxu0 %v7221
        %7239 = vmatprep.subr.bf16.mxu0 0
        %7240 = vmatpush1.bf16.msra.mxu0 %v7222
        %7241 = vmatprep.subr.bf16.mxu0 0
        %7242 = vmatpush1.bf16.msra.mxu0 %v7223
        %7243 = vmatprep.subr.bf16.mxu0 0
        %7244 = vmatpush1.bf16.msra.mxu0 %v7224
        %7245 = vmatprep.subr.bf16.mxu0 0
        %7246 = vmatpush1.bf16.msra.mxu0 %v7225
        %7247 = vmatprep.subr.bf16.mxu0 0
        %7248 = vmatpush1.bf16.msra.mxu0 %v7226
        %7249 = vmatprep.subr.bf16.mxu0 0
        %7250 = vmatpush1.bf16.msra.mxu0 %v7227
        %7251 = vmatprep.subr.bf16.mxu0 0
        %7252 = vmatpush1.bf16.msra.mxu0 %v7228
        %7253 = vmatprep.subr.bf16.mxu0 0
        %7254 = vmatpush1.bf16.msra.mxu0 0
        %7255 = vmatprep.subr.bf16.mxu0 0
        %7256 = vmatpush1.bf16.msra.mxu0 0
        %7257 = vmatprep.subr.bf16.mxu0 0
        %7258 = vmatpush1.bf16.msra.mxu0 0
        %7259 = vmatprep.subr.bf16.mxu0 0
        %7260 = vmatpush1.bf16.msra.mxu0 0
        %7261 = vmatprep.subr.bf16.mxu0 0
        %7262 = vmatpush1.bf16.msra.mxu0 0
        %7263 = vmatprep.subr.bf16.mxu0 0
        %7264 = vmatpush1.bf16.msra.mxu0 0
        %7265 = vmatprep.subr.bf16.mxu0 0
        %7266 = vmatpush1.bf16.msra.mxu0 0
        %7267 = vmatprep.subr.bf16.mxu0 0
        %7268 = vmatpush1.bf16.msra.mxu0 0
        %7269 = vmatprep.mubr.bf16.mxu0 0
        %7270 = vmatmul.mubr.bf16.gmra.mrb[0].mxu0 %v7157
        %v7271 = vpop.f32.mrb[0].mxu0
        %v7272 = vadd.f32 %v6967, %v7271
        %v7273 = vpop.f32.mrb[0].mxu0
        %v7274 = vpop.f32.mrb[0].mxu0
        %v7275 = vadd.f32 %v6970, %v7274
        %v7276 = vpop.f32.mrb[0].mxu0
        %7277 = vmatprep.mubr.bf16.mxu0 0
        %7278 = vmatmul.mubr.bf16.gmra.mrb[0].mxu0 %v7158
        %v7279 = vpop.f32.mrb[0].mxu0
        %v7280 = vadd.f32 %v6975, %v7279
        %v7281 = vpop.f32.mrb[0].mxu0
        %v7282 = vpop.f32.mrb[0].mxu0
        %v7283 = vadd.f32 %v6978, %v7282
        %v7284 = vpop.f32.mrb[0].mxu0
        %7285 = vmatprep.mubr.bf16.mxu0 0
        %7286 = vmatmul.mubr.bf16.gmra.mrb[0].mxu0 %v7159
        %v7287 = vpop.f32.mrb[0].mxu0
        %v7288 = vadd.f32 %v6983, %v7287
        %v7289 = vpop.f32.mrb[0].mxu0
        %v7290 = vpop.f32.mrb[0].mxu0
        %v7291 = vadd.f32 %v6986, %v7290
        %v7292 = vpop.f32.mrb[0].mxu0
        %7293 = vmatprep.mubr.bf16.mxu0 0
        %7294 = vmatmul.mubr.bf16.gmra.mrb[0].mxu0 %v7160
        %v7295 = vpop.f32.mrb[0].mxu0
        %v7296 = vadd.f32 %v6991, %v7295
        %v7297 = vpop.f32.mrb[0].mxu0
        %v7298 = vpop.f32.mrb[0].mxu0
        %v7299 = vadd.f32 %v6994, %v7298
        %v7300 = vpop.f32.mrb[0].mxu0
        %7301 = vmatprep.mubr.bf16.mxu0 0
        %7302 = vmatmul.mubr.bf16.gmra.mrb[0].mxu0 %v7161
        %v7303 = vpop.f32.mrb[0].mxu0
        %v7304 = vadd.f32 %v6999, %v7303
        %v7305 = vpop.f32.mrb[0].mxu0
        %v7306 = vpop.f32.mrb[0].mxu0
        %v7307 = vadd.f32 %v7002, %v7306
        %v7308 = vpop.f32.mrb[0].mxu0
        %7309 = vmatprep.mubr.bf16.mxu0 0
        %7310 = vmatmul.mubr.bf16.gmra.mrb[0].mxu0 %v7162
        %v7311 = vpop.f32.mrb[0].mxu0
        %v7312 = vadd.f32 %v7007, %v7311
        %v7313 = vpop.f32.mrb[0].mxu0
        %v7314 = vpop.f32.mrb[0].mxu0
        %v7315 = vadd.f32 %v7010, %v7314
        %v7316 = vpop.f32.mrb[0].mxu0
        %7317 = vmatprep.mubr.bf16.mxu0 0
        %7318 = vmatmul.mubr.bf16.gmra.mrb[0].mxu0 %v7163
        %v7319 = vpop.f32.mrb[0].mxu0
        %v7320 = vadd.f32 %v7015, %v7319
        %v7321 = vpop.f32.mrb[0].mxu0
        %v7322 = vpop.f32.mrb[0].mxu0
        %v7323 = vadd.f32 %v7018, %v7322
        %v7324 = vpop.f32.mrb[0].mxu0
        %7325 = vmatprep.mubr.bf16.mxu0 0
        %7326 = vmatmul.mubr.bf16.gmra.mrb[0].mxu0 %v7164
        %v7327 = vpop.f32.mrb[0].mxu0
        %v7328 = vadd.f32 %v7023, %v7327
        %v7329 = vpop.f32.mrb[0].mxu0
        %v7330 = vpop.f32.mrb[0].mxu0
        %v7331 = vadd.f32 %v7026, %v7330
        %v7332 = vpop.f32.mrb[0].mxu0
        %7333 = vmatprep.mubr.bf16.mxu0 0
        %7334 = vmatmul.mubr.bf16.gmra.mrb[0].mxu0 %v7165
        %v7335 = vpop.f32.mrb[0].mxu0
        %v7336 = vadd.f32 %v7031, %v7335
        %v7337 = vpop.f32.mrb[0].mxu0
        %v7338 = vpop.f32.mrb[0].mxu0
        %v7339 = vadd.f32 %v7034, %v7338
        %v7340 = vpop.f32.mrb[0].mxu0
        %7341 = vmatprep.mubr.bf16.mxu0 0
        %7342 = vmatmul.mubr.bf16.gmra.mrb[0].mxu0 %v7166
        %v7343 = vpop.f32.mrb[0].mxu0
        %v7344 = vadd.f32 %v7039, %v7343
        %v7345 = vpop.f32.mrb[0].mxu0
        %v7346 = vpop.f32.mrb[0].mxu0
        %v7347 = vadd.f32 %v7042, %v7346
        %v7348 = vpop.f32.mrb[0].mxu0
        %7349 = vmatprep.mubr.bf16.mxu0 0
        %7350 = vmatmul.mubr.bf16.gmra.mrb[0].mxu0 %v7167
        %v7351 = vpop.f32.mrb[0].mxu0
        %v7352 = vadd.f32 %v7047, %v7351
        %v7353 = vpop.f32.mrb[0].mxu0
        %v7354 = vpop.f32.mrb[0].mxu0
        %v7355 = vadd.f32 %v7050, %v7354
        %v7356 = vpop.f32.mrb[0].mxu0
        %7357 = vmatprep.mubr.bf16.mxu0 0
        %7358 = vmatmul.mubr.bf16.gmra.mrb[0].mxu0 %v7168
        %v7359 = vpop.f32.mrb[0].mxu0
        %v7360 = vadd.f32 %v7055, %v7359
        %v7361 = vpop.f32.mrb[0].mxu0
        %v7362 = vpop.f32.mrb[0].mxu0
        %v7363 = vadd.f32 %v7058, %v7362
        %v7364 = vpop.f32.mrb[0].mxu0
        %7365 = vmatprep.mubr.bf16.mxu0 0
        %7366 = vmatmul.mubr.bf16.gmra.mrb[0].mxu0 %v7169
        %v7367 = vpop.f32.mrb[0].mxu0
        %v7368 = vadd.f32 %v7063, %v7367
        %v7369 = vpop.f32.mrb[0].mxu0
        %v7370 = vpop.f32.mrb[0].mxu0
        %v7371 = vadd.f32 %v7066, %v7370
        %v7372 = vpop.f32.mrb[0].mxu0
        %7373 = vmatprep.mubr.bf16.mxu0 0
        %7374 = vmatmul.mubr.bf16.gmra.mrb[0].mxu0 %v7170
        %v7375 = vpop.f32.mrb[0].mxu0
        %v7376 = vadd.f32 %v7071, %v7375
        %v7377 = vpop.f32.mrb[0].mxu0
        %v7378 = vpop.f32.mrb[0].mxu0
        %v7379 = vadd.f32 %v7074, %v7378
        %v7380 = vpop.f32.mrb[0].mxu0
        %7381 = vmatprep.mubr.bf16.mxu0 0
        %7382 = vmatmul.mubr.bf16.gmra.mrb[0].mxu0 %v7171
        %v7383 = vpop.f32.mrb[0].mxu0
        %v7384 = vadd.f32 %v7079, %v7383
        %v7385 = vpop.f32.mrb[0].mxu0
        %v7386 = vpop.f32.mrb[0].mxu0
        %v7387 = vadd.f32 %v7082, %v7386
        %v7388 = vpop.f32.mrb[0].mxu0
        %7389 = vmatprep.mubr.bf16.mxu0 0
        %7390 = vmatmul.mubr.bf16.gmra.mrb[0].mxu0 %v7172
        %v7391 = vpop.f32.mrb[0].mxu0
        %v7392 = vadd.f32 %v7087, %v7391
        %v7393 = vpop.f32.mrb[0].mxu0
        %v7394 = vpop.f32.mrb[0].mxu0
        %v7395 = vadd.f32 %v7090, %v7394
        %v7396 = vpop.f32.mrb[0].mxu0
        %7397 = vdwg.mxu0
        %v7398 = vld [vmem:[#allocation2] sm:$0xe]
        %v7399 = vld [vmem:[#allocation2 + $0xc] sm:$0xe]
        %v7400 = vld [vmem:[#allocation2 + $0x18] sm:$0xe]
        %v7401 = vld [vmem:[#allocation2 + $0x24] sm:$0xe]
        %v7402 = vld [vmem:[#allocation2 + $0x30] sm:$0xe]
        %v7403 = vld [vmem:[#allocation2 + $0x3c] sm:$0xe]
        %v7404 = vld [vmem:[#allocation2 + $0x48] sm:$0xe]
        %v7405 = vld [vmem:[#allocation2 + $0x54] sm:$0xe]
        %v7406 = vld [vmem:[#allocation2 + $0x60] sm:$0xe]
        %v7407 = vld [vmem:[#allocation2 + $0x6c] sm:$0xe]
        %v7408 = vld [vmem:[#allocation2 + $0x78] sm:$0xe]
        %v7409 = vld [vmem:[#allocation2 + $0x84] sm:$0xe]
        %v7410 = vld [vmem:[#allocation2 + $0x90] sm:$0xe]
        %v7411 = vld [vmem:[#allocation2 + $0x9c] sm:$0xe]
        %v7412 = vld [vmem:[#allocation2 + $0xa8] sm:$0xe]
        %v7413 = vld [vmem:[#allocation2 + $0xb4] sm:$0xe]
        %v7446 = vrot.slane %v7398, 5
        %v7447 = vrot.slane %v7446, 4
        %v7448 = vrot.slane %v6357, 5
        %v7449 = vsel %vm2053, %v7447, %v7448
        %v7450 = vrot.slane %v7448, 4
        %v7451 = vrot.slane %v6404, 5
        %v7452 = vsel %vm2053, %v7450, %v7451
        %v7453 = vrot.slane %v7399, 5
        %v7454 = vrot.slane %v7453, 4
        %v7455 = vrot.slane %v6359, 5
        %v7456 = vsel %vm2053, %v7454, %v7455
        %v7457 = vrot.slane %v7455, 4
        %v7458 = vrot.slane %v6405, 5
        %v7459 = vsel %vm2053, %v7457, %v7458
        %v7460 = vrot.slane %v7400, 5
        %v7461 = vrot.slane %v7460, 4
        %v7462 = vrot.slane %v6361, 5
        %v7463 = vsel %vm2053, %v7461, %v7462
        %v7464 = vrot.slane %v7462, 4
        %v7465 = vrot.slane %v6406, 5
        %v7466 = vsel %vm2053, %v7464, %v7465
        %v7467 = vrot.slane %v7401, 5
        %v7468 = vrot.slane %v7467, 4
        %v7469 = vrot.slane %v6363, 5
        %v7470 = vsel %vm2053, %v7468, %v7469
        %v7471 = vrot.slane %v7469, 4
        %v7472 = vrot.slane %v6407, 5
        %v7473 = vsel %vm2053, %v7471, %v7472
        %v7474 = vrot.slane %v7402, 5
        %v7475 = vrot.slane %v7474, 4
        %v7476 = vrot.slane %v6365, 5
        %v7477 = vsel %vm2053, %v7475, %v7476
        %v7478 = vrot.slane %v7476, 4
        %v7479 = vrot.slane %v6408, 5
        %v7480 = vsel %vm2053, %v7478, %v7479
        %v7481 = vrot.slane %v7403, 5
        %v7482 = vrot.slane %v7481, 4
        %v7483 = vrot.slane %v6367, 5
        %v7484 = vsel %vm2053, %v7482, %v7483
        %v7485 = vrot.slane %v7483, 4
        %v7486 = vrot.slane %v6409, 5
        %v7487 = vsel %vm2053, %v7485, %v7486
        %v7488 = vrot.slane %v7404, 5
        %v7489 = vrot.slane %v7488, 4
        %v7490 = vrot.slane %v6369, 5
        %v7491 = vsel %vm2053, %v7489, %v7490
        %v7492 = vrot.slane %v7490, 4
        %v7493 = vrot.slane %v6410, 5
        %v7494 = vsel %vm2053, %v7492, %v7493
        %v7495 = vrot.slane %v7405, 5
        %v7496 = vrot.slane %v7495, 4
        %v7497 = vrot.slane %v6371, 5
        %v7498 = vsel %vm2053, %v7496, %v7497
        %v7499 = vrot.slane %v7497, 4
        %v7500 = vrot.slane %v6411, 5
        %v7501 = vsel %vm2053, %v7499, %v7500
        %v7502 = vrot.slane %v7406, 5
        %v7503 = vrot.slane %v7502, 4
        %v7504 = vrot.slane %v6373, 5
        %v7505 = vsel %vm2053, %v7503, %v7504
        %v7506 = vrot.slane %v7504, 4
        %v7507 = vrot.slane %v6412, 5
        %v7508 = vsel %vm2053, %v7506, %v7507
        %v7509 = vrot.slane %v7407, 5
        %v7510 = vrot.slane %v7509, 4
        %v7511 = vrot.slane %v6375, 5
        %v7512 = vsel %vm2053, %v7510, %v7511
        %v7513 = vrot.slane %v7511, 4
        %v7514 = vrot.slane %v6413, 5
        %v7515 = vsel %vm2053, %v7513, %v7514
        %v7516 = vrot.slane %v7408, 5
        %v7517 = vrot.slane %v7516, 4
        %v7518 = vrot.slane %v6377, 5
        %v7519 = vsel %vm2053, %v7517, %v7518
        %v7520 = vrot.slane %v7518, 4
        %v7521 = vrot.slane %v6414, 5
        %v7522 = vsel %vm2053, %v7520, %v7521
        %v7523 = vrot.slane %v7409, 5
        %v7524 = vrot.slane %v7523, 4
        %v7525 = vrot.slane %v6379, 5
        %v7526 = vsel %vm2053, %v7524, %v7525
        %v7527 = vrot.slane %v7525, 4
        %v7528 = vrot.slane %v6415, 5
        %v7529 = vsel %vm2053, %v7527, %v7528
        %v7530 = vrot.slane %v7410, 5
        %v7531 = vrot.slane %v7530, 4
        %v7532 = vrot.slane %v6381, 5
        %v7533 = vsel %vm2053, %v7531, %v7532
        %v7534 = vrot.slane %v7532, 4
        %v7535 = vrot.slane %v6416, 5
        %v7536 = vsel %vm2053, %v7534, %v7535
        %v7537 = vrot.slane %v7411, 5
        %v7538 = vrot.slane %v7537, 4
        %v7539 = vrot.slane %v6383, 5
        %v7540 = vsel %vm2053, %v7538, %v7539
        %v7541 = vrot.slane %v7539, 4
        %v7542 = vrot.slane %v6417, 5
        %v7543 = vsel %vm2053, %v7541, %v7542
        %v7544 = vrot.slane %v7412, 5
        %v7545 = vrot.slane %v7544, 4
        %v7546 = vrot.slane %v6385, 5
        %v7547 = vsel %vm2053, %v7545, %v7546
        %v7548 = vrot.slane %v7546, 4
        %v7549 = vrot.slane %v6418, 5
        %v7550 = vsel %vm2053, %v7548, %v7549
        %v7551 = vrot.slane %v7413, 5
        %v7552 = vrot.slane %v7551, 4
        %v7553 = vrot.slane %v6387, 5
        %v7554 = vsel %vm2053, %v7552, %v7553
        %v7555 = vrot.slane %v7553, 4
        %v7556 = vrot.slane %v6419, 5
        %v7557 = vsel %vm2053, %v7555, %v7556
        %v7558 = vld [vmem:[#allocation8 + $0x80] sm:$0xf]
        %v7559 = vld [vmem:[#allocation8 + $0x84] sm:$0xf]
        %v7560 = vld [vmem:[#allocation8 + $0x88] sm:$0xf]
        %v7561 = vld [vmem:[#allocation8 + $0x8c] sm:$0xf]
        %v7562 = vld [vmem:[#allocation8 + $0x90] sm:$0xf]
        %v7563 = vld [vmem:[#allocation8 + $0x94] sm:$0xf]
        %v7564 = vld [vmem:[#allocation8 + $0x98] sm:$0xf]
        %v7565 = vld [vmem:[#allocation8 + $0x9c] sm:$0xf]
        %v7566 = vld [vmem:[#allocation8 + $0xa0] sm:$0xf]
        %v7567 = vld [vmem:[#allocation8 + $0xa4] sm:$0xf]
        %v7568 = vld [vmem:[#allocation8 + $0xa8] sm:$0xf]
        %v7569 = vld [vmem:[#allocation8 + $0xac] sm:$0xf]
        %v7570 = vld [vmem:[#allocation8 + $0xb0] sm:$0xf]
        %v7571 = vld [vmem:[#allocation8 + $0xb4] sm:$0xf]
        %v7572 = vld [vmem:[#allocation8 + $0xb8] sm:$0xf]
        %v7573 = vld [vmem:[#allocation8 + $0xbc] sm:$0xf]
        %v7574 = vunpack.c.l.b16 %v7449
        %v7575 = vunpack.c.l.b16 %v7452
        %v7576 = vunpack.c.l.b16 %v7456
        %v7577 = vunpack.c.l.b16 %v7459
        %v7578 = vunpack.c.l.b16 %v7463
        %v7579 = vunpack.c.l.b16 %v7466
        %v7580 = vunpack.c.l.b16 %v7470
        %v7581 = vunpack.c.l.b16 %v7473
        %v7582 = vunpack.c.l.b16 %v7477
        %v7583 = vunpack.c.l.b16 %v7480
        %v7584 = vunpack.c.l.b16 %v7484
        %v7585 = vunpack.c.l.b16 %v7487
        %v7586 = vunpack.c.l.b16 %v7491
        %v7587 = vunpack.c.l.b16 %v7494
        %v7588 = vunpack.c.l.b16 %v7498
        %v7589 = vunpack.c.l.b16 %v7501
        %v7590 = vunpack.c.l.b16 %v7505
        %v7591 = vunpack.c.l.b16 %v7508
        %v7592 = vunpack.c.l.b16 %v7512
        %v7593 = vunpack.c.l.b16 %v7515
        %v7594 = vunpack.c.l.b16 %v7519
        %v7595 = vunpack.c.l.b16 %v7522
        %v7596 = vunpack.c.l.b16 %v7526
        %v7597 = vunpack.c.l.b16 %v7529
        %v7598 = vunpack.c.l.b16 %v7533
        %v7599 = vunpack.c.l.b16 %v7536
        %v7600 = vunpack.c.l.b16 %v7540
        %v7601 = vunpack.c.l.b16 %v7543
        %v7602 = vunpack.c.l.b16 %v7547
        %v7603 = vunpack.c.l.b16 %v7550
        %v7604 = vunpack.c.l.b16 %v7554
        %v7605 = vunpack.c.l.b16 %v7557
        %v7606 = vpack.c.b16 %v7575, %v7574
        %v7607 = vpack.c.b16 %v7577, %v7576
        %v7608 = vpack.c.b16 %v7579, %v7578
        %v7609 = vpack.c.b16 %v7581, %v7580
        %v7610 = vpack.c.b16 %v7583, %v7582
        %v7611 = vpack.c.b16 %v7585, %v7584
        %v7612 = vpack.c.b16 %v7587, %v7586
        %v7613 = vpack.c.b16 %v7589, %v7588
        %v7614 = vpack.c.b16 %v7591, %v7590
        %v7615 = vpack.c.b16 %v7593, %v7592
        %v7616 = vpack.c.b16 %v7595, %v7594
        %v7617 = vpack.c.b16 %v7597, %v7596
        %v7618 = vpack.c.b16 %v7599, %v7598
        %v7619 = vpack.c.b16 %v7601, %v7600
        %v7620 = vpack.c.b16 %v7603, %v7602
        %v7621 = vpack.c.b16 %v7605, %v7604
        %v7654 = vunpack.c.l.b16 %v7558
        %v7655 = vunpack.c.l.b16 %v7559
        %v7656 = vunpack.c.l.b16 %v7560
        %v7657 = vunpack.c.l.b16 %v7561
        %v7658 = vunpack.c.l.b16 %v7562
        %v7659 = vunpack.c.l.b16 %v7563
        %v7660 = vunpack.c.l.b16 %v7564
        %v7661 = vunpack.c.l.b16 %v7565
        %v7662 = vunpack.c.l.b16 %v7566
        %v7663 = vunpack.c.l.b16 %v7567
        %v7664 = vunpack.c.l.b16 %v7568
        %v7665 = vunpack.c.l.b16 %v7569
        %v7666 = vunpack.c.l.b16 %v7570
        %v7667 = vunpack.c.l.b16 %v7571
        %v7668 = vunpack.c.l.b16 %v7572
        %v7669 = vunpack.c.l.b16 %v7573
        %v7670 = vpack.c.b16 %v7655, %v7654
        %v7671 = vpack.c.b16 %v7657, %v7656
        %v7672 = vpack.c.b16 %v7659, %v7658
        %v7673 = vpack.c.b16 %v7661, %v7660
        %v7674 = vpack.c.b16 %v7663, %v7662
        %v7675 = vpack.c.b16 %v7665, %v7664
        %v7676 = vpack.c.b16 %v7667, %v7666
        %v7677 = vpack.c.b16 %v7669, %v7668
        %7686 = vmatprep.subr.bf16.mxu0 0
        %7687 = vmatpush1.bf16.msra.mxu0 %v7670
        %7688 = vmatprep.subr.bf16.mxu0 0
        %7689 = vmatpush1.bf16.msra.mxu0 %v7671
        %7690 = vmatprep.subr.bf16.mxu0 0
        %7691 = vmatpush1.bf16.msra.mxu0 %v7672
        %7692 = vmatprep.subr.bf16.mxu0 0
        %7693 = vmatpush1.bf16.msra.mxu0 %v7673
        %7694 = vmatprep.subr.bf16.mxu0 0
        %7695 = vmatpush1.bf16.msra.mxu0 %v7674
        %7696 = vmatprep.subr.bf16.mxu0 0
        %7697 = vmatpush1.bf16.msra.mxu0 %v7675
        %7698 = vmatprep.subr.bf16.mxu0 0
        %7699 = vmatpush1.bf16.msra.mxu0 %v7676
        %7700 = vmatprep.subr.bf16.mxu0 0
        %7701 = vmatpush1.bf16.msra.mxu0 %v7677
        %7702 = vmatprep.subr.bf16.mxu0 0
        %7703 = vmatpush1.bf16.msra.mxu0 0
        %7704 = vmatprep.subr.bf16.mxu0 0
        %7705 = vmatpush1.bf16.msra.mxu0 0
        %7706 = vmatprep.subr.bf16.mxu0 0
        %7707 = vmatpush1.bf16.msra.mxu0 0
        %7708 = vmatprep.subr.bf16.mxu0 0
        %7709 = vmatpush1.bf16.msra.mxu0 0
        %7710 = vmatprep.subr.bf16.mxu0 0
        %7711 = vmatpush1.bf16.msra.mxu0 0
        %7712 = vmatprep.subr.bf16.mxu0 0
        %7713 = vmatpush1.bf16.msra.mxu0 0
        %7714 = vmatprep.subr.bf16.mxu0 0
        %7715 = vmatpush1.bf16.msra.mxu0 0
        %7716 = vmatprep.subr.bf16.mxu0 0
        %7717 = vmatpush1.bf16.msra.mxu0 0
        %7718 = vmatprep.mubr.bf16.mxu0 0
        %7719 = vmatmul.mubr.bf16.gmra.mrb[0].mxu0 %v7606
        %v7720 = vpop.f32.mrb[0].mxu0
        %v7721 = vadd.f32 0.0, %v7720
        %v7722 = vpop.f32.mrb[0].mxu0
        %v7723 = vpop.f32.mrb[0].mxu0
        %v7724 = vadd.f32 0.0, %v7723
        %v7725 = vpop.f32.mrb[0].mxu0
        %7726 = vmatprep.mubr.bf16.mxu0 0
        %7727 = vmatmul.mubr.bf16.gmra.mrb[0].mxu0 %v7607
        %v7728 = vpop.f32.mrb[0].mxu0
        %v7729 = vadd.f32 0.0, %v7728
        %v7730 = vpop.f32.mrb[0].mxu0
        %v7731 = vpop.f32.mrb[0].mxu0
        %v7732 = vadd.f32 0.0, %v7731
        %v7733 = vpop.f32.mrb[0].mxu0
        %7734 = vmatprep.mubr.bf16.mxu0 0
        %7735 = vmatmul.mubr.bf16.gmra.mrb[0].mxu0 %v7608
        %v7736 = vpop.f32.mrb[0].mxu0
        %v7737 = vadd.f32 0.0, %v7736
        %v7738 = vpop.f32.mrb[0].mxu0
        %v7739 = vpop.f32.mrb[0].mxu0
        %v7740 = vadd.f32 0.0, %v7739
        %v7741 = vpop.f32.mrb[0].mxu0
        %7742 = vmatprep.mubr.bf16.mxu0 0
        %7743 = vmatmul.mubr.bf16.gmra.mrb[0].mxu0 %v7609
        %v7744 = vpop.f32.mrb[0].mxu0
        %v7745 = vadd.f32 0.0, %v7744
        %v7746 = vpop.f32.mrb[0].mxu0
        %v7747 = vpop.f32.mrb[0].mxu0
        %v7748 = vadd.f32 0.0, %v7747
        %v7749 = vpop.f32.mrb[0].mxu0
        %7750 = vmatprep.mubr.bf16.mxu0 0
        %7751 = vmatmul.mubr.bf16.gmra.mrb[0].mxu0 %v7610
        %v7752 = vpop.f32.mrb[0].mxu0
        %v7753 = vadd.f32 0.0, %v7752
        %v7754 = vpop.f32.mrb[0].mxu0
        %v7755 = vpop.f32.mrb[0].mxu0
        %v7756 = vadd.f32 0.0, %v7755
        %v7757 = vpop.f32.mrb[0].mxu0
        %7758 = vmatprep.mubr.bf16.mxu0 0
        %7759 = vmatmul.mubr.bf16.gmra.mrb[0].mxu0 %v7611
        %v7760 = vpop.f32.mrb[0].mxu0
        %v7761 = vadd.f32 0.0, %v7760
        %v7762 = vpop.f32.mrb[0].mxu0
        %v7763 = vpop.f32.mrb[0].mxu0
        %v7764 = vadd.f32 0.0, %v7763
        %v7765 = vpop.f32.mrb[0].mxu0
        %7766 = vmatprep.mubr.bf16.mxu0 0
        %7767 = vmatmul.mubr.bf16.gmra.mrb[0].mxu0 %v7612
        %v7768 = vpop.f32.mrb[0].mxu0
        %v7769 = vadd.f32 0.0, %v7768
        %v7770 = vpop.f32.mrb[0].mxu0
        %v7771 = vpop.f32.mrb[0].mxu0
        %v7772 = vadd.f32 0.0, %v7771
        %v7773 = vpop.f32.mrb[0].mxu0
        %7774 = vmatprep.mubr.bf16.mxu0 0
        %7775 = vmatmul.mubr.bf16.gmra.mrb[0].mxu0 %v7613
        %v7776 = vpop.f32.mrb[0].mxu0
        %v7777 = vadd.f32 0.0, %v7776
        %v7778 = vpop.f32.mrb[0].mxu0
        %v7779 = vpop.f32.mrb[0].mxu0
        %v7780 = vadd.f32 0.0, %v7779
        %v7781 = vpop.f32.mrb[0].mxu0
        %7782 = vmatprep.mubr.bf16.mxu0 0
        %7783 = vmatmul.mubr.bf16.gmra.mrb[0].mxu0 %v7614
        %v7784 = vpop.f32.mrb[0].mxu0
        %v7785 = vadd.f32 0.0, %v7784
        %v7786 = vpop.f32.mrb[0].mxu0
        %v7787 = vpop.f32.mrb[0].mxu0
        %v7788 = vadd.f32 0.0, %v7787
        %v7789 = vpop.f32.mrb[0].mxu0
        %7790 = vmatprep.mubr.bf16.mxu0 0
        %7791 = vmatmul.mubr.bf16.gmra.mrb[0].mxu0 %v7615
        %v7792 = vpop.f32.mrb[0].mxu0
        %v7793 = vadd.f32 0.0, %v7792
        %v7794 = vpop.f32.mrb[0].mxu0
        %v7795 = vpop.f32.mrb[0].mxu0
        %v7796 = vadd.f32 0.0, %v7795
        %v7797 = vpop.f32.mrb[0].mxu0
        %7798 = vmatprep.mubr.bf16.mxu0 0
        %7799 = vmatmul.mubr.bf16.gmra.mrb[0].mxu0 %v7616
        %v7800 = vpop.f32.mrb[0].mxu0
        %v7801 = vadd.f32 0.0, %v7800
        %v7802 = vpop.f32.mrb[0].mxu0
        %v7803 = vpop.f32.mrb[0].mxu0
        %v7804 = vadd.f32 0.0, %v7803
        %v7805 = vpop.f32.mrb[0].mxu0
        %7806 = vmatprep.mubr.bf16.mxu0 0
        %7807 = vmatmul.mubr.bf16.gmra.mrb[0].mxu0 %v7617
        %v7808 = vpop.f32.mrb[0].mxu0
        %v7809 = vadd.f32 0.0, %v7808
        %v7810 = vpop.f32.mrb[0].mxu0
        %v7811 = vpop.f32.mrb[0].mxu0
        %v7812 = vadd.f32 0.0, %v7811
        %v7813 = vpop.f32.mrb[0].mxu0
        %7814 = vmatprep.mubr.bf16.mxu0 0
        %7815 = vmatmul.mubr.bf16.gmra.mrb[0].mxu0 %v7618
        %v7816 = vpop.f32.mrb[0].mxu0
        %v7817 = vadd.f32 0.0, %v7816
        %v7818 = vpop.f32.mrb[0].mxu0
        %v7819 = vpop.f32.mrb[0].mxu0
        %v7820 = vadd.f32 0.0, %v7819
        %v7821 = vpop.f32.mrb[0].mxu0
        %7822 = vmatprep.mubr.bf16.mxu0 0
        %7823 = vmatmul.mubr.bf16.gmra.mrb[0].mxu0 %v7619
        %v7824 = vpop.f32.mrb[0].mxu0
        %v7825 = vadd.f32 0.0, %v7824
        %v7826 = vpop.f32.mrb[0].mxu0
        %v7827 = vpop.f32.mrb[0].mxu0
        %v7828 = vadd.f32 0.0, %v7827
        %v7829 = vpop.f32.mrb[0].mxu0
        %7830 = vmatprep.mubr.bf16.mxu0 0
        %7831 = vmatmul.mubr.bf16.gmra.mrb[0].mxu0 %v7620
        %v7832 = vpop.f32.mrb[0].mxu0
        %v7833 = vadd.f32 0.0, %v7832
        %v7834 = vpop.f32.mrb[0].mxu0
        %v7835 = vpop.f32.mrb[0].mxu0
        %v7836 = vadd.f32 0.0, %v7835
        %v7837 = vpop.f32.mrb[0].mxu0
        %7838 = vmatprep.mubr.bf16.mxu0 0
        %7839 = vmatmul.mubr.bf16.gmra.mrb[0].mxu0 %v7621
        %v7840 = vpop.f32.mrb[0].mxu0
        %v7841 = vadd.f32 0.0, %v7840
        %v7842 = vpop.f32.mrb[0].mxu0
        %v7843 = vpop.f32.mrb[0].mxu0
        %v7844 = vadd.f32 0.0, %v7843
        %v7845 = vpop.f32.mrb[0].mxu0
        %7846 = vdwg.mxu0
        %v7847 = vadd.f32 %v7272, %v7721
        %v7848 = vadd.f32 %v7275, %v7724
        %v7849 = vadd.f32 %v7280, %v7729
        %v7850 = vadd.f32 %v7283, %v7732
        %v7851 = vadd.f32 %v7288, %v7737
        %v7852 = vadd.f32 %v7291, %v7740
        %v7853 = vadd.f32 %v7296, %v7745
        %v7854 = vadd.f32 %v7299, %v7748
        %v7855 = vadd.f32 %v7304, %v7753
        %v7856 = vadd.f32 %v7307, %v7756
        %v7857 = vadd.f32 %v7312, %v7761
        %v7858 = vadd.f32 %v7315, %v7764
        %v7859 = vadd.f32 %v7320, %v7769
        %v7860 = vadd.f32 %v7323, %v7772
        %v7861 = vadd.f32 %v7328, %v7777
        %v7862 = vadd.f32 %v7331, %v7780
        %v7863 = vadd.f32 %v7336, %v7785
        %v7864 = vadd.f32 %v7339, %v7788
        %v7865 = vadd.f32 %v7344, %v7793
        %v7866 = vadd.f32 %v7347, %v7796
        %v7867 = vadd.f32 %v7352, %v7801
        %v7868 = vadd.f32 %v7355, %v7804
        %v7869 = vadd.f32 %v7360, %v7809
        %v7870 = vadd.f32 %v7363, %v7812
        %v7871 = vadd.f32 %v7368, %v7817
        %v7872 = vadd.f32 %v7371, %v7820
        %v7873 = vadd.f32 %v7376, %v7825
        %v7874 = vadd.f32 %v7379, %v7828
        %v7875 = vadd.f32 %v7384, %v7833
        %v7876 = vadd.f32 %v7387, %v7836
        %v7877 = vadd.f32 %v7392, %v7841
        %v7878 = vadd.f32 %v7395, %v7844
        %v7879 = vld [vmem:[%s843] sm:$0xf]
        %v7880 = vld [vmem:[%s843 + $0x4] sm:$0xf]
        %v7881 = vld [vmem:[%s843 + $0xc] sm:$0xf]
        %v7882 = vld [vmem:[%s843 + $0x10] sm:$0xf]
        %v7883 = vld [vmem:[%s843 + $0x18] sm:$0xf]
        %v7884 = vld [vmem:[%s843 + $0x1c] sm:$0xf]
        %v7885 = vld [vmem:[%s843 + $0x24] sm:$0xf]
        %v7886 = vld [vmem:[%s843 + $0x28] sm:$0xf]
        %v7887 = vld [vmem:[%s843 + $0x30] sm:$0xf]
        %v7888 = vld [vmem:[%s843 + $0x34] sm:$0xf]
        %v7889 = vld [vmem:[%s843 + $0x3c] sm:$0xf]
        %v7890 = vld [vmem:[%s843 + $0x40] sm:$0xf]
        %v7891 = vld [vmem:[%s843 + $0x48] sm:$0xf]
        %v7892 = vld [vmem:[%s843 + $0x4c] sm:$0xf]
        %v7893 = vld [vmem:[%s843 + $0x54] sm:$0xf]
        %v7894 = vld [vmem:[%s843 + $0x58] sm:$0xf]
        %v7895 = vld [vmem:[%s843 + $0x60] sm:$0xf]
        %v7896 = vld [vmem:[%s843 + $0x64] sm:$0xf]
        %v7897 = vld [vmem:[%s843 + $0x6c] sm:$0xf]
        %v7898 = vld [vmem:[%s843 + $0x70] sm:$0xf]
        %v7899 = vld [vmem:[%s843 + $0x78] sm:$0xf]
        %v7900 = vld [vmem:[%s843 + $0x7c] sm:$0xf]
        %v7901 = vld [vmem:[%s843 + $0x84] sm:$0xf]
        %v7902 = vld [vmem:[%s843 + $0x88] sm:$0xf]
        %v7903 = vld [vmem:[%s843 + $0x90] sm:$0xf]
        %v7904 = vld [vmem:[%s843 + $0x94] sm:$0xf]
        %v7905 = vld [vmem:[%s843 + $0x9c] sm:$0xf]
        %v7906 = vld [vmem:[%s843 + $0xa0] sm:$0xf]
        %v7907 = vld [vmem:[%s843 + $0xa8] sm:$0xf]
        %v7908 = vld [vmem:[%s843 + $0xac] sm:$0xf]
        %v7909 = vld [vmem:[%s843 + $0xb4] sm:$0xf]
        %v7910 = vld [vmem:[%s843 + $0xb8] sm:$0xf]
        %v7911 = vld [vmem:[#allocation8 + $0xc0] sm:$0xf]
        %v7912 = vld [vmem:[#allocation8 + $0xc4] sm:$0xf]
        %v7913 = vld [vmem:[#allocation8 + $0xc8] sm:$0xf]
        %v7914 = vld [vmem:[#allocation8 + $0xcc] sm:$0xf]
        %v7915 = vld [vmem:[#allocation8 + $0xd0] sm:$0xf]
        %v7916 = vld [vmem:[#allocation8 + $0xd4] sm:$0xf]
        %v7917 = vld [vmem:[#allocation8 + $0xd8] sm:$0xf]
        %v7918 = vld [vmem:[#allocation8 + $0xdc] sm:$0xf]
        %v7919 = vld [vmem:[#allocation8 + $0xe0] sm:$0xf]
        %v7920 = vld [vmem:[#allocation8 + $0xe4] sm:$0xf]
        %v7921 = vld [vmem:[#allocation8 + $0xe8] sm:$0xf]
        %v7922 = vld [vmem:[#allocation8 + $0xec] sm:$0xf]
        %v7923 = vld [vmem:[#allocation8 + $0xf0] sm:$0xf]
        %v7924 = vld [vmem:[#allocation8 + $0xf4] sm:$0xf]
        %v7925 = vld [vmem:[#allocation8 + $0xf8] sm:$0xf]
        %v7926 = vld [vmem:[#allocation8 + $0xfc] sm:$0xf]
        %v7959 = vunpack.c.l.b16 %v7879
        %v7960 = vunpack.c.l.b16 %v7880
        %v7961 = vunpack.c.l.b16 %v7881
        %v7962 = vunpack.c.l.b16 %v7882
        %v7963 = vunpack.c.l.b16 %v7883
        %v7964 = vunpack.c.l.b16 %v7884
        %v7965 = vunpack.c.l.b16 %v7885
        %v7966 = vunpack.c.l.b16 %v7886
        %v7967 = vunpack.c.l.b16 %v7887
        %v7968 = vunpack.c.l.b16 %v7888
        %v7969 = vunpack.c.l.b16 %v7889
        %v7970 = vunpack.c.l.b16 %v7890
        %v7971 = vunpack.c.l.b16 %v7891
        %v7972 = vunpack.c.l.b16 %v7892
        %v7973 = vunpack.c.l.b16 %v7893
        %v7974 = vunpack.c.l.b16 %v7894
        %v7975 = vunpack.c.l.b16 %v7895
        %v7976 = vunpack.c.l.b16 %v7896
        %v7977 = vunpack.c.l.b16 %v7897
        %v7978 = vunpack.c.l.b16 %v7898
        %v7979 = vunpack.c.l.b16 %v7899
        %v7980 = vunpack.c.l.b16 %v7900
        %v7981 = vunpack.c.l.b16 %v7901
        %v7982 = vunpack.c.l.b16 %v7902
        %v7983 = vunpack.c.l.b16 %v7903
        %v7984 = vunpack.c.l.b16 %v7904
        %v7985 = vunpack.c.l.b16 %v7905
        %v7986 = vunpack.c.l.b16 %v7906
        %v7987 = vunpack.c.l.b16 %v7907
        %v7988 = vunpack.c.l.b16 %v7908
        %v7989 = vunpack.c.l.b16 %v7909
        %v7990 = vunpack.c.l.b16 %v7910
        %v7991 = vpack.c.b16 %v7960, %v7959
        %v7992 = vpack.c.b16 %v7962, %v7961
        %v7993 = vpack.c.b16 %v7964, %v7963
        %v7994 = vpack.c.b16 %v7966, %v7965
        %v7995 = vpack.c.b16 %v7968, %v7967
        %v7996 = vpack.c.b16 %v7970, %v7969
        %v7997 = vpack.c.b16 %v7972, %v7971
        %v7998 = vpack.c.b16 %v7974, %v7973
        %v7999 = vpack.c.b16 %v7976, %v7975
        %v8000 = vpack.c.b16 %v7978, %v7977
        %v8001 = vpack.c.b16 %v7980, %v7979
        %v8002 = vpack.c.b16 %v7982, %v7981
        %v8003 = vpack.c.b16 %v7984, %v7983
        %v8004 = vpack.c.b16 %v7986, %v7985
        %v8005 = vpack.c.b16 %v7988, %v7987
        %v8006 = vpack.c.b16 %v7990, %v7989
        %v8039 = vunpack.c.l.b16 %v7911
        %v8040 = vunpack.c.l.b16 %v7912
        %v8041 = vunpack.c.l.b16 %v7913
        %v8042 = vunpack.c.l.b16 %v7914
        %v8043 = vunpack.c.l.b16 %v7915
        %v8044 = vunpack.c.l.b16 %v7916
        %v8045 = vunpack.c.l.b16 %v7917
        %v8046 = vunpack.c.l.b16 %v7918
        %v8047 = vunpack.c.l.b16 %v7919
        %v8048 = vunpack.c.l.b16 %v7920
        %v8049 = vunpack.c.l.b16 %v7921
        %v8050 = vunpack.c.l.b16 %v7922
        %v8051 = vunpack.c.l.b16 %v7923
        %v8052 = vunpack.c.l.b16 %v7924
        %v8053 = vunpack.c.l.b16 %v7925
        %v8054 = vunpack.c.l.b16 %v7926
        %v8055 = vpack.c.b16 %v8040, %v8039
        %v8056 = vpack.c.b16 %v8042, %v8041
        %v8057 = vpack.c.b16 %v8044, %v8043
        %v8058 = vpack.c.b16 %v8046, %v8045
        %v8059 = vpack.c.b16 %v8048, %v8047
        %v8060 = vpack.c.b16 %v8050, %v8049
        %v8061 = vpack.c.b16 %v8052, %v8051
        %v8062 = vpack.c.b16 %v8054, %v8053
        %8071 = vmatprep.subr.bf16.mxu0 0
        %8072 = vmatpush1.bf16.msra.mxu0 %v8055
        %8073 = vmatprep.subr.bf16.mxu0 0
        %8074 = vmatpush1.bf16.msra.mxu0 %v8056
        %8075 = vmatprep.subr.bf16.mxu0 0
        %8076 = vmatpush1.bf16.msra.mxu0 %v8057
        %8077 = vmatprep.subr.bf16.mxu0 0
        %8078 = vmatpush1.bf16.msra.mxu0 %v8058
        %8079 = vmatprep.subr.bf16.mxu0 0
        %8080 = vmatpush1.bf16.msra.mxu0 %v8059
        %8081 = vmatprep.subr.bf16.mxu0 0
        %8082 = vmatpush1.bf16.msra.mxu0 %v8060
        %8083 = vmatprep.subr.bf16.mxu0 0
        %8084 = vmatpush1.bf16.msra.mxu0 %v8061
        %8085 = vmatprep.subr.bf16.mxu0 0
        %8086 = vmatpush1.bf16.msra.mxu0 %v8062
        %8087 = vmatprep.subr.bf16.mxu0 0
        %8088 = vmatpush1.bf16.msra.mxu0 0
        %8089 = vmatprep.subr.bf16.mxu0 0
        %8090 = vmatpush1.bf16.msra.mxu0 0
        %8091 = vmatprep.subr.bf16.mxu0 0
        %8092 = vmatpush1.bf16.msra.mxu0 0
        %8093 = vmatprep.subr.bf16.mxu0 0
        %8094 = vmatpush1.bf16.msra.mxu0 0
        %8095 = vmatprep.subr.bf16.mxu0 0
        %8096 = vmatpush1.bf16.msra.mxu0 0
        %8097 = vmatprep.subr.bf16.mxu0 0
        %8098 = vmatpush1.bf16.msra.mxu0 0
        %8099 = vmatprep.subr.bf16.mxu0 0
        %8100 = vmatpush1.bf16.msra.mxu0 0
        %8101 = vmatprep.subr.bf16.mxu0 0
        %8102 = vmatpush1.bf16.msra.mxu0 0
        %8103 = vmatprep.mubr.bf16.mxu0 0
        %8104 = vmatmul.mubr.bf16.gmra.mrb[0].mxu0 %v7991
        %v8105 = vpop.f32.mrb[0].mxu0
        %v8106 = vadd.f32 0.0, %v8105
        %v8107 = vpop.f32.mrb[0].mxu0
        %v8108 = vpop.f32.mrb[0].mxu0
        %v8109 = vadd.f32 0.0, %v8108
        %v8110 = vpop.f32.mrb[0].mxu0
        %8111 = vmatprep.mubr.bf16.mxu0 0
        %8112 = vmatmul.mubr.bf16.gmra.mrb[0].mxu0 %v7992
        %v8113 = vpop.f32.mrb[0].mxu0
        %v8114 = vadd.f32 0.0, %v8113
        %v8115 = vpop.f32.mrb[0].mxu0
        %v8116 = vpop.f32.mrb[0].mxu0
        %v8117 = vadd.f32 0.0, %v8116
        %v8118 = vpop.f32.mrb[0].mxu0
        %8119 = vmatprep.mubr.bf16.mxu0 0
        %8120 = vmatmul.mubr.bf16.gmra.mrb[0].mxu0 %v7993
        %v8121 = vpop.f32.mrb[0].mxu0
        %v8122 = vadd.f32 0.0, %v8121
        %v8123 = vpop.f32.mrb[0].mxu0
        %v8124 = vpop.f32.mrb[0].mxu0
        %v8125 = vadd.f32 0.0, %v8124
        %v8126 = vpop.f32.mrb[0].mxu0
        %8127 = vmatprep.mubr.bf16.mxu0 0
        %8128 = vmatmul.mubr.bf16.gmra.mrb[0].mxu0 %v7994
        %v8129 = vpop.f32.mrb[0].mxu0
        %v8130 = vadd.f32 0.0, %v8129
        %v8131 = vpop.f32.mrb[0].mxu0
        %v8132 = vpop.f32.mrb[0].mxu0
        %v8133 = vadd.f32 0.0, %v8132
        %v8134 = vpop.f32.mrb[0].mxu0
        %8135 = vmatprep.mubr.bf16.mxu0 0
        %8136 = vmatmul.mubr.bf16.gmra.mrb[0].mxu0 %v7995
        %v8137 = vpop.f32.mrb[0].mxu0
        %v8138 = vadd.f32 0.0, %v8137
        %v8139 = vpop.f32.mrb[0].mxu0
        %v8140 = vpop.f32.mrb[0].mxu0
        %v8141 = vadd.f32 0.0, %v8140
        %v8142 = vpop.f32.mrb[0].mxu0
        %8143 = vmatprep.mubr.bf16.mxu0 0
        %8144 = vmatmul.mubr.bf16.gmra.mrb[0].mxu0 %v7996
        %v8145 = vpop.f32.mrb[0].mxu0
        %v8146 = vadd.f32 0.0, %v8145
        %v8147 = vpop.f32.mrb[0].mxu0
        %v8148 = vpop.f32.mrb[0].mxu0
        %v8149 = vadd.f32 0.0, %v8148
        %v8150 = vpop.f32.mrb[0].mxu0
        %8151 = vmatprep.mubr.bf16.mxu0 0
        %8152 = vmatmul.mubr.bf16.gmra.mrb[0].mxu0 %v7997
        %v8153 = vpop.f32.mrb[0].mxu0
        %v8154 = vadd.f32 0.0, %v8153
        %v8155 = vpop.f32.mrb[0].mxu0
        %v8156 = vpop.f32.mrb[0].mxu0
        %v8157 = vadd.f32 0.0, %v8156
        %v8158 = vpop.f32.mrb[0].mxu0
        %8159 = vmatprep.mubr.bf16.mxu0 0
        %8160 = vmatmul.mubr.bf16.gmra.mrb[0].mxu0 %v7998
        %v8161 = vpop.f32.mrb[0].mxu0
        %v8162 = vadd.f32 0.0, %v8161
        %v8163 = vpop.f32.mrb[0].mxu0
        %v8164 = vpop.f32.mrb[0].mxu0
        %v8165 = vadd.f32 0.0, %v8164
        %v8166 = vpop.f32.mrb[0].mxu0
        %8167 = vmatprep.mubr.bf16.mxu0 0
        %8168 = vmatmul.mubr.bf16.gmra.mrb[0].mxu0 %v7999
        %v8169 = vpop.f32.mrb[0].mxu0
        %v8170 = vadd.f32 0.0, %v8169
        %v8171 = vpop.f32.mrb[0].mxu0
        %v8172 = vpop.f32.mrb[0].mxu0
        %v8173 = vadd.f32 0.0, %v8172
        %v8174 = vpop.f32.mrb[0].mxu0
        %8175 = vmatprep.mubr.bf16.mxu0 0
        %8176 = vmatmul.mubr.bf16.gmra.mrb[0].mxu0 %v8000
        %v8177 = vpop.f32.mrb[0].mxu0
        %v8178 = vadd.f32 0.0, %v8177
        %v8179 = vpop.f32.mrb[0].mxu0
        %v8180 = vpop.f32.mrb[0].mxu0
        %v8181 = vadd.f32 0.0, %v8180
        %v8182 = vpop.f32.mrb[0].mxu0
        %8183 = vmatprep.mubr.bf16.mxu0 0
        %8184 = vmatmul.mubr.bf16.gmra.mrb[0].mxu0 %v8001
        %v8185 = vpop.f32.mrb[0].mxu0
        %v8186 = vadd.f32 0.0, %v8185
        %v8187 = vpop.f32.mrb[0].mxu0
        %v8188 = vpop.f32.mrb[0].mxu0
        %v8189 = vadd.f32 0.0, %v8188
        %v8190 = vpop.f32.mrb[0].mxu0
        %8191 = vmatprep.mubr.bf16.mxu0 0
        %8192 = vmatmul.mubr.bf16.gmra.mrb[0].mxu0 %v8002
        %v8193 = vpop.f32.mrb[0].mxu0
        %v8194 = vadd.f32 0.0, %v8193
        %v8195 = vpop.f32.mrb[0].mxu0
        %v8196 = vpop.f32.mrb[0].mxu0
        %v8197 = vadd.f32 0.0, %v8196
        %v8198 = vpop.f32.mrb[0].mxu0
        %8199 = vmatprep.mubr.bf16.mxu0 0
        %8200 = vmatmul.mubr.bf16.gmra.mrb[0].mxu0 %v8003
        %v8201 = vpop.f32.mrb[0].mxu0
        %v8202 = vadd.f32 0.0, %v8201
        %v8203 = vpop.f32.mrb[0].mxu0
        %v8204 = vpop.f32.mrb[0].mxu0
        %v8205 = vadd.f32 0.0, %v8204
        %v8206 = vpop.f32.mrb[0].mxu0
        %8207 = vmatprep.mubr.bf16.mxu0 0
        %8208 = vmatmul.mubr.bf16.gmra.mrb[0].mxu0 %v8004
        %v8209 = vpop.f32.mrb[0].mxu0
        %v8210 = vadd.f32 0.0, %v8209
        %v8211 = vpop.f32.mrb[0].mxu0
        %v8212 = vpop.f32.mrb[0].mxu0
        %v8213 = vadd.f32 0.0, %v8212
        %v8214 = vpop.f32.mrb[0].mxu0
        %8215 = vmatprep.mubr.bf16.mxu0 0
        %8216 = vmatmul.mubr.bf16.gmra.mrb[0].mxu0 %v8005
        %v8217 = vpop.f32.mrb[0].mxu0
        %v8218 = vadd.f32 0.0, %v8217
        %v8219 = vpop.f32.mrb[0].mxu0
        %v8220 = vpop.f32.mrb[0].mxu0
        %v8221 = vadd.f32 0.0, %v8220
        %v8222 = vpop.f32.mrb[0].mxu0
        %8223 = vmatprep.mubr.bf16.mxu0 0
        %8224 = vmatmul.mubr.bf16.gmra.mrb[0].mxu0 %v8006
        %v8225 = vpop.f32.mrb[0].mxu0
        %v8226 = vadd.f32 0.0, %v8225
        %v8227 = vpop.f32.mrb[0].mxu0
        %v8228 = vpop.f32.mrb[0].mxu0
        %v8229 = vadd.f32 0.0, %v8228
        %v8230 = vpop.f32.mrb[0].mxu0
        %8231 = vdwg.mxu0
        %v8232 = vadd.f32 %v7847, %v8106
        %v8233 = vadd.f32 %v7848, %v8109
        %v8234 = vadd.f32 %v7849, %v8114
        %v8235 = vadd.f32 %v7850, %v8117
        %v8236 = vadd.f32 %v7851, %v8122
        %v8237 = vadd.f32 %v7852, %v8125
        %v8238 = vadd.f32 %v7853, %v8130
        %v8239 = vadd.f32 %v7854, %v8133
        %v8240 = vadd.f32 %v7855, %v8138
        %v8241 = vadd.f32 %v7856, %v8141
        %v8242 = vadd.f32 %v7857, %v8146
        %v8243 = vadd.f32 %v7858, %v8149
        %v8244 = vadd.f32 %v7859, %v8154
        %v8245 = vadd.f32 %v7860, %v8157
        %v8246 = vadd.f32 %v7861, %v8162
        %v8247 = vadd.f32 %v7862, %v8165
        %v8248 = vadd.f32 %v7863, %v8170
        %v8249 = vadd.f32 %v7864, %v8173
        %v8250 = vadd.f32 %v7865, %v8178
        %v8251 = vadd.f32 %v7866, %v8181
        %v8252 = vadd.f32 %v7867, %v8186
        %v8253 = vadd.f32 %v7868, %v8189
        %v8254 = vadd.f32 %v7869, %v8194
        %v8255 = vadd.f32 %v7870, %v8197
        %v8256 = vadd.f32 %v7871, %v8202
        %v8257 = vadd.f32 %v7872, %v8205
        %v8258 = vadd.f32 %v7873, %v8210
        %v8259 = vadd.f32 %v7874, %v8213
        %v8260 = vadd.f32 %v7875, %v8218
        %v8261 = vadd.f32 %v7876, %v8221
        %v8262 = vadd.f32 %v7877, %v8226
        %v8263 = vadd.f32 %v7878, %v8229
        %v8264 = vld [vmem:[%s843] sm:$0xf]
        %v8265 = vld [vmem:[%s843 + $0x4] sm:$0xf]
        %v8266 = vld [vmem:[%s843 + $0x8] sm:$0x1]
        %v8267 = vld [vmem:[%s843 + $0xc] sm:$0xf]
        %v8268 = vld [vmem:[%s843 + $0x10] sm:$0xf]
        %v8269 = vld [vmem:[%s843 + $0x14] sm:$0x1]
        %v8270 = vld [vmem:[%s843 + $0x18] sm:$0xf]
        %v8271 = vld [vmem:[%s843 + $0x1c] sm:$0xf]
        %v8272 = vld [vmem:[%s843 + $0x20] sm:$0x1]
        %v8273 = vld [vmem:[%s843 + $0x24] sm:$0xf]
        %v8274 = vld [vmem:[%s843 + $0x28] sm:$0xf]
        %v8275 = vld [vmem:[%s843 + $0x2c] sm:$0x1]
        %v8276 = vld [vmem:[%s843 + $0x30] sm:$0xf]
        %v8277 = vld [vmem:[%s843 + $0x34] sm:$0xf]
        %v8278 = vld [vmem:[%s843 + $0x38] sm:$0x1]
        %v8279 = vld [vmem:[%s843 + $0x3c] sm:$0xf]
        %v8280 = vld [vmem:[%s843 + $0x40] sm:$0xf]
        %v8281 = vld [vmem:[%s843 + $0x44] sm:$0x1]
        %v8282 = vld [vmem:[%s843 + $0x48] sm:$0xf]
        %v8283 = vld [vmem:[%s843 + $0x4c] sm:$0xf]
        %v8284 = vld [vmem:[%s843 + $0x50] sm:$0x1]
        %v8285 = vld [vmem:[%s843 + $0x54] sm:$0xf]
        %v8286 = vld [vmem:[%s843 + $0x58] sm:$0xf]
        %v8287 = vld [vmem:[%s843 + $0x5c] sm:$0x1]
        %v8288 = vld [vmem:[%s843 + $0x60] sm:$0xf]
        %v8289 = vld [vmem:[%s843 + $0x64] sm:$0xf]
        %v8290 = vld [vmem:[%s843 + $0x68] sm:$0x1]
        %v8291 = vld [vmem:[%s843 + $0x6c] sm:$0xf]
        %v8292 = vld [vmem:[%s843 + $0x70] sm:$0xf]
        %v8293 = vld [vmem:[%s843 + $0x74] sm:$0x1]
        %v8294 = vld [vmem:[%s843 + $0x78] sm:$0xf]
        %v8295 = vld [vmem:[%s843 + $0x7c] sm:$0xf]
        %v8296 = vld [vmem:[%s843 + $0x80] sm:$0x1]
        %v8297 = vld [vmem:[%s843 + $0x84] sm:$0xf]
        %v8298 = vld [vmem:[%s843 + $0x88] sm:$0xf]
        %v8299 = vld [vmem:[%s843 + $0x8c] sm:$0x1]
        %v8300 = vld [vmem:[%s843 + $0x90] sm:$0xf]
        %v8301 = vld [vmem:[%s843 + $0x94] sm:$0xf]
        %v8302 = vld [vmem:[%s843 + $0x98] sm:$0x1]
        %v8303 = vld [vmem:[%s843 + $0x9c] sm:$0xf]
        %v8304 = vld [vmem:[%s843 + $0xa0] sm:$0xf]
        %v8305 = vld [vmem:[%s843 + $0xa4] sm:$0x1]
        %v8306 = vld [vmem:[%s843 + $0xa8] sm:$0xf]
        %v8307 = vld [vmem:[%s843 + $0xac] sm:$0xf]
        %v8308 = vld [vmem:[%s843 + $0xb0] sm:$0x1]
        %v8309 = vld [vmem:[%s843 + $0xb4] sm:$0xf]
        %v8310 = vld [vmem:[%s843 + $0xb8] sm:$0xf]
        %v8311 = vld [vmem:[%s843 + $0xbc] sm:$0x1]
        %v8313 = vshrl.u32 %v8264, 16
        %v8315 = vrot.slane %v8313, 4
        %v8316 = vshll.u32 %v8264, 16
        %v8318 = vrot.slane %v8316, 5
        %v8319 = vor.u32 %v8315, %v8318
        %v8320 = vrot.slane %v8319, 4
        %v8322 = vshll.u32 %v8265, 16
        %v8324 = vrot.slane %v8322, 5
        %v8325 = vsel %vm1024, %v8320, %v8324
        %v8326 = vshrl.u32 %v8265, 16
        %v8328 = vrot.slane %v8326, 4
        %v8329 = vor.u32 %v8328, %v8324
        %v8330 = vrot.slane %v8329, 4
        %v8332 = vshll.u32 %v8266, 16
        %v8334 = vrot.slane %v8332, 5
        %v8335 = vsel %vm1024, %v8330, %v8334
        %v8337 = vshrl.u32 %v8267, 16
        %v8339 = vrot.slane %v8337, 4
        %v8340 = vshll.u32 %v8267, 16
        %v8342 = vrot.slane %v8340, 5
        %v8343 = vor.u32 %v8339, %v8342
        %v8344 = vrot.slane %v8343, 4
        %v8346 = vshll.u32 %v8268, 16
        %v8348 = vrot.slane %v8346, 5
        %v8349 = vsel %vm1024, %v8344, %v8348
        %v8350 = vshrl.u32 %v8268, 16
        %v8352 = vrot.slane %v8350, 4
        %v8353 = vor.u32 %v8352, %v8348
        %v8354 = vrot.slane %v8353, 4
        %v8356 = vshll.u32 %v8269, 16
        %v8358 = vrot.slane %v8356, 5
        %v8359 = vsel %vm1024, %v8354, %v8358
        %v8361 = vshrl.u32 %v8270, 16
        %v8363 = vrot.slane %v8361, 4
        %v8364 = vshll.u32 %v8270, 16
        %v8366 = vrot.slane %v8364, 5
        %v8367 = vor.u32 %v8363, %v8366
        %v8368 = vrot.slane %v8367, 4
        %v8370 = vshll.u32 %v8271, 16
        %v8372 = vrot.slane %v8370, 5
        %v8373 = vsel %vm1024, %v8368, %v8372
        %v8374 = vshrl.u32 %v8271, 16
        %v8376 = vrot.slane %v8374, 4
        %v8377 = vor.u32 %v8376, %v8372
        %v8378 = vrot.slane %v8377, 4
        %v8380 = vshll.u32 %v8272, 16
        %v8382 = vrot.slane %v8380, 5
        %v8383 = vsel %vm1024, %v8378, %v8382
        %v8385 = vshrl.u32 %v8273, 16
        %v8387 = vrot.slane %v8385, 4
        %v8388 = vshll.u32 %v8273, 16
        %v8390 = vrot.slane %v8388, 5
        %v8391 = vor.u32 %v8387, %v8390
        %v8392 = vrot.slane %v8391, 4
        %v8394 = vshll.u32 %v8274, 16
        %v8396 = vrot.slane %v8394, 5
        %v8397 = vsel %vm1024, %v8392, %v8396
        %v8398 = vshrl.u32 %v8274, 16
        %v8400 = vrot.slane %v8398, 4
        %v8401 = vor.u32 %v8400, %v8396
        %v8402 = vrot.slane %v8401, 4
        %v8404 = vshll.u32 %v8275, 16
        %v8406 = vrot.slane %v8404, 5
        %v8407 = vsel %vm1024, %v8402, %v8406
        %v8409 = vshrl.u32 %v8276, 16
        %v8411 = vrot.slane %v8409, 4
        %v8412 = vshll.u32 %v8276, 16
        %v8414 = vrot.slane %v8412, 5
        %v8415 = vor.u32 %v8411, %v8414
        %v8416 = vrot.slane %v8415, 4
        %v8418 = vshll.u32 %v8277, 16
        %v8420 = vrot.slane %v8418, 5
        %v8421 = vsel %vm1024, %v8416, %v8420
        %v8422 = vshrl.u32 %v8277, 16
        %v8424 = vrot.slane %v8422, 4
        %v8425 = vor.u32 %v8424, %v8420
        %v8426 = vrot.slane %v8425, 4
        %v8428 = vshll.u32 %v8278, 16
        %v8430 = vrot.slane %v8428, 5
        %v8431 = vsel %vm1024, %v8426, %v8430
        %v8433 = vshrl.u32 %v8279, 16
        %v8435 = vrot.slane %v8433, 4
        %v8436 = vshll.u32 %v8279, 16
        %v8438 = vrot.slane %v8436, 5
        %v8439 = vor.u32 %v8435, %v8438
        %v8440 = vrot.slane %v8439, 4
        %v8442 = vshll.u32 %v8280, 16
        %v8444 = vrot.slane %v8442, 5
        %v8445 = vsel %vm1024, %v8440, %v8444
        %v8446 = vshrl.u32 %v8280, 16
        %v8448 = vrot.slane %v8446, 4
        %v8449 = vor.u32 %v8448, %v8444
        %v8450 = vrot.slane %v8449, 4
        %v8452 = vshll.u32 %v8281, 16
        %v8454 = vrot.slane %v8452, 5
        %v8455 = vsel %vm1024, %v8450, %v8454
        %v8457 = vshrl.u32 %v8282, 16
        %v8459 = vrot.slane %v8457, 4
        %v8460 = vshll.u32 %v8282, 16
        %v8462 = vrot.slane %v8460, 5
        %v8463 = vor.u32 %v8459, %v8462
        %v8464 = vrot.slane %v8463, 4
        %v8466 = vshll.u32 %v8283, 16
        %v8468 = vrot.slane %v8466, 5
        %v8469 = vsel %vm1024, %v8464, %v8468
        %v8470 = vshrl.u32 %v8283, 16
        %v8472 = vrot.slane %v8470, 4
        %v8473 = vor.u32 %v8472, %v8468
        %v8474 = vrot.slane %v8473, 4
        %v8476 = vshll.u32 %v8284, 16
        %v8478 = vrot.slane %v8476, 5
        %v8479 = vsel %vm1024, %v8474, %v8478
        %v8481 = vshrl.u32 %v8285, 16
        %v8483 = vrot.slane %v8481, 4
        %v8484 = vshll.u32 %v8285, 16
        %v8486 = vrot.slane %v8484, 5
        %v8487 = vor.u32 %v8483, %v8486
        %v8488 = vrot.slane %v8487, 4
        %v8490 = vshll.u32 %v8286, 16
        %v8492 = vrot.slane %v8490, 5
        %v8493 = vsel %vm1024, %v8488, %v8492
        %v8494 = vshrl.u32 %v8286, 16
        %v8496 = vrot.slane %v8494, 4
        %v8497 = vor.u32 %v8496, %v8492
        %v8498 = vrot.slane %v8497, 4
        %v8500 = vshll.u32 %v8287, 16
        %v8502 = vrot.slane %v8500, 5
        %v8503 = vsel %vm1024, %v8498, %v8502
        %v8505 = vshrl.u32 %v8288, 16
        %v8507 = vrot.slane %v8505, 4
        %v8508 = vshll.u32 %v8288, 16
        %v8510 = vrot.slane %v8508, 5
        %v8511 = vor.u32 %v8507, %v8510
        %v8512 = vrot.slane %v8511, 4
        %v8514 = vshll.u32 %v8289, 16
        %v8516 = vrot.slane %v8514, 5
        %v8517 = vsel %vm1024, %v8512, %v8516
        %v8518 = vshrl.u32 %v8289, 16
        %v8520 = vrot.slane %v8518, 4
        %v8521 = vor.u32 %v8520, %v8516
        %v8522 = vrot.slane %v8521, 4
        %v8524 = vshll.u32 %v8290, 16
        %v8526 = vrot.slane %v8524, 5
        %v8527 = vsel %vm1024, %v8522, %v8526
        %v8529 = vshrl.u32 %v8291, 16
        %v8531 = vrot.slane %v8529, 4
        %v8532 = vshll.u32 %v8291, 16
        %v8534 = vrot.slane %v8532, 5
        %v8535 = vor.u32 %v8531, %v8534
        %v8536 = vrot.slane %v8535, 4
        %v8538 = vshll.u32 %v8292, 16
        %v8540 = vrot.slane %v8538, 5
        %v8541 = vsel %vm1024, %v8536, %v8540
        %v8542 = vshrl.u32 %v8292, 16
        %v8544 = vrot.slane %v8542, 4
        %v8545 = vor.u32 %v8544, %v8540
        %v8546 = vrot.slane %v8545, 4
        %v8548 = vshll.u32 %v8293, 16
        %v8550 = vrot.slane %v8548, 5
        %v8551 = vsel %vm1024, %v8546, %v8550
        %v8553 = vshrl.u32 %v8294, 16
        %v8555 = vrot.slane %v8553, 4
        %v8556 = vshll.u32 %v8294, 16
        %v8558 = vrot.slane %v8556, 5
        %v8559 = vor.u32 %v8555, %v8558
        %v8560 = vrot.slane %v8559, 4
        %v8562 = vshll.u32 %v8295, 16
        %v8564 = vrot.slane %v8562, 5
        %v8565 = vsel %vm1024, %v8560, %v8564
        %v8566 = vshrl.u32 %v8295, 16
        %v8568 = vrot.slane %v8566, 4
        %v8569 = vor.u32 %v8568, %v8564
        %v8570 = vrot.slane %v8569, 4
        %v8572 = vshll.u32 %v8296, 16
        %v8574 = vrot.slane %v8572, 5
        %v8575 = vsel %vm1024, %v8570, %v8574
        %v8577 = vshrl.u32 %v8297, 16
        %v8579 = vrot.slane %v8577, 4
        %v8580 = vshll.u32 %v8297, 16
        %v8582 = vrot.slane %v8580, 5
        %v8583 = vor.u32 %v8579, %v8582
        %v8584 = vrot.slane %v8583, 4
        %v8586 = vshll.u32 %v8298, 16
        %v8588 = vrot.slane %v8586, 5
        %v8589 = vsel %vm1024, %v8584, %v8588
        %v8590 = vshrl.u32 %v8298, 16
        %v8592 = vrot.slane %v8590, 4
        %v8593 = vor.u32 %v8592, %v8588
        %v8594 = vrot.slane %v8593, 4
        %v8596 = vshll.u32 %v8299, 16
        %v8598 = vrot.slane %v8596, 5
        %v8599 = vsel %vm1024, %v8594, %v8598
        %v8601 = vshrl.u32 %v8300, 16
        %v8603 = vrot.slane %v8601, 4
        %v8604 = vshll.u32 %v8300, 16
        %v8606 = vrot.slane %v8604, 5
        %v8607 = vor.u32 %v8603, %v8606
        %v8608 = vrot.slane %v8607, 4
        %v8610 = vshll.u32 %v8301, 16
        %v8612 = vrot.slane %v8610, 5
        %v8613 = vsel %vm1024, %v8608, %v8612
        %v8614 = vshrl.u32 %v8301, 16
        %v8616 = vrot.slane %v8614, 4
        %v8617 = vor.u32 %v8616, %v8612
        %v8618 = vrot.slane %v8617, 4
        %v8620 = vshll.u32 %v8302, 16
        %v8622 = vrot.slane %v8620, 5
        %v8623 = vsel %vm1024, %v8618, %v8622
        %v8625 = vshrl.u32 %v8303, 16
        %v8627 = vrot.slane %v8625, 4
        %v8628 = vshll.u32 %v8303, 16
        %v8630 = vrot.slane %v8628, 5
        %v8631 = vor.u32 %v8627, %v8630
        %v8632 = vrot.slane %v8631, 4
        %v8634 = vshll.u32 %v8304, 16
        %v8636 = vrot.slane %v8634, 5
        %v8637 = vsel %vm1024, %v8632, %v8636
        %v8638 = vshrl.u32 %v8304, 16
        %v8640 = vrot.slane %v8638, 4
        %v8641 = vor.u32 %v8640, %v8636
        %v8642 = vrot.slane %v8641, 4
        %v8644 = vshll.u32 %v8305, 16
        %v8646 = vrot.slane %v8644, 5
        %v8647 = vsel %vm1024, %v8642, %v8646
        %v8649 = vshrl.u32 %v8306, 16
        %v8651 = vrot.slane %v8649, 4
        %v8652 = vshll.u32 %v8306, 16
        %v8654 = vrot.slane %v8652, 5
        %v8655 = vor.u32 %v8651, %v8654
        %v8656 = vrot.slane %v8655, 4
        %v8658 = vshll.u32 %v8307, 16
        %v8660 = vrot.slane %v8658, 5
        %v8661 = vsel %vm1024, %v8656, %v8660
        %v8662 = vshrl.u32 %v8307, 16
        %v8664 = vrot.slane %v8662, 4
        %v8665 = vor.u32 %v8664, %v8660
        %v8666 = vrot.slane %v8665, 4
        %v8668 = vshll.u32 %v8308, 16
        %v8670 = vrot.slane %v8668, 5
        %v8671 = vsel %vm1024, %v8666, %v8670
        %v8673 = vshrl.u32 %v8309, 16
        %v8675 = vrot.slane %v8673, 4
        %v8676 = vshll.u32 %v8309, 16
        %v8678 = vrot.slane %v8676, 5
        %v8679 = vor.u32 %v8675, %v8678
        %v8680 = vrot.slane %v8679, 4
        %v8682 = vshll.u32 %v8310, 16
        %v8684 = vrot.slane %v8682, 5
        %v8685 = vsel %vm1024, %v8680, %v8684
        %v8686 = vshrl.u32 %v8310, 16
        %v8688 = vrot.slane %v8686, 4
        %v8689 = vor.u32 %v8688, %v8684
        %v8690 = vrot.slane %v8689, 4
        %v8692 = vshll.u32 %v8311, 16
        %v8694 = vrot.slane %v8692, 5
        %v8695 = vsel %vm1024, %v8690, %v8694
        %v8696 = vld [vmem:[#allocation8 + $0x100] sm:$0xf]
        %v8697 = vld [vmem:[#allocation8 + $0x104] sm:$0xf]
        %v8698 = vld [vmem:[#allocation8 + $0x108] sm:$0xf]
        %v8699 = vld [vmem:[#allocation8 + $0x10c] sm:$0xf]
        %v8700 = vld [vmem:[#allocation8 + $0x110] sm:$0xf]
        %v8701 = vld [vmem:[#allocation8 + $0x114] sm:$0xf]
        %v8702 = vld [vmem:[#allocation8 + $0x118] sm:$0xf]
        %v8703 = vld [vmem:[#allocation8 + $0x11c] sm:$0xf]
        %v8704 = vld [vmem:[#allocation8 + $0x120] sm:$0xf]
        %v8705 = vld [vmem:[#allocation8 + $0x124] sm:$0xf]
        %v8706 = vld [vmem:[#allocation8 + $0x128] sm:$0xf]
        %v8707 = vld [vmem:[#allocation8 + $0x12c] sm:$0xf]
        %v8708 = vld [vmem:[#allocation8 + $0x130] sm:$0xf]
        %v8709 = vld [vmem:[#allocation8 + $0x134] sm:$0xf]
        %v8710 = vld [vmem:[#allocation8 + $0x138] sm:$0xf]
        %v8711 = vld [vmem:[#allocation8 + $0x13c] sm:$0xf]
        %v8712 = vunpack.c.l.b16 %v8325
        %v8713 = vunpack.c.l.b16 %v8335
        %v8714 = vunpack.c.l.b16 %v8349
        %v8715 = vunpack.c.l.b16 %v8359
        %v8716 = vunpack.c.l.b16 %v8373
        %v8717 = vunpack.c.l.b16 %v8383
        %v8718 = vunpack.c.l.b16 %v8397
        %v8719 = vunpack.c.l.b16 %v8407
        %v8720 = vunpack.c.l.b16 %v8421
        %v8721 = vunpack.c.l.b16 %v8431
        %v8722 = vunpack.c.l.b16 %v8445
        %v8723 = vunpack.c.l.b16 %v8455
        %v8724 = vunpack.c.l.b16 %v8469
        %v8725 = vunpack.c.l.b16 %v8479
        %v8726 = vunpack.c.l.b16 %v8493
        %v8727 = vunpack.c.l.b16 %v8503
        %v8728 = vunpack.c.l.b16 %v8517
        %v8729 = vunpack.c.l.b16 %v8527
        %v8730 = vunpack.c.l.b16 %v8541
        %v8731 = vunpack.c.l.b16 %v8551
        %v8732 = vunpack.c.l.b16 %v8565
        %v8733 = vunpack.c.l.b16 %v8575
        %v8734 = vunpack.c.l.b16 %v8589
        %v8735 = vunpack.c.l.b16 %v8599
        %v8736 = vunpack.c.l.b16 %v8613
        %v8737 = vunpack.c.l.b16 %v8623
        %v8738 = vunpack.c.l.b16 %v8637
        %v8739 = vunpack.c.l.b16 %v8647
        %v8740 = vunpack.c.l.b16 %v8661
        %v8741 = vunpack.c.l.b16 %v8671
        %v8742 = vunpack.c.l.b16 %v8685
        %v8743 = vunpack.c.l.b16 %v8695
        %v8744 = vpack.c.b16 %v8713, %v8712
        %v8745 = vpack.c.b16 %v8715, %v8714
        %v8746 = vpack.c.b16 %v8717, %v8716
        %v8747 = vpack.c.b16 %v8719, %v8718
        %v8748 = vpack.c.b16 %v8721, %v8720
        %v8749 = vpack.c.b16 %v8723, %v8722
        %v8750 = vpack.c.b16 %v8725, %v8724
        %v8751 = vpack.c.b16 %v8727, %v8726
        %v8752 = vpack.c.b16 %v8729, %v8728
        %v8753 = vpack.c.b16 %v8731, %v8730
        %v8754 = vpack.c.b16 %v8733, %v8732
        %v8755 = vpack.c.b16 %v8735, %v8734
        %v8756 = vpack.c.b16 %v8737, %v8736
        %v8757 = vpack.c.b16 %v8739, %v8738
        %v8758 = vpack.c.b16 %v8741, %v8740
        %v8759 = vpack.c.b16 %v8743, %v8742
        %v8792 = vunpack.c.l.b16 %v8696
        %v8793 = vunpack.c.l.b16 %v8697
        %v8794 = vunpack.c.l.b16 %v8698
        %v8795 = vunpack.c.l.b16 %v8699
        %v8796 = vunpack.c.l.b16 %v8700
        %v8797 = vunpack.c.l.b16 %v8701
        %v8798 = vunpack.c.l.b16 %v8702
        %v8799 = vunpack.c.l.b16 %v8703
        %v8800 = vunpack.c.l.b16 %v8704
        %v8801 = vunpack.c.l.b16 %v8705
        %v8802 = vunpack.c.l.b16 %v8706
        %v8803 = vunpack.c.l.b16 %v8707
        %v8804 = vunpack.c.l.b16 %v8708
        %v8805 = vunpack.c.l.b16 %v8709
        %v8806 = vunpack.c.l.b16 %v8710
        %v8807 = vunpack.c.l.b16 %v8711
        %v8808 = vpack.c.b16 %v8793, %v8792
        %v8809 = vpack.c.b16 %v8795, %v8794
        %v8810 = vpack.c.b16 %v8797, %v8796
        %v8811 = vpack.c.b16 %v8799, %v8798
        %v8812 = vpack.c.b16 %v8801, %v8800
        %v8813 = vpack.c.b16 %v8803, %v8802
        %v8814 = vpack.c.b16 %v8805, %v8804
        %v8815 = vpack.c.b16 %v8807, %v8806
        %8824 = vmatprep.subr.bf16.mxu0 0
        %8825 = vmatpush1.bf16.msra.mxu0 %v8808
        %8826 = vmatprep.subr.bf16.mxu0 0
        %8827 = vmatpush1.bf16.msra.mxu0 %v8809
        %8828 = vmatprep.subr.bf16.mxu0 0
        %8829 = vmatpush1.bf16.msra.mxu0 %v8810
        %8830 = vmatprep.subr.bf16.mxu0 0
        %8831 = vmatpush1.bf16.msra.mxu0 %v8811
        %8832 = vmatprep.subr.bf16.mxu0 0
        %8833 = vmatpush1.bf16.msra.mxu0 %v8812
        %8834 = vmatprep.subr.bf16.mxu0 0
        %8835 = vmatpush1.bf16.msra.mxu0 %v8813
        %8836 = vmatprep.subr.bf16.mxu0 0
        %8837 = vmatpush1.bf16.msra.mxu0 %v8814
        %8838 = vmatprep.subr.bf16.mxu0 0
        %8839 = vmatpush1.bf16.msra.mxu0 %v8815
        %8840 = vmatprep.subr.bf16.mxu0 0
        %8841 = vmatpush1.bf16.msra.mxu0 0
        %8842 = vmatprep.subr.bf16.mxu0 0
        %8843 = vmatpush1.bf16.msra.mxu0 0
        %8844 = vmatprep.subr.bf16.mxu0 0
        %8845 = vmatpush1.bf16.msra.mxu0 0
        %8846 = vmatprep.subr.bf16.mxu0 0
        %8847 = vmatpush1.bf16.msra.mxu0 0
        %8848 = vmatprep.subr.bf16.mxu0 0
        %8849 = vmatpush1.bf16.msra.mxu0 0
        %8850 = vmatprep.subr.bf16.mxu0 0
        %8851 = vmatpush1.bf16.msra.mxu0 0
        %8852 = vmatprep.subr.bf16.mxu0 0
        %8853 = vmatpush1.bf16.msra.mxu0 0
        %8854 = vmatprep.subr.bf16.mxu0 0
        %8855 = vmatpush1.bf16.msra.mxu0 0
        %8856 = vmatprep.mubr.bf16.mxu0 0
        %8857 = vmatmul.mubr.bf16.gmra.mrb[0].mxu0 %v8744
        %v8858 = vpop.f32.mrb[0].mxu0
        %v8859 = vadd.f32 0.0, %v8858
        %v8860 = vpop.f32.mrb[0].mxu0
        %v8861 = vpop.f32.mrb[0].mxu0
        %v8862 = vadd.f32 0.0, %v8861
        %v8863 = vpop.f32.mrb[0].mxu0
        %8864 = vmatprep.mubr.bf16.mxu0 0
        %8865 = vmatmul.mubr.bf16.gmra.mrb[0].mxu0 %v8745
        %v8866 = vpop.f32.mrb[0].mxu0
        %v8867 = vadd.f32 0.0, %v8866
        %v8868 = vpop.f32.mrb[0].mxu0
        %v8869 = vpop.f32.mrb[0].mxu0
        %v8870 = vadd.f32 0.0, %v8869
        %v8871 = vpop.f32.mrb[0].mxu0
        %8872 = vmatprep.mubr.bf16.mxu0 0
        %8873 = vmatmul.mubr.bf16.gmra.mrb[0].mxu0 %v8746
        %v8874 = vpop.f32.mrb[0].mxu0
        %v8875 = vadd.f32 0.0, %v8874
        %v8876 = vpop.f32.mrb[0].mxu0
        %v8877 = vpop.f32.mrb[0].mxu0
        %v8878 = vadd.f32 0.0, %v8877
        %v8879 = vpop.f32.mrb[0].mxu0
        %8880 = vmatprep.mubr.bf16.mxu0 0
        %8881 = vmatmul.mubr.bf16.gmra.mrb[0].mxu0 %v8747
        %v8882 = vpop.f32.mrb[0].mxu0
        %v8883 = vadd.f32 0.0, %v8882
        %v8884 = vpop.f32.mrb[0].mxu0
        %v8885 = vpop.f32.mrb[0].mxu0
        %v8886 = vadd.f32 0.0, %v8885
        %v8887 = vpop.f32.mrb[0].mxu0
        %8888 = vmatprep.mubr.bf16.mxu0 0
        %8889 = vmatmul.mubr.bf16.gmra.mrb[0].mxu0 %v8748
        %v8890 = vpop.f32.mrb[0].mxu0
        %v8891 = vadd.f32 0.0, %v8890
        %v8892 = vpop.f32.mrb[0].mxu0
        %v8893 = vpop.f32.mrb[0].mxu0
        %v8894 = vadd.f32 0.0, %v8893
        %v8895 = vpop.f32.mrb[0].mxu0
        %8896 = vmatprep.mubr.bf16.mxu0 0
        %8897 = vmatmul.mubr.bf16.gmra.mrb[0].mxu0 %v8749
        %v8898 = vpop.f32.mrb[0].mxu0
        %v8899 = vadd.f32 0.0, %v8898
        %v8900 = vpop.f32.mrb[0].mxu0
        %v8901 = vpop.f32.mrb[0].mxu0
        %v8902 = vadd.f32 0.0, %v8901
        %v8903 = vpop.f32.mrb[0].mxu0
        %8904 = vmatprep.mubr.bf16.mxu0 0
        %8905 = vmatmul.mubr.bf16.gmra.mrb[0].mxu0 %v8750
        %v8906 = vpop.f32.mrb[0].mxu0
        %v8907 = vadd.f32 0.0, %v8906
        %v8908 = vpop.f32.mrb[0].mxu0
        %v8909 = vpop.f32.mrb[0].mxu0
        %v8910 = vadd.f32 0.0, %v8909
        %v8911 = vpop.f32.mrb[0].mxu0
        %8912 = vmatprep.mubr.bf16.mxu0 0
        %8913 = vmatmul.mubr.bf16.gmra.mrb[0].mxu0 %v8751
        %v8914 = vpop.f32.mrb[0].mxu0
        %v8915 = vadd.f32 0.0, %v8914
        %v8916 = vpop.f32.mrb[0].mxu0
        %v8917 = vpop.f32.mrb[0].mxu0
        %v8918 = vadd.f32 0.0, %v8917
        %v8919 = vpop.f32.mrb[0].mxu0
        %8920 = vmatprep.mubr.bf16.mxu0 0
        %8921 = vmatmul.mubr.bf16.gmra.mrb[0].mxu0 %v8752
        %v8922 = vpop.f32.mrb[0].mxu0
        %v8923 = vadd.f32 0.0, %v8922
        %v8924 = vpop.f32.mrb[0].mxu0
        %v8925 = vpop.f32.mrb[0].mxu0
        %v8926 = vadd.f32 0.0, %v8925
        %v8927 = vpop.f32.mrb[0].mxu0
        %8928 = vmatprep.mubr.bf16.mxu0 0
        %8929 = vmatmul.mubr.bf16.gmra.mrb[0].mxu0 %v8753
        %v8930 = vpop.f32.mrb[0].mxu0
        %v8931 = vadd.f32 0.0, %v8930
        %v8932 = vpop.f32.mrb[0].mxu0
        %v8933 = vpop.f32.mrb[0].mxu0
        %v8934 = vadd.f32 0.0, %v8933
        %v8935 = vpop.f32.mrb[0].mxu0
        %8936 = vmatprep.mubr.bf16.mxu0 0
        %8937 = vmatmul.mubr.bf16.gmra.mrb[0].mxu0 %v8754
        %v8938 = vpop.f32.mrb[0].mxu0
        %v8939 = vadd.f32 0.0, %v8938
        %v8940 = vpop.f32.mrb[0].mxu0
        %v8941 = vpop.f32.mrb[0].mxu0
        %v8942 = vadd.f32 0.0, %v8941
        %v8943 = vpop.f32.mrb[0].mxu0
        %8944 = vmatprep.mubr.bf16.mxu0 0
        %8945 = vmatmul.mubr.bf16.gmra.mrb[0].mxu0 %v8755
        %v8946 = vpop.f32.mrb[0].mxu0
        %v8947 = vadd.f32 0.0, %v8946
        %v8948 = vpop.f32.mrb[0].mxu0
        %v8949 = vpop.f32.mrb[0].mxu0
        %v8950 = vadd.f32 0.0, %v8949
        %v8951 = vpop.f32.mrb[0].mxu0
        %8952 = vmatprep.mubr.bf16.mxu0 0
        %8953 = vmatmul.mubr.bf16.gmra.mrb[0].mxu0 %v8756
        %v8954 = vpop.f32.mrb[0].mxu0
        %v8955 = vadd.f32 0.0, %v8954
        %v8956 = vpop.f32.mrb[0].mxu0
        %v8957 = vpop.f32.mrb[0].mxu0
        %v8958 = vadd.f32 0.0, %v8957
        %v8959 = vpop.f32.mrb[0].mxu0
        %8960 = vmatprep.mubr.bf16.mxu0 0
        %8961 = vmatmul.mubr.bf16.gmra.mrb[0].mxu0 %v8757
        %v8962 = vpop.f32.mrb[0].mxu0
        %v8963 = vadd.f32 0.0, %v8962
        %v8964 = vpop.f32.mrb[0].mxu0
        %v8965 = vpop.f32.mrb[0].mxu0
        %v8966 = vadd.f32 0.0, %v8965
        %v8967 = vpop.f32.mrb[0].mxu0
        %8968 = vmatprep.mubr.bf16.mxu0 0
        %8969 = vmatmul.mubr.bf16.gmra.mrb[0].mxu0 %v8758
        %v8970 = vpop.f32.mrb[0].mxu0
        %v8971 = vadd.f32 0.0, %v8970
        %v8972 = vpop.f32.mrb[0].mxu0
        %v8973 = vpop.f32.mrb[0].mxu0
        %v8974 = vadd.f32 0.0, %v8973
        %v8975 = vpop.f32.mrb[0].mxu0
        %8976 = vmatprep.mubr.bf16.mxu0 0
        %8977 = vmatmul.mubr.bf16.gmra.mrb[0].mxu0 %v8759
        %v8978 = vpop.f32.mrb[0].mxu0
        %v8979 = vadd.f32 0.0, %v8978
        %v8980 = vpop.f32.mrb[0].mxu0
        %v8981 = vpop.f32.mrb[0].mxu0
        %v8982 = vadd.f32 0.0, %v8981
        %v8983 = vpop.f32.mrb[0].mxu0
        %8984 = vdwg.mxu0
        %v8985 = vadd.f32 %v8232, %v8859
        %v8986 = vadd.f32 %v8233, %v8862
        %v8987 = vadd.f32 %v8234, %v8867
        %v8988 = vadd.f32 %v8235, %v8870
        %v8989 = vadd.f32 %v8236, %v8875
        %v8990 = vadd.f32 %v8237, %v8878
        %v8991 = vadd.f32 %v8238, %v8883
        %v8992 = vadd.f32 %v8239, %v8886
        %v8993 = vadd.f32 %v8240, %v8891
        %v8994 = vadd.f32 %v8241, %v8894
        %v8995 = vadd.f32 %v8242, %v8899
        %v8996 = vadd.f32 %v8243, %v8902
        %v8997 = vadd.f32 %v8244, %v8907
        %v8998 = vadd.f32 %v8245, %v8910
        %v8999 = vadd.f32 %v8246, %v8915
        %v9000 = vadd.f32 %v8247, %v8918
        %v9001 = vadd.f32 %v8248, %v8923
        %v9002 = vadd.f32 %v8249, %v8926
        %v9003 = vadd.f32 %v8250, %v8931
        %v9004 = vadd.f32 %v8251, %v8934
        %v9005 = vadd.f32 %v8252, %v8939
        %v9006 = vadd.f32 %v8253, %v8942
        %v9007 = vadd.f32 %v8254, %v8947
        %v9008 = vadd.f32 %v8255, %v8950
        %v9009 = vadd.f32 %v8256, %v8955
        %v9010 = vadd.f32 %v8257, %v8958
        %v9011 = vadd.f32 %v8258, %v8963
        %v9012 = vadd.f32 %v8259, %v8966
        %v9013 = vadd.f32 %v8260, %v8971
        %v9014 = vadd.f32 %v8261, %v8974
        %v9015 = vadd.f32 %v8262, %v8979
        %v9016 = vadd.f32 %v8263, %v8982
        %v9017 = vld [vmem:[%s843] sm:$0xe]
        %v9018 = vld [vmem:[%s843 + $0xc] sm:$0xe]
        %v9019 = vld [vmem:[%s843 + $0x18] sm:$0xe]
        %v9020 = vld [vmem:[%s843 + $0x24] sm:$0xe]
        %v9021 = vld [vmem:[%s843 + $0x30] sm:$0xe]
        %v9022 = vld [vmem:[%s843 + $0x3c] sm:$0xe]
        %v9023 = vld [vmem:[%s843 + $0x48] sm:$0xe]
        %v9024 = vld [vmem:[%s843 + $0x54] sm:$0xe]
        %v9025 = vld [vmem:[%s843 + $0x60] sm:$0xe]
        %v9026 = vld [vmem:[%s843 + $0x6c] sm:$0xe]
        %v9027 = vld [vmem:[%s843 + $0x78] sm:$0xe]
        %v9028 = vld [vmem:[%s843 + $0x84] sm:$0xe]
        %v9029 = vld [vmem:[%s843 + $0x90] sm:$0xe]
        %v9030 = vld [vmem:[%s843 + $0x9c] sm:$0xe]
        %v9031 = vld [vmem:[%s843 + $0xa8] sm:$0xe]
        %v9032 = vld [vmem:[%s843 + $0xb4] sm:$0xe]
        %v9081 = vrot.slane %v9017, 5
        %v9082 = vrot.slane %v9081, 4
        %v9083 = vrot.slane %v8265, 5
        %v9084 = vsel %vm2053, %v9082, %v9083
        %v9085 = vrot.slane %v9083, 4
        %v9086 = vrot.slane %v8266, 5
        %v9087 = vsel %vm2053, %v9085, %v9086
        %v9088 = vrot.slane %v9018, 5
        %v9089 = vrot.slane %v9088, 4
        %v9090 = vrot.slane %v8268, 5
        %v9091 = vsel %vm2053, %v9089, %v9090
        %v9092 = vrot.slane %v9090, 4
        %v9093 = vrot.slane %v8269, 5
        %v9094 = vsel %vm2053, %v9092, %v9093
        %v9095 = vrot.slane %v9019, 5
        %v9096 = vrot.slane %v9095, 4
        %v9097 = vrot.slane %v8271, 5
        %v9098 = vsel %vm2053, %v9096, %v9097
        %v9099 = vrot.slane %v9097, 4
        %v9100 = vrot.slane %v8272, 5
        %v9101 = vsel %vm2053, %v9099, %v9100
        %v9102 = vrot.slane %v9020, 5
        %v9103 = vrot.slane %v9102, 4
        %v9104 = vrot.slane %v8274, 5
        %v9105 = vsel %vm2053, %v9103, %v9104
        %v9106 = vrot.slane %v9104, 4
        %v9107 = vrot.slane %v8275, 5
        %v9108 = vsel %vm2053, %v9106, %v9107
        %v9109 = vrot.slane %v9021, 5
        %v9110 = vrot.slane %v9109, 4
        %v9111 = vrot.slane %v8277, 5
        %v9112 = vsel %vm2053, %v9110, %v9111
        %v9113 = vrot.slane %v9111, 4
        %v9114 = vrot.slane %v8278, 5
        %v9115 = vsel %vm2053, %v9113, %v9114
        %v9116 = vrot.slane %v9022, 5
        %v9117 = vrot.slane %v9116, 4
        %v9118 = vrot.slane %v8280, 5
        %v9119 = vsel %vm2053, %v9117, %v9118
        %v9120 = vrot.slane %v9118, 4
        %v9121 = vrot.slane %v8281, 5
        %v9122 = vsel %vm2053, %v9120, %v9121
        %v9123 = vrot.slane %v9023, 5
        %v9124 = vrot.slane %v9123, 4
        %v9125 = vrot.slane %v8283, 5
        %v9126 = vsel %vm2053, %v9124, %v9125
        %v9127 = vrot.slane %v9125, 4
        %v9128 = vrot.slane %v8284, 5
        %v9129 = vsel %vm2053, %v9127, %v9128
        %v9130 = vrot.slane %v9024, 5
        %v9131 = vrot.slane %v9130, 4
        %v9132 = vrot.slane %v8286, 5
        %v9133 = vsel %vm2053, %v9131, %v9132
        %v9134 = vrot.slane %v9132, 4
        %v9135 = vrot.slane %v8287, 5
        %v9136 = vsel %vm2053, %v9134, %v9135
        %v9137 = vrot.slane %v9025, 5
        %v9138 = vrot.slane %v9137, 4
        %v9139 = vrot.slane %v8289, 5
        %v9140 = vsel %vm2053, %v9138, %v9139
        %v9141 = vrot.slane %v9139, 4
        %v9142 = vrot.slane %v8290, 5
        %v9143 = vsel %vm2053, %v9141, %v9142
        %v9144 = vrot.slane %v9026, 5
        %v9145 = vrot.slane %v9144, 4
        %v9146 = vrot.slane %v8292, 5
        %v9147 = vsel %vm2053, %v9145, %v9146
        %v9148 = vrot.slane %v9146, 4
        %v9149 = vrot.slane %v8293, 5
        %v9150 = vsel %vm2053, %v9148, %v9149
        %v9151 = vrot.slane %v9027, 5
        %v9152 = vrot.slane %v9151, 4
        %v9153 = vrot.slane %v8295, 5
        %v9154 = vsel %vm2053, %v9152, %v9153
        %v9155 = vrot.slane %v9153, 4
        %v9156 = vrot.slane %v8296, 5
        %v9157 = vsel %vm2053, %v9155, %v9156
        %v9158 = vrot.slane %v9028, 5
        %v9159 = vrot.slane %v9158, 4
        %v9160 = vrot.slane %v8298, 5
        %v9161 = vsel %vm2053, %v9159, %v9160
        %v9162 = vrot.slane %v9160, 4
        %v9163 = vrot.slane %v8299, 5
        %v9164 = vsel %vm2053, %v9162, %v9163
        %v9165 = vrot.slane %v9029, 5
        %v9166 = vrot.slane %v9165, 4
        %v9167 = vrot.slane %v8301, 5
        %v9168 = vsel %vm2053, %v9166, %v9167
        %v9169 = vrot.slane %v9167, 4
        %v9170 = vrot.slane %v8302, 5
        %v9171 = vsel %vm2053, %v9169, %v9170
        %v9172 = vrot.slane %v9030, 5
        %v9173 = vrot.slane %v9172, 4
        %v9174 = vrot.slane %v8304, 5
        %v9175 = vsel %vm2053, %v9173, %v9174
        %v9176 = vrot.slane %v9174, 4
        %v9177 = vrot.slane %v8305, 5
        %v9178 = vsel %vm2053, %v9176, %v9177
        %v9179 = vrot.slane %v9031, 5
        %v9180 = vrot.slane %v9179, 4
        %v9181 = vrot.slane %v8307, 5
        %v9182 = vsel %vm2053, %v9180, %v9181
        %v9183 = vrot.slane %v9181, 4
        %v9184 = vrot.slane %v8308, 5
        %v9185 = vsel %vm2053, %v9183, %v9184
        %v9186 = vrot.slane %v9032, 5
        %v9187 = vrot.slane %v9186, 4
        %v9188 = vrot.slane %v8310, 5
        %v9189 = vsel %vm2053, %v9187, %v9188
        %v9190 = vrot.slane %v9188, 4
        %v9191 = vrot.slane %v8311, 5
        %v9192 = vsel %vm2053, %v9190, %v9191
        %v9193 = vld [vmem:[#allocation8 + $0x140] sm:$0xf]
        %v9194 = vld [vmem:[#allocation8 + $0x144] sm:$0xf]
        %v9195 = vld [vmem:[#allocation8 + $0x148] sm:$0xf]
        %v9196 = vld [vmem:[#allocation8 + $0x14c] sm:$0xf]
        %v9197 = vld [vmem:[#allocation8 + $0x150] sm:$0xf]
        %v9198 = vld [vmem:[#allocation8 + $0x154] sm:$0xf]
        %v9199 = vld [vmem:[#allocation8 + $0x158] sm:$0xf]
        %v9200 = vld [vmem:[#allocation8 + $0x15c] sm:$0xf]
        %v9201 = vld [vmem:[#allocation8 + $0x160] sm:$0xf]
        %v9202 = vld [vmem:[#allocation8 + $0x164] sm:$0xf]
        %v9203 = vld [vmem:[#allocation8 + $0x168] sm:$0xf]
        %v9204 = vld [vmem:[#allocation8 + $0x16c] sm:$0xf]
        %v9205 = vld [vmem:[#allocation8 + $0x170] sm:$0xf]
        %v9206 = vld [vmem:[#allocation8 + $0x174] sm:$0xf]
        %v9207 = vld [vmem:[#allocation8 + $0x178] sm:$0xf]
        %v9208 = vld [vmem:[#allocation8 + $0x17c] sm:$0xf]
        %v9209 = vunpack.c.l.b16 %v9084
        %v9210 = vunpack.c.l.b16 %v9087
        %v9211 = vunpack.c.l.b16 %v9091
        %v9212 = vunpack.c.l.b16 %v9094
        %v9213 = vunpack.c.l.b16 %v9098
        %v9214 = vunpack.c.l.b16 %v9101
        %v9215 = vunpack.c.l.b16 %v9105
        %v9216 = vunpack.c.l.b16 %v9108
        %v9217 = vunpack.c.l.b16 %v9112
        %v9218 = vunpack.c.l.b16 %v9115
        %v9219 = vunpack.c.l.b16 %v9119
        %v9220 = vunpack.c.l.b16 %v9122
        %v9221 = vunpack.c.l.b16 %v9126
        %v9222 = vunpack.c.l.b16 %v9129
        %v9223 = vunpack.c.l.b16 %v9133
        %v9224 = vunpack.c.l.b16 %v9136
        %v9225 = vunpack.c.l.b16 %v9140
        %v9226 = vunpack.c.l.b16 %v9143
        %v9227 = vunpack.c.l.b16 %v9147
        %v9228 = vunpack.c.l.b16 %v9150
        %v9229 = vunpack.c.l.b16 %v9154
        %v9230 = vunpack.c.l.b16 %v9157
        %v9231 = vunpack.c.l.b16 %v9161
        %v9232 = vunpack.c.l.b16 %v9164
        %v9233 = vunpack.c.l.b16 %v9168
        %v9234 = vunpack.c.l.b16 %v9171
        %v9235 = vunpack.c.l.b16 %v9175
        %v9236 = vunpack.c.l.b16 %v9178
        %v9237 = vunpack.c.l.b16 %v9182
        %v9238 = vunpack.c.l.b16 %v9185
        %v9239 = vunpack.c.l.b16 %v9189
        %v9240 = vunpack.c.l.b16 %v9192
        %v9241 = vpack.c.b16 %v9210, %v9209
        %v9242 = vpack.c.b16 %v9212, %v9211
        %v9243 = vpack.c.b16 %v9214, %v9213
        %v9244 = vpack.c.b16 %v9216, %v9215
        %v9245 = vpack.c.b16 %v9218, %v9217
        %v9246 = vpack.c.b16 %v9220, %v9219
        %v9247 = vpack.c.b16 %v9222, %v9221
        %v9248 = vpack.c.b16 %v9224, %v9223
        %v9249 = vpack.c.b16 %v9226, %v9225
        %v9250 = vpack.c.b16 %v9228, %v9227
        %v9251 = vpack.c.b16 %v9230, %v9229
        %v9252 = vpack.c.b16 %v9232, %v9231
        %v9253 = vpack.c.b16 %v9234, %v9233
        %v9254 = vpack.c.b16 %v9236, %v9235
        %v9255 = vpack.c.b16 %v9238, %v9237
        %v9256 = vpack.c.b16 %v9240, %v9239
        %v9289 = vunpack.c.l.b16 %v9193
        %v9290 = vunpack.c.l.b16 %v9194
        %v9291 = vunpack.c.l.b16 %v9195
        %v9292 = vunpack.c.l.b16 %v9196
        %v9293 = vunpack.c.l.b16 %v9197
        %v9294 = vunpack.c.l.b16 %v9198
        %v9295 = vunpack.c.l.b16 %v9199
        %v9296 = vunpack.c.l.b16 %v9200
        %v9297 = vunpack.c.l.b16 %v9201
        %v9298 = vunpack.c.l.b16 %v9202
        %v9299 = vunpack.c.l.b16 %v9203
        %v9300 = vunpack.c.l.b16 %v9204
        %v9301 = vunpack.c.l.b16 %v9205
        %v9302 = vunpack.c.l.b16 %v9206
        %v9303 = vunpack.c.l.b16 %v9207
        %v9304 = vunpack.c.l.b16 %v9208
        %v9305 = vpack.c.b16 %v9290, %v9289
        %v9306 = vpack.c.b16 %v9292, %v9291
        %v9307 = vpack.c.b16 %v9294, %v9293
        %v9308 = vpack.c.b16 %v9296, %v9295
        %v9309 = vpack.c.b16 %v9298, %v9297
        %v9310 = vpack.c.b16 %v9300, %v9299
        %v9311 = vpack.c.b16 %v9302, %v9301
        %v9312 = vpack.c.b16 %v9304, %v9303
        %9321 = vmatprep.subr.bf16.mxu0 0
        %9322 = vmatpush1.bf16.msra.mxu0 %v9305
        %9323 = vmatprep.subr.bf16.mxu0 0
        %9324 = vmatpush1.bf16.msra.mxu0 %v9306
        %9325 = vmatprep.subr.bf16.mxu0 0
        %9326 = vmatpush1.bf16.msra.mxu0 %v9307
        %9327 = vmatprep.subr.bf16.mxu0 0
        %9328 = vmatpush1.bf16.msra.mxu0 %v9308
        %9329 = vmatprep.subr.bf16.mxu0 0
        %9330 = vmatpush1.bf16.msra.mxu0 %v9309
        %9331 = vmatprep.subr.bf16.mxu0 0
        %9332 = vmatpush1.bf16.msra.mxu0 %v9310
        %9333 = vmatprep.subr.bf16.mxu0 0
        %9334 = vmatpush1.bf16.msra.mxu0 %v9311
        %9335 = vmatprep.subr.bf16.mxu0 0
        %9336 = vmatpush1.bf16.msra.mxu0 %v9312
        %9337 = vmatprep.subr.bf16.mxu0 0
        %9338 = vmatpush1.bf16.msra.mxu0 0
        %9339 = vmatprep.subr.bf16.mxu0 0
        %9340 = vmatpush1.bf16.msra.mxu0 0
        %9341 = vmatprep.subr.bf16.mxu0 0
        %9342 = vmatpush1.bf16.msra.mxu0 0
        %9343 = vmatprep.subr.bf16.mxu0 0
        %9344 = vmatpush1.bf16.msra.mxu0 0
        %9345 = vmatprep.subr.bf16.mxu0 0
        %9346 = vmatpush1.bf16.msra.mxu0 0
        %9347 = vmatprep.subr.bf16.mxu0 0
        %9348 = vmatpush1.bf16.msra.mxu0 0
        %9349 = vmatprep.subr.bf16.mxu0 0
        %9350 = vmatpush1.bf16.msra.mxu0 0
        %9351 = vmatprep.subr.bf16.mxu0 0
        %9352 = vmatpush1.bf16.msra.mxu0 0
        %9353 = vmatprep.mubr.bf16.mxu0 0
        %9354 = vmatmul.mubr.bf16.gmra.mrb[0].mxu0 %v9241
        %v9355 = vpop.f32.mrb[0].mxu0
        %v9356 = vadd.f32 0.0, %v9355
        %v9357 = vpop.f32.mrb[0].mxu0
        %v9358 = vpop.f32.mrb[0].mxu0
        %v9359 = vadd.f32 0.0, %v9358
        %v9360 = vpop.f32.mrb[0].mxu0
        %9361 = vmatprep.mubr.bf16.mxu0 0
        %9362 = vmatmul.mubr.bf16.gmra.mrb[0].mxu0 %v9242
        %v9363 = vpop.f32.mrb[0].mxu0
        %v9364 = vadd.f32 0.0, %v9363
        %v9365 = vpop.f32.mrb[0].mxu0
        %v9366 = vpop.f32.mrb[0].mxu0
        %v9367 = vadd.f32 0.0, %v9366
        %v9368 = vpop.f32.mrb[0].mxu0
        %9369 = vmatprep.mubr.bf16.mxu0 0
        %9370 = vmatmul.mubr.bf16.gmra.mrb[0].mxu0 %v9243
        %v9371 = vpop.f32.mrb[0].mxu0
        %v9372 = vadd.f32 0.0, %v9371
        %v9373 = vpop.f32.mrb[0].mxu0
        %v9374 = vpop.f32.mrb[0].mxu0
        %v9375 = vadd.f32 0.0, %v9374
        %v9376 = vpop.f32.mrb[0].mxu0
        %9377 = vmatprep.mubr.bf16.mxu0 0
        %9378 = vmatmul.mubr.bf16.gmra.mrb[0].mxu0 %v9244
        %v9379 = vpop.f32.mrb[0].mxu0
        %v9380 = vadd.f32 0.0, %v9379
        %v9381 = vpop.f32.mrb[0].mxu0
        %v9382 = vpop.f32.mrb[0].mxu0
        %v9383 = vadd.f32 0.0, %v9382
        %v9384 = vpop.f32.mrb[0].mxu0
        %9385 = vmatprep.mubr.bf16.mxu0 0
        %9386 = vmatmul.mubr.bf16.gmra.mrb[0].mxu0 %v9245
        %v9387 = vpop.f32.mrb[0].mxu0
        %v9388 = vadd.f32 0.0, %v9387
        %v9389 = vpop.f32.mrb[0].mxu0
        %v9390 = vpop.f32.mrb[0].mxu0
        %v9391 = vadd.f32 0.0, %v9390
        %v9392 = vpop.f32.mrb[0].mxu0
        %9393 = vmatprep.mubr.bf16.mxu0 0
        %9394 = vmatmul.mubr.bf16.gmra.mrb[0].mxu0 %v9246
        %v9395 = vpop.f32.mrb[0].mxu0
        %v9396 = vadd.f32 0.0, %v9395
        %v9397 = vpop.f32.mrb[0].mxu0
        %v9398 = vpop.f32.mrb[0].mxu0
        %v9399 = vadd.f32 0.0, %v9398
        %v9400 = vpop.f32.mrb[0].mxu0
        %9401 = vmatprep.mubr.bf16.mxu0 0
        %9402 = vmatmul.mubr.bf16.gmra.mrb[0].mxu0 %v9247
        %v9403 = vpop.f32.mrb[0].mxu0
        %v9404 = vadd.f32 0.0, %v9403
        %v9405 = vpop.f32.mrb[0].mxu0
        %v9406 = vpop.f32.mrb[0].mxu0
        %v9407 = vadd.f32 0.0, %v9406
        %v9408 = vpop.f32.mrb[0].mxu0
        %9409 = vmatprep.mubr.bf16.mxu0 0
        %9410 = vmatmul.mubr.bf16.gmra.mrb[0].mxu0 %v9248
        %v9411 = vpop.f32.mrb[0].mxu0
        %v9412 = vadd.f32 0.0, %v9411
        %v9413 = vpop.f32.mrb[0].mxu0
        %v9414 = vpop.f32.mrb[0].mxu0
        %v9415 = vadd.f32 0.0, %v9414
        %v9416 = vpop.f32.mrb[0].mxu0
        %9417 = vmatprep.mubr.bf16.mxu0 0
        %9418 = vmatmul.mubr.bf16.gmra.mrb[0].mxu0 %v9249
        %v9419 = vpop.f32.mrb[0].mxu0
        %v9420 = vadd.f32 0.0, %v9419
        %v9421 = vpop.f32.mrb[0].mxu0
        %v9422 = vpop.f32.mrb[0].mxu0
        %v9423 = vadd.f32 0.0, %v9422
        %v9424 = vpop.f32.mrb[0].mxu0
        %9425 = vmatprep.mubr.bf16.mxu0 0
        %9426 = vmatmul.mubr.bf16.gmra.mrb[0].mxu0 %v9250
        %v9427 = vpop.f32.mrb[0].mxu0
        %v9428 = vadd.f32 0.0, %v9427
        %v9429 = vpop.f32.mrb[0].mxu0
        %v9430 = vpop.f32.mrb[0].mxu0
        %v9431 = vadd.f32 0.0, %v9430
        %v9432 = vpop.f32.mrb[0].mxu0
        %9433 = vmatprep.mubr.bf16.mxu0 0
        %9434 = vmatmul.mubr.bf16.gmra.mrb[0].mxu0 %v9251
        %v9435 = vpop.f32.mrb[0].mxu0
        %v9436 = vadd.f32 0.0, %v9435
        %v9437 = vpop.f32.mrb[0].mxu0
        %v9438 = vpop.f32.mrb[0].mxu0
        %v9439 = vadd.f32 0.0, %v9438
        %v9440 = vpop.f32.mrb[0].mxu0
        %9441 = vmatprep.mubr.bf16.mxu0 0
        %9442 = vmatmul.mubr.bf16.gmra.mrb[0].mxu0 %v9252
        %v9443 = vpop.f32.mrb[0].mxu0
        %v9444 = vadd.f32 0.0, %v9443
        %v9445 = vpop.f32.mrb[0].mxu0
        %v9446 = vpop.f32.mrb[0].mxu0
        %v9447 = vadd.f32 0.0, %v9446
        %v9448 = vpop.f32.mrb[0].mxu0
        %9449 = vmatprep.mubr.bf16.mxu0 0
        %9450 = vmatmul.mubr.bf16.gmra.mrb[0].mxu0 %v9253
        %v9451 = vpop.f32.mrb[0].mxu0
        %v9452 = vadd.f32 0.0, %v9451
        %v9453 = vpop.f32.mrb[0].mxu0
        %v9454 = vpop.f32.mrb[0].mxu0
        %v9455 = vadd.f32 0.0, %v9454
        %v9456 = vpop.f32.mrb[0].mxu0
        %9457 = vmatprep.mubr.bf16.mxu0 0
        %9458 = vmatmul.mubr.bf16.gmra.mrb[0].mxu0 %v9254
        %v9459 = vpop.f32.mrb[0].mxu0
        %v9460 = vadd.f32 0.0, %v9459
        %v9461 = vpop.f32.mrb[0].mxu0
        %v9462 = vpop.f32.mrb[0].mxu0
        %v9463 = vadd.f32 0.0, %v9462
        %v9464 = vpop.f32.mrb[0].mxu0
        %9465 = vmatprep.mubr.bf16.mxu0 0
        %9466 = vmatmul.mubr.bf16.gmra.mrb[0].mxu0 %v9255
        %v9467 = vpop.f32.mrb[0].mxu0
        %v9468 = vadd.f32 0.0, %v9467
        %v9469 = vpop.f32.mrb[0].mxu0
        %v9470 = vpop.f32.mrb[0].mxu0
        %v9471 = vadd.f32 0.0, %v9470
        %v9472 = vpop.f32.mrb[0].mxu0
        %9473 = vmatprep.mubr.bf16.mxu0 0
        %9474 = vmatmul.mubr.bf16.gmra.mrb[0].mxu0 %v9256
        %v9475 = vpop.f32.mrb[0].mxu0
        %v9476 = vadd.f32 0.0, %v9475
        %v9477 = vpop.f32.mrb[0].mxu0
        %v9478 = vpop.f32.mrb[0].mxu0
        %v9479 = vadd.f32 0.0, %v9478
        %v9480 = vpop.f32.mrb[0].mxu0
        %9481 = vdwg.mxu0
        %v9482 = vadd.f32 %v8985, %v9356
        %v9483 = vadd.f32 %v8986, %v9359
        %v9484 = vadd.f32 %v8987, %v9364
        %v9485 = vadd.f32 %v8988, %v9367
        %v9486 = vadd.f32 %v8989, %v9372
        %v9487 = vadd.f32 %v8990, %v9375
        %v9488 = vadd.f32 %v8991, %v9380
        %v9489 = vadd.f32 %v8992, %v9383
        %v9490 = vadd.f32 %v8993, %v9388
        %v9491 = vadd.f32 %v8994, %v9391
        %v9492 = vadd.f32 %v8995, %v9396
        %v9493 = vadd.f32 %v8996, %v9399
        %v9494 = vadd.f32 %v8997, %v9404
        %v9495 = vadd.f32 %v8998, %v9407
        %v9496 = vadd.f32 %v8999, %v9412
        %v9497 = vadd.f32 %v9000, %v9415
        %v9498 = vadd.f32 %v9001, %v9420
        %v9499 = vadd.f32 %v9002, %v9423
        %v9500 = vadd.f32 %v9003, %v9428
        %v9501 = vadd.f32 %v9004, %v9431
        %v9502 = vadd.f32 %v9005, %v9436
        %v9503 = vadd.f32 %v9006, %v9439
        %v9504 = vadd.f32 %v9007, %v9444
        %v9505 = vadd.f32 %v9008, %v9447
        %v9506 = vadd.f32 %v9009, %v9452
        %v9507 = vadd.f32 %v9010, %v9455
        %v9508 = vadd.f32 %v9011, %v9460
        %v9509 = vadd.f32 %v9012, %v9463
        %v9510 = vadd.f32 %v9013, %v9468
        %v9511 = vadd.f32 %v9014, %v9471
        %v9512 = vadd.f32 %v9015, %v9476
        %v9513 = vadd.f32 %v9016, %v9479
        %v9514 = vld [vmem:[%s4122] sm:$0xf]
        %v9515 = vld [vmem:[%s4122 + $0x4] sm:$0xf]
        %v9516 = vld [vmem:[%s4122 + $0xc] sm:$0xf]
        %v9517 = vld [vmem:[%s4122 + $0x10] sm:$0xf]
        %v9518 = vld [vmem:[%s4122 + $0x18] sm:$0xf]
        %v9519 = vld [vmem:[%s4122 + $0x1c] sm:$0xf]
        %v9520 = vld [vmem:[%s4122 + $0x24] sm:$0xf]
        %v9521 = vld [vmem:[%s4122 + $0x28] sm:$0xf]
        %v9522 = vld [vmem:[%s4122 + $0x30] sm:$0xf]
        %v9523 = vld [vmem:[%s4122 + $0x34] sm:$0xf]
        %v9524 = vld [vmem:[%s4122 + $0x3c] sm:$0xf]
        %v9525 = vld [vmem:[%s4122 + $0x40] sm:$0xf]
        %v9526 = vld [vmem:[%s4122 + $0x48] sm:$0xf]
        %v9527 = vld [vmem:[%s4122 + $0x4c] sm:$0xf]
        %v9528 = vld [vmem:[%s4122 + $0x54] sm:$0xf]
        %v9529 = vld [vmem:[%s4122 + $0x58] sm:$0xf]
        %v9530 = vld [vmem:[%s4122 + $0x60] sm:$0xf]
        %v9531 = vld [vmem:[%s4122 + $0x64] sm:$0xf]
        %v9532 = vld [vmem:[%s4122 + $0x6c] sm:$0xf]
        %v9533 = vld [vmem:[%s4122 + $0x70] sm:$0xf]
        %v9534 = vld [vmem:[%s4122 + $0x78] sm:$0xf]
        %v9535 = vld [vmem:[%s4122 + $0x7c] sm:$0xf]
        %v9536 = vld [vmem:[%s4122 + $0x84] sm:$0xf]
        %v9537 = vld [vmem:[%s4122 + $0x88] sm:$0xf]
        %v9538 = vld [vmem:[%s4122 + $0x90] sm:$0xf]
        %v9539 = vld [vmem:[%s4122 + $0x94] sm:$0xf]
        %v9540 = vld [vmem:[%s4122 + $0x9c] sm:$0xf]
        %v9541 = vld [vmem:[%s4122 + $0xa0] sm:$0xf]
        %v9542 = vld [vmem:[%s4122 + $0xa8] sm:$0xf]
        %v9543 = vld [vmem:[%s4122 + $0xac] sm:$0xf]
        %v9544 = vld [vmem:[%s4122 + $0xb4] sm:$0xf]
        %v9545 = vld [vmem:[%s4122 + $0xb8] sm:$0xf]
        %v9546 = vld [vmem:[#allocation8 + $0x180] sm:$0xf]
        %v9547 = vld [vmem:[#allocation8 + $0x184] sm:$0xf]
        %v9548 = vld [vmem:[#allocation8 + $0x188] sm:$0xf]
        %v9549 = vld [vmem:[#allocation8 + $0x18c] sm:$0xf]
        %v9550 = vld [vmem:[#allocation8 + $0x190] sm:$0xf]
        %v9551 = vld [vmem:[#allocation8 + $0x194] sm:$0xf]
        %v9552 = vld [vmem:[#allocation8 + $0x198] sm:$0xf]
        %v9553 = vld [vmem:[#allocation8 + $0x19c] sm:$0xf]
        %v9554 = vld [vmem:[#allocation8 + $0x1a0] sm:$0xf]
        %v9555 = vld [vmem:[#allocation8 + $0x1a4] sm:$0xf]
        %v9556 = vld [vmem:[#allocation8 + $0x1a8] sm:$0xf]
        %v9557 = vld [vmem:[#allocation8 + $0x1ac] sm:$0xf]
        %v9558 = vld [vmem:[#allocation8 + $0x1b0] sm:$0xf]
        %v9559 = vld [vmem:[#allocation8 + $0x1b4] sm:$0xf]
        %v9560 = vld [vmem:[#allocation8 + $0x1b8] sm:$0xf]
        %v9561 = vld [vmem:[#allocation8 + $0x1bc] sm:$0xf]
        %v9594 = vunpack.c.l.b16 %v9514
        %v9595 = vunpack.c.l.b16 %v9515
        %v9596 = vunpack.c.l.b16 %v9516
        %v9597 = vunpack.c.l.b16 %v9517
        %v9598 = vunpack.c.l.b16 %v9518
        %v9599 = vunpack.c.l.b16 %v9519
        %v9600 = vunpack.c.l.b16 %v9520
        %v9601 = vunpack.c.l.b16 %v9521
        %v9602 = vunpack.c.l.b16 %v9522
        %v9603 = vunpack.c.l.b16 %v9523
        %v9604 = vunpack.c.l.b16 %v9524
        %v9605 = vunpack.c.l.b16 %v9525
        %v9606 = vunpack.c.l.b16 %v9526
        %v9607 = vunpack.c.l.b16 %v9527
        %v9608 = vunpack.c.l.b16 %v9528
        %v9609 = vunpack.c.l.b16 %v9529
        %v9610 = vunpack.c.l.b16 %v9530
        %v9611 = vunpack.c.l.b16 %v9531
        %v9612 = vunpack.c.l.b16 %v9532
        %v9613 = vunpack.c.l.b16 %v9533
        %v9614 = vunpack.c.l.b16 %v9534
        %v9615 = vunpack.c.l.b16 %v9535
        %v9616 = vunpack.c.l.b16 %v9536
        %v9617 = vunpack.c.l.b16 %v9537
        %v9618 = vunpack.c.l.b16 %v9538
        %v9619 = vunpack.c.l.b16 %v9539
        %v9620 = vunpack.c.l.b16 %v9540
        %v9621 = vunpack.c.l.b16 %v9541
        %v9622 = vunpack.c.l.b16 %v9542
        %v9623 = vunpack.c.l.b16 %v9543
        %v9624 = vunpack.c.l.b16 %v9544
        %v9625 = vunpack.c.l.b16 %v9545
        %v9626 = vpack.c.b16 %v9595, %v9594
        %v9627 = vpack.c.b16 %v9597, %v9596
        %v9628 = vpack.c.b16 %v9599, %v9598
        %v9629 = vpack.c.b16 %v9601, %v9600
        %v9630 = vpack.c.b16 %v9603, %v9602
        %v9631 = vpack.c.b16 %v9605, %v9604
        %v9632 = vpack.c.b16 %v9607, %v9606
        %v9633 = vpack.c.b16 %v9609, %v9608
        %v9634 = vpack.c.b16 %v9611, %v9610
        %v9635 = vpack.c.b16 %v9613, %v9612
        %v9636 = vpack.c.b16 %v9615, %v9614
        %v9637 = vpack.c.b16 %v9617, %v9616
        %v9638 = vpack.c.b16 %v9619, %v9618
        %v9639 = vpack.c.b16 %v9621, %v9620
        %v9640 = vpack.c.b16 %v9623, %v9622
        %v9641 = vpack.c.b16 %v9625, %v9624
        %v9674 = vunpack.c.l.b16 %v9546
        %v9675 = vunpack.c.l.b16 %v9547
        %v9676 = vunpack.c.l.b16 %v9548
        %v9677 = vunpack.c.l.b16 %v9549
        %v9678 = vunpack.c.l.b16 %v9550
        %v9679 = vunpack.c.l.b16 %v9551
        %v9680 = vunpack.c.l.b16 %v9552
        %v9681 = vunpack.c.l.b16 %v9553
        %v9682 = vunpack.c.l.b16 %v9554
        %v9683 = vunpack.c.l.b16 %v9555
        %v9684 = vunpack.c.l.b16 %v9556
        %v9685 = vunpack.c.l.b16 %v9557
        %v9686 = vunpack.c.l.b16 %v9558
        %v9687 = vunpack.c.l.b16 %v9559
        %v9688 = vunpack.c.l.b16 %v9560
        %v9689 = vunpack.c.l.b16 %v9561
        %v9690 = vpack.c.b16 %v9675, %v9674
        %v9691 = vpack.c.b16 %v9677, %v9676
        %v9692 = vpack.c.b16 %v9679, %v9678
        %v9693 = vpack.c.b16 %v9681, %v9680
        %v9694 = vpack.c.b16 %v9683, %v9682
        %v9695 = vpack.c.b16 %v9685, %v9684
        %v9696 = vpack.c.b16 %v9687, %v9686
        %v9697 = vpack.c.b16 %v9689, %v9688
        %9706 = vmatprep.subr.bf16.mxu0 0
        %9707 = vmatpush1.bf16.msra.mxu0 %v9690
        %9708 = vmatprep.subr.bf16.mxu0 0
        %9709 = vmatpush1.bf16.msra.mxu0 %v9691
        %9710 = vmatprep.subr.bf16.mxu0 0
        %9711 = vmatpush1.bf16.msra.mxu0 %v9692
        %9712 = vmatprep.subr.bf16.mxu0 0
        %9713 = vmatpush1.bf16.msra.mxu0 %v9693
        %9714 = vmatprep.subr.bf16.mxu0 0
        %9715 = vmatpush1.bf16.msra.mxu0 %v9694
        %9716 = vmatprep.subr.bf16.mxu0 0
        %9717 = vmatpush1.bf16.msra.mxu0 %v9695
        %9718 = vmatprep.subr.bf16.mxu0 0
        %9719 = vmatpush1.bf16.msra.mxu0 %v9696
        %9720 = vmatprep.subr.bf16.mxu0 0
        %9721 = vmatpush1.bf16.msra.mxu0 %v9697
        %9722 = vmatprep.subr.bf16.mxu0 0
        %9723 = vmatpush1.bf16.msra.mxu0 0
        %9724 = vmatprep.subr.bf16.mxu0 0
        %9725 = vmatpush1.bf16.msra.mxu0 0
        %9726 = vmatprep.subr.bf16.mxu0 0
        %9727 = vmatpush1.bf16.msra.mxu0 0
        %9728 = vmatprep.subr.bf16.mxu0 0
        %9729 = vmatpush1.bf16.msra.mxu0 0
        %9730 = vmatprep.subr.bf16.mxu0 0
        %9731 = vmatpush1.bf16.msra.mxu0 0
        %9732 = vmatprep.subr.bf16.mxu0 0
        %9733 = vmatpush1.bf16.msra.mxu0 0
        %9734 = vmatprep.subr.bf16.mxu0 0
        %9735 = vmatpush1.bf16.msra.mxu0 0
        %9736 = vmatprep.subr.bf16.mxu0 0
        %9737 = vmatpush1.bf16.msra.mxu0 0
        %9738 = vmatprep.mubr.bf16.mxu0 0
        %9739 = vmatmul.mubr.bf16.gmra.mrb[0].mxu0 %v9626
        %v9740 = vpop.f32.mrb[0].mxu0
        %v9741 = vadd.f32 0.0, %v9740
        %v9742 = vpop.f32.mrb[0].mxu0
        %v9743 = vpop.f32.mrb[0].mxu0
        %v9744 = vadd.f32 0.0, %v9743
        %v9745 = vpop.f32.mrb[0].mxu0
        %9746 = vmatprep.mubr.bf16.mxu0 0
        %9747 = vmatmul.mubr.bf16.gmra.mrb[0].mxu0 %v9627
        %v9748 = vpop.f32.mrb[0].mxu0
        %v9749 = vadd.f32 0.0, %v9748
        %v9750 = vpop.f32.mrb[0].mxu0
        %v9751 = vpop.f32.mrb[0].mxu0
        %v9752 = vadd.f32 0.0, %v9751
        %v9753 = vpop.f32.mrb[0].mxu0
        %9754 = vmatprep.mubr.bf16.mxu0 0
        %9755 = vmatmul.mubr.bf16.gmra.mrb[0].mxu0 %v9628
        %v9756 = vpop.f32.mrb[0].mxu0
        %v9757 = vadd.f32 0.0, %v9756
        %v9758 = vpop.f32.mrb[0].mxu0
        %v9759 = vpop.f32.mrb[0].mxu0
        %v9760 = vadd.f32 0.0, %v9759
        %v9761 = vpop.f32.mrb[0].mxu0
        %9762 = vmatprep.mubr.bf16.mxu0 0
        %9763 = vmatmul.mubr.bf16.gmra.mrb[0].mxu0 %v9629
        %v9764 = vpop.f32.mrb[0].mxu0
        %v9765 = vadd.f32 0.0, %v9764
        %v9766 = vpop.f32.mrb[0].mxu0
        %v9767 = vpop.f32.mrb[0].mxu0
        %v9768 = vadd.f32 0.0, %v9767
        %v9769 = vpop.f32.mrb[0].mxu0
        %9770 = vmatprep.mubr.bf16.mxu0 0
        %9771 = vmatmul.mubr.bf16.gmra.mrb[0].mxu0 %v9630
        %v9772 = vpop.f32.mrb[0].mxu0
        %v9773 = vadd.f32 0.0, %v9772
        %v9774 = vpop.f32.mrb[0].mxu0
        %v9775 = vpop.f32.mrb[0].mxu0
        %v9776 = vadd.f32 0.0, %v9775
        %v9777 = vpop.f32.mrb[0].mxu0
        %9778 = vmatprep.mubr.bf16.mxu0 0
        %9779 = vmatmul.mubr.bf16.gmra.mrb[0].mxu0 %v9631
        %v9780 = vpop.f32.mrb[0].mxu0
        %v9781 = vadd.f32 0.0, %v9780
        %v9782 = vpop.f32.mrb[0].mxu0
        %v9783 = vpop.f32.mrb[0].mxu0
        %v9784 = vadd.f32 0.0, %v9783
        %v9785 = vpop.f32.mrb[0].mxu0
        %9786 = vmatprep.mubr.bf16.mxu0 0
        %9787 = vmatmul.mubr.bf16.gmra.mrb[0].mxu0 %v9632
        %v9788 = vpop.f32.mrb[0].mxu0
        %v9789 = vadd.f32 0.0, %v9788
        %v9790 = vpop.f32.mrb[0].mxu0
        %v9791 = vpop.f32.mrb[0].mxu0
        %v9792 = vadd.f32 0.0, %v9791
        %v9793 = vpop.f32.mrb[0].mxu0
        %9794 = vmatprep.mubr.bf16.mxu0 0
        %9795 = vmatmul.mubr.bf16.gmra.mrb[0].mxu0 %v9633
        %v9796 = vpop.f32.mrb[0].mxu0
        %v9797 = vadd.f32 0.0, %v9796
        %v9798 = vpop.f32.mrb[0].mxu0
        %v9799 = vpop.f32.mrb[0].mxu0
        %v9800 = vadd.f32 0.0, %v9799
        %v9801 = vpop.f32.mrb[0].mxu0
        %9802 = vmatprep.mubr.bf16.mxu0 0
        %9803 = vmatmul.mubr.bf16.gmra.mrb[0].mxu0 %v9634
        %v9804 = vpop.f32.mrb[0].mxu0
        %v9805 = vadd.f32 0.0, %v9804
        %v9806 = vpop.f32.mrb[0].mxu0
        %v9807 = vpop.f32.mrb[0].mxu0
        %v9808 = vadd.f32 0.0, %v9807
        %v9809 = vpop.f32.mrb[0].mxu0
        %9810 = vmatprep.mubr.bf16.mxu0 0
        %9811 = vmatmul.mubr.bf16.gmra.mrb[0].mxu0 %v9635
        %v9812 = vpop.f32.mrb[0].mxu0
        %v9813 = vadd.f32 0.0, %v9812
        %v9814 = vpop.f32.mrb[0].mxu0
        %v9815 = vpop.f32.mrb[0].mxu0
        %v9816 = vadd.f32 0.0, %v9815
        %v9817 = vpop.f32.mrb[0].mxu0
        %9818 = vmatprep.mubr.bf16.mxu0 0
        %9819 = vmatmul.mubr.bf16.gmra.mrb[0].mxu0 %v9636
        %v9820 = vpop.f32.mrb[0].mxu0
        %v9821 = vadd.f32 0.0, %v9820
        %v9822 = vpop.f32.mrb[0].mxu0
        %v9823 = vpop.f32.mrb[0].mxu0
        %v9824 = vadd.f32 0.0, %v9823
        %v9825 = vpop.f32.mrb[0].mxu0
        %9826 = vmatprep.mubr.bf16.mxu0 0
        %9827 = vmatmul.mubr.bf16.gmra.mrb[0].mxu0 %v9637
        %v9828 = vpop.f32.mrb[0].mxu0
        %v9829 = vadd.f32 0.0, %v9828
        %v9830 = vpop.f32.mrb[0].mxu0
        %v9831 = vpop.f32.mrb[0].mxu0
        %v9832 = vadd.f32 0.0, %v9831
        %v9833 = vpop.f32.mrb[0].mxu0
        %9834 = vmatprep.mubr.bf16.mxu0 0
        %9835 = vmatmul.mubr.bf16.gmra.mrb[0].mxu0 %v9638
        %v9836 = vpop.f32.mrb[0].mxu0
        %v9837 = vadd.f32 0.0, %v9836
        %v9838 = vpop.f32.mrb[0].mxu0
        %v9839 = vpop.f32.mrb[0].mxu0
        %v9840 = vadd.f32 0.0, %v9839
        %v9841 = vpop.f32.mrb[0].mxu0
        %9842 = vmatprep.mubr.bf16.mxu0 0
        %9843 = vmatmul.mubr.bf16.gmra.mrb[0].mxu0 %v9639
        %v9844 = vpop.f32.mrb[0].mxu0
        %v9845 = vadd.f32 0.0, %v9844
        %v9846 = vpop.f32.mrb[0].mxu0
        %v9847 = vpop.f32.mrb[0].mxu0
        %v9848 = vadd.f32 0.0, %v9847
        %v9849 = vpop.f32.mrb[0].mxu0
        %9850 = vmatprep.mubr.bf16.mxu0 0
        %9851 = vmatmul.mubr.bf16.gmra.mrb[0].mxu0 %v9640
        %v9852 = vpop.f32.mrb[0].mxu0
        %v9853 = vadd.f32 0.0, %v9852
        %v9854 = vpop.f32.mrb[0].mxu0
        %v9855 = vpop.f32.mrb[0].mxu0
        %v9856 = vadd.f32 0.0, %v9855
        %v9857 = vpop.f32.mrb[0].mxu0
        %9858 = vmatprep.mubr.bf16.mxu0 0
        %9859 = vmatmul.mubr.bf16.gmra.mrb[0].mxu0 %v9641
        %v9860 = vpop.f32.mrb[0].mxu0
        %v9861 = vadd.f32 0.0, %v9860
        %v9862 = vpop.f32.mrb[0].mxu0
        %v9863 = vpop.f32.mrb[0].mxu0
        %v9864 = vadd.f32 0.0, %v9863
        %v9865 = vpop.f32.mrb[0].mxu0
        %9866 = vdwg.mxu0
        %v9867 = vadd.f32 %v9482, %v9741
        %v9868 = vadd.f32 %v9483, %v9744
        %v9869 = vadd.f32 %v9484, %v9749
        %v9870 = vadd.f32 %v9485, %v9752
        %v9871 = vadd.f32 %v9486, %v9757
        %v9872 = vadd.f32 %v9487, %v9760
        %v9873 = vadd.f32 %v9488, %v9765
        %v9874 = vadd.f32 %v9489, %v9768
        %v9875 = vadd.f32 %v9490, %v9773
        %v9876 = vadd.f32 %v9491, %v9776
        %v9877 = vadd.f32 %v9492, %v9781
        %v9878 = vadd.f32 %v9493, %v9784
        %v9879 = vadd.f32 %v9494, %v9789
        %v9880 = vadd.f32 %v9495, %v9792
        %v9881 = vadd.f32 %v9496, %v9797
        %v9882 = vadd.f32 %v9497, %v9800
        %v9883 = vadd.f32 %v9498, %v9805
        %v9884 = vadd.f32 %v9499, %v9808
        %v9885 = vadd.f32 %v9500, %v9813
        %v9886 = vadd.f32 %v9501, %v9816
        %v9887 = vadd.f32 %v9502, %v9821
        %v9888 = vadd.f32 %v9503, %v9824
        %v9889 = vadd.f32 %v9504, %v9829
        %v9890 = vadd.f32 %v9505, %v9832
        %v9891 = vadd.f32 %v9506, %v9837
        %v9892 = vadd.f32 %v9507, %v9840
        %v9893 = vadd.f32 %v9508, %v9845
        %v9894 = vadd.f32 %v9509, %v9848
        %v9895 = vadd.f32 %v9510, %v9853
        %v9896 = vadd.f32 %v9511, %v9856
        %v9897 = vadd.f32 %v9512, %v9861
        %v9898 = vadd.f32 %v9513, %v9864
        %v9899 = vld [vmem:[%s4122] sm:$0xf]
        %v9900 = vld [vmem:[%s4122 + $0x4] sm:$0xf]
        %v9901 = vld [vmem:[%s4122 + $0x8] sm:$0x1]
        %v9902 = vld [vmem:[%s4122 + $0xc] sm:$0xf]
        %v9903 = vld [vmem:[%s4122 + $0x10] sm:$0xf]
        %v9904 = vld [vmem:[%s4122 + $0x14] sm:$0x1]
        %v9905 = vld [vmem:[%s4122 + $0x18] sm:$0xf]
        %v9906 = vld [vmem:[%s4122 + $0x1c] sm:$0xf]
        %v9907 = vld [vmem:[%s4122 + $0x20] sm:$0x1]
        %v9908 = vld [vmem:[%s4122 + $0x24] sm:$0xf]
        %v9909 = vld [vmem:[%s4122 + $0x28] sm:$0xf]
        %v9910 = vld [vmem:[%s4122 + $0x2c] sm:$0x1]
        %v9911 = vld [vmem:[%s4122 + $0x30] sm:$0xf]
        %v9912 = vld [vmem:[%s4122 + $0x34] sm:$0xf]
        %v9913 = vld [vmem:[%s4122 + $0x38] sm:$0x1]
        %v9914 = vld [vmem:[%s4122 + $0x3c] sm:$0xf]
        %v9915 = vld [vmem:[%s4122 + $0x40] sm:$0xf]
        %v9916 = vld [vmem:[%s4122 + $0x44] sm:$0x1]
        %v9917 = vld [vmem:[%s4122 + $0x48] sm:$0xf]
        %v9918 = vld [vmem:[%s4122 + $0x4c] sm:$0xf]
        %v9919 = vld [vmem:[%s4122 + $0x50] sm:$0x1]
        %v9920 = vld [vmem:[%s4122 + $0x54] sm:$0xf]
        %v9921 = vld [vmem:[%s4122 + $0x58] sm:$0xf]
        %v9922 = vld [vmem:[%s4122 + $0x5c] sm:$0x1]
        %v9923 = vld [vmem:[%s4122 + $0x60] sm:$0xf]
        %v9924 = vld [vmem:[%s4122 + $0x64] sm:$0xf]
        %v9925 = vld [vmem:[%s4122 + $0x68] sm:$0x1]
        %v9926 = vld [vmem:[%s4122 + $0x6c] sm:$0xf]
        %v9927 = vld [vmem:[%s4122 + $0x70] sm:$0xf]
        %v9928 = vld [vmem:[%s4122 + $0x74] sm:$0x1]
        %v9929 = vld [vmem:[%s4122 + $0x78] sm:$0xf]
        %v9930 = vld [vmem:[%s4122 + $0x7c] sm:$0xf]
        %v9931 = vld [vmem:[%s4122 + $0x80] sm:$0x1]
        %v9932 = vld [vmem:[%s4122 + $0x84] sm:$0xf]
        %v9933 = vld [vmem:[%s4122 + $0x88] sm:$0xf]
        %v9934 = vld [vmem:[%s4122 + $0x8c] sm:$0x1]
        %v9935 = vld [vmem:[%s4122 + $0x90] sm:$0xf]
        %v9936 = vld [vmem:[%s4122 + $0x94] sm:$0xf]
        %v9937 = vld [vmem:[%s4122 + $0x98] sm:$0x1]
        %v9938 = vld [vmem:[%s4122 + $0x9c] sm:$0xf]
        %v9939 = vld [vmem:[%s4122 + $0xa0] sm:$0xf]
        %v9940 = vld [vmem:[%s4122 + $0xa4] sm:$0x1]
        %v9941 = vld [vmem:[%s4122 + $0xa8] sm:$0xf]
        %v9942 = vld [vmem:[%s4122 + $0xac] sm:$0xf]
        %v9943 = vld [vmem:[%s4122 + $0xb0] sm:$0x1]
        %v9944 = vld [vmem:[%s4122 + $0xb4] sm:$0xf]
        %v9945 = vld [vmem:[%s4122 + $0xb8] sm:$0xf]
        %v9946 = vld [vmem:[%s4122 + $0xbc] sm:$0x1]
        %v9948 = vshrl.u32 %v9899, 16
        %v9950 = vrot.slane %v9948, 4
        %v9951 = vshll.u32 %v9899, 16
        %v9953 = vrot.slane %v9951, 5
        %v9954 = vor.u32 %v9950, %v9953
        %v9955 = vrot.slane %v9954, 4
        %v9957 = vshll.u32 %v9900, 16
        %v9959 = vrot.slane %v9957, 5
        %v9960 = vsel %vm1024, %v9955, %v9959
        %v9961 = vshrl.u32 %v9900, 16
        %v9963 = vrot.slane %v9961, 4
        %v9964 = vor.u32 %v9963, %v9959
        %v9965 = vrot.slane %v9964, 4
        %v9967 = vshll.u32 %v9901, 16
        %v9969 = vrot.slane %v9967, 5
        %v9970 = vsel %vm1024, %v9965, %v9969
        %v9972 = vshrl.u32 %v9902, 16
        %v9974 = vrot.slane %v9972, 4
        %v9975 = vshll.u32 %v9902, 16
        %v9977 = vrot.slane %v9975, 5
        %v9978 = vor.u32 %v9974, %v9977
        %v9979 = vrot.slane %v9978, 4
        %v9981 = vshll.u32 %v9903, 16
        %v9983 = vrot.slane %v9981, 5
        %v9984 = vsel %vm1024, %v9979, %v9983
        %v9985 = vshrl.u32 %v9903, 16
        %v9987 = vrot.slane %v9985, 4
        %v9988 = vor.u32 %v9987, %v9983
        %v9989 = vrot.slane %v9988, 4
        %v9991 = vshll.u32 %v9904, 16
        %v9993 = vrot.slane %v9991, 5
        %v9994 = vsel %vm1024, %v9989, %v9993
        %v9996 = vshrl.u32 %v9905, 16
        %v9998 = vrot.slane %v9996, 4
        %v9999 = vshll.u32 %v9905, 16
        %v10001 = vrot.slane %v9999, 5
        %v10002 = vor.u32 %v9998, %v10001
        %v10003 = vrot.slane %v10002, 4
        %v10005 = vshll.u32 %v9906, 16
        %v10007 = vrot.slane %v10005, 5
        %v10008 = vsel %vm1024, %v10003, %v10007
        %v10009 = vshrl.u32 %v9906, 16
        %v10011 = vrot.slane %v10009, 4
        %v10012 = vor.u32 %v10011, %v10007
        %v10013 = vrot.slane %v10012, 4
        %v10015 = vshll.u32 %v9907, 16
        %v10017 = vrot.slane %v10015, 5
        %v10018 = vsel %vm1024, %v10013, %v10017
        %v10020 = vshrl.u32 %v9908, 16
        %v10022 = vrot.slane %v10020, 4
        %v10023 = vshll.u32 %v9908, 16
        %v10025 = vrot.slane %v10023, 5
        %v10026 = vor.u32 %v10022, %v10025
        %v10027 = vrot.slane %v10026, 4
        %v10029 = vshll.u32 %v9909, 16
        %v10031 = vrot.slane %v10029, 5
        %v10032 = vsel %vm1024, %v10027, %v10031
        %v10033 = vshrl.u32 %v9909, 16
        %v10035 = vrot.slane %v10033, 4
        %v10036 = vor.u32 %v10035, %v10031
        %v10037 = vrot.slane %v10036, 4
        %v10039 = vshll.u32 %v9910, 16
        %v10041 = vrot.slane %v10039, 5
        %v10042 = vsel %vm1024, %v10037, %v10041
        %v10044 = vshrl.u32 %v9911, 16
        %v10046 = vrot.slane %v10044, 4
        %v10047 = vshll.u32 %v9911, 16
        %v10049 = vrot.slane %v10047, 5
        %v10050 = vor.u32 %v10046, %v10049
        %v10051 = vrot.slane %v10050, 4
        %v10053 = vshll.u32 %v9912, 16
        %v10055 = vrot.slane %v10053, 5
        %v10056 = vsel %vm1024, %v10051, %v10055
        %v10057 = vshrl.u32 %v9912, 16
        %v10059 = vrot.slane %v10057, 4
        %v10060 = vor.u32 %v10059, %v10055
        %v10061 = vrot.slane %v10060, 4
        %v10063 = vshll.u32 %v9913, 16
        %v10065 = vrot.slane %v10063, 5
        %v10066 = vsel %vm1024, %v10061, %v10065
        %v10068 = vshrl.u32 %v9914, 16
        %v10070 = vrot.slane %v10068, 4
        %v10071 = vshll.u32 %v9914, 16
        %v10073 = vrot.slane %v10071, 5
        %v10074 = vor.u32 %v10070, %v10073
        %v10075 = vrot.slane %v10074, 4
        %v10077 = vshll.u32 %v9915, 16
        %v10079 = vrot.slane %v10077, 5
        %v10080 = vsel %vm1024, %v10075, %v10079
        %v10081 = vshrl.u32 %v9915, 16
        %v10083 = vrot.slane %v10081, 4
        %v10084 = vor.u32 %v10083, %v10079
        %v10085 = vrot.slane %v10084, 4
        %v10087 = vshll.u32 %v9916, 16
        %v10089 = vrot.slane %v10087, 5
        %v10090 = vsel %vm1024, %v10085, %v10089
        %v10092 = vshrl.u32 %v9917, 16
        %v10094 = vrot.slane %v10092, 4
        %v10095 = vshll.u32 %v9917, 16
        %v10097 = vrot.slane %v10095, 5
        %v10098 = vor.u32 %v10094, %v10097
        %v10099 = vrot.slane %v10098, 4
        %v10101 = vshll.u32 %v9918, 16
        %v10103 = vrot.slane %v10101, 5
        %v10104 = vsel %vm1024, %v10099, %v10103
        %v10105 = vshrl.u32 %v9918, 16
        %v10107 = vrot.slane %v10105, 4
        %v10108 = vor.u32 %v10107, %v10103
        %v10109 = vrot.slane %v10108, 4
        %v10111 = vshll.u32 %v9919, 16
        %v10113 = vrot.slane %v10111, 5
        %v10114 = vsel %vm1024, %v10109, %v10113
        %v10116 = vshrl.u32 %v9920, 16
        %v10118 = vrot.slane %v10116, 4
        %v10119 = vshll.u32 %v9920, 16
        %v10121 = vrot.slane %v10119, 5
        %v10122 = vor.u32 %v10118, %v10121
        %v10123 = vrot.slane %v10122, 4
        %v10125 = vshll.u32 %v9921, 16
        %v10127 = vrot.slane %v10125, 5
        %v10128 = vsel %vm1024, %v10123, %v10127
        %v10129 = vshrl.u32 %v9921, 16
        %v10131 = vrot.slane %v10129, 4
        %v10132 = vor.u32 %v10131, %v10127
        %v10133 = vrot.slane %v10132, 4
        %v10135 = vshll.u32 %v9922, 16
        %v10137 = vrot.slane %v10135, 5
        %v10138 = vsel %vm1024, %v10133, %v10137
        %v10140 = vshrl.u32 %v9923, 16
        %v10142 = vrot.slane %v10140, 4
        %v10143 = vshll.u32 %v9923, 16
        %v10145 = vrot.slane %v10143, 5
        %v10146 = vor.u32 %v10142, %v10145
        %v10147 = vrot.slane %v10146, 4
        %v10149 = vshll.u32 %v9924, 16
        %v10151 = vrot.slane %v10149, 5
        %v10152 = vsel %vm1024, %v10147, %v10151
        %v10153 = vshrl.u32 %v9924, 16
        %v10155 = vrot.slane %v10153, 4
        %v10156 = vor.u32 %v10155, %v10151
        %v10157 = vrot.slane %v10156, 4
        %v10159 = vshll.u32 %v9925, 16
        %v10161 = vrot.slane %v10159, 5
        %v10162 = vsel %vm1024, %v10157, %v10161
        %v10164 = vshrl.u32 %v9926, 16
        %v10166 = vrot.slane %v10164, 4
        %v10167 = vshll.u32 %v9926, 16
        %v10169 = vrot.slane %v10167, 5
        %v10170 = vor.u32 %v10166, %v10169
        %v10171 = vrot.slane %v10170, 4
        %v10173 = vshll.u32 %v9927, 16
        %v10175 = vrot.slane %v10173, 5
        %v10176 = vsel %vm1024, %v10171, %v10175
        %v10177 = vshrl.u32 %v9927, 16
        %v10179 = vrot.slane %v10177, 4
        %v10180 = vor.u32 %v10179, %v10175
        %v10181 = vrot.slane %v10180, 4
        %v10183 = vshll.u32 %v9928, 16
        %v10185 = vrot.slane %v10183, 5
        %v10186 = vsel %vm1024, %v10181, %v10185
        %v10188 = vshrl.u32 %v9929, 16
        %v10190 = vrot.slane %v10188, 4
        %v10191 = vshll.u32 %v9929, 16
        %v10193 = vrot.slane %v10191, 5
        %v10194 = vor.u32 %v10190, %v10193
        %v10195 = vrot.slane %v10194, 4
        %v10197 = vshll.u32 %v9930, 16
        %v10199 = vrot.slane %v10197, 5
        %v10200 = vsel %vm1024, %v10195, %v10199
        %v10201 = vshrl.u32 %v9930, 16
        %v10203 = vrot.slane %v10201, 4
        %v10204 = vor.u32 %v10203, %v10199
        %v10205 = vrot.slane %v10204, 4
        %v10207 = vshll.u32 %v9931, 16
        %v10209 = vrot.slane %v10207, 5
        %v10210 = vsel %vm1024, %v10205, %v10209
        %v10212 = vshrl.u32 %v9932, 16
        %v10214 = vrot.slane %v10212, 4
        %v10215 = vshll.u32 %v9932, 16
        %v10217 = vrot.slane %v10215, 5
        %v10218 = vor.u32 %v10214, %v10217
        %v10219 = vrot.slane %v10218, 4
        %v10221 = vshll.u32 %v9933, 16
        %v10223 = vrot.slane %v10221, 5
        %v10224 = vsel %vm1024, %v10219, %v10223
        %v10225 = vshrl.u32 %v9933, 16
        %v10227 = vrot.slane %v10225, 4
        %v10228 = vor.u32 %v10227, %v10223
        %v10229 = vrot.slane %v10228, 4
        %v10231 = vshll.u32 %v9934, 16
        %v10233 = vrot.slane %v10231, 5
        %v10234 = vsel %vm1024, %v10229, %v10233
        %v10236 = vshrl.u32 %v9935, 16
        %v10238 = vrot.slane %v10236, 4
        %v10239 = vshll.u32 %v9935, 16
        %v10241 = vrot.slane %v10239, 5
        %v10242 = vor.u32 %v10238, %v10241
        %v10243 = vrot.slane %v10242, 4
        %v10245 = vshll.u32 %v9936, 16
        %v10247 = vrot.slane %v10245, 5
        %v10248 = vsel %vm1024, %v10243, %v10247
        %v10249 = vshrl.u32 %v9936, 16
        %v10251 = vrot.slane %v10249, 4
        %v10252 = vor.u32 %v10251, %v10247
        %v10253 = vrot.slane %v10252, 4
        %v10255 = vshll.u32 %v9937, 16
        %v10257 = vrot.slane %v10255, 5
        %v10258 = vsel %vm1024, %v10253, %v10257
        %v10260 = vshrl.u32 %v9938, 16
        %v10262 = vrot.slane %v10260, 4
        %v10263 = vshll.u32 %v9938, 16
        %v10265 = vrot.slane %v10263, 5
        %v10266 = vor.u32 %v10262, %v10265
        %v10267 = vrot.slane %v10266, 4
        %v10269 = vshll.u32 %v9939, 16
        %v10271 = vrot.slane %v10269, 5
        %v10272 = vsel %vm1024, %v10267, %v10271
        %v10273 = vshrl.u32 %v9939, 16
        %v10275 = vrot.slane %v10273, 4
        %v10276 = vor.u32 %v10275, %v10271
        %v10277 = vrot.slane %v10276, 4
        %v10279 = vshll.u32 %v9940, 16
        %v10281 = vrot.slane %v10279, 5
        %v10282 = vsel %vm1024, %v10277, %v10281
        %v10284 = vshrl.u32 %v9941, 16
        %v10286 = vrot.slane %v10284, 4
        %v10287 = vshll.u32 %v9941, 16
        %v10289 = vrot.slane %v10287, 5
        %v10290 = vor.u32 %v10286, %v10289
        %v10291 = vrot.slane %v10290, 4
        %v10293 = vshll.u32 %v9942, 16
        %v10295 = vrot.slane %v10293, 5
        %v10296 = vsel %vm1024, %v10291, %v10295
        %v10297 = vshrl.u32 %v9942, 16
        %v10299 = vrot.slane %v10297, 4
        %v10300 = vor.u32 %v10299, %v10295
        %v10301 = vrot.slane %v10300, 4
        %v10303 = vshll.u32 %v9943, 16
        %v10305 = vrot.slane %v10303, 5
        %v10306 = vsel %vm1024, %v10301, %v10305
        %v10308 = vshrl.u32 %v9944, 16
        %v10310 = vrot.slane %v10308, 4
        %v10311 = vshll.u32 %v9944, 16
        %v10313 = vrot.slane %v10311, 5
        %v10314 = vor.u32 %v10310, %v10313
        %v10315 = vrot.slane %v10314, 4
        %v10317 = vshll.u32 %v9945, 16
        %v10319 = vrot.slane %v10317, 5
        %v10320 = vsel %vm1024, %v10315, %v10319
        %v10321 = vshrl.u32 %v9945, 16
        %v10323 = vrot.slane %v10321, 4
        %v10324 = vor.u32 %v10323, %v10319
        %v10325 = vrot.slane %v10324, 4
        %v10327 = vshll.u32 %v9946, 16
        %v10329 = vrot.slane %v10327, 5
        %v10330 = vsel %vm1024, %v10325, %v10329
        %v10331 = vld [vmem:[#allocation8 + $0x1c0] sm:$0xf]
        %v10332 = vld [vmem:[#allocation8 + $0x1c4] sm:$0xf]
        %v10333 = vld [vmem:[#allocation8 + $0x1c8] sm:$0xf]
        %v10334 = vld [vmem:[#allocation8 + $0x1cc] sm:$0xf]
        %v10335 = vld [vmem:[#allocation8 + $0x1d0] sm:$0xf]
        %v10336 = vld [vmem:[#allocation8 + $0x1d4] sm:$0xf]
        %v10337 = vld [vmem:[#allocation8 + $0x1d8] sm:$0xf]
        %v10338 = vld [vmem:[#allocation8 + $0x1dc] sm:$0xf]
        %v10339 = vld [vmem:[#allocation8 + $0x1e0] sm:$0xf]
        %v10340 = vld [vmem:[#allocation8 + $0x1e4] sm:$0xf]
        %v10341 = vld [vmem:[#allocation8 + $0x1e8] sm:$0xf]
        %v10342 = vld [vmem:[#allocation8 + $0x1ec] sm:$0xf]
        %v10343 = vld [vmem:[#allocation8 + $0x1f0] sm:$0xf]
        %v10344 = vld [vmem:[#allocation8 + $0x1f4] sm:$0xf]
        %v10345 = vld [vmem:[#allocation8 + $0x1f8] sm:$0xf]
        %v10346 = vld [vmem:[#allocation8 + $0x1fc] sm:$0xf]
        %v10347 = vunpack.c.l.b16 %v9960
        %v10348 = vunpack.c.l.b16 %v9970
        %v10349 = vunpack.c.l.b16 %v9984
        %v10350 = vunpack.c.l.b16 %v9994
        %v10351 = vunpack.c.l.b16 %v10008
        %v10352 = vunpack.c.l.b16 %v10018
        %v10353 = vunpack.c.l.b16 %v10032
        %v10354 = vunpack.c.l.b16 %v10042
        %v10355 = vunpack.c.l.b16 %v10056
        %v10356 = vunpack.c.l.b16 %v10066
        %v10357 = vunpack.c.l.b16 %v10080
        %v10358 = vunpack.c.l.b16 %v10090
        %v10359 = vunpack.c.l.b16 %v10104
        %v10360 = vunpack.c.l.b16 %v10114
        %v10361 = vunpack.c.l.b16 %v10128
        %v10362 = vunpack.c.l.b16 %v10138
        %v10363 = vunpack.c.l.b16 %v10152
        %v10364 = vunpack.c.l.b16 %v10162
        %v10365 = vunpack.c.l.b16 %v10176
        %v10366 = vunpack.c.l.b16 %v10186
        %v10367 = vunpack.c.l.b16 %v10200
        %v10368 = vunpack.c.l.b16 %v10210
        %v10369 = vunpack.c.l.b16 %v10224
        %v10370 = vunpack.c.l.b16 %v10234
        %v10371 = vunpack.c.l.b16 %v10248
        %v10372 = vunpack.c.l.b16 %v10258
        %v10373 = vunpack.c.l.b16 %v10272
        %v10374 = vunpack.c.l.b16 %v10282
        %v10375 = vunpack.c.l.b16 %v10296
        %v10376 = vunpack.c.l.b16 %v10306
        %v10377 = vunpack.c.l.b16 %v10320
        %v10378 = vunpack.c.l.b16 %v10330
        %v10379 = vpack.c.b16 %v10348, %v10347
        %v10380 = vpack.c.b16 %v10350, %v10349
        %v10381 = vpack.c.b16 %v10352, %v10351
        %v10382 = vpack.c.b16 %v10354, %v10353
        %v10383 = vpack.c.b16 %v10356, %v10355
        %v10384 = vpack.c.b16 %v10358, %v10357
        %v10385 = vpack.c.b16 %v10360, %v10359
        %v10386 = vpack.c.b16 %v10362, %v10361
        %v10387 = vpack.c.b16 %v10364, %v10363
        %v10388 = vpack.c.b16 %v10366, %v10365
        %v10389 = vpack.c.b16 %v10368, %v10367
        %v10390 = vpack.c.b16 %v10370, %v10369
        %v10391 = vpack.c.b16 %v10372, %v10371
        %v10392 = vpack.c.b16 %v10374, %v10373
        %v10393 = vpack.c.b16 %v10376, %v10375
        %v10394 = vpack.c.b16 %v10378, %v10377
        %v10427 = vunpack.c.l.b16 %v10331
        %v10428 = vunpack.c.l.b16 %v10332
        %v10429 = vunpack.c.l.b16 %v10333
        %v10430 = vunpack.c.l.b16 %v10334
        %v10431 = vunpack.c.l.b16 %v10335
        %v10432 = vunpack.c.l.b16 %v10336
        %v10433 = vunpack.c.l.b16 %v10337
        %v10434 = vunpack.c.l.b16 %v10338
        %v10435 = vunpack.c.l.b16 %v10339
        %v10436 = vunpack.c.l.b16 %v10340
        %v10437 = vunpack.c.l.b16 %v10341
        %v10438 = vunpack.c.l.b16 %v10342
        %v10439 = vunpack.c.l.b16 %v10343
        %v10440 = vunpack.c.l.b16 %v10344
        %v10441 = vunpack.c.l.b16 %v10345
        %v10442 = vunpack.c.l.b16 %v10346
        %v10443 = vpack.c.b16 %v10428, %v10427
        %v10444 = vpack.c.b16 %v10430, %v10429
        %v10445 = vpack.c.b16 %v10432, %v10431
        %v10446 = vpack.c.b16 %v10434, %v10433
        %v10447 = vpack.c.b16 %v10436, %v10435
        %v10448 = vpack.c.b16 %v10438, %v10437
        %v10449 = vpack.c.b16 %v10440, %v10439
        %v10450 = vpack.c.b16 %v10442, %v10441
        %10459 = vmatprep.subr.bf16.mxu0 0
        %10460 = vmatpush1.bf16.msra.mxu0 %v10443
        %10461 = vmatprep.subr.bf16.mxu0 0
        %10462 = vmatpush1.bf16.msra.mxu0 %v10444
        %10463 = vmatprep.subr.bf16.mxu0 0
        %10464 = vmatpush1.bf16.msra.mxu0 %v10445
        %10465 = vmatprep.subr.bf16.mxu0 0
        %10466 = vmatpush1.bf16.msra.mxu0 %v10446
        %10467 = vmatprep.subr.bf16.mxu0 0
        %10468 = vmatpush1.bf16.msra.mxu0 %v10447
        %10469 = vmatprep.subr.bf16.mxu0 0
        %10470 = vmatpush1.bf16.msra.mxu0 %v10448
        %10471 = vmatprep.subr.bf16.mxu0 0
        %10472 = vmatpush1.bf16.msra.mxu0 %v10449
        %10473 = vmatprep.subr.bf16.mxu0 0
        %10474 = vmatpush1.bf16.msra.mxu0 %v10450
        %10475 = vmatprep.subr.bf16.mxu0 0
        %10476 = vmatpush1.bf16.msra.mxu0 0
        %10477 = vmatprep.subr.bf16.mxu0 0
        %10478 = vmatpush1.bf16.msra.mxu0 0
        %10479 = vmatprep.subr.bf16.mxu0 0
        %10480 = vmatpush1.bf16.msra.mxu0 0
        %10481 = vmatprep.subr.bf16.mxu0 0
        %10482 = vmatpush1.bf16.msra.mxu0 0
        %10483 = vmatprep.subr.bf16.mxu0 0
        %10484 = vmatpush1.bf16.msra.mxu0 0
        %10485 = vmatprep.subr.bf16.mxu0 0
        %10486 = vmatpush1.bf16.msra.mxu0 0
        %10487 = vmatprep.subr.bf16.mxu0 0
        %10488 = vmatpush1.bf16.msra.mxu0 0
        %10489 = vmatprep.subr.bf16.mxu0 0
        %10490 = vmatpush1.bf16.msra.mxu0 0
        %10491 = vmatprep.mubr.bf16.mxu0 0
        %10492 = vmatmul.mubr.bf16.gmra.mrb[0].mxu0 %v10379
        %v10493 = vpop.f32.mrb[0].mxu0
        %v10494 = vadd.f32 0.0, %v10493
        %v10495 = vpop.f32.mrb[0].mxu0
        %v10496 = vpop.f32.mrb[0].mxu0
        %v10497 = vadd.f32 0.0, %v10496
        %v10498 = vpop.f32.mrb[0].mxu0
        %10499 = vmatprep.mubr.bf16.mxu0 0
        %10500 = vmatmul.mubr.bf16.gmra.mrb[0].mxu0 %v10380
        %v10501 = vpop.f32.mrb[0].mxu0
        %v10502 = vadd.f32 0.0, %v10501
        %v10503 = vpop.f32.mrb[0].mxu0
        %v10504 = vpop.f32.mrb[0].mxu0
        %v10505 = vadd.f32 0.0, %v10504
        %v10506 = vpop.f32.mrb[0].mxu0
        %10507 = vmatprep.mubr.bf16.mxu0 0
        %10508 = vmatmul.mubr.bf16.gmra.mrb[0].mxu0 %v10381
        %v10509 = vpop.f32.mrb[0].mxu0
        %v10510 = vadd.f32 0.0, %v10509
        %v10511 = vpop.f32.mrb[0].mxu0
        %v10512 = vpop.f32.mrb[0].mxu0
        %v10513 = vadd.f32 0.0, %v10512
        %v10514 = vpop.f32.mrb[0].mxu0
        %10515 = vmatprep.mubr.bf16.mxu0 0
        %10516 = vmatmul.mubr.bf16.gmra.mrb[0].mxu0 %v10382
        %v10517 = vpop.f32.mrb[0].mxu0
        %v10518 = vadd.f32 0.0, %v10517
        %v10519 = vpop.f32.mrb[0].mxu0
        %v10520 = vpop.f32.mrb[0].mxu0
        %v10521 = vadd.f32 0.0, %v10520
        %v10522 = vpop.f32.mrb[0].mxu0
        %10523 = vmatprep.mubr.bf16.mxu0 0
        %10524 = vmatmul.mubr.bf16.gmra.mrb[0].mxu0 %v10383
        %v10525 = vpop.f32.mrb[0].mxu0
        %v10526 = vadd.f32 0.0, %v10525
        %v10527 = vpop.f32.mrb[0].mxu0
        %v10528 = vpop.f32.mrb[0].mxu0
        %v10529 = vadd.f32 0.0, %v10528
        %v10530 = vpop.f32.mrb[0].mxu0
        %10531 = vmatprep.mubr.bf16.mxu0 0
        %10532 = vmatmul.mubr.bf16.gmra.mrb[0].mxu0 %v10384
        %v10533 = vpop.f32.mrb[0].mxu0
        %v10534 = vadd.f32 0.0, %v10533
        %v10535 = vpop.f32.mrb[0].mxu0
        %v10536 = vpop.f32.mrb[0].mxu0
        %v10537 = vadd.f32 0.0, %v10536
        %v10538 = vpop.f32.mrb[0].mxu0
        %10539 = vmatprep.mubr.bf16.mxu0 0
        %10540 = vmatmul.mubr.bf16.gmra.mrb[0].mxu0 %v10385
        %v10541 = vpop.f32.mrb[0].mxu0
        %v10542 = vadd.f32 0.0, %v10541
        %v10543 = vpop.f32.mrb[0].mxu0
        %v10544 = vpop.f32.mrb[0].mxu0
        %v10545 = vadd.f32 0.0, %v10544
        %v10546 = vpop.f32.mrb[0].mxu0
        %10547 = vmatprep.mubr.bf16.mxu0 0
        %10548 = vmatmul.mubr.bf16.gmra.mrb[0].mxu0 %v10386
        %v10549 = vpop.f32.mrb[0].mxu0
        %v10550 = vadd.f32 0.0, %v10549
        %v10551 = vpop.f32.mrb[0].mxu0
        %v10552 = vpop.f32.mrb[0].mxu0
        %v10553 = vadd.f32 0.0, %v10552
        %v10554 = vpop.f32.mrb[0].mxu0
        %10555 = vmatprep.mubr.bf16.mxu0 0
        %10556 = vmatmul.mubr.bf16.gmra.mrb[0].mxu0 %v10387
        %v10557 = vpop.f32.mrb[0].mxu0
        %v10558 = vadd.f32 0.0, %v10557
        %v10559 = vpop.f32.mrb[0].mxu0
        %v10560 = vpop.f32.mrb[0].mxu0
        %v10561 = vadd.f32 0.0, %v10560
        %v10562 = vpop.f32.mrb[0].mxu0
        %10563 = vmatprep.mubr.bf16.mxu0 0
        %10564 = vmatmul.mubr.bf16.gmra.mrb[0].mxu0 %v10388
        %v10565 = vpop.f32.mrb[0].mxu0
        %v10566 = vadd.f32 0.0, %v10565
        %v10567 = vpop.f32.mrb[0].mxu0
        %v10568 = vpop.f32.mrb[0].mxu0
        %v10569 = vadd.f32 0.0, %v10568
        %v10570 = vpop.f32.mrb[0].mxu0
        %10571 = vmatprep.mubr.bf16.mxu0 0
        %10572 = vmatmul.mubr.bf16.gmra.mrb[0].mxu0 %v10389
        %v10573 = vpop.f32.mrb[0].mxu0
        %v10574 = vadd.f32 0.0, %v10573
        %v10575 = vpop.f32.mrb[0].mxu0
        %v10576 = vpop.f32.mrb[0].mxu0
        %v10577 = vadd.f32 0.0, %v10576
        %v10578 = vpop.f32.mrb[0].mxu0
        %10579 = vmatprep.mubr.bf16.mxu0 0
        %10580 = vmatmul.mubr.bf16.gmra.mrb[0].mxu0 %v10390
        %v10581 = vpop.f32.mrb[0].mxu0
        %v10582 = vadd.f32 0.0, %v10581
        %v10583 = vpop.f32.mrb[0].mxu0
        %v10584 = vpop.f32.mrb[0].mxu0
        %v10585 = vadd.f32 0.0, %v10584
        %v10586 = vpop.f32.mrb[0].mxu0
        %10587 = vmatprep.mubr.bf16.mxu0 0
        %10588 = vmatmul.mubr.bf16.gmra.mrb[0].mxu0 %v10391
        %v10589 = vpop.f32.mrb[0].mxu0
        %v10590 = vadd.f32 0.0, %v10589
        %v10591 = vpop.f32.mrb[0].mxu0
        %v10592 = vpop.f32.mrb[0].mxu0
        %v10593 = vadd.f32 0.0, %v10592
        %v10594 = vpop.f32.mrb[0].mxu0
        %10595 = vmatprep.mubr.bf16.mxu0 0
        %10596 = vmatmul.mubr.bf16.gmra.mrb[0].mxu0 %v10392
        %v10597 = vpop.f32.mrb[0].mxu0
        %v10598 = vadd.f32 0.0, %v10597
        %v10599 = vpop.f32.mrb[0].mxu0
        %v10600 = vpop.f32.mrb[0].mxu0
        %v10601 = vadd.f32 0.0, %v10600
        %v10602 = vpop.f32.mrb[0].mxu0
        %10603 = vmatprep.mubr.bf16.mxu0 0
        %10604 = vmatmul.mubr.bf16.gmra.mrb[0].mxu0 %v10393
        %v10605 = vpop.f32.mrb[0].mxu0
        %v10606 = vadd.f32 0.0, %v10605
        %v10607 = vpop.f32.mrb[0].mxu0
        %v10608 = vpop.f32.mrb[0].mxu0
        %v10609 = vadd.f32 0.0, %v10608
        %v10610 = vpop.f32.mrb[0].mxu0
        %10611 = vmatprep.mubr.bf16.mxu0 0
        %10612 = vmatmul.mubr.bf16.gmra.mrb[0].mxu0 %v10394
        %v10613 = vpop.f32.mrb[0].mxu0
        %v10614 = vadd.f32 0.0, %v10613
        %v10615 = vpop.f32.mrb[0].mxu0
        %v10616 = vpop.f32.mrb[0].mxu0
        %v10617 = vadd.f32 0.0, %v10616
        %v10618 = vpop.f32.mrb[0].mxu0
        %10619 = vdwg.mxu0
        %v10620 = vadd.f32 %v9867, %v10494
        %v10621 = vadd.f32 %v9868, %v10497
        %v10622 = vadd.f32 %v9869, %v10502
        %v10623 = vadd.f32 %v9870, %v10505
        %v10624 = vadd.f32 %v9871, %v10510
        %v10625 = vadd.f32 %v9872, %v10513
        %v10626 = vadd.f32 %v9873, %v10518
        %v10627 = vadd.f32 %v9874, %v10521
        %v10628 = vadd.f32 %v9875, %v10526
        %v10629 = vadd.f32 %v9876, %v10529
        %v10630 = vadd.f32 %v9877, %v10534
        %v10631 = vadd.f32 %v9878, %v10537
        %v10632 = vadd.f32 %v9879, %v10542
        %v10633 = vadd.f32 %v9880, %v10545
        %v10634 = vadd.f32 %v9881, %v10550
        %v10635 = vadd.f32 %v9882, %v10553
        %v10636 = vadd.f32 %v9883, %v10558
        %v10637 = vadd.f32 %v9884, %v10561
        %v10638 = vadd.f32 %v9885, %v10566
        %v10639 = vadd.f32 %v9886, %v10569
        %v10640 = vadd.f32 %v9887, %v10574
        %v10641 = vadd.f32 %v9888, %v10577
        %v10642 = vadd.f32 %v9889, %v10582
        %v10643 = vadd.f32 %v9890, %v10585
        %v10644 = vadd.f32 %v9891, %v10590
        %v10645 = vadd.f32 %v9892, %v10593
        %v10646 = vadd.f32 %v9893, %v10598
        %v10647 = vadd.f32 %v9894, %v10601
        %v10648 = vadd.f32 %v9895, %v10606
        %v10649 = vadd.f32 %v9896, %v10609
        %v10650 = vadd.f32 %v9897, %v10614
        %v10651 = vadd.f32 %v9898, %v10617
        %v10652 = vld [vmem:[%s4122] sm:$0xe]
        %v10653 = vld [vmem:[%s4122 + $0xc] sm:$0xe]
        %v10654 = vld [vmem:[%s4122 + $0x18] sm:$0xe]
        %v10655 = vld [vmem:[%s4122 + $0x24] sm:$0xe]
        %v10656 = vld [vmem:[%s4122 + $0x30] sm:$0xe]
        %v10657 = vld [vmem:[%s4122 + $0x3c] sm:$0xe]
        %v10658 = vld [vmem:[%s4122 + $0x48] sm:$0xe]
        %v10659 = vld [vmem:[%s4122 + $0x54] sm:$0xe]
        %v10660 = vld [vmem:[%s4122 + $0x60] sm:$0xe]
        %v10661 = vld [vmem:[%s4122 + $0x6c] sm:$0xe]
        %v10662 = vld [vmem:[%s4122 + $0x78] sm:$0xe]
        %v10663 = vld [vmem:[%s4122 + $0x84] sm:$0xe]
        %v10664 = vld [vmem:[%s4122 + $0x90] sm:$0xe]
        %v10665 = vld [vmem:[%s4122 + $0x9c] sm:$0xe]
        %v10666 = vld [vmem:[%s4122 + $0xa8] sm:$0xe]
        %v10667 = vld [vmem:[%s4122 + $0xb4] sm:$0xe]
        %v10716 = vrot.slane %v10652, 5
        %v10717 = vrot.slane %v10716, 4
        %v10718 = vrot.slane %v9900, 5
        %v10719 = vsel %vm2053, %v10717, %v10718
        %v10720 = vrot.slane %v10718, 4
        %v10721 = vrot.slane %v9901, 5
        %v10722 = vsel %vm2053, %v10720, %v10721
        %v10723 = vrot.slane %v10653, 5
        %v10724 = vrot.slane %v10723, 4
        %v10725 = vrot.slane %v9903, 5
        %v10726 = vsel %vm2053, %v10724, %v10725
        %v10727 = vrot.slane %v10725, 4
        %v10728 = vrot.slane %v9904, 5
        %v10729 = vsel %vm2053, %v10727, %v10728
        %v10730 = vrot.slane %v10654, 5
        %v10731 = vrot.slane %v10730, 4
        %v10732 = vrot.slane %v9906, 5
        %v10733 = vsel %vm2053, %v10731, %v10732
        %v10734 = vrot.slane %v10732, 4
        %v10735 = vrot.slane %v9907, 5
        %v10736 = vsel %vm2053, %v10734, %v10735
        %v10737 = vrot.slane %v10655, 5
        %v10738 = vrot.slane %v10737, 4
        %v10739 = vrot.slane %v9909, 5
        %v10740 = vsel %vm2053, %v10738, %v10739
        %v10741 = vrot.slane %v10739, 4
        %v10742 = vrot.slane %v9910, 5
        %v10743 = vsel %vm2053, %v10741, %v10742
        %v10744 = vrot.slane %v10656, 5
        %v10745 = vrot.slane %v10744, 4
        %v10746 = vrot.slane %v9912, 5
        %v10747 = vsel %vm2053, %v10745, %v10746
        %v10748 = vrot.slane %v10746, 4
        %v10749 = vrot.slane %v9913, 5
        %v10750 = vsel %vm2053, %v10748, %v10749
        %v10751 = vrot.slane %v10657, 5
        %v10752 = vrot.slane %v10751, 4
        %v10753 = vrot.slane %v9915, 5
        %v10754 = vsel %vm2053, %v10752, %v10753
        %v10755 = vrot.slane %v10753, 4
        %v10756 = vrot.slane %v9916, 5
        %v10757 = vsel %vm2053, %v10755, %v10756
        %v10758 = vrot.slane %v10658, 5
        %v10759 = vrot.slane %v10758, 4
        %v10760 = vrot.slane %v9918, 5
        %v10761 = vsel %vm2053, %v10759, %v10760
        %v10762 = vrot.slane %v10760, 4
        %v10763 = vrot.slane %v9919, 5
        %v10764 = vsel %vm2053, %v10762, %v10763
        %v10765 = vrot.slane %v10659, 5
        %v10766 = vrot.slane %v10765, 4
        %v10767 = vrot.slane %v9921, 5
        %v10768 = vsel %vm2053, %v10766, %v10767
        %v10769 = vrot.slane %v10767, 4
        %v10770 = vrot.slane %v9922, 5
        %v10771 = vsel %vm2053, %v10769, %v10770
        %v10772 = vrot.slane %v10660, 5
        %v10773 = vrot.slane %v10772, 4
        %v10774 = vrot.slane %v9924, 5
        %v10775 = vsel %vm2053, %v10773, %v10774
        %v10776 = vrot.slane %v10774, 4
        %v10777 = vrot.slane %v9925, 5
        %v10778 = vsel %vm2053, %v10776, %v10777
        %v10779 = vrot.slane %v10661, 5
        %v10780 = vrot.slane %v10779, 4
        %v10781 = vrot.slane %v9927, 5
        %v10782 = vsel %vm2053, %v10780, %v10781
        %v10783 = vrot.slane %v10781, 4
        %v10784 = vrot.slane %v9928, 5
        %v10785 = vsel %vm2053, %v10783, %v10784
        %v10786 = vrot.slane %v10662, 5
        %v10787 = vrot.slane %v10786, 4
        %v10788 = vrot.slane %v9930, 5
        %v10789 = vsel %vm2053, %v10787, %v10788
        %v10790 = vrot.slane %v10788, 4
        %v10791 = vrot.slane %v9931, 5
        %v10792 = vsel %vm2053, %v10790, %v10791
        %v10793 = vrot.slane %v10663, 5
        %v10794 = vrot.slane %v10793, 4
        %v10795 = vrot.slane %v9933, 5
        %v10796 = vsel %vm2053, %v10794, %v10795
        %v10797 = vrot.slane %v10795, 4
        %v10798 = vrot.slane %v9934, 5
        %v10799 = vsel %vm2053, %v10797, %v10798
        %v10800 = vrot.slane %v10664, 5
        %v10801 = vrot.slane %v10800, 4
        %v10802 = vrot.slane %v9936, 5
        %v10803 = vsel %vm2053, %v10801, %v10802
        %v10804 = vrot.slane %v10802, 4
        %v10805 = vrot.slane %v9937, 5
        %v10806 = vsel %vm2053, %v10804, %v10805
        %v10807 = vrot.slane %v10665, 5
        %v10808 = vrot.slane %v10807, 4
        %v10809 = vrot.slane %v9939, 5
        %v10810 = vsel %vm2053, %v10808, %v10809
        %v10811 = vrot.slane %v10809, 4
        %v10812 = vrot.slane %v9940, 5
        %v10813 = vsel %vm2053, %v10811, %v10812
        %v10814 = vrot.slane %v10666, 5
        %v10815 = vrot.slane %v10814, 4
        %v10816 = vrot.slane %v9942, 5
        %v10817 = vsel %vm2053, %v10815, %v10816
        %v10818 = vrot.slane %v10816, 4
        %v10819 = vrot.slane %v9943, 5
        %v10820 = vsel %vm2053, %v10818, %v10819
        %v10821 = vrot.slane %v10667, 5
        %v10822 = vrot.slane %v10821, 4
        %v10823 = vrot.slane %v9945, 5
        %v10824 = vsel %vm2053, %v10822, %v10823
        %v10825 = vrot.slane %v10823, 4
        %v10826 = vrot.slane %v9946, 5
        %v10827 = vsel %vm2053, %v10825, %v10826
        %v10828 = vld [vmem:[#allocation8 + $0x200] sm:$0xf]
        %v10829 = vld [vmem:[#allocation8 + $0x204] sm:$0xf]
        %v10830 = vld [vmem:[#allocation8 + $0x208] sm:$0xf]
        %v10831 = vld [vmem:[#allocation8 + $0x20c] sm:$0xf]
        %v10832 = vld [vmem:[#allocation8 + $0x210] sm:$0xf]
        %v10833 = vld [vmem:[#allocation8 + $0x214] sm:$0xf]
        %v10834 = vld [vmem:[#allocation8 + $0x218] sm:$0xf]
        %v10835 = vld [vmem:[#allocation8 + $0x21c] sm:$0xf]
        %v10836 = vld [vmem:[#allocation8 + $0x220] sm:$0xf]
        %v10837 = vld [vmem:[#allocation8 + $0x224] sm:$0xf]
        %v10838 = vld [vmem:[#allocation8 + $0x228] sm:$0xf]
        %v10839 = vld [vmem:[#allocation8 + $0x22c] sm:$0xf]
        %v10840 = vld [vmem:[#allocation8 + $0x230] sm:$0xf]
        %v10841 = vld [vmem:[#allocation8 + $0x234] sm:$0xf]
        %v10842 = vld [vmem:[#allocation8 + $0x238] sm:$0xf]
        %v10843 = vld [vmem:[#allocation8 + $0x23c] sm:$0xf]
        %v10844 = vunpack.c.l.b16 %v10719
        %v10845 = vunpack.c.l.b16 %v10722
        %v10846 = vunpack.c.l.b16 %v10726
        %v10847 = vunpack.c.l.b16 %v10729
        %v10848 = vunpack.c.l.b16 %v10733
        %v10849 = vunpack.c.l.b16 %v10736
        %v10850 = vunpack.c.l.b16 %v10740
        %v10851 = vunpack.c.l.b16 %v10743
        %v10852 = vunpack.c.l.b16 %v10747
        %v10853 = vunpack.c.l.b16 %v10750
        %v10854 = vunpack.c.l.b16 %v10754
        %v10855 = vunpack.c.l.b16 %v10757
        %v10856 = vunpack.c.l.b16 %v10761
        %v10857 = vunpack.c.l.b16 %v10764
        %v10858 = vunpack.c.l.b16 %v10768
        %v10859 = vunpack.c.l.b16 %v10771
        %v10860 = vunpack.c.l.b16 %v10775
        %v10861 = vunpack.c.l.b16 %v10778
        %v10862 = vunpack.c.l.b16 %v10782
        %v10863 = vunpack.c.l.b16 %v10785
        %v10864 = vunpack.c.l.b16 %v10789
        %v10865 = vunpack.c.l.b16 %v10792
        %v10866 = vunpack.c.l.b16 %v10796
        %v10867 = vunpack.c.l.b16 %v10799
        %v10868 = vunpack.c.l.b16 %v10803
        %v10869 = vunpack.c.l.b16 %v10806
        %v10870 = vunpack.c.l.b16 %v10810
        %v10871 = vunpack.c.l.b16 %v10813
        %v10872 = vunpack.c.l.b16 %v10817
        %v10873 = vunpack.c.l.b16 %v10820
        %v10874 = vunpack.c.l.b16 %v10824
        %v10875 = vunpack.c.l.b16 %v10827
        %v10876 = vpack.c.b16 %v10845, %v10844
        %v10877 = vpack.c.b16 %v10847, %v10846
        %v10878 = vpack.c.b16 %v10849, %v10848
        %v10879 = vpack.c.b16 %v10851, %v10850
        %v10880 = vpack.c.b16 %v10853, %v10852
        %v10881 = vpack.c.b16 %v10855, %v10854
        %v10882 = vpack.c.b16 %v10857, %v10856
        %v10883 = vpack.c.b16 %v10859, %v10858
        %v10884 = vpack.c.b16 %v10861, %v10860
        %v10885 = vpack.c.b16 %v10863, %v10862
        %v10886 = vpack.c.b16 %v10865, %v10864
        %v10887 = vpack.c.b16 %v10867, %v10866
        %v10888 = vpack.c.b16 %v10869, %v10868
        %v10889 = vpack.c.b16 %v10871, %v10870
        %v10890 = vpack.c.b16 %v10873, %v10872
        %v10891 = vpack.c.b16 %v10875, %v10874
        %v10924 = vunpack.c.l.b16 %v10828
        %v10925 = vunpack.c.l.b16 %v10829
        %v10926 = vunpack.c.l.b16 %v10830
        %v10927 = vunpack.c.l.b16 %v10831
        %v10928 = vunpack.c.l.b16 %v10832
        %v10929 = vunpack.c.l.b16 %v10833
        %v10930 = vunpack.c.l.b16 %v10834
        %v10931 = vunpack.c.l.b16 %v10835
        %v10932 = vunpack.c.l.b16 %v10836
        %v10933 = vunpack.c.l.b16 %v10837
        %v10934 = vunpack.c.l.b16 %v10838
        %v10935 = vunpack.c.l.b16 %v10839
        %v10936 = vunpack.c.l.b16 %v10840
        %v10937 = vunpack.c.l.b16 %v10841
        %v10938 = vunpack.c.l.b16 %v10842
        %v10939 = vunpack.c.l.b16 %v10843
        %v10940 = vpack.c.b16 %v10925, %v10924
        %v10941 = vpack.c.b16 %v10927, %v10926
        %v10942 = vpack.c.b16 %v10929, %v10928
        %v10943 = vpack.c.b16 %v10931, %v10930
        %v10944 = vpack.c.b16 %v10933, %v10932
        %v10945 = vpack.c.b16 %v10935, %v10934
        %v10946 = vpack.c.b16 %v10937, %v10936
        %v10947 = vpack.c.b16 %v10939, %v10938
        %10956 = vmatprep.subr.bf16.mxu0 0
        %10957 = vmatpush1.bf16.msra.mxu0 %v10940
        %10958 = vmatprep.subr.bf16.mxu0 0
        %10959 = vmatpush1.bf16.msra.mxu0 %v10941
        %10960 = vmatprep.subr.bf16.mxu0 0
        %10961 = vmatpush1.bf16.msra.mxu0 %v10942
        %10962 = vmatprep.subr.bf16.mxu0 0
        %10963 = vmatpush1.bf16.msra.mxu0 %v10943
        %10964 = vmatprep.subr.bf16.mxu0 0
        %10965 = vmatpush1.bf16.msra.mxu0 %v10944
        %10966 = vmatprep.subr.bf16.mxu0 0
        %10967 = vmatpush1.bf16.msra.mxu0 %v10945
        %10968 = vmatprep.subr.bf16.mxu0 0
        %10969 = vmatpush1.bf16.msra.mxu0 %v10946
        %10970 = vmatprep.subr.bf16.mxu0 0
        %10971 = vmatpush1.bf16.msra.mxu0 %v10947
        %10972 = vmatprep.subr.bf16.mxu0 0
        %10973 = vmatpush1.bf16.msra.mxu0 0
        %10974 = vmatprep.subr.bf16.mxu0 0
        %10975 = vmatpush1.bf16.msra.mxu0 0
        %10976 = vmatprep.subr.bf16.mxu0 0
        %10977 = vmatpush1.bf16.msra.mxu0 0
        %10978 = vmatprep.subr.bf16.mxu0 0
        %10979 = vmatpush1.bf16.msra.mxu0 0
        %10980 = vmatprep.subr.bf16.mxu0 0
        %10981 = vmatpush1.bf16.msra.mxu0 0
        %10982 = vmatprep.subr.bf16.mxu0 0
        %10983 = vmatpush1.bf16.msra.mxu0 0
        %10984 = vmatprep.subr.bf16.mxu0 0
        %10985 = vmatpush1.bf16.msra.mxu0 0
        %10986 = vmatprep.subr.bf16.mxu0 0
        %10987 = vmatpush1.bf16.msra.mxu0 0
        %10988 = vmatprep.mubr.bf16.mxu0 0
        %10989 = vmatmul.mubr.bf16.gmra.mrb[0].mxu0 %v10876
        %v10990 = vpop.f32.mrb[0].mxu0
        %v10991 = vadd.f32 0.0, %v10990
        %v10992 = vpop.f32.mrb[0].mxu0
        %v10993 = vpop.f32.mrb[0].mxu0
        %v10994 = vadd.f32 0.0, %v10993
        %v10995 = vpop.f32.mrb[0].mxu0
        %10996 = vmatprep.mubr.bf16.mxu0 0
        %10997 = vmatmul.mubr.bf16.gmra.mrb[0].mxu0 %v10877
        %v10998 = vpop.f32.mrb[0].mxu0
        %v10999 = vadd.f32 0.0, %v10998
        %v11000 = vpop.f32.mrb[0].mxu0
        %v11001 = vpop.f32.mrb[0].mxu0
        %v11002 = vadd.f32 0.0, %v11001
        %v11003 = vpop.f32.mrb[0].mxu0
        %11004 = vmatprep.mubr.bf16.mxu0 0
        %11005 = vmatmul.mubr.bf16.gmra.mrb[0].mxu0 %v10878
        %v11006 = vpop.f32.mrb[0].mxu0
        %v11007 = vadd.f32 0.0, %v11006
        %v11008 = vpop.f32.mrb[0].mxu0
        %v11009 = vpop.f32.mrb[0].mxu0
        %v11010 = vadd.f32 0.0, %v11009
        %v11011 = vpop.f32.mrb[0].mxu0
        %11012 = vmatprep.mubr.bf16.mxu0 0
        %11013 = vmatmul.mubr.bf16.gmra.mrb[0].mxu0 %v10879
        %v11014 = vpop.f32.mrb[0].mxu0
        %v11015 = vadd.f32 0.0, %v11014
        %v11016 = vpop.f32.mrb[0].mxu0
        %v11017 = vpop.f32.mrb[0].mxu0
        %v11018 = vadd.f32 0.0, %v11017
        %v11019 = vpop.f32.mrb[0].mxu0
        %11020 = vmatprep.mubr.bf16.mxu0 0
        %11021 = vmatmul.mubr.bf16.gmra.mrb[0].mxu0 %v10880
        %v11022 = vpop.f32.mrb[0].mxu0
        %v11023 = vadd.f32 0.0, %v11022
        %v11024 = vpop.f32.mrb[0].mxu0
        %v11025 = vpop.f32.mrb[0].mxu0
        %v11026 = vadd.f32 0.0, %v11025
        %v11027 = vpop.f32.mrb[0].mxu0
        %11028 = vmatprep.mubr.bf16.mxu0 0
        %11029 = vmatmul.mubr.bf16.gmra.mrb[0].mxu0 %v10881
        %v11030 = vpop.f32.mrb[0].mxu0
        %v11031 = vadd.f32 0.0, %v11030
        %v11032 = vpop.f32.mrb[0].mxu0
        %v11033 = vpop.f32.mrb[0].mxu0
        %v11034 = vadd.f32 0.0, %v11033
        %v11035 = vpop.f32.mrb[0].mxu0
        %11036 = vmatprep.mubr.bf16.mxu0 0
        %11037 = vmatmul.mubr.bf16.gmra.mrb[0].mxu0 %v10882
        %v11038 = vpop.f32.mrb[0].mxu0
        %v11039 = vadd.f32 0.0, %v11038
        %v11040 = vpop.f32.mrb[0].mxu0
        %v11041 = vpop.f32.mrb[0].mxu0
        %v11042 = vadd.f32 0.0, %v11041
        %v11043 = vpop.f32.mrb[0].mxu0
        %11044 = vmatprep.mubr.bf16.mxu0 0
        %11045 = vmatmul.mubr.bf16.gmra.mrb[0].mxu0 %v10883
        %v11046 = vpop.f32.mrb[0].mxu0
        %v11047 = vadd.f32 0.0, %v11046
        %v11048 = vpop.f32.mrb[0].mxu0
        %v11049 = vpop.f32.mrb[0].mxu0
        %v11050 = vadd.f32 0.0, %v11049
        %v11051 = vpop.f32.mrb[0].mxu0
        %11052 = vmatprep.mubr.bf16.mxu0 0
        %11053 = vmatmul.mubr.bf16.gmra.mrb[0].mxu0 %v10884
        %v11054 = vpop.f32.mrb[0].mxu0
        %v11055 = vadd.f32 0.0, %v11054
        %v11056 = vpop.f32.mrb[0].mxu0
        %v11057 = vpop.f32.mrb[0].mxu0
        %v11058 = vadd.f32 0.0, %v11057
        %v11059 = vpop.f32.mrb[0].mxu0
        %11060 = vmatprep.mubr.bf16.mxu0 0
        %11061 = vmatmul.mubr.bf16.gmra.mrb[0].mxu0 %v10885
        %v11062 = vpop.f32.mrb[0].mxu0
        %v11063 = vadd.f32 0.0, %v11062
        %v11064 = vpop.f32.mrb[0].mxu0
        %v11065 = vpop.f32.mrb[0].mxu0
        %v11066 = vadd.f32 0.0, %v11065
        %v11067 = vpop.f32.mrb[0].mxu0
        %11068 = vmatprep.mubr.bf16.mxu0 0
        %11069 = vmatmul.mubr.bf16.gmra.mrb[0].mxu0 %v10886
        %v11070 = vpop.f32.mrb[0].mxu0
        %v11071 = vadd.f32 0.0, %v11070
        %v11072 = vpop.f32.mrb[0].mxu0
        %v11073 = vpop.f32.mrb[0].mxu0
        %v11074 = vadd.f32 0.0, %v11073
        %v11075 = vpop.f32.mrb[0].mxu0
        %11076 = vmatprep.mubr.bf16.mxu0 0
        %11077 = vmatmul.mubr.bf16.gmra.mrb[0].mxu0 %v10887
        %v11078 = vpop.f32.mrb[0].mxu0
        %v11079 = vadd.f32 0.0, %v11078
        %v11080 = vpop.f32.mrb[0].mxu0
        %v11081 = vpop.f32.mrb[0].mxu0
        %v11082 = vadd.f32 0.0, %v11081
        %v11083 = vpop.f32.mrb[0].mxu0
        %11084 = vmatprep.mubr.bf16.mxu0 0
        %11085 = vmatmul.mubr.bf16.gmra.mrb[0].mxu0 %v10888
        %v11086 = vpop.f32.mrb[0].mxu0
        %v11087 = vadd.f32 0.0, %v11086
        %v11088 = vpop.f32.mrb[0].mxu0
        %v11089 = vpop.f32.mrb[0].mxu0
        %v11090 = vadd.f32 0.0, %v11089
        %v11091 = vpop.f32.mrb[0].mxu0
        %11092 = vmatprep.mubr.bf16.mxu0 0
        %11093 = vmatmul.mubr.bf16.gmra.mrb[0].mxu0 %v10889
        %v11094 = vpop.f32.mrb[0].mxu0
        %v11095 = vadd.f32 0.0, %v11094
        %v11096 = vpop.f32.mrb[0].mxu0
        %v11097 = vpop.f32.mrb[0].mxu0
        %v11098 = vadd.f32 0.0, %v11097
        %v11099 = vpop.f32.mrb[0].mxu0
        %11100 = vmatprep.mubr.bf16.mxu0 0
        %11101 = vmatmul.mubr.bf16.gmra.mrb[0].mxu0 %v10890
        %v11102 = vpop.f32.mrb[0].mxu0
        %v11103 = vadd.f32 0.0, %v11102
        %v11104 = vpop.f32.mrb[0].mxu0
        %v11105 = vpop.f32.mrb[0].mxu0
        %v11106 = vadd.f32 0.0, %v11105
        %v11107 = vpop.f32.mrb[0].mxu0
        %11108 = vmatprep.mubr.bf16.mxu0 0
        %11109 = vmatmul.mubr.bf16.gmra.mrb[0].mxu0 %v10891
        %v11110 = vpop.f32.mrb[0].mxu0
        %v11111 = vadd.f32 0.0, %v11110
        %v11112 = vpop.f32.mrb[0].mxu0
        %v11113 = vpop.f32.mrb[0].mxu0
        %v11114 = vadd.f32 0.0, %v11113
        %v11115 = vpop.f32.mrb[0].mxu0
        %11116 = vdwg.mxu0
        %v11117 = vadd.f32 %v10620, %v10991
        %v11118 = vadd.f32 %v10621, %v10994
        %v11119 = vadd.f32 %v10622, %v10999
        %v11120 = vadd.f32 %v10623, %v11002
        %v11121 = vadd.f32 %v10624, %v11007
        %v11122 = vadd.f32 %v10625, %v11010
        %v11123 = vadd.f32 %v10626, %v11015
        %v11124 = vadd.f32 %v10627, %v11018
        %v11125 = vadd.f32 %v10628, %v11023
        %v11126 = vadd.f32 %v10629, %v11026
        %v11127 = vadd.f32 %v10630, %v11031
        %v11128 = vadd.f32 %v10631, %v11034
        %v11129 = vadd.f32 %v10632, %v11039
        %v11130 = vadd.f32 %v10633, %v11042
        %v11131 = vadd.f32 %v10634, %v11047
        %v11132 = vadd.f32 %v10635, %v11050
        %v11133 = vadd.f32 %v10636, %v11055
        %v11134 = vadd.f32 %v10637, %v11058
        %v11135 = vadd.f32 %v10638, %v11063
        %v11136 = vadd.f32 %v10639, %v11066
        %v11137 = vadd.f32 %v10640, %v11071
        %v11138 = vadd.f32 %v10641, %v11074
        %v11139 = vadd.f32 %v10642, %v11079
        %v11140 = vadd.f32 %v10643, %v11082
        %v11141 = vadd.f32 %v10644, %v11087
        %v11142 = vadd.f32 %v10645, %v11090
        %v11143 = vadd.f32 %v10646, %v11095
        %v11144 = vadd.f32 %v10647, %v11098
        %v11145 = vadd.f32 %v10648, %v11103
        %v11146 = vadd.f32 %v10649, %v11106
        %v11147 = vadd.f32 %v10650, %v11111
        %v11148 = vadd.f32 %v10651, %v11114
        %v11149 = vld [vmem:[%s4] sm:$0x1]
        %v11151 = vlaneseq
        %v11152 = vshrl.u32 %v11151, 7
        %v11153 = vsub.s32 0, %v11152
        %v11154 = vrot.slane %v11149, %v11153
        %v11156 = vadd.f32 %v11117, %v11154
        %v11157 = vadd.f32 %v11118, %v11154
        %v11158 = vadd.f32 %v11119, %v11154
        %v11159 = vadd.f32 %v11120, %v11154
        %v11160 = vadd.f32 %v11121, %v11154
        %v11161 = vadd.f32 %v11122, %v11154
        %v11162 = vadd.f32 %v11123, %v11154
        %v11163 = vadd.f32 %v11124, %v11154
        %v11164 = vadd.f32 %v11125, %v11154
        %v11165 = vadd.f32 %v11126, %v11154
        %v11166 = vadd.f32 %v11127, %v11154
        %v11167 = vadd.f32 %v11128, %v11154
        %v11168 = vadd.f32 %v11129, %v11154
        %v11169 = vadd.f32 %v11130, %v11154
        %v11170 = vadd.f32 %v11131, %v11154
        %v11171 = vadd.f32 %v11132, %v11154
        %v11172 = vadd.f32 %v11133, %v11154
        %v11173 = vadd.f32 %v11134, %v11154
        %v11174 = vadd.f32 %v11135, %v11154
        %v11175 = vadd.f32 %v11136, %v11154
        %v11176 = vadd.f32 %v11137, %v11154
        %v11177 = vadd.f32 %v11138, %v11154
        %v11178 = vadd.f32 %v11139, %v11154
        %v11179 = vadd.f32 %v11140, %v11154
        %v11180 = vadd.f32 %v11141, %v11154
        %v11181 = vadd.f32 %v11142, %v11154
        %v11182 = vadd.f32 %v11143, %v11154
        %v11183 = vadd.f32 %v11144, %v11154
        %v11184 = vadd.f32 %v11145, %v11154
        %v11185 = vadd.f32 %v11146, %v11154
        %v11186 = vadd.f32 %v11147, %v11154
        %v11187 = vadd.f32 %v11148, %v11154
        %v11188 = vld [vmem:[%s237] sm:$0xff]
        %v11189 = vld [vmem:[%s237 + $0x8] sm:$0xff]
        %v11190 = vld [vmem:[%s237 + $0x10] sm:$0xff]
        %v11191 = vld [vmem:[%s237 + $0x18] sm:$0xff]
        %v11192 = vld [vmem:[%s237 + $0x20] sm:$0xff]
        %v11193 = vld [vmem:[%s237 + $0x28] sm:$0xff]
        %v11194 = vld [vmem:[%s237 + $0x30] sm:$0xff]
        %v11195 = vld [vmem:[%s237 + $0x38] sm:$0xff]
        %v11196 = vld [vmem:[%s237 + $0x40] sm:$0xff]
        %v11197 = vld [vmem:[%s237 + $0x48] sm:$0xff]
        %v11198 = vld [vmem:[%s237 + $0x50] sm:$0xff]
        %v11199 = vld [vmem:[%s237 + $0x58] sm:$0xff]
        %v11200 = vld [vmem:[%s237 + $0x60] sm:$0xff]
        %v11201 = vld [vmem:[%s237 + $0x68] sm:$0xff]
        %v11202 = vld [vmem:[%s237 + $0x70] sm:$0xff]
        %v11203 = vld [vmem:[%s237 + $0x78] sm:$0xff]
        %v11204 = vld [vmem:[%s237 + $0x80] sm:$0xff]
        %v11205 = vld [vmem:[%s237 + $0x88] sm:$0xff]
        %v11206 = vld [vmem:[%s237 + $0x90] sm:$0xff]
        %v11207 = vld [vmem:[%s237 + $0x98] sm:$0xff]
        %v11208 = vld [vmem:[%s237 + $0xa0] sm:$0xff]
        %v11209 = vld [vmem:[%s237 + $0xa8] sm:$0xff]
        %v11210 = vld [vmem:[%s237 + $0xb0] sm:$0xff]
        %v11211 = vld [vmem:[%s237 + $0xb8] sm:$0xff]
        %v11212 = vld [vmem:[%s237 + $0xc0] sm:$0xff]
        %v11213 = vld [vmem:[%s237 + $0xc8] sm:$0xff]
        %v11214 = vld [vmem:[%s237 + $0xd0] sm:$0xff]
        %v11215 = vld [vmem:[%s237 + $0xd8] sm:$0xff]
        %v11216 = vld [vmem:[%s237 + $0xe0] sm:$0xff]
        %v11217 = vld [vmem:[%s237 + $0xe8] sm:$0xff]
        %v11218 = vld [vmem:[%s237 + $0xf0] sm:$0xff]
        %v11219 = vld [vmem:[%s237 + $0xf8] sm:$0xff]
        %v11220 = vadd.f32 %v11156, %v11188
        %v11221 = vadd.f32 %v11157, %v11189
        %v11222 = vadd.f32 %v11158, %v11190
        %v11223 = vadd.f32 %v11159, %v11191
        %v11224 = vadd.f32 %v11160, %v11192
        %v11225 = vadd.f32 %v11161, %v11193
        %v11226 = vadd.f32 %v11162, %v11194
        %v11227 = vadd.f32 %v11163, %v11195
        %v11228 = vadd.f32 %v11164, %v11196
        %v11229 = vadd.f32 %v11165, %v11197
        %v11230 = vadd.f32 %v11166, %v11198
        %v11231 = vadd.f32 %v11167, %v11199
        %v11232 = vadd.f32 %v11168, %v11200
        %v11233 = vadd.f32 %v11169, %v11201
        %v11234 = vadd.f32 %v11170, %v11202
        %v11235 = vadd.f32 %v11171, %v11203
        %v11236 = vadd.f32 %v11172, %v11204
        %v11237 = vadd.f32 %v11173, %v11205
        %v11238 = vadd.f32 %v11174, %v11206
        %v11239 = vadd.f32 %v11175, %v11207
        %v11240 = vadd.f32 %v11176, %v11208
        %v11241 = vadd.f32 %v11177, %v11209
        %v11242 = vadd.f32 %v11178, %v11210
        %v11243 = vadd.f32 %v11179, %v11211
        %v11244 = vadd.f32 %v11180, %v11212
        %v11245 = vadd.f32 %v11181, %v11213
        %v11246 = vadd.f32 %v11182, %v11214
        %v11247 = vadd.f32 %v11183, %v11215
        %v11248 = vadd.f32 %v11184, %v11216
        %v11249 = vadd.f32 %v11185, %v11217
        %v11250 = vadd.f32 %v11186, %v11218
        %v11251 = vadd.f32 %v11187, %v11219
        %v11252 = vmax.f32 %v11220, 0.0
        %v11253 = vmax.f32 %v11221, 0.0
        %v11254 = vmax.f32 %v11222, 0.0
        %v11255 = vmax.f32 %v11223, 0.0
        %v11256 = vmax.f32 %v11224, 0.0
        %v11257 = vmax.f32 %v11225, 0.0
        %v11258 = vmax.f32 %v11226, 0.0
        %v11259 = vmax.f32 %v11227, 0.0
        %v11260 = vmax.f32 %v11228, 0.0
        %v11261 = vmax.f32 %v11229, 0.0
        %v11262 = vmax.f32 %v11230, 0.0
        %v11263 = vmax.f32 %v11231, 0.0
        %v11264 = vmax.f32 %v11232, 0.0
        %v11265 = vmax.f32 %v11233, 0.0
        %v11266 = vmax.f32 %v11234, 0.0
        %v11267 = vmax.f32 %v11235, 0.0
        %v11268 = vmax.f32 %v11236, 0.0
        %v11269 = vmax.f32 %v11237, 0.0
        %v11270 = vmax.f32 %v11238, 0.0
        %v11271 = vmax.f32 %v11239, 0.0
        %v11272 = vmax.f32 %v11240, 0.0
        %v11273 = vmax.f32 %v11241, 0.0
        %v11274 = vmax.f32 %v11242, 0.0
        %v11275 = vmax.f32 %v11243, 0.0
        %v11276 = vmax.f32 %v11244, 0.0
        %v11277 = vmax.f32 %v11245, 0.0
        %v11278 = vmax.f32 %v11246, 0.0
        %v11279 = vmax.f32 %v11247, 0.0
        %v11280 = vmax.f32 %v11248, 0.0
        %v11281 = vmax.f32 %v11249, 0.0
        %v11282 = vmax.f32 %v11250, 0.0
        %v11283 = vmax.f32 %v11251, 0.0
        %11284 = vst [vmem:[%s271] sm:$0xff] %v11252
        %11285 = vst [vmem:[%s271 + $0x8] sm:$0xff] %v11253
        %11286 = vst [vmem:[%s271 + $0x10] sm:$0xff] %v11254
        %11287 = vst [vmem:[%s271 + $0x18] sm:$0xff] %v11255
        %11288 = vst [vmem:[%s271 + $0x20] sm:$0xff] %v11256
        %11289 = vst [vmem:[%s271 + $0x28] sm:$0xff] %v11257
        %11290 = vst [vmem:[%s271 + $0x30] sm:$0xff] %v11258
        %11291 = vst [vmem:[%s271 + $0x38] sm:$0xff] %v11259
        %11292 = vst [vmem:[%s271 + $0x40] sm:$0xff] %v11260
        %11293 = vst [vmem:[%s271 + $0x48] sm:$0xff] %v11261
        %11294 = vst [vmem:[%s271 + $0x50] sm:$0xff] %v11262
        %11295 = vst [vmem:[%s271 + $0x58] sm:$0xff] %v11263
        %11296 = vst [vmem:[%s271 + $0x60] sm:$0xff] %v11264
        %11297 = vst [vmem:[%s271 + $0x68] sm:$0xff] %v11265
        %11298 = vst [vmem:[%s271 + $0x70] sm:$0xff] %v11266
        %11299 = vst [vmem:[%s271 + $0x78] sm:$0xff] %v11267
        %11300 = vst [vmem:[%s271 + $0x80] sm:$0xff] %v11268
        %11301 = vst [vmem:[%s271 + $0x88] sm:$0xff] %v11269
        %11302 = vst [vmem:[%s271 + $0x90] sm:$0xff] %v11270
        %11303 = vst [vmem:[%s271 + $0x98] sm:$0xff] %v11271
        %11304 = vst [vmem:[%s271 + $0xa0] sm:$0xff] %v11272
        %11305 = vst [vmem:[%s271 + $0xa8] sm:$0xff] %v11273
        %11306 = vst [vmem:[%s271 + $0xb0] sm:$0xff] %v11274
        %11307 = vst [vmem:[%s271 + $0xb8] sm:$0xff] %v11275
        %11308 = vst [vmem:[%s271 + $0xc0] sm:$0xff] %v11276
        %11309 = vst [vmem:[%s271 + $0xc8] sm:$0xff] %v11277
        %11310 = vst [vmem:[%s271 + $0xd0] sm:$0xff] %v11278
        %11311 = vst [vmem:[%s271 + $0xd8] sm:$0xff] %v11279
        %11312 = vst [vmem:[%s271 + $0xe0] sm:$0xff] %v11280
        %11313 = vst [vmem:[%s271 + $0xe8] sm:$0xff] %v11281
        %11314 = vst [vmem:[%s271 + $0xf0] sm:$0xff] %v11282
        %11315 = vst [vmem:[%s271 + $0xf8] sm:$0xff] %v11283
        %s11316 = sand.u32 %s141, 1
        %s11317 = scalar_lea.sflag [#allocation5], %s11316
        %s11318 = sand.u32 %s141, 1
        %s11319 = smul.addr %s11318, 256
        %s11320 = scalar_lea.vmem [#allocation9], %s11319
        // Predicated region
        $region53: #{tpu_custom_call.1} parent=39 // pred_check
          %p11321 = pneg %p151
        $region54: #{tpu_custom_call.1} parent=39 // pred_check_branch
          %11323 = sbr.rel (%p11321) target = $region56
        $region55: #{tpu_custom_call.1} parent=39 // pred_region
          %s11325 = ssub.s32 4096, 4096
          %11326 = vsyncadd %s11317, %s11325
          %s11327 = smul.addr %s23, 32
          %s11328 = smul.addr %s11327, 128
          %s11329 = scalar_lea.hbm %s5, %s11328
          %s11330 = sshll.u32 %s11320, 4
          %s11331 = int_to_ptr.vmem [resolvable:$true] %s11330
          %11336 = dma.vmem_to_hbm [thread:$0]  %s11331, 4096, %s11329, %s11317, 128, 128, 8
        $region56: #{tpu_custom_call.1} parent=39 // pred_fallthru
          _
      $region40: #{tpu_custom_call.1} parent=5 // pred_fallthru
        _
      %p11337 = scmp.le.s32.totalorder 2, %s18
      // Predicated region
      $region57: #{tpu_custom_call.1} parent=5 // pred_check
        %p11338 = pneg %p11337
      $region58: #{tpu_custom_call.1} parent=5 // pred_check_branch
        %11340 = sbr.rel (%p11338) target = $region60
      $region59: #{tpu_custom_call.1} parent=5 // pred_region
        %s11341 = ssub.s32 %s18, 2
        // Predicated region
        $region61: #{tpu_custom_call.1} parent=59 // pred_check
          %p11342 = pneg %p157
        $region62: #{tpu_custom_call.1} parent=59 // pred_check_branch
          %11344 = sbr.rel (%p11342) target = $region64
        $region63: #{tpu_custom_call.1} parent=59 // pred_region
          %s11345 = sand.u32 %s142, 1
          %s11346 = scalar_lea.sflag [#allocation5], %s11345
          %s11347 = sand.u32 %s142, 1
          %s11348 = smul.addr %s11347, 256
          %s11349 = scalar_lea.vmem [#allocation9], %s11348
          %11350 = dma.done %s11346, 4096
        $region64: #{tpu_custom_call.1} parent=59 // pred_fallthru
          _
      $region60: #{tpu_custom_call.1} parent=5 // pred_fallthru
        _
    $region6: #{tpu_custom_call.1} parent=1 // loop_footer
      %s22 = sadd.s32 1, %s18
    $region7: #{tpu_custom_call.1} parent=1 // loop_footer_branch
      %17 = sbr.rel target = $region3
    $region8: #{tpu_custom_call.1} parent=1 // loop_exit
      _
    %11351 = vsyncpa [#allocation4], 1
    %s11352 = scalar_lea.sflag [#allocation4], 1
    %11353 = vsyncpa %s11352, 1
    %11354 = vsyncpa [#allocation7], 1
    %11355 = vsyncpa [#allocation5], 1
    %s11356 = scalar_lea.sflag [#allocation5], 1
    %11357 = vsyncpa %s11356, 1

</llo_original>
